<compile_context>
chip_gen: v6e
topology: v6e:2x2x1
jax: 0.10.0
libtpu: 0.0.40
codegen_flags: <defaults>
</compile_context>

<pallas_src>
import jax
import jax.numpy as jnp
from jax.experimental import pallas as pl
from jax.experimental.pallas import tpu as pltpu

EPS = 1e-5


def _round_up(a, m):
    return ((a + m - 1) // m) * m


def _make_basic_block_kernel(N, H, W, C, compute_dtype):
    Hp, Wp = H + 2, W + 2                     # single-ring zero-padded frame
    rows_img = N * Hp * Wp                    # real padded-frame pixel rows
    Rr = _round_up(rows_img, 8)               # conv/output row extent (8-aligned)
    Cpad = _round_up(C, 128)                  # channels on the lane axis
    HALO = _round_up(Wp + 1, 8)               # 8-aligned slack for +/-(Wp+1) row shifts
    Rt = HALO + Rr + HALO                     # staged input / scratch row extent
    inv_cnt = 1.0 / float(N * H * W)          # BN reduction count (true image pixels)
    # tap (ky, kx) -> flattened row offset inside the padded frame
    SHIFTS = tuple((ky - 1) * Wp + (kx - 1) for ky in range(3) for kx in range(3))

    def kernel(x_ref, w1_ref, w2_ref, g1_ref, b1_ref, g2_ref, b2_ref,
               rmask_ref, o_ref, y1_scr):
        rmask = rmask_ref[...]                            # (Rr, 1) f32, loaded once

        def conv3x3(src_ref, w_ref):
            # Banded im2col: K = 9*Cpad (true 9*C taps, lane-padded); one MXU push per
            # conv with RHS (9*Cpad, Cpad) instead of (Wp*C)^2 Toeplitz matmuls.
            lhs = jnp.concatenate(
                [src_ref[HALO + s:HALO + s + Rr, :] for s in SHIFTS], axis=1)
            return jnp.dot(lhs.astype(compute_dtype), w_ref[...],
                           preferred_element_type=jnp.float32)        # (Rr, Cpad) f32

        def batchnorm(acc, g, b):
            # Channels on lanes -> per-channel reduce/broadcast is a plain axis-0 sum.
            # Two-pass stats (mean, then centered variance) for numerical robustness.
            mean = jnp.sum(acc * rmask, axis=0, keepdims=True) * inv_cnt    # (1, Cpad)
            d = (acc - mean) * rmask
            var = jnp.sum(d * d, axis=0, keepdims=True) * inv_cnt
            scale = g * jax.lax.rsqrt(var + EPS)          # fused affine:
            shift = b - mean * scale                      #   y = acc * scale + shift
            return acc * scale + shift

        # ---- conv1 -> bn1 -> relu, masked to zero outside the image (== conv2's pad) ----
        y1 = batchnorm(conv3x3(x_ref, w1_ref), g1_ref[...], b1_ref[...])
        y1 = jnp.maximum(y1, 0.0) * rmask

        # stage y1 into an 8-aligned zero-haloed scratch so conv2's row shifts stay in-bounds
        y1_scr[0:HALO, :] = jnp.zeros((HALO, Cpad), jnp.float32)
        y1_scr[HALO + Rr:Rt, :] = jnp.zeros((Rt - HALO - Rr, Cpad), jnp.float32)
        y1_scr[HALO:HALO + Rr, :] = y1

        # ---- conv2 -> bn2 -> + residual (f32) -> relu ----
        y2 = batchnorm(conv3x3(y1_scr, w2_ref), g2_ref[...], b2_ref[...])
        o_ref[...] = jnp.maximum(y2 + x_ref[HALO:HALO + Rr, :], 0.0)

    dims = dict(Hp=Hp, Wp=Wp, rows_img=rows_img, Rr=Rr, Cpad=Cpad, HALO=HALO, Rt=Rt)
    return kernel, dims


def basic_block_forward(x_nchw, w1_oihw, w2_oihw, g1, b1, g2, b2,
                        compute_dtype=jnp.bfloat16):
    N, Cin, H, W = x_nchw.shape
    Cout = w1_oihw.shape[0]
    assert Cin == Cout, "no-downsample residual add requires inplanes == planes"
    C = Cin
    kernel, d = _make_basic_block_kernel(N, H, W, C, compute_dtype)
    Hp, Wp, rows_img = d["Hp"], d["Wp"], d["rows_img"]
    Rr, Cpad, HALO, Rt = d["Rr"], d["Cpad"], d["HALO"], d["Rt"]

    # --- NCHW -> zero-padded NHWC frame, flattened: rows = n*Hp*Wp pixels, lanes = C ---
    # x stays f32 (residual add in f32); matmul operands are cast in-kernel.
    x_nhwc = jnp.transpose(x_nchw, (0, 2, 3, 1)).astype(jnp.float32)
    x_pad = jnp.pad(x_nhwc, ((0, 0), (1, 1), (1, 1), (0, 0)))          # (N, Hp, Wp, C)
    x_rows = x_pad.reshape(rows_img, C)
    x_rows = jnp.pad(x_rows, ((HALO, Rt - HALO - rows_img), (0, Cpad - C)))

    # --- OIHW conv weights -> banded im2col RHS (9*Cpad, Cpad): rows = (tap, ci), cols = co ---
    def to_rhs(w_oihw):
        w = jnp.transpose(w_oihw.astype(jnp.float32), (2, 3, 1, 0)).reshape(9, C, C)
        rhs = jnp.zeros((9, Cpad, Cpad), jnp.float32).at[:, :C, :C].set(w)
        return rhs.reshape(9 * Cpad, Cpad).astype(compute_dtype)

    w1r, w2r = to_rhs(w1_oihw), to_rhs(w2_oihw)

    # --- per-channel BN affine params on the lane axis ---
    def pad_param(p):
        return jnp.pad(p.astype(jnp.float32), (0, Cpad - C)).reshape(1, Cpad)

    g1t, b1t, g2t, b2t = (pad_param(p) for p in (g1, b1, g2, b2))

    # --- separable (rows, 1) validity mask: true image pixels only ---
    r = jnp.arange(Rr)
    yp = (r % (Hp * Wp)) // Wp
    xp = r % Wp
    rmask = ((r < rows_img) & (yp >= 1) & (yp <= H) & (xp >= 1) & (xp <= W))
    rmask = rmask.astype(jnp.float32).reshape(Rr, 1)

    vmem = pl.BlockSpec(memory_space=pltpu.MemorySpace.VMEM)
    bpe = jnp.dtype(compute_dtype).itemsize
    in_bytes = 4 * x_rows.size + bpe * (w1r.size + w2r.size) + 4 * (4 * Cpad + Rr)
    out_bytes = 4 * Rr * Cpad
    scratch_bytes = 4 * Rt * Cpad
    lhs_tmp_bytes = bpe * Rr * 9 * Cpad          # in-kernel im2col operand (per conv)
    cost = pl.CostEstimate(
        flops=2 * (2 * Rr * (9 * Cpad) * Cpad) + 16 * Rr * Cpad,
        transcendentals=2 * Cpad,
        bytes_accessed=in_bytes + out_bytes)
    # sized from actual buffers + headroom; capped below v7x's 64 MiB physical VMEM
    vmem_limit = int(min(2 * (in_bytes + out_bytes) + scratch_bytes
                         + 2 * lhs_tmp_bytes + (16 << 20), 48 << 20))

    out_flat = pl.pallas_call(
        kernel,
        out_shape=jax.ShapeDtypeStruct((Rr, Cpad), jnp.float32),
        in_specs=[vmem] * 8,
        out_specs=vmem,
        scratch_shapes=[pltpu.VMEM((Rt, Cpad), jnp.float32)],
        compiler_params=pltpu.CompilerParams(vmem_limit_bytes=vmem_limit),
        cost_estimate=cost,
    )(x_rows, w1r, w2r, g1t, b1t, g2t, b2t, rmask)

    # --- (rows, lanes) layout -> NCHW crop of the interior pixels ---
    out = out_flat[:rows_img, :C].reshape(N, Hp, Wp, C)[:, 1:H + 1, 1:W + 1, :]
    return jnp.transpose(out, (0, 3, 1, 2))


def reference_basic_block(x, w1, w2, g1, b1, g2, b2):
    """Pure-JAX reference matching PyTorch BasicBlock.forward (training-mode BN)."""
    def conv(z, w):
        return jax.lax.conv_general_dilated(
            z, w, window_strides=(1, 1), padding=((1, 1), (1, 1)),
            dimension_numbers=("NCHW", "OIHW", "NCHW"))

    def bn(z, g, b):
        mean = jnp.mean(z, axis=(0, 2, 3), keepdims=True)
        var = jnp.mean((z - mean) ** 2, axis=(0, 2, 3), keepdims=True)
        return ((z - mean) * jax.lax.rsqrt(var + EPS)
                * g.reshape(1, -1, 1, 1) + b.reshape(1, -1, 1, 1))

    out = jax.nn.relu(bn(conv(x, w1), g1, b1))
    out = bn(conv(out, w2), g2, b2)
    return jax.nn.relu(out + x)


def _check(name, out, ref, atol, rtol):
    if not jnp.allclose(out, ref, atol=atol, rtol=rtol):
        raise AssertionError("%s mismatch vs reference, max abs err = %e"
                             % (name, float(jnp.max(jnp.abs(out - ref)))))


if __name__ == "__main__":
    N, C, H, W = 2, 4, 16, 16      # inplanes == planes == 4
    planes = C
    key = jax.random.PRNGKey(0)
    kx, k1, k2, kg1, kb1, kg2, kb2 = jax.random.split(key, 7)

    x = jax.random.normal(kx, (N, C, H, W), jnp.float32)

    # xavier_uniform for 3x3 convs (fan_in = Cin*9, fan_out = Cout*9), bias-free convs
    bound1 = (6.0 / (C * 9 + planes * 9)) ** 0.5
    w1 = jax.random.uniform(k1, (planes, C, 3, 3), jnp.float32, -bound1, bound1)
    bound2 = (6.0 / (planes * 9 + planes * 9)) ** 0.5
    w2 = jax.random.uniform(k2, (planes, planes, 3, 3), jnp.float32, -bound2, bound2)

    # --- check 1: the module's own init (bn1: w=1,b=0; bn2: w=0,b=0), default bf16 path ---
    g1 = jnp.ones((planes,), jnp.float32)
    b1 = jnp.zeros((planes,), jnp.float32)
    g2 = jnp.zeros((planes,), jnp.float32)
    b2 = jnp.zeros((planes,), jnp.float32)
    out = jax.block_until_ready(basic_block_forward(x, w1, w2, g1, b1, g2, b2))
    ref = reference_basic_block(x, w1, w2, g1, b1, g2, b2)
    assert out.shape == ref.shape == (N, planes, H, W)
    _check("module-init(bf16)", out, ref, atol=1e-4, rtol=1e-4)

    # --- check 2: non-trivial BN params exercise the full conv/BN data path ---
    g1r = jax.random.uniform(kg1, (planes,), jnp.float32, 0.5, 1.5)
    b1r = jax.random.uniform(kb1, (planes,), jnp.float32, -0.5, 0.5)
    g2r = jax.random.uniform(kg2, (planes,), jnp.float32, 0.5, 1.5)
    b2r = jax.random.uniform(kb2, (planes,), jnp.float32, -0.5, 0.5)
    ref_r = reference_basic_block(x, w1, w2, g1r, b1r, g2r, b2r)

    # f32 matmul operands: tight algorithmic parity
    out_f32 = jax.block_until_ready(basic_block_forward(
        x, w1, w2, g1r, b1r, g2r, b2r, compute_dtype=jnp.float32))
    _check("random-bn(f32)", out_f32, ref_r, atol=1e-4, rtol=1e-4)

    # bf16 matmul operands (default / production path): relaxed tolerance per review
    out_bf16 = jax.block_until_ready(basic_block_forward(
        x, w1, w2, g1r, b1r, g2r, b2r, compute_dtype=jnp.bfloat16))
    _check("random-bn(bf16)", out_bf16, ref_r, atol=7.5e-2, rtol=7.5e-2)

    print("KERNEL_OK")
</pallas_src>

<mosaic_0001>
module attributes {stable_mosaic.version = 11 : i64} {
  func.func @kernel(%arg0: memref<696x128xf32, #tpu.memory_space<vmem>>, %arg1: memref<1152x128xbf16, #tpu.memory_space<vmem>>, %arg2: memref<1152x128xbf16, #tpu.memory_space<vmem>>, %arg3: memref<1x128xf32, #tpu.memory_space<vmem>>, %arg4: memref<1x128xf32, #tpu.memory_space<vmem>>, %arg5: memref<1x128xf32, #tpu.memory_space<vmem>>, %arg6: memref<1x128xf32, #tpu.memory_space<vmem>>, %arg7: memref<648x1xf32, #tpu.memory_space<vmem>>, %arg8: memref<648x128xf32, #tpu.memory_space<vmem>>, %arg9: memref<696x128xf32, #tpu.memory_space<vmem>>) attributes {dimension_semantics = [], scalar_prefetch = 0 : i64, scratch_operands = 1 : i64, tpu.core_type = #tpu.core_type<tc>} {
    %c0 = arith.constant 0 : index
    %c0_0 = arith.constant 0 : index
    %0 = vector.load %arg7[%c0, %c0_0] : memref<648x1xf32, #tpu.memory_space<vmem>>, vector<648x1xf32>
    %c5 = arith.constant 5 : index
    %c0_1 = arith.constant 0 : index
    %1 = vector.load %arg0[%c5, %c0_1] : memref<696x128xf32, #tpu.memory_space<vmem>>, vector<648x128xf32>
    %c6 = arith.constant 6 : index
    %c0_2 = arith.constant 0 : index
    %2 = vector.load %arg0[%c6, %c0_2] : memref<696x128xf32, #tpu.memory_space<vmem>>, vector<648x128xf32>
    %c7 = arith.constant 7 : index
    %c0_3 = arith.constant 0 : index
    %3 = vector.load %arg0[%c7, %c0_3] : memref<696x128xf32, #tpu.memory_space<vmem>>, vector<648x128xf32>
    %c23 = arith.constant 23 : index
    %c0_4 = arith.constant 0 : index
    %4 = vector.load %arg0[%c23, %c0_4] : memref<696x128xf32, #tpu.memory_space<vmem>>, vector<648x128xf32>
    %c24 = arith.constant 24 : index
    %c0_5 = arith.constant 0 : index
    %5 = vector.load %arg0[%c24, %c0_5] : memref<696x128xf32, #tpu.memory_space<vmem>>, vector<648x128xf32>
    %c25 = arith.constant 25 : index
    %c0_6 = arith.constant 0 : index
    %6 = vector.load %arg0[%c25, %c0_6] : memref<696x128xf32, #tpu.memory_space<vmem>>, vector<648x128xf32>
    %c41 = arith.constant 41 : index
    %c0_7 = arith.constant 0 : index
    %7 = vector.load %arg0[%c41, %c0_7] : memref<696x128xf32, #tpu.memory_space<vmem>>, vector<648x128xf32>
    %c42 = arith.constant 42 : index
    %c0_8 = arith.constant 0 : index
    %8 = vector.load %arg0[%c42, %c0_8] : memref<696x128xf32, #tpu.memory_space<vmem>>, vector<648x128xf32>
    %c43 = arith.constant 43 : index
    %c0_9 = arith.constant 0 : index
    %9 = vector.load %arg0[%c43, %c0_9] : memref<696x128xf32, #tpu.memory_space<vmem>>, vector<648x128xf32>
    %10 = tpu.concatenate %1, %2, %3, %4, %5, %6, %7, %8, %9 in 1 : vector<648x128xf32>, vector<648x128xf32>, vector<648x128xf32>, vector<648x128xf32>, vector<648x128xf32>, vector<648x128xf32>, vector<648x128xf32>, vector<648x128xf32>, vector<648x128xf32> -> vector<648x1152xf32>
    %11 = arith.truncf %10 : vector<648x1152xf32> to vector<648x1152xbf16>
    %c0_10 = arith.constant 0 : index
    %c0_11 = arith.constant 0 : index
    %12 = vector.load %arg1[%c0_10, %c0_11] : memref<1152x128xbf16, #tpu.memory_space<vmem>>, vector<1152x128xbf16>
    %cst = arith.constant dense<0.000000e+00> : vector<648x128xf32>
    %13 = tpu.matmul %11, %12, %cst {dimension_numbers = #tpu.dot_dimension_numbers<[1], [0], [0], [1], [0, 0, 1, 1], [], []>} : vector<648x1152xbf16>, vector<1152x128xbf16>, vector<648x128xf32> -> vector<648x128xf32>
    %c0_12 = arith.constant 0 : index
    %c0_13 = arith.constant 0 : index
    %14 = vector.load %arg3[%c0_12, %c0_13] : memref<1x128xf32, #tpu.memory_space<vmem>>, vector<1x128xf32>
    %c0_14 = arith.constant 0 : index
    %c0_15 = arith.constant 0 : index
    %15 = vector.load %arg4[%c0_14, %c0_15] : memref<1x128xf32, #tpu.memory_space<vmem>>, vector<1x128xf32>
    %16 = vector.broadcast %0 : vector<648x1xf32> to vector<648x128xf32>
    %17 = arith.mulf %13, %16 : vector<648x128xf32>
    %cst_16 = arith.constant dense<0.000000e+00> : vector<128xf32>
    %18 = vector.multi_reduction <add>, %17, %cst_16 [0] : vector<648x128xf32> to vector<128xf32>
    %19 = vector.shape_cast %18 : vector<128xf32> to vector<1x128xf32>
    %cst_17 = arith.constant 0.001953125 : f32
    %20 = vector.broadcast %cst_17 : f32 to vector<1x128xf32>
    %21 = arith.mulf %19, %20 : vector<1x128xf32>
    %22 = vector.broadcast %21 : vector<1x128xf32> to vector<648x128xf32>
    %23 = arith.subf %13, %22 : vector<648x128xf32>
    %24 = vector.broadcast %0 : vector<648x1xf32> to vector<648x128xf32>
    %25 = arith.mulf %23, %24 : vector<648x128xf32>
    %26 = arith.mulf %25, %25 : vector<648x128xf32>
    %cst_18 = arith.constant dense<0.000000e+00> : vector<128xf32>
    %27 = vector.multi_reduction <add>, %26, %cst_18 [0] : vector<648x128xf32> to vector<128xf32>
    %28 = vector.shape_cast %27 : vector<128xf32> to vector<1x128xf32>
    %cst_19 = arith.constant 0.001953125 : f32
    %29 = vector.broadcast %cst_19 : f32 to vector<1x128xf32>
    %30 = arith.mulf %28, %29 : vector<1x128xf32>
    %cst_20 = arith.constant 9.99999974E-6 : f32
    %31 = vector.broadcast %cst_20 : f32 to vector<1x128xf32>
    %32 = arith.addf %30, %31 : vector<1x128xf32>
    %33 = math.rsqrt %32 : vector<1x128xf32>
    %34 = arith.mulf %14, %33 : vector<1x128xf32>
    %35 = arith.mulf %21, %34 : vector<1x128xf32>
    %36 = arith.subf %15, %35 : vector<1x128xf32>
    %37 = vector.broadcast %34 : vector<1x128xf32> to vector<648x128xf32>
    %38 = arith.mulf %13, %37 : vector<648x128xf32>
    %39 = vector.broadcast %36 : vector<1x128xf32> to vector<648x128xf32>
    %40 = arith.addf %38, %39 : vector<648x128xf32>
    %cst_21 = arith.constant 0.000000e+00 : f32
    %41 = vector.broadcast %cst_21 : f32 to vector<648x128xf32>
    %42 = arith.maximumf %40, %41 : vector<648x128xf32>
    %43 = vector.broadcast %0 : vector<648x1xf32> to vector<648x128xf32>
    %44 = arith.mulf %42, %43 : vector<648x128xf32>
    %cst_22 = arith.constant 0.000000e+00 : f32
    %45 = vector.broadcast %cst_22 : f32 to vector<24x128xf32>
    %c0_23 = arith.constant 0 : index
    %c0_24 = arith.constant 0 : index
    %46 = vector.load %arg9[%c0_23, %c0_24] : memref<696x128xf32, #tpu.memory_space<vmem>>, vector<24x128xf32>
    tpu.vector_store %arg9[%c0_23, %c0_24], %45 {strides = array<i32>} : memref<696x128xf32, #tpu.memory_space<vmem>>, vector<24x128xf32>,
    %cst_25 = arith.constant 0.000000e+00 : f32
    %47 = vector.broadcast %cst_25 : f32 to vector<24x128xf32>
    %c672 = arith.constant 672 : index
    %c0_26 = arith.constant 0 : index
    %48 = vector.load %arg9[%c672, %c0_26] : memref<696x128xf32, #tpu.memory_space<vmem>>, vector<24x128xf32>
    tpu.vector_store %arg9[%c672, %c0_26], %47 {strides = array<i32>} : memref<696x128xf32, #tpu.memory_space<vmem>>, vector<24x128xf32>,
    %c24_27 = arith.constant 24 : index
    %c0_28 = arith.constant 0 : index
    %49 = vector.load %arg9[%c24_27, %c0_28] : memref<696x128xf32, #tpu.memory_space<vmem>>, vector<648x128xf32>
    tpu.vector_store %arg9[%c24_27, %c0_28], %44 {strides = array<i32>} : memref<696x128xf32, #tpu.memory_space<vmem>>, vector<648x128xf32>,
    %c5_29 = arith.constant 5 : index
    %c0_30 = arith.constant 0 : index
    %50 = vector.load %arg9[%c5_29, %c0_30] : memref<696x128xf32, #tpu.memory_space<vmem>>, vector<648x128xf32>
    %c6_31 = arith.constant 6 : index
    %c0_32 = arith.constant 0 : index
    %51 = vector.load %arg9[%c6_31, %c0_32] : memref<696x128xf32, #tpu.memory_space<vmem>>, vector<648x128xf32>
    %c7_33 = arith.constant 7 : index
    %c0_34 = arith.constant 0 : index
    %52 = vector.load %arg9[%c7_33, %c0_34] : memref<696x128xf32, #tpu.memory_space<vmem>>, vector<648x128xf32>
    %c23_35 = arith.constant 23 : index
    %c0_36 = arith.constant 0 : index
    %53 = vector.load %arg9[%c23_35, %c0_36] : memref<696x128xf32, #tpu.memory_space<vmem>>, vector<648x128xf32>
    %c24_37 = arith.constant 24 : index
    %c0_38 = arith.constant 0 : index
    %54 = vector.load %arg9[%c24_37, %c0_38] : memref<696x128xf32, #tpu.memory_space<vmem>>, vector<648x128xf32>
    %c25_39 = arith.constant 25 : index
    %c0_40 = arith.constant 0 : index
    %55 = vector.load %arg9[%c25_39, %c0_40] : memref<696x128xf32, #tpu.memory_space<vmem>>, vector<648x128xf32>
    %c41_41 = arith.constant 41 : index
    %c0_42 = arith.constant 0 : index
    %56 = vector.load %arg9[%c41_41, %c0_42] : memref<696x128xf32, #tpu.memory_space<vmem>>, vector<648x128xf32>
    %c42_43 = arith.constant 42 : index
    %c0_44 = arith.constant 0 : index
    %57 = vector.load %arg9[%c42_43, %c0_44] : memref<696x128xf32, #tpu.memory_space<vmem>>, vector<648x128xf32>
    %c43_45 = arith.constant 43 : index
    %c0_46 = arith.constant 0 : index
    %58 = vector.load %arg9[%c43_45, %c0_46] : memref<696x128xf32, #tpu.memory_space<vmem>>, vector<648x128xf32>
    %59 = tpu.concatenate %50, %51, %52, %53, %54, %55, %56, %57, %58 in 1 : vector<648x128xf32>, vector<648x128xf32>, vector<648x128xf32>, vector<648x128xf32>, vector<648x128xf32>, vector<648x128xf32>, vector<648x128xf32>, vector<648x128xf32>, vector<648x128xf32> -> vector<648x1152xf32>
    %60 = arith.truncf %59 : vector<648x1152xf32> to vector<648x1152xbf16>
    %c0_47 = arith.constant 0 : index
    %c0_48 = arith.constant 0 : index
    %61 = vector.load %arg2[%c0_47, %c0_48] : memref<1152x128xbf16, #tpu.memory_space<vmem>>, vector<1152x128xbf16>
    %cst_49 = arith.constant dense<0.000000e+00> : vector<648x128xf32>
    %62 = tpu.matmul %60, %61, %cst_49 {dimension_numbers = #tpu.dot_dimension_numbers<[1], [0], [0], [1], [0, 0, 1, 1], [], []>} : vector<648x1152xbf16>, vector<1152x128xbf16>, vector<648x128xf32> -> vector<648x128xf32>
    %c0_50 = arith.constant 0 : index
    %c0_51 = arith.constant 0 : index
    %63 = vector.load %arg5[%c0_50, %c0_51] : memref<1x128xf32, #tpu.memory_space<vmem>>, vector<1x128xf32>
    %c0_52 = arith.constant 0 : index
    %c0_53 = arith.constant 0 : index
    %64 = vector.load %arg6[%c0_52, %c0_53] : memref<1x128xf32, #tpu.memory_space<vmem>>, vector<1x128xf32>
    %65 = vector.broadcast %0 : vector<648x1xf32> to vector<648x128xf32>
    %66 = arith.mulf %62, %65 : vector<648x128xf32>
    %cst_54 = arith.constant dense<0.000000e+00> : vector<128xf32>
    %67 = vector.multi_reduction <add>, %66, %cst_54 [0] : vector<648x128xf32> to vector<128xf32>
    %68 = vector.shape_cast %67 : vector<128xf32> to vector<1x128xf32>
    %cst_55 = arith.constant 0.001953125 : f32
    %69 = vector.broadcast %cst_55 : f32 to vector<1x128xf32>
    %70 = arith.mulf %68, %69 : vector<1x128xf32>
    %71 = vector.broadcast %70 : vector<1x128xf32> to vector<648x128xf32>
    %72 = arith.subf %62, %71 : vector<648x128xf32>
    %73 = vector.broadcast %0 : vector<648x1xf32> to vector<648x128xf32>
    %74 = arith.mulf %72, %73 : vector<648x128xf32>
    %75 = arith.mulf %74, %74 : vector<648x128xf32>
    %cst_56 = arith.constant dense<0.000000e+00> : vector<128xf32>
    %76 = vector.multi_reduction <add>, %75, %cst_56 [0] : vector<648x128xf32> to vector<128xf32>
    %77 = vector.shape_cast %76 : vector<128xf32> to vector<1x128xf32>
    %cst_57 = arith.constant 0.001953125 : f32
    %78 = vector.broadcast %cst_57 : f32 to vector<1x128xf32>
    %79 = arith.mulf %77, %78 : vector<1x128xf32>
    %cst_58 = arith.constant 9.99999974E-6 : f32
    %80 = vector.broadcast %cst_58 : f32 to vector<1x128xf32>
    %81 = arith.addf %79, %80 : vector<1x128xf32>
    %82 = math.rsqrt %81 : vector<1x128xf32>
    %83 = arith.mulf %63, %82 : vector<1x128xf32>
    %84 = arith.mulf %70, %83 : vector<1x128xf32>
    %85 = arith.subf %64, %84 : vector<1x128xf32>
    %86 = vector.broadcast %83 : vector<1x128xf32> to vector<648x128xf32>
    %87 = arith.mulf %62, %86 : vector<648x128xf32>
    %88 = vector.broadcast %85 : vector<1x128xf32> to vector<648x128xf32>
    %89 = arith.addf %87, %88 : vector<648x128xf32>
    %c24_59 = arith.constant 24 : index
    %c0_60 = arith.constant 0 : index
    %90 = vector.load %arg0[%c24_59, %c0_60] : memref<696x128xf32, #tpu.memory_space<vmem>>, vector<648x128xf32>
    %91 = arith.addf %89, %90 : vector<648x128xf32>
    %cst_61 = arith.constant 0.000000e+00 : f32
    %92 = vector.broadcast %cst_61 : f32 to vector<648x128xf32>
    %93 = arith.maximumf %91, %92 : vector<648x128xf32>
    %c0_62 = arith.constant 0 : index
    %c0_63 = arith.constant 0 : index
    %94 = vector.load %arg8[%c0_62, %c0_63] : memref<648x128xf32, #tpu.memory_space<vmem>>, vector<648x128xf32>
    tpu.vector_store %arg8[%c0_62, %c0_63], %93 {strides = array<i32>} : memref<648x128xf32, #tpu.memory_space<vmem>>, vector<648x128xf32>,
    return
  }
}

</mosaic_0001>

<llo_original>
// kernel: tpu_custom_call.1
$region0: #{tpu_custom_call.1}
  #allocation0 [shape = 'u32[]', space=smem, size = 0x4, offset = 0x4, fixed_abs, tag = 'smem constant byte address 0x4 - core index']
  #allocation1 [shape = 'u32[144,128]{1,0:T(1,128)}', space=vmem, size = 0x12000, scoped, tag = 'internal scratch']
  #allocation2 [shape = 'f32[696,128]{1,0:T(8,128)}', space=vmem, size = 0x57000, scoped, tag = 'scratch operand']
  %s0 = inlined_call_operand.hbm [shape: f32[696,128], index: 0, kind: input, shape index: {}]
  %s1 = inlined_call_operand.vmem [shape: bf16[1152,128], index: 1, kind: input, shape index: {}]
  %s2 = inlined_call_operand.hbm [shape: bf16[1152,128], index: 2, kind: input, shape index: {}]
  %s3 = inlined_call_operand.vmem [shape: f32[1,128], index: 3, kind: input, shape index: {}]
  %s4 = inlined_call_operand.vmem [shape: f32[1,128], index: 4, kind: input, shape index: {}]
  %s5 = inlined_call_operand.vmem [shape: f32[1,128], index: 5, kind: input, shape index: {}]
  %s6 = inlined_call_operand.vmem [shape: f32[1,128], index: 6, kind: input, shape index: {}]
  %s7 = inlined_call_operand.vmem [shape: f32[648,1], index: 7, kind: input, shape index: {}]
  %s8 = inlined_call_operand.hbm [shape: f32[648,128], index: 8, kind: output, shape index: {}]
  %s9 = sld [smem:[#allocation0]]
  $region50: #{tpu_custom_call.1} parent=0
    _
  %s11 = ssub.s32 1, %s9
  %s12 = scalar_select 0, %s11, %s9
  $region1: #{tpu_custom_call.1} parent=0
    #allocation3 [shape = 'u8[356352]{0}', space=vmem, size = 0x57000, scoped, tag = 'input window, operand 0, single buffered']
    #allocation4 [shape = 's32[1]{0}', space=sflag, size = 0x4, scoped, tag = 'scoped memory for tpu_custom_call.1']
    #allocation5 [shape = 's32[1]{0}', space=sflag, size = 0x4, scoped, tag = 'scoped memory for tpu_custom_call.1']
    #allocation6 [shape = 'u8[294912]{0}', space=vmem, size = 0x48000, scoped, tag = 'input window, operand 2, single buffered']
    #allocation7 [shape = 's32[1]{0}', space=sflag, size = 0x4, scoped, tag = 'scoped memory for tpu_custom_call.1']
    #allocation8 [shape = 'u8[331776]{0}', space=vmem, size = 0x51000, scoped, tag = 'output window, operand 0, single buffered']
    %13 = vsyncpa [#allocation4], 0
    %14 = vsyncpa [#allocation7], 0
    %15 = vsyncpa [#allocation5], 0
    // Predicated region
    $region2: #{tpu_custom_call.1} parent=1 // pred_check
      _
    $region3: #{tpu_custom_call.1} parent=1 // pred_check_branch
      %17 = sbr.rel (0) target = $region5
    $region4: #{tpu_custom_call.1} parent=1 // pred_region
      %s19 = ssub.s32 11136, 11136
      %20 = vsyncadd [#allocation4], %s19
      %s21 = sshll.u32 [#allocation3], 4
      %s22 = int_to_ptr.vmem [resolvable:$true] %s21
      %27 = dma.hbm_to_vmem [thread:$0]  %s0, 11136, %s22, [#allocation4], 128, 128, 8
    $region5: #{tpu_custom_call.1} parent=1 // pred_fallthru
      _
    // Predicated region
    $region6: #{tpu_custom_call.1} parent=1 // pred_check
      _
    $region7: #{tpu_custom_call.1} parent=1 // pred_check_branch
      %29 = sbr.rel (0) target = $region9
    $region8: #{tpu_custom_call.1} parent=1 // pred_region
      _
    $region9: #{tpu_custom_call.1} parent=1 // pred_fallthru
      _
    // Predicated region
    $region10: #{tpu_custom_call.1} parent=1 // pred_check
      _
    $region11: #{tpu_custom_call.1} parent=1 // pred_check_branch
      %31 = sbr.rel (0) target = $region13
    $region12: #{tpu_custom_call.1} parent=1 // pred_region
      %s33 = ssub.s32 9216, 9216
      %34 = vsyncadd [#allocation7], %s33
      %s35 = sshll.u32 [#allocation6], 4
      %s36 = int_to_ptr.vmem [resolvable:$true] %s35
      %41 = dma.hbm_to_vmem [thread:$0]  %s2, 9216, %s36, [#allocation7], 64, 64, 4
    $region13: #{tpu_custom_call.1} parent=1 // pred_fallthru
      _
    // Predicated region
    $region14: #{tpu_custom_call.1} parent=1 // pred_check
      _
    $region15: #{tpu_custom_call.1} parent=1 // pred_check_branch
      %43 = sbr.rel (0) target = $region17
    $region16: #{tpu_custom_call.1} parent=1 // pred_region
      _
    $region17: #{tpu_custom_call.1} parent=1 // pred_fallthru
      _
    // Predicated region
    $region18: #{tpu_custom_call.1} parent=1 // pred_check
      _
    $region19: #{tpu_custom_call.1} parent=1 // pred_check_branch
      %45 = sbr.rel (0) target = $region21
    $region20: #{tpu_custom_call.1} parent=1 // pred_region
      _
    $region21: #{tpu_custom_call.1} parent=1 // pred_fallthru
      _
    // Predicated region
    $region22: #{tpu_custom_call.1} parent=1 // pred_check
      _
    $region23: #{tpu_custom_call.1} parent=1 // pred_check_branch
      %47 = sbr.rel (0) target = $region25
    $region24: #{tpu_custom_call.1} parent=1 // pred_region
      _
    $region25: #{tpu_custom_call.1} parent=1 // pred_fallthru
      _
    // Predicated region
    $region26: #{tpu_custom_call.1} parent=1 // pred_check
      _
    $region27: #{tpu_custom_call.1} parent=1 // pred_check_branch
      %49 = sbr.rel (0) target = $region29
    $region28: #{tpu_custom_call.1} parent=1 // pred_region
      _
    $region29: #{tpu_custom_call.1} parent=1 // pred_fallthru
      _
    // Predicated region
    $region30: #{tpu_custom_call.1} parent=1 // pred_check
      _
    $region31: #{tpu_custom_call.1} parent=1 // pred_check_branch
      %51 = sbr.rel (0) target = $region33
    $region32: #{tpu_custom_call.1} parent=1 // pred_region
      _
    $region33: #{tpu_custom_call.1} parent=1 // pred_fallthru
      _
    // Predicated region
    $region34: #{tpu_custom_call.1} parent=1 // pred_check
      _
    $region35: #{tpu_custom_call.1} parent=1 // pred_check_branch
      %53 = sbr.rel (0) target = $region37
    $region36: #{tpu_custom_call.1} parent=1 // pred_region
      %54 = dma.done [#allocation4], 11136
    $region37: #{tpu_custom_call.1} parent=1 // pred_fallthru
      _
    // Predicated region
    $region38: #{tpu_custom_call.1} parent=1 // pred_check
      _
    $region39: #{tpu_custom_call.1} parent=1 // pred_check_branch
      %56 = sbr.rel (0) target = $region41
    $region40: #{tpu_custom_call.1} parent=1 // pred_region
      %57 = dma.done [#allocation7], 9216
    $region41: #{tpu_custom_call.1} parent=1 // pred_fallthru
      _
    %v59 = vld [vmem:[%s7] sm:$0xff]
    %v60 = vld [vmem:[%s7 + $0x8] sm:$0xff]
    %v61 = vld [vmem:[%s7 + $0x10] sm:$0xff]
    %v62 = vld [vmem:[%s7 + $0x18] sm:$0xff]
    %v63 = vld [vmem:[%s7 + $0x20] sm:$0xff]
    %v64 = vld [vmem:[%s7 + $0x28] sm:$0xff]
    %v65 = vld [vmem:[%s7 + $0x30] sm:$0xff]
    %v66 = vld [vmem:[%s7 + $0x38] sm:$0xff]
    %v67 = vld [vmem:[%s7 + $0x40] sm:$0xff]
    %v68 = vld [vmem:[%s7 + $0x48] sm:$0xff]
    %v69 = vld [vmem:[%s7 + $0x50] sm:$0xff]
    %v70 = vld [vmem:[%s7 + $0x58] sm:$0xff]
    %v71 = vld [vmem:[%s7 + $0x60] sm:$0xff]
    %v72 = vld [vmem:[%s7 + $0x68] sm:$0xff]
    %v73 = vld [vmem:[%s7 + $0x70] sm:$0xff]
    %v74 = vld [vmem:[%s7 + $0x78] sm:$0xff]
    %v75 = vld [vmem:[%s7 + $0x80] sm:$0xff]
    %v76 = vld [vmem:[%s7 + $0x88] sm:$0xff]
    %v77 = vld [vmem:[%s7 + $0x90] sm:$0xff]
    %v78 = vld [vmem:[%s7 + $0x98] sm:$0xff]
    %v79 = vld [vmem:[%s7 + $0xa0] sm:$0xff]
    %v80 = vld [vmem:[%s7 + $0xa8] sm:$0xff]
    %v81 = vld [vmem:[%s7 + $0xb0] sm:$0xff]
    %v82 = vld [vmem:[%s7 + $0xb8] sm:$0xff]
    %v83 = vld [vmem:[%s7 + $0xc0] sm:$0xff]
    %v84 = vld [vmem:[%s7 + $0xc8] sm:$0xff]
    %v85 = vld [vmem:[%s7 + $0xd0] sm:$0xff]
    %v86 = vld [vmem:[%s7 + $0xd8] sm:$0xff]
    %v87 = vld [vmem:[%s7 + $0xe0] sm:$0xff]
    %v88 = vld [vmem:[%s7 + $0xe8] sm:$0xff]
    %v89 = vld [vmem:[%s7 + $0xf0] sm:$0xff]
    %v90 = vld [vmem:[%s7 + $0xf8] sm:$0xff]
    %v91 = vld [vmem:[%s7 + $0x100] sm:$0xff]
    %v92 = vld [vmem:[%s7 + $0x108] sm:$0xff]
    %v93 = vld [vmem:[%s7 + $0x110] sm:$0xff]
    %v94 = vld [vmem:[%s7 + $0x118] sm:$0xff]
    %v95 = vld [vmem:[%s7 + $0x120] sm:$0xff]
    %v96 = vld [vmem:[%s7 + $0x128] sm:$0xff]
    %v97 = vld [vmem:[%s7 + $0x130] sm:$0xff]
    %v98 = vld [vmem:[%s7 + $0x138] sm:$0xff]
    %v99 = vld [vmem:[%s7 + $0x140] sm:$0xff]
    %v100 = vld [vmem:[%s7 + $0x148] sm:$0xff]
    %v101 = vld [vmem:[%s7 + $0x150] sm:$0xff]
    %v102 = vld [vmem:[%s7 + $0x158] sm:$0xff]
    %v103 = vld [vmem:[%s7 + $0x160] sm:$0xff]
    %v104 = vld [vmem:[%s7 + $0x168] sm:$0xff]
    %v105 = vld [vmem:[%s7 + $0x170] sm:$0xff]
    %v106 = vld [vmem:[%s7 + $0x178] sm:$0xff]
    %v107 = vld [vmem:[%s7 + $0x180] sm:$0xff]
    %v108 = vld [vmem:[%s7 + $0x188] sm:$0xff]
    %v109 = vld [vmem:[%s7 + $0x190] sm:$0xff]
    %v110 = vld [vmem:[%s7 + $0x198] sm:$0xff]
    %v111 = vld [vmem:[%s7 + $0x1a0] sm:$0xff]
    %v112 = vld [vmem:[%s7 + $0x1a8] sm:$0xff]
    %v113 = vld [vmem:[%s7 + $0x1b0] sm:$0xff]
    %v114 = vld [vmem:[%s7 + $0x1b8] sm:$0xff]
    %v115 = vld [vmem:[%s7 + $0x1c0] sm:$0xff]
    %v116 = vld [vmem:[%s7 + $0x1c8] sm:$0xff]
    %v117 = vld [vmem:[%s7 + $0x1d0] sm:$0xff]
    %v118 = vld [vmem:[%s7 + $0x1d8] sm:$0xff]
    %v119 = vld [vmem:[%s7 + $0x1e0] sm:$0xff]
    %v120 = vld [vmem:[%s7 + $0x1e8] sm:$0xff]
    %v121 = vld [vmem:[%s7 + $0x1f0] sm:$0xff]
    %v122 = vld [vmem:[%s7 + $0x1f8] sm:$0xff]
    %v123 = vld [vmem:[%s7 + $0x200] sm:$0xff]
    %v124 = vld [vmem:[%s7 + $0x208] sm:$0xff]
    %v125 = vld [vmem:[%s7 + $0x210] sm:$0xff]
    %v126 = vld [vmem:[%s7 + $0x218] sm:$0xff]
    %v127 = vld [vmem:[%s7 + $0x220] sm:$0xff]
    %v128 = vld [vmem:[%s7 + $0x228] sm:$0xff]
    %v129 = vld [vmem:[%s7 + $0x230] sm:$0xff]
    %v130 = vld [vmem:[%s7 + $0x238] sm:$0xff]
    %v131 = vld [vmem:[%s7 + $0x240] sm:$0xff]
    %v132 = vld [vmem:[%s7 + $0x248] sm:$0xff]
    %v133 = vld [vmem:[%s7 + $0x250] sm:$0xff]
    %v134 = vld [vmem:[%s7 + $0x258] sm:$0xff]
    %v135 = vld [vmem:[%s7 + $0x260] sm:$0xff]
    %v136 = vld [vmem:[%s7 + $0x268] sm:$0xff]
    %v137 = vld [vmem:[%s7 + $0x270] sm:$0xff]
    %v138 = vld [vmem:[%s7 + $0x278] sm:$0xff]
    %v139 = vld [vmem:[%s7 + $0x280] sm:$0xff]
    %v140 = vld [vmem:[#allocation3 + $0x5] sm:$0xff]
    %v141 = vld [vmem:[#allocation3 + $0xd] sm:$0xff]
    %v142 = vld [vmem:[#allocation3 + $0x15] sm:$0xff]
    %v143 = vld [vmem:[#allocation3 + $0x1d] sm:$0xff]
    %v144 = vld [vmem:[#allocation3 + $0x25] sm:$0xff]
    %v145 = vld [vmem:[#allocation3 + $0x2d] sm:$0xff]
    %v146 = vld [vmem:[#allocation3 + $0x35] sm:$0xff]
    %v147 = vld [vmem:[#allocation3 + $0x3d] sm:$0xff]
    %v148 = vld [vmem:[#allocation3 + $0x45] sm:$0xff]
    %v149 = vld [vmem:[#allocation3 + $0x4d] sm:$0xff]
    %v150 = vld [vmem:[#allocation3 + $0x55] sm:$0xff]
    %v151 = vld [vmem:[#allocation3 + $0x5d] sm:$0xff]
    %v152 = vld [vmem:[#allocation3 + $0x65] sm:$0xff]
    %v153 = vld [vmem:[#allocation3 + $0x6d] sm:$0xff]
    %v154 = vld [vmem:[#allocation3 + $0x75] sm:$0xff]
    %v155 = vld [vmem:[#allocation3 + $0x7d] sm:$0xff]
    %v156 = vld [vmem:[#allocation3 + $0x85] sm:$0xff]
    %v157 = vld [vmem:[#allocation3 + $0x8d] sm:$0xff]
    %v158 = vld [vmem:[#allocation3 + $0x95] sm:$0xff]
    %v159 = vld [vmem:[#allocation3 + $0x9d] sm:$0xff]
    %v160 = vld [vmem:[#allocation3 + $0xa5] sm:$0xff]
    %v161 = vld [vmem:[#allocation3 + $0xad] sm:$0xff]
    %v162 = vld [vmem:[#allocation3 + $0xb5] sm:$0xff]
    %v163 = vld [vmem:[#allocation3 + $0xbd] sm:$0xff]
    %v164 = vld [vmem:[#allocation3 + $0xc5] sm:$0xff]
    %v165 = vld [vmem:[#allocation3 + $0xcd] sm:$0xff]
    %v166 = vld [vmem:[#allocation3 + $0xd5] sm:$0xff]
    %v167 = vld [vmem:[#allocation3 + $0xdd] sm:$0xff]
    %v168 = vld [vmem:[#allocation3 + $0xe5] sm:$0xff]
    %v169 = vld [vmem:[#allocation3 + $0xed] sm:$0xff]
    %v170 = vld [vmem:[#allocation3 + $0xf5] sm:$0xff]
    %v171 = vld [vmem:[#allocation3 + $0xfd] sm:$0xff]
    %v172 = vld [vmem:[#allocation3 + $0x105] sm:$0xff]
    %v173 = vld [vmem:[#allocation3 + $0x10d] sm:$0xff]
    %v174 = vld [vmem:[#allocation3 + $0x115] sm:$0xff]
    %v175 = vld [vmem:[#allocation3 + $0x11d] sm:$0xff]
    %v176 = vld [vmem:[#allocation3 + $0x125] sm:$0xff]
    %v177 = vld [vmem:[#allocation3 + $0x12d] sm:$0xff]
    %v178 = vld [vmem:[#allocation3 + $0x135] sm:$0xff]
    %v179 = vld [vmem:[#allocation3 + $0x13d] sm:$0xff]
    %v180 = vld [vmem:[#allocation3 + $0x145] sm:$0xff]
    %v181 = vld [vmem:[#allocation3 + $0x14d] sm:$0xff]
    %v182 = vld [vmem:[#allocation3 + $0x155] sm:$0xff]
    %v183 = vld [vmem:[#allocation3 + $0x15d] sm:$0xff]
    %v184 = vld [vmem:[#allocation3 + $0x165] sm:$0xff]
    %v185 = vld [vmem:[#allocation3 + $0x16d] sm:$0xff]
    %v186 = vld [vmem:[#allocation3 + $0x175] sm:$0xff]
    %v187 = vld [vmem:[#allocation3 + $0x17d] sm:$0xff]
    %v188 = vld [vmem:[#allocation3 + $0x185] sm:$0xff]
    %v189 = vld [vmem:[#allocation3 + $0x18d] sm:$0xff]
    %v190 = vld [vmem:[#allocation3 + $0x195] sm:$0xff]
    %v191 = vld [vmem:[#allocation3 + $0x19d] sm:$0xff]
    %v192 = vld [vmem:[#allocation3 + $0x1a5] sm:$0xff]
    %v193 = vld [vmem:[#allocation3 + $0x1ad] sm:$0xff]
    %v194 = vld [vmem:[#allocation3 + $0x1b5] sm:$0xff]
    %v195 = vld [vmem:[#allocation3 + $0x1bd] sm:$0xff]
    %v196 = vld [vmem:[#allocation3 + $0x1c5] sm:$0xff]
    %v197 = vld [vmem:[#allocation3 + $0x1cd] sm:$0xff]
    %v198 = vld [vmem:[#allocation3 + $0x1d5] sm:$0xff]
    %v199 = vld [vmem:[#allocation3 + $0x1dd] sm:$0xff]
    %v200 = vld [vmem:[#allocation3 + $0x1e5] sm:$0xff]
    %v201 = vld [vmem:[#allocation3 + $0x1ed] sm:$0xff]
    %v202 = vld [vmem:[#allocation3 + $0x1f5] sm:$0xff]
    %v203 = vld [vmem:[#allocation3 + $0x1fd] sm:$0xff]
    %v204 = vld [vmem:[#allocation3 + $0x205] sm:$0xff]
    %v205 = vld [vmem:[#allocation3 + $0x20d] sm:$0xff]
    %v206 = vld [vmem:[#allocation3 + $0x215] sm:$0xff]
    %v207 = vld [vmem:[#allocation3 + $0x21d] sm:$0xff]
    %v208 = vld [vmem:[#allocation3 + $0x225] sm:$0xff]
    %v209 = vld [vmem:[#allocation3 + $0x22d] sm:$0xff]
    %v210 = vld [vmem:[#allocation3 + $0x235] sm:$0xff]
    %v211 = vld [vmem:[#allocation3 + $0x23d] sm:$0xff]
    %v212 = vld [vmem:[#allocation3 + $0x245] sm:$0xff]
    %v213 = vld [vmem:[#allocation3 + $0x24d] sm:$0xff]
    %v214 = vld [vmem:[#allocation3 + $0x255] sm:$0xff]
    %v215 = vld [vmem:[#allocation3 + $0x25d] sm:$0xff]
    %v216 = vld [vmem:[#allocation3 + $0x265] sm:$0xff]
    %v217 = vld [vmem:[#allocation3 + $0x26d] sm:$0xff]
    %v218 = vld [vmem:[#allocation3 + $0x275] sm:$0xff]
    %v219 = vld [vmem:[#allocation3 + $0x27d] sm:$0xff]
    %v220 = vld [vmem:[#allocation3 + $0x285] sm:$0xff]
    %v221 = vld [vmem:[#allocation3 + $0x6] sm:$0xff]
    %v222 = vld [vmem:[#allocation3 + $0xe] sm:$0xff]
    %v223 = vld [vmem:[#allocation3 + $0x16] sm:$0xff]
    %v224 = vld [vmem:[#allocation3 + $0x1e] sm:$0xff]
    %v225 = vld [vmem:[#allocation3 + $0x26] sm:$0xff]
    %v226 = vld [vmem:[#allocation3 + $0x2e] sm:$0xff]
    %v227 = vld [vmem:[#allocation3 + $0x36] sm:$0xff]
    %v228 = vld [vmem:[#allocation3 + $0x3e] sm:$0xff]
    %v229 = vld [vmem:[#allocation3 + $0x46] sm:$0xff]
    %v230 = vld [vmem:[#allocation3 + $0x4e] sm:$0xff]
    %v231 = vld [vmem:[#allocation3 + $0x56] sm:$0xff]
    %v232 = vld [vmem:[#allocation3 + $0x5e] sm:$0xff]
    %v233 = vld [vmem:[#allocation3 + $0x66] sm:$0xff]
    %v234 = vld [vmem:[#allocation3 + $0x6e] sm:$0xff]
    %v235 = vld [vmem:[#allocation3 + $0x76] sm:$0xff]
    %v236 = vld [vmem:[#allocation3 + $0x7e] sm:$0xff]
    %v237 = vld [vmem:[#allocation3 + $0x86] sm:$0xff]
    %v238 = vld [vmem:[#allocation3 + $0x8e] sm:$0xff]
    %v239 = vld [vmem:[#allocation3 + $0x96] sm:$0xff]
    %v240 = vld [vmem:[#allocation3 + $0x9e] sm:$0xff]
    %v241 = vld [vmem:[#allocation3 + $0xa6] sm:$0xff]
    %v242 = vld [vmem:[#allocation3 + $0xae] sm:$0xff]
    %v243 = vld [vmem:[#allocation3 + $0xb6] sm:$0xff]
    %v244 = vld [vmem:[#allocation3 + $0xbe] sm:$0xff]
    %v245 = vld [vmem:[#allocation3 + $0xc6] sm:$0xff]
    %v246 = vld [vmem:[#allocation3 + $0xce] sm:$0xff]
    %v247 = vld [vmem:[#allocation3 + $0xd6] sm:$0xff]
    %v248 = vld [vmem:[#allocation3 + $0xde] sm:$0xff]
    %v249 = vld [vmem:[#allocation3 + $0xe6] sm:$0xff]
    %v250 = vld [vmem:[#allocation3 + $0xee] sm:$0xff]
    %v251 = vld [vmem:[#allocation3 + $0xf6] sm:$0xff]
    %v252 = vld [vmem:[#allocation3 + $0xfe] sm:$0xff]
    %v253 = vld [vmem:[#allocation3 + $0x106] sm:$0xff]
    %v254 = vld [vmem:[#allocation3 + $0x10e] sm:$0xff]
    %v255 = vld [vmem:[#allocation3 + $0x116] sm:$0xff]
    %v256 = vld [vmem:[#allocation3 + $0x11e] sm:$0xff]
    %v257 = vld [vmem:[#allocation3 + $0x126] sm:$0xff]
    %v258 = vld [vmem:[#allocation3 + $0x12e] sm:$0xff]
    %v259 = vld [vmem:[#allocation3 + $0x136] sm:$0xff]
    %v260 = vld [vmem:[#allocation3 + $0x13e] sm:$0xff]
    %v261 = vld [vmem:[#allocation3 + $0x146] sm:$0xff]
    %v262 = vld [vmem:[#allocation3 + $0x14e] sm:$0xff]
    %v263 = vld [vmem:[#allocation3 + $0x156] sm:$0xff]
    %v264 = vld [vmem:[#allocation3 + $0x15e] sm:$0xff]
    %v265 = vld [vmem:[#allocation3 + $0x166] sm:$0xff]
    %v266 = vld [vmem:[#allocation3 + $0x16e] sm:$0xff]
    %v267 = vld [vmem:[#allocation3 + $0x176] sm:$0xff]
    %v268 = vld [vmem:[#allocation3 + $0x17e] sm:$0xff]
    %v269 = vld [vmem:[#allocation3 + $0x186] sm:$0xff]
    %v270 = vld [vmem:[#allocation3 + $0x18e] sm:$0xff]
    %v271 = vld [vmem:[#allocation3 + $0x196] sm:$0xff]
    %v272 = vld [vmem:[#allocation3 + $0x19e] sm:$0xff]
    %v273 = vld [vmem:[#allocation3 + $0x1a6] sm:$0xff]
    %v274 = vld [vmem:[#allocation3 + $0x1ae] sm:$0xff]
    %v275 = vld [vmem:[#allocation3 + $0x1b6] sm:$0xff]
    %v276 = vld [vmem:[#allocation3 + $0x1be] sm:$0xff]
    %v277 = vld [vmem:[#allocation3 + $0x1c6] sm:$0xff]
    %v278 = vld [vmem:[#allocation3 + $0x1ce] sm:$0xff]
    %v279 = vld [vmem:[#allocation3 + $0x1d6] sm:$0xff]
    %v280 = vld [vmem:[#allocation3 + $0x1de] sm:$0xff]
    %v281 = vld [vmem:[#allocation3 + $0x1e6] sm:$0xff]
    %v282 = vld [vmem:[#allocation3 + $0x1ee] sm:$0xff]
    %v283 = vld [vmem:[#allocation3 + $0x1f6] sm:$0xff]
    %v284 = vld [vmem:[#allocation3 + $0x1fe] sm:$0xff]
    %v285 = vld [vmem:[#allocation3 + $0x206] sm:$0xff]
    %v286 = vld [vmem:[#allocation3 + $0x20e] sm:$0xff]
    %v287 = vld [vmem:[#allocation3 + $0x216] sm:$0xff]
    %v288 = vld [vmem:[#allocation3 + $0x21e] sm:$0xff]
    %v289 = vld [vmem:[#allocation3 + $0x226] sm:$0xff]
    %v290 = vld [vmem:[#allocation3 + $0x22e] sm:$0xff]
    %v291 = vld [vmem:[#allocation3 + $0x236] sm:$0xff]
    %v292 = vld [vmem:[#allocation3 + $0x23e] sm:$0xff]
    %v293 = vld [vmem:[#allocation3 + $0x246] sm:$0xff]
    %v294 = vld [vmem:[#allocation3 + $0x24e] sm:$0xff]
    %v295 = vld [vmem:[#allocation3 + $0x256] sm:$0xff]
    %v296 = vld [vmem:[#allocation3 + $0x25e] sm:$0xff]
    %v297 = vld [vmem:[#allocation3 + $0x266] sm:$0xff]
    %v298 = vld [vmem:[#allocation3 + $0x26e] sm:$0xff]
    %v299 = vld [vmem:[#allocation3 + $0x276] sm:$0xff]
    %v300 = vld [vmem:[#allocation3 + $0x27e] sm:$0xff]
    %v301 = vld [vmem:[#allocation3 + $0x286] sm:$0xff]
    %v302 = vld [vmem:[#allocation3 + $0x7] sm:$0xff]
    %v303 = vld [vmem:[#allocation3 + $0xf] sm:$0xff]
    %v304 = vld [vmem:[#allocation3 + $0x17] sm:$0xff]
    %v305 = vld [vmem:[#allocation3 + $0x1f] sm:$0xff]
    %v306 = vld [vmem:[#allocation3 + $0x27] sm:$0xff]
    %v307 = vld [vmem:[#allocation3 + $0x2f] sm:$0xff]
    %v308 = vld [vmem:[#allocation3 + $0x37] sm:$0xff]
    %v309 = vld [vmem:[#allocation3 + $0x3f] sm:$0xff]
    %v310 = vld [vmem:[#allocation3 + $0x47] sm:$0xff]
    %v311 = vld [vmem:[#allocation3 + $0x4f] sm:$0xff]
    %v312 = vld [vmem:[#allocation3 + $0x57] sm:$0xff]
    %v313 = vld [vmem:[#allocation3 + $0x5f] sm:$0xff]
    %v314 = vld [vmem:[#allocation3 + $0x67] sm:$0xff]
    %v315 = vld [vmem:[#allocation3 + $0x6f] sm:$0xff]
    %v316 = vld [vmem:[#allocation3 + $0x77] sm:$0xff]
    %v317 = vld [vmem:[#allocation3 + $0x7f] sm:$0xff]
    %v318 = vld [vmem:[#allocation3 + $0x87] sm:$0xff]
    %v319 = vld [vmem:[#allocation3 + $0x8f] sm:$0xff]
    %v320 = vld [vmem:[#allocation3 + $0x97] sm:$0xff]
    %v321 = vld [vmem:[#allocation3 + $0x9f] sm:$0xff]
    %v322 = vld [vmem:[#allocation3 + $0xa7] sm:$0xff]
    %v323 = vld [vmem:[#allocation3 + $0xaf] sm:$0xff]
    %v324 = vld [vmem:[#allocation3 + $0xb7] sm:$0xff]
    %v325 = vld [vmem:[#allocation3 + $0xbf] sm:$0xff]
    %v326 = vld [vmem:[#allocation3 + $0xc7] sm:$0xff]
    %v327 = vld [vmem:[#allocation3 + $0xcf] sm:$0xff]
    %v328 = vld [vmem:[#allocation3 + $0xd7] sm:$0xff]
    %v329 = vld [vmem:[#allocation3 + $0xdf] sm:$0xff]
    %v330 = vld [vmem:[#allocation3 + $0xe7] sm:$0xff]
    %v331 = vld [vmem:[#allocation3 + $0xef] sm:$0xff]
    %v332 = vld [vmem:[#allocation3 + $0xf7] sm:$0xff]
    %v333 = vld [vmem:[#allocation3 + $0xff] sm:$0xff]
    %v334 = vld [vmem:[#allocation3 + $0x107] sm:$0xff]
    %v335 = vld [vmem:[#allocation3 + $0x10f] sm:$0xff]
    %v336 = vld [vmem:[#allocation3 + $0x117] sm:$0xff]
    %v337 = vld [vmem:[#allocation3 + $0x11f] sm:$0xff]
    %v338 = vld [vmem:[#allocation3 + $0x127] sm:$0xff]
    %v339 = vld [vmem:[#allocation3 + $0x12f] sm:$0xff]
    %v340 = vld [vmem:[#allocation3 + $0x137] sm:$0xff]
    %v341 = vld [vmem:[#allocation3 + $0x13f] sm:$0xff]
    %v342 = vld [vmem:[#allocation3 + $0x147] sm:$0xff]
    %v343 = vld [vmem:[#allocation3 + $0x14f] sm:$0xff]
    %v344 = vld [vmem:[#allocation3 + $0x157] sm:$0xff]
    %v345 = vld [vmem:[#allocation3 + $0x15f] sm:$0xff]
    %v346 = vld [vmem:[#allocation3 + $0x167] sm:$0xff]
    %v347 = vld [vmem:[#allocation3 + $0x16f] sm:$0xff]
    %v348 = vld [vmem:[#allocation3 + $0x177] sm:$0xff]
    %v349 = vld [vmem:[#allocation3 + $0x17f] sm:$0xff]
    %v350 = vld [vmem:[#allocation3 + $0x187] sm:$0xff]
    %v351 = vld [vmem:[#allocation3 + $0x18f] sm:$0xff]
    %v352 = vld [vmem:[#allocation3 + $0x197] sm:$0xff]
    %v353 = vld [vmem:[#allocation3 + $0x19f] sm:$0xff]
    %v354 = vld [vmem:[#allocation3 + $0x1a7] sm:$0xff]
    %v355 = vld [vmem:[#allocation3 + $0x1af] sm:$0xff]
    %v356 = vld [vmem:[#allocation3 + $0x1b7] sm:$0xff]
    %v357 = vld [vmem:[#allocation3 + $0x1bf] sm:$0xff]
    %v358 = vld [vmem:[#allocation3 + $0x1c7] sm:$0xff]
    %v359 = vld [vmem:[#allocation3 + $0x1cf] sm:$0xff]
    %v360 = vld [vmem:[#allocation3 + $0x1d7] sm:$0xff]
    %v361 = vld [vmem:[#allocation3 + $0x1df] sm:$0xff]
    %v362 = vld [vmem:[#allocation3 + $0x1e7] sm:$0xff]
    %v363 = vld [vmem:[#allocation3 + $0x1ef] sm:$0xff]
    %v364 = vld [vmem:[#allocation3 + $0x1f7] sm:$0xff]
    %v365 = vld [vmem:[#allocation3 + $0x1ff] sm:$0xff]
    %v366 = vld [vmem:[#allocation3 + $0x207] sm:$0xff]
    %v367 = vld [vmem:[#allocation3 + $0x20f] sm:$0xff]
    %v368 = vld [vmem:[#allocation3 + $0x217] sm:$0xff]
    %v369 = vld [vmem:[#allocation3 + $0x21f] sm:$0xff]
    %v370 = vld [vmem:[#allocation3 + $0x227] sm:$0xff]
    %v371 = vld [vmem:[#allocation3 + $0x22f] sm:$0xff]
    %v372 = vld [vmem:[#allocation3 + $0x237] sm:$0xff]
    %v373 = vld [vmem:[#allocation3 + $0x23f] sm:$0xff]
    %v374 = vld [vmem:[#allocation3 + $0x247] sm:$0xff]
    %v375 = vld [vmem:[#allocation3 + $0x24f] sm:$0xff]
    %v376 = vld [vmem:[#allocation3 + $0x257] sm:$0xff]
    %v377 = vld [vmem:[#allocation3 + $0x25f] sm:$0xff]
    %v378 = vld [vmem:[#allocation3 + $0x267] sm:$0xff]
    %v379 = vld [vmem:[#allocation3 + $0x26f] sm:$0xff]
    %v380 = vld [vmem:[#allocation3 + $0x277] sm:$0xff]
    %v381 = vld [vmem:[#allocation3 + $0x27f] sm:$0xff]
    %v382 = vld [vmem:[#allocation3 + $0x287] sm:$0xff]
    %v383 = vld [vmem:[#allocation3 + $0x28f] sm:$0xff]
    %v384 = vld [vmem:[#allocation3 + $0x297] sm:$0xff]
    %v385 = vld [vmem:[#allocation3 + $0x18] sm:$0xff]
    %v386 = vld [vmem:[#allocation3 + $0x20] sm:$0xff]
    %v387 = vld [vmem:[#allocation3 + $0x28] sm:$0xff]
    %v388 = vld [vmem:[#allocation3 + $0x30] sm:$0xff]
    %v389 = vld [vmem:[#allocation3 + $0x38] sm:$0xff]
    %v390 = vld [vmem:[#allocation3 + $0x40] sm:$0xff]
    %v391 = vld [vmem:[#allocation3 + $0x48] sm:$0xff]
    %v392 = vld [vmem:[#allocation3 + $0x50] sm:$0xff]
    %v393 = vld [vmem:[#allocation3 + $0x58] sm:$0xff]
    %v394 = vld [vmem:[#allocation3 + $0x60] sm:$0xff]
    %v395 = vld [vmem:[#allocation3 + $0x68] sm:$0xff]
    %v396 = vld [vmem:[#allocation3 + $0x70] sm:$0xff]
    %v397 = vld [vmem:[#allocation3 + $0x78] sm:$0xff]
    %v398 = vld [vmem:[#allocation3 + $0x80] sm:$0xff]
    %v399 = vld [vmem:[#allocation3 + $0x88] sm:$0xff]
    %v400 = vld [vmem:[#allocation3 + $0x90] sm:$0xff]
    %v401 = vld [vmem:[#allocation3 + $0x98] sm:$0xff]
    %v402 = vld [vmem:[#allocation3 + $0xa0] sm:$0xff]
    %v403 = vld [vmem:[#allocation3 + $0xa8] sm:$0xff]
    %v404 = vld [vmem:[#allocation3 + $0xb0] sm:$0xff]
    %v405 = vld [vmem:[#allocation3 + $0xb8] sm:$0xff]
    %v406 = vld [vmem:[#allocation3 + $0xc0] sm:$0xff]
    %v407 = vld [vmem:[#allocation3 + $0xc8] sm:$0xff]
    %v408 = vld [vmem:[#allocation3 + $0xd0] sm:$0xff]
    %v409 = vld [vmem:[#allocation3 + $0xd8] sm:$0xff]
    %v410 = vld [vmem:[#allocation3 + $0xe0] sm:$0xff]
    %v411 = vld [vmem:[#allocation3 + $0xe8] sm:$0xff]
    %v412 = vld [vmem:[#allocation3 + $0xf0] sm:$0xff]
    %v413 = vld [vmem:[#allocation3 + $0xf8] sm:$0xff]
    %v414 = vld [vmem:[#allocation3 + $0x100] sm:$0xff]
    %v415 = vld [vmem:[#allocation3 + $0x108] sm:$0xff]
    %v416 = vld [vmem:[#allocation3 + $0x110] sm:$0xff]
    %v417 = vld [vmem:[#allocation3 + $0x118] sm:$0xff]
    %v418 = vld [vmem:[#allocation3 + $0x120] sm:$0xff]
    %v419 = vld [vmem:[#allocation3 + $0x128] sm:$0xff]
    %v420 = vld [vmem:[#allocation3 + $0x130] sm:$0xff]
    %v421 = vld [vmem:[#allocation3 + $0x138] sm:$0xff]
    %v422 = vld [vmem:[#allocation3 + $0x140] sm:$0xff]
    %v423 = vld [vmem:[#allocation3 + $0x148] sm:$0xff]
    %v424 = vld [vmem:[#allocation3 + $0x150] sm:$0xff]
    %v425 = vld [vmem:[#allocation3 + $0x158] sm:$0xff]
    %v426 = vld [vmem:[#allocation3 + $0x160] sm:$0xff]
    %v427 = vld [vmem:[#allocation3 + $0x168] sm:$0xff]
    %v428 = vld [vmem:[#allocation3 + $0x170] sm:$0xff]
    %v429 = vld [vmem:[#allocation3 + $0x178] sm:$0xff]
    %v430 = vld [vmem:[#allocation3 + $0x180] sm:$0xff]
    %v431 = vld [vmem:[#allocation3 + $0x188] sm:$0xff]
    %v432 = vld [vmem:[#allocation3 + $0x190] sm:$0xff]
    %v433 = vld [vmem:[#allocation3 + $0x198] sm:$0xff]
    %v434 = vld [vmem:[#allocation3 + $0x1a0] sm:$0xff]
    %v435 = vld [vmem:[#allocation3 + $0x1a8] sm:$0xff]
    %v436 = vld [vmem:[#allocation3 + $0x1b0] sm:$0xff]
    %v437 = vld [vmem:[#allocation3 + $0x1b8] sm:$0xff]
    %v438 = vld [vmem:[#allocation3 + $0x1c0] sm:$0xff]
    %v439 = vld [vmem:[#allocation3 + $0x1c8] sm:$0xff]
    %v440 = vld [vmem:[#allocation3 + $0x1d0] sm:$0xff]
    %v441 = vld [vmem:[#allocation3 + $0x1d8] sm:$0xff]
    %v442 = vld [vmem:[#allocation3 + $0x1e0] sm:$0xff]
    %v443 = vld [vmem:[#allocation3 + $0x1e8] sm:$0xff]
    %v444 = vld [vmem:[#allocation3 + $0x1f0] sm:$0xff]
    %v445 = vld [vmem:[#allocation3 + $0x1f8] sm:$0xff]
    %v446 = vld [vmem:[#allocation3 + $0x200] sm:$0xff]
    %v447 = vld [vmem:[#allocation3 + $0x208] sm:$0xff]
    %v448 = vld [vmem:[#allocation3 + $0x210] sm:$0xff]
    %v449 = vld [vmem:[#allocation3 + $0x218] sm:$0xff]
    %v450 = vld [vmem:[#allocation3 + $0x220] sm:$0xff]
    %v451 = vld [vmem:[#allocation3 + $0x228] sm:$0xff]
    %v452 = vld [vmem:[#allocation3 + $0x230] sm:$0xff]
    %v453 = vld [vmem:[#allocation3 + $0x238] sm:$0xff]
    %v454 = vld [vmem:[#allocation3 + $0x240] sm:$0xff]
    %v455 = vld [vmem:[#allocation3 + $0x248] sm:$0xff]
    %v456 = vld [vmem:[#allocation3 + $0x250] sm:$0xff]
    %v457 = vld [vmem:[#allocation3 + $0x258] sm:$0xff]
    %v458 = vld [vmem:[#allocation3 + $0x260] sm:$0xff]
    %v459 = vld [vmem:[#allocation3 + $0x268] sm:$0xff]
    %v460 = vld [vmem:[#allocation3 + $0x270] sm:$0xff]
    %v461 = vld [vmem:[#allocation3 + $0x278] sm:$0xff]
    %v462 = vld [vmem:[#allocation3 + $0x280] sm:$0xff]
    %v463 = vld [vmem:[#allocation3 + $0x288] sm:$0xff]
    %v464 = vld [vmem:[#allocation3 + $0x290] sm:$0xff]
    %v465 = vld [vmem:[#allocation3 + $0x298] sm:$0xff]
    %v466 = vld [vmem:[#allocation3 + $0x19] sm:$0xff]
    %v467 = vld [vmem:[#allocation3 + $0x21] sm:$0xff]
    %v468 = vld [vmem:[#allocation3 + $0x29] sm:$0xff]
    %v469 = vld [vmem:[#allocation3 + $0x31] sm:$0xff]
    %v470 = vld [vmem:[#allocation3 + $0x39] sm:$0xff]
    %v471 = vld [vmem:[#allocation3 + $0x41] sm:$0xff]
    %v472 = vld [vmem:[#allocation3 + $0x49] sm:$0xff]
    %v473 = vld [vmem:[#allocation3 + $0x51] sm:$0xff]
    %v474 = vld [vmem:[#allocation3 + $0x59] sm:$0xff]
    %v475 = vld [vmem:[#allocation3 + $0x61] sm:$0xff]
    %v476 = vld [vmem:[#allocation3 + $0x69] sm:$0xff]
    %v477 = vld [vmem:[#allocation3 + $0x71] sm:$0xff]
    %v478 = vld [vmem:[#allocation3 + $0x79] sm:$0xff]
    %v479 = vld [vmem:[#allocation3 + $0x81] sm:$0xff]
    %v480 = vld [vmem:[#allocation3 + $0x89] sm:$0xff]
    %v481 = vld [vmem:[#allocation3 + $0x91] sm:$0xff]
    %v482 = vld [vmem:[#allocation3 + $0x99] sm:$0xff]
    %v483 = vld [vmem:[#allocation3 + $0xa1] sm:$0xff]
    %v484 = vld [vmem:[#allocation3 + $0xa9] sm:$0xff]
    %v485 = vld [vmem:[#allocation3 + $0xb1] sm:$0xff]
    %v486 = vld [vmem:[#allocation3 + $0xb9] sm:$0xff]
    %v487 = vld [vmem:[#allocation3 + $0xc1] sm:$0xff]
    %v488 = vld [vmem:[#allocation3 + $0xc9] sm:$0xff]
    %v489 = vld [vmem:[#allocation3 + $0xd1] sm:$0xff]
    %v490 = vld [vmem:[#allocation3 + $0xd9] sm:$0xff]
    %v491 = vld [vmem:[#allocation3 + $0xe1] sm:$0xff]
    %v492 = vld [vmem:[#allocation3 + $0xe9] sm:$0xff]
    %v493 = vld [vmem:[#allocation3 + $0xf1] sm:$0xff]
    %v494 = vld [vmem:[#allocation3 + $0xf9] sm:$0xff]
    %v495 = vld [vmem:[#allocation3 + $0x101] sm:$0xff]
    %v496 = vld [vmem:[#allocation3 + $0x109] sm:$0xff]
    %v497 = vld [vmem:[#allocation3 + $0x111] sm:$0xff]
    %v498 = vld [vmem:[#allocation3 + $0x119] sm:$0xff]
    %v499 = vld [vmem:[#allocation3 + $0x121] sm:$0xff]
    %v500 = vld [vmem:[#allocation3 + $0x129] sm:$0xff]
    %v501 = vld [vmem:[#allocation3 + $0x131] sm:$0xff]
    %v502 = vld [vmem:[#allocation3 + $0x139] sm:$0xff]
    %v503 = vld [vmem:[#allocation3 + $0x141] sm:$0xff]
    %v504 = vld [vmem:[#allocation3 + $0x149] sm:$0xff]
    %v505 = vld [vmem:[#allocation3 + $0x151] sm:$0xff]
    %v506 = vld [vmem:[#allocation3 + $0x159] sm:$0xff]
    %v507 = vld [vmem:[#allocation3 + $0x161] sm:$0xff]
    %v508 = vld [vmem:[#allocation3 + $0x169] sm:$0xff]
    %v509 = vld [vmem:[#allocation3 + $0x171] sm:$0xff]
    %v510 = vld [vmem:[#allocation3 + $0x179] sm:$0xff]
    %v511 = vld [vmem:[#allocation3 + $0x181] sm:$0xff]
    %v512 = vld [vmem:[#allocation3 + $0x189] sm:$0xff]
    %v513 = vld [vmem:[#allocation3 + $0x191] sm:$0xff]
    %v514 = vld [vmem:[#allocation3 + $0x199] sm:$0xff]
    %v515 = vld [vmem:[#allocation3 + $0x1a1] sm:$0xff]
    %v516 = vld [vmem:[#allocation3 + $0x1a9] sm:$0xff]
    %v517 = vld [vmem:[#allocation3 + $0x1b1] sm:$0xff]
    %v518 = vld [vmem:[#allocation3 + $0x1b9] sm:$0xff]
    %v519 = vld [vmem:[#allocation3 + $0x1c1] sm:$0xff]
    %v520 = vld [vmem:[#allocation3 + $0x1c9] sm:$0xff]
    %v521 = vld [vmem:[#allocation3 + $0x1d1] sm:$0xff]
    %v522 = vld [vmem:[#allocation3 + $0x1d9] sm:$0xff]
    %v523 = vld [vmem:[#allocation3 + $0x1e1] sm:$0xff]
    %v524 = vld [vmem:[#allocation3 + $0x1e9] sm:$0xff]
    %v525 = vld [vmem:[#allocation3 + $0x1f1] sm:$0xff]
    %v526 = vld [vmem:[#allocation3 + $0x1f9] sm:$0xff]
    %v527 = vld [vmem:[#allocation3 + $0x201] sm:$0xff]
    %v528 = vld [vmem:[#allocation3 + $0x209] sm:$0xff]
    %v529 = vld [vmem:[#allocation3 + $0x211] sm:$0xff]
    %v530 = vld [vmem:[#allocation3 + $0x219] sm:$0xff]
    %v531 = vld [vmem:[#allocation3 + $0x221] sm:$0xff]
    %v532 = vld [vmem:[#allocation3 + $0x229] sm:$0xff]
    %v533 = vld [vmem:[#allocation3 + $0x231] sm:$0xff]
    %v534 = vld [vmem:[#allocation3 + $0x239] sm:$0xff]
    %v535 = vld [vmem:[#allocation3 + $0x241] sm:$0xff]
    %v536 = vld [vmem:[#allocation3 + $0x249] sm:$0xff]
    %v537 = vld [vmem:[#allocation3 + $0x251] sm:$0xff]
    %v538 = vld [vmem:[#allocation3 + $0x259] sm:$0xff]
    %v539 = vld [vmem:[#allocation3 + $0x261] sm:$0xff]
    %v540 = vld [vmem:[#allocation3 + $0x269] sm:$0xff]
    %v541 = vld [vmem:[#allocation3 + $0x271] sm:$0xff]
    %v542 = vld [vmem:[#allocation3 + $0x279] sm:$0xff]
    %v543 = vld [vmem:[#allocation3 + $0x281] sm:$0xff]
    %v544 = vld [vmem:[#allocation3 + $0x289] sm:$0xff]
    %v545 = vld [vmem:[#allocation3 + $0x291] sm:$0xff]
    %v546 = vld [vmem:[#allocation3 + $0x299] sm:$0xff]
    %v547 = vld [vmem:[#allocation3 + $0x2a1] sm:$0xff]
    %v548 = vld [vmem:[#allocation3 + $0x2a9] sm:$0xff]
    %v549 = vld [vmem:[#allocation3 + $0x2a] sm:$0xff]
    %v550 = vld [vmem:[#allocation3 + $0x32] sm:$0xff]
    %v551 = vld [vmem:[#allocation3 + $0x3a] sm:$0xff]
    %v552 = vld [vmem:[#allocation3 + $0x42] sm:$0xff]
    %v553 = vld [vmem:[#allocation3 + $0x4a] sm:$0xff]
    %v554 = vld [vmem:[#allocation3 + $0x52] sm:$0xff]
    %v555 = vld [vmem:[#allocation3 + $0x5a] sm:$0xff]
    %v556 = vld [vmem:[#allocation3 + $0x62] sm:$0xff]
    %v557 = vld [vmem:[#allocation3 + $0x6a] sm:$0xff]
    %v558 = vld [vmem:[#allocation3 + $0x72] sm:$0xff]
    %v559 = vld [vmem:[#allocation3 + $0x7a] sm:$0xff]
    %v560 = vld [vmem:[#allocation3 + $0x82] sm:$0xff]
    %v561 = vld [vmem:[#allocation3 + $0x8a] sm:$0xff]
    %v562 = vld [vmem:[#allocation3 + $0x92] sm:$0xff]
    %v563 = vld [vmem:[#allocation3 + $0x9a] sm:$0xff]
    %v564 = vld [vmem:[#allocation3 + $0xa2] sm:$0xff]
    %v565 = vld [vmem:[#allocation3 + $0xaa] sm:$0xff]
    %v566 = vld [vmem:[#allocation3 + $0xb2] sm:$0xff]
    %v567 = vld [vmem:[#allocation3 + $0xba] sm:$0xff]
    %v568 = vld [vmem:[#allocation3 + $0xc2] sm:$0xff]
    %v569 = vld [vmem:[#allocation3 + $0xca] sm:$0xff]
    %v570 = vld [vmem:[#allocation3 + $0xd2] sm:$0xff]
    %v571 = vld [vmem:[#allocation3 + $0xda] sm:$0xff]
    %v572 = vld [vmem:[#allocation3 + $0xe2] sm:$0xff]
    %v573 = vld [vmem:[#allocation3 + $0xea] sm:$0xff]
    %v574 = vld [vmem:[#allocation3 + $0xf2] sm:$0xff]
    %v575 = vld [vmem:[#allocation3 + $0xfa] sm:$0xff]
    %v576 = vld [vmem:[#allocation3 + $0x102] sm:$0xff]
    %v577 = vld [vmem:[#allocation3 + $0x10a] sm:$0xff]
    %v578 = vld [vmem:[#allocation3 + $0x112] sm:$0xff]
    %v579 = vld [vmem:[#allocation3 + $0x11a] sm:$0xff]
    %v580 = vld [vmem:[#allocation3 + $0x122] sm:$0xff]
    %v581 = vld [vmem:[#allocation3 + $0x12a] sm:$0xff]
    %v582 = vld [vmem:[#allocation3 + $0x132] sm:$0xff]
    %v583 = vld [vmem:[#allocation3 + $0x13a] sm:$0xff]
    %v584 = vld [vmem:[#allocation3 + $0x142] sm:$0xff]
    %v585 = vld [vmem:[#allocation3 + $0x14a] sm:$0xff]
    %v586 = vld [vmem:[#allocation3 + $0x152] sm:$0xff]
    %v587 = vld [vmem:[#allocation3 + $0x15a] sm:$0xff]
    %v588 = vld [vmem:[#allocation3 + $0x162] sm:$0xff]
    %v589 = vld [vmem:[#allocation3 + $0x16a] sm:$0xff]
    %v590 = vld [vmem:[#allocation3 + $0x172] sm:$0xff]
    %v591 = vld [vmem:[#allocation3 + $0x17a] sm:$0xff]
    %v592 = vld [vmem:[#allocation3 + $0x182] sm:$0xff]
    %v593 = vld [vmem:[#allocation3 + $0x18a] sm:$0xff]
    %v594 = vld [vmem:[#allocation3 + $0x192] sm:$0xff]
    %v595 = vld [vmem:[#allocation3 + $0x19a] sm:$0xff]
    %v596 = vld [vmem:[#allocation3 + $0x1a2] sm:$0xff]
    %v597 = vld [vmem:[#allocation3 + $0x1aa] sm:$0xff]
    %v598 = vld [vmem:[#allocation3 + $0x1b2] sm:$0xff]
    %v599 = vld [vmem:[#allocation3 + $0x1ba] sm:$0xff]
    %v600 = vld [vmem:[#allocation3 + $0x1c2] sm:$0xff]
    %v601 = vld [vmem:[#allocation3 + $0x1ca] sm:$0xff]
    %v602 = vld [vmem:[#allocation3 + $0x1d2] sm:$0xff]
    %v603 = vld [vmem:[#allocation3 + $0x1da] sm:$0xff]
    %v604 = vld [vmem:[#allocation3 + $0x1e2] sm:$0xff]
    %v605 = vld [vmem:[#allocation3 + $0x1ea] sm:$0xff]
    %v606 = vld [vmem:[#allocation3 + $0x1f2] sm:$0xff]
    %v607 = vld [vmem:[#allocation3 + $0x1fa] sm:$0xff]
    %v608 = vld [vmem:[#allocation3 + $0x202] sm:$0xff]
    %v609 = vld [vmem:[#allocation3 + $0x20a] sm:$0xff]
    %v610 = vld [vmem:[#allocation3 + $0x212] sm:$0xff]
    %v611 = vld [vmem:[#allocation3 + $0x21a] sm:$0xff]
    %v612 = vld [vmem:[#allocation3 + $0x222] sm:$0xff]
    %v613 = vld [vmem:[#allocation3 + $0x22a] sm:$0xff]
    %v614 = vld [vmem:[#allocation3 + $0x232] sm:$0xff]
    %v615 = vld [vmem:[#allocation3 + $0x23a] sm:$0xff]
    %v616 = vld [vmem:[#allocation3 + $0x242] sm:$0xff]
    %v617 = vld [vmem:[#allocation3 + $0x24a] sm:$0xff]
    %v618 = vld [vmem:[#allocation3 + $0x252] sm:$0xff]
    %v619 = vld [vmem:[#allocation3 + $0x25a] sm:$0xff]
    %v620 = vld [vmem:[#allocation3 + $0x262] sm:$0xff]
    %v621 = vld [vmem:[#allocation3 + $0x26a] sm:$0xff]
    %v622 = vld [vmem:[#allocation3 + $0x272] sm:$0xff]
    %v623 = vld [vmem:[#allocation3 + $0x27a] sm:$0xff]
    %v624 = vld [vmem:[#allocation3 + $0x282] sm:$0xff]
    %v625 = vld [vmem:[#allocation3 + $0x28a] sm:$0xff]
    %v626 = vld [vmem:[#allocation3 + $0x292] sm:$0xff]
    %v627 = vld [vmem:[#allocation3 + $0x29a] sm:$0xff]
    %v628 = vld [vmem:[#allocation3 + $0x2a2] sm:$0xff]
    %v629 = vld [vmem:[#allocation3 + $0x2aa] sm:$0xff]
    %v630 = vld [vmem:[#allocation3 + $0x2b] sm:$0xff]
    %v631 = vld [vmem:[#allocation3 + $0x33] sm:$0xff]
    %v632 = vld [vmem:[#allocation3 + $0x3b] sm:$0xff]
    %v633 = vld [vmem:[#allocation3 + $0x43] sm:$0xff]
    %v634 = vld [vmem:[#allocation3 + $0x4b] sm:$0xff]
    %v635 = vld [vmem:[#allocation3 + $0x53] sm:$0xff]
    %v636 = vld [vmem:[#allocation3 + $0x5b] sm:$0xff]
    %v637 = vld [vmem:[#allocation3 + $0x63] sm:$0xff]
    %v638 = vld [vmem:[#allocation3 + $0x6b] sm:$0xff]
    %v639 = vld [vmem:[#allocation3 + $0x73] sm:$0xff]
    %v640 = vld [vmem:[#allocation3 + $0x7b] sm:$0xff]
    %v641 = vld [vmem:[#allocation3 + $0x83] sm:$0xff]
    %v642 = vld [vmem:[#allocation3 + $0x8b] sm:$0xff]
    %v643 = vld [vmem:[#allocation3 + $0x93] sm:$0xff]
    %v644 = vld [vmem:[#allocation3 + $0x9b] sm:$0xff]
    %v645 = vld [vmem:[#allocation3 + $0xa3] sm:$0xff]
    %v646 = vld [vmem:[#allocation3 + $0xab] sm:$0xff]
    %v647 = vld [vmem:[#allocation3 + $0xb3] sm:$0xff]
    %v648 = vld [vmem:[#allocation3 + $0xbb] sm:$0xff]
    %v649 = vld [vmem:[#allocation3 + $0xc3] sm:$0xff]
    %v650 = vld [vmem:[#allocation3 + $0xcb] sm:$0xff]
    %v651 = vld [vmem:[#allocation3 + $0xd3] sm:$0xff]
    %v652 = vld [vmem:[#allocation3 + $0xdb] sm:$0xff]
    %v653 = vld [vmem:[#allocation3 + $0xe3] sm:$0xff]
    %v654 = vld [vmem:[#allocation3 + $0xeb] sm:$0xff]
    %v655 = vld [vmem:[#allocation3 + $0xf3] sm:$0xff]
    %v656 = vld [vmem:[#allocation3 + $0xfb] sm:$0xff]
    %v657 = vld [vmem:[#allocation3 + $0x103] sm:$0xff]
    %v658 = vld [vmem:[#allocation3 + $0x10b] sm:$0xff]
    %v659 = vld [vmem:[#allocation3 + $0x113] sm:$0xff]
    %v660 = vld [vmem:[#allocation3 + $0x11b] sm:$0xff]
    %v661 = vld [vmem:[#allocation3 + $0x123] sm:$0xff]
    %v662 = vld [vmem:[#allocation3 + $0x12b] sm:$0xff]
    %v663 = vld [vmem:[#allocation3 + $0x133] sm:$0xff]
    %v664 = vld [vmem:[#allocation3 + $0x13b] sm:$0xff]
    %v665 = vld [vmem:[#allocation3 + $0x143] sm:$0xff]
    %v666 = vld [vmem:[#allocation3 + $0x14b] sm:$0xff]
    %v667 = vld [vmem:[#allocation3 + $0x153] sm:$0xff]
    %v668 = vld [vmem:[#allocation3 + $0x15b] sm:$0xff]
    %v669 = vld [vmem:[#allocation3 + $0x163] sm:$0xff]
    %v670 = vld [vmem:[#allocation3 + $0x16b] sm:$0xff]
    %v671 = vld [vmem:[#allocation3 + $0x173] sm:$0xff]
    %v672 = vld [vmem:[#allocation3 + $0x17b] sm:$0xff]
    %v673 = vld [vmem:[#allocation3 + $0x183] sm:$0xff]
    %v674 = vld [vmem:[#allocation3 + $0x18b] sm:$0xff]
    %v675 = vld [vmem:[#allocation3 + $0x193] sm:$0xff]
    %v676 = vld [vmem:[#allocation3 + $0x19b] sm:$0xff]
    %v677 = vld [vmem:[#allocation3 + $0x1a3] sm:$0xff]
    %v678 = vld [vmem:[#allocation3 + $0x1ab] sm:$0xff]
    %v679 = vld [vmem:[#allocation3 + $0x1b3] sm:$0xff]
    %v680 = vld [vmem:[#allocation3 + $0x1bb] sm:$0xff]
    %v681 = vld [vmem:[#allocation3 + $0x1c3] sm:$0xff]
    %v682 = vld [vmem:[#allocation3 + $0x1cb] sm:$0xff]
    %v683 = vld [vmem:[#allocation3 + $0x1d3] sm:$0xff]
    %v684 = vld [vmem:[#allocation3 + $0x1db] sm:$0xff]
    %v685 = vld [vmem:[#allocation3 + $0x1e3] sm:$0xff]
    %v686 = vld [vmem:[#allocation3 + $0x1eb] sm:$0xff]
    %v687 = vld [vmem:[#allocation3 + $0x1f3] sm:$0xff]
    %v688 = vld [vmem:[#allocation3 + $0x1fb] sm:$0xff]
    %v689 = vld [vmem:[#allocation3 + $0x203] sm:$0xff]
    %v690 = vld [vmem:[#allocation3 + $0x20b] sm:$0xff]
    %v691 = vld [vmem:[#allocation3 + $0x213] sm:$0xff]
    %v692 = vld [vmem:[#allocation3 + $0x21b] sm:$0xff]
    %v693 = vld [vmem:[#allocation3 + $0x223] sm:$0xff]
    %v694 = vld [vmem:[#allocation3 + $0x22b] sm:$0xff]
    %v695 = vld [vmem:[#allocation3 + $0x233] sm:$0xff]
    %v696 = vld [vmem:[#allocation3 + $0x23b] sm:$0xff]
    %v697 = vld [vmem:[#allocation3 + $0x243] sm:$0xff]
    %v698 = vld [vmem:[#allocation3 + $0x24b] sm:$0xff]
    %v699 = vld [vmem:[#allocation3 + $0x253] sm:$0xff]
    %v700 = vld [vmem:[#allocation3 + $0x25b] sm:$0xff]
    %v701 = vld [vmem:[#allocation3 + $0x263] sm:$0xff]
    %v702 = vld [vmem:[#allocation3 + $0x26b] sm:$0xff]
    %v703 = vld [vmem:[#allocation3 + $0x273] sm:$0xff]
    %v704 = vld [vmem:[#allocation3 + $0x27b] sm:$0xff]
    %v705 = vld [vmem:[#allocation3 + $0x283] sm:$0xff]
    %v706 = vld [vmem:[#allocation3 + $0x28b] sm:$0xff]
    %v707 = vld [vmem:[#allocation3 + $0x293] sm:$0xff]
    %v708 = vld [vmem:[#allocation3 + $0x29b] sm:$0xff]
    %v709 = vld [vmem:[#allocation3 + $0x2a3] sm:$0xff]
    %v710 = vld [vmem:[#allocation3 + $0x2ab] sm:$0xff]
    %v711 = vpack.c.bf16 %v141, %v140
    %v712 = vpack.c.bf16 %v222, %v221
    %v713 = vpack.c.bf16 %v303, %v302
    %v714 = vpack.c.bf16 %v305, %v304
    %v715 = vpack.c.bf16 %v386, %v385
    %v716 = vpack.c.bf16 %v467, %v466
    %v717 = vpack.c.bf16 %v469, %v468
    %v718 = vpack.c.bf16 %v550, %v549
    %v719 = vpack.c.bf16 %v631, %v630
    %v720 = vpack.c.bf16 %v143, %v142
    %v721 = vpack.c.bf16 %v224, %v223
    %v722 = vpack.c.bf16 %v307, %v306
    %v723 = vpack.c.bf16 %v388, %v387
    %v724 = vpack.c.bf16 %v471, %v470
    %v725 = vpack.c.bf16 %v552, %v551
    %v726 = vpack.c.bf16 %v633, %v632
    %v727 = vpack.c.bf16 %v145, %v144
    %v728 = vpack.c.bf16 %v226, %v225
    %v729 = vpack.c.bf16 %v309, %v308
    %v730 = vpack.c.bf16 %v390, %v389
    %v731 = vpack.c.bf16 %v473, %v472
    %v732 = vpack.c.bf16 %v554, %v553
    %v733 = vpack.c.bf16 %v635, %v634
    %v734 = vpack.c.bf16 %v147, %v146
    %v735 = vpack.c.bf16 %v228, %v227
    %v736 = vpack.c.bf16 %v311, %v310
    %v737 = vpack.c.bf16 %v392, %v391
    %v738 = vpack.c.bf16 %v475, %v474
    %v739 = vpack.c.bf16 %v556, %v555
    %v740 = vpack.c.bf16 %v637, %v636
    %v741 = vpack.c.bf16 %v149, %v148
    %v742 = vpack.c.bf16 %v230, %v229
    %v743 = vpack.c.bf16 %v313, %v312
    %v744 = vpack.c.bf16 %v394, %v393
    %v745 = vpack.c.bf16 %v477, %v476
    %v746 = vpack.c.bf16 %v558, %v557
    %v747 = vpack.c.bf16 %v639, %v638
    %v748 = vpack.c.bf16 %v151, %v150
    %v749 = vpack.c.bf16 %v232, %v231
    %v750 = vpack.c.bf16 %v315, %v314
    %v751 = vpack.c.bf16 %v396, %v395
    %v752 = vpack.c.bf16 %v479, %v478
    %v753 = vpack.c.bf16 %v560, %v559
    %v754 = vpack.c.bf16 %v641, %v640
    %v755 = vpack.c.bf16 %v153, %v152
    %v756 = vpack.c.bf16 %v234, %v233
    %v757 = vpack.c.bf16 %v317, %v316
    %v758 = vpack.c.bf16 %v398, %v397
    %v759 = vpack.c.bf16 %v481, %v480
    %v760 = vpack.c.bf16 %v562, %v561
    %v761 = vpack.c.bf16 %v643, %v642
    %v762 = vpack.c.bf16 %v155, %v154
    %v763 = vpack.c.bf16 %v236, %v235
    %v764 = vpack.c.bf16 %v319, %v318
    %v765 = vpack.c.bf16 %v400, %v399
    %v766 = vpack.c.bf16 %v483, %v482
    %v767 = vpack.c.bf16 %v564, %v563
    %v768 = vpack.c.bf16 %v645, %v644
    %v769 = vpack.c.bf16 %v157, %v156
    %v770 = vpack.c.bf16 %v238, %v237
    %v771 = vpack.c.bf16 %v321, %v320
    %v772 = vpack.c.bf16 %v402, %v401
    %v773 = vpack.c.bf16 %v485, %v484
    %v774 = vpack.c.bf16 %v566, %v565
    %v775 = vpack.c.bf16 %v647, %v646
    %v776 = vpack.c.bf16 %v159, %v158
    %v777 = vpack.c.bf16 %v240, %v239
    %v778 = vpack.c.bf16 %v323, %v322
    %v779 = vpack.c.bf16 %v404, %v403
    %v780 = vpack.c.bf16 %v487, %v486
    %v781 = vpack.c.bf16 %v568, %v567
    %v782 = vpack.c.bf16 %v649, %v648
    %v783 = vpack.c.bf16 %v161, %v160
    %v784 = vpack.c.bf16 %v242, %v241
    %v785 = vpack.c.bf16 %v325, %v324
    %v786 = vpack.c.bf16 %v406, %v405
    %v787 = vpack.c.bf16 %v489, %v488
    %v788 = vpack.c.bf16 %v570, %v569
    %v789 = vpack.c.bf16 %v651, %v650
    %v790 = vpack.c.bf16 %v163, %v162
    %v791 = vpack.c.bf16 %v244, %v243
    %v792 = vpack.c.bf16 %v327, %v326
    %v793 = vpack.c.bf16 %v408, %v407
    %v794 = vpack.c.bf16 %v491, %v490
    %v795 = vpack.c.bf16 %v572, %v571
    %v796 = vpack.c.bf16 %v653, %v652
    %v797 = vpack.c.bf16 %v165, %v164
    %v798 = vpack.c.bf16 %v246, %v245
    %v799 = vpack.c.bf16 %v329, %v328
    %v800 = vpack.c.bf16 %v410, %v409
    %v801 = vpack.c.bf16 %v493, %v492
    %v802 = vpack.c.bf16 %v574, %v573
    %v803 = vpack.c.bf16 %v655, %v654
    %v804 = vpack.c.bf16 %v167, %v166
    %v805 = vpack.c.bf16 %v248, %v247
    %v806 = vpack.c.bf16 %v331, %v330
    %v807 = vpack.c.bf16 %v412, %v411
    %v808 = vpack.c.bf16 %v495, %v494
    %v809 = vpack.c.bf16 %v576, %v575
    %v810 = vpack.c.bf16 %v657, %v656
    %v811 = vpack.c.bf16 %v169, %v168
    %v812 = vpack.c.bf16 %v250, %v249
    %v813 = vpack.c.bf16 %v333, %v332
    %v814 = vpack.c.bf16 %v414, %v413
    %v815 = vpack.c.bf16 %v497, %v496
    %v816 = vpack.c.bf16 %v578, %v577
    %v817 = vpack.c.bf16 %v659, %v658
    %v818 = vpack.c.bf16 %v171, %v170
    %v819 = vpack.c.bf16 %v252, %v251
    %v820 = vpack.c.bf16 %v335, %v334
    %v821 = vpack.c.bf16 %v416, %v415
    %v822 = vpack.c.bf16 %v499, %v498
    %v823 = vpack.c.bf16 %v580, %v579
    %v824 = vpack.c.bf16 %v661, %v660
    %v825 = vpack.c.bf16 %v173, %v172
    %v826 = vpack.c.bf16 %v254, %v253
    %v827 = vpack.c.bf16 %v337, %v336
    %v828 = vpack.c.bf16 %v418, %v417
    %v829 = vpack.c.bf16 %v501, %v500
    %v830 = vpack.c.bf16 %v582, %v581
    %v831 = vpack.c.bf16 %v663, %v662
    %v832 = vpack.c.bf16 %v175, %v174
    %v833 = vpack.c.bf16 %v256, %v255
    %v834 = vpack.c.bf16 %v339, %v338
    %v835 = vpack.c.bf16 %v420, %v419
    %v836 = vpack.c.bf16 %v503, %v502
    %v837 = vpack.c.bf16 %v584, %v583
    %v838 = vpack.c.bf16 %v665, %v664
    %v839 = vpack.c.bf16 %v177, %v176
    %v840 = vpack.c.bf16 %v258, %v257
    %v841 = vpack.c.bf16 %v341, %v340
    %v842 = vpack.c.bf16 %v422, %v421
    %v843 = vpack.c.bf16 %v505, %v504
    %v844 = vpack.c.bf16 %v586, %v585
    %v845 = vpack.c.bf16 %v667, %v666
    %v846 = vpack.c.bf16 %v179, %v178
    %v847 = vpack.c.bf16 %v260, %v259
    %v848 = vpack.c.bf16 %v343, %v342
    %v849 = vpack.c.bf16 %v424, %v423
    %v850 = vpack.c.bf16 %v507, %v506
    %v851 = vpack.c.bf16 %v588, %v587
    %v852 = vpack.c.bf16 %v669, %v668
    %v853 = vpack.c.bf16 %v181, %v180
    %v854 = vpack.c.bf16 %v262, %v261
    %v855 = vpack.c.bf16 %v345, %v344
    %v856 = vpack.c.bf16 %v426, %v425
    %v857 = vpack.c.bf16 %v509, %v508
    %v858 = vpack.c.bf16 %v590, %v589
    %v859 = vpack.c.bf16 %v671, %v670
    %v860 = vpack.c.bf16 %v183, %v182
    %v861 = vpack.c.bf16 %v264, %v263
    %v862 = vpack.c.bf16 %v347, %v346
    %v863 = vpack.c.bf16 %v428, %v427
    %v864 = vpack.c.bf16 %v511, %v510
    %v865 = vpack.c.bf16 %v592, %v591
    %v866 = vpack.c.bf16 %v673, %v672
    %v867 = vpack.c.bf16 %v185, %v184
    %v868 = vpack.c.bf16 %v266, %v265
    %v869 = vpack.c.bf16 %v349, %v348
    %v870 = vpack.c.bf16 %v430, %v429
    %v871 = vpack.c.bf16 %v513, %v512
    %v872 = vpack.c.bf16 %v594, %v593
    %v873 = vpack.c.bf16 %v675, %v674
    %v874 = vpack.c.bf16 %v187, %v186
    %v875 = vpack.c.bf16 %v268, %v267
    %v876 = vpack.c.bf16 %v351, %v350
    %v877 = vpack.c.bf16 %v432, %v431
    %v878 = vpack.c.bf16 %v515, %v514
    %v879 = vpack.c.bf16 %v596, %v595
    %v880 = vpack.c.bf16 %v677, %v676
    %v881 = vpack.c.bf16 %v189, %v188
    %v882 = vpack.c.bf16 %v270, %v269
    %v883 = vpack.c.bf16 %v353, %v352
    %v884 = vpack.c.bf16 %v434, %v433
    %v885 = vpack.c.bf16 %v517, %v516
    %v886 = vpack.c.bf16 %v598, %v597
    %v887 = vpack.c.bf16 %v679, %v678
    %v888 = vpack.c.bf16 %v191, %v190
    %v889 = vpack.c.bf16 %v272, %v271
    %v890 = vpack.c.bf16 %v355, %v354
    %v891 = vpack.c.bf16 %v436, %v435
    %v892 = vpack.c.bf16 %v519, %v518
    %v893 = vpack.c.bf16 %v600, %v599
    %v894 = vpack.c.bf16 %v681, %v680
    %v895 = vpack.c.bf16 %v193, %v192
    %v896 = vpack.c.bf16 %v274, %v273
    %v897 = vpack.c.bf16 %v357, %v356
    %v898 = vpack.c.bf16 %v438, %v437
    %v899 = vpack.c.bf16 %v521, %v520
    %v900 = vpack.c.bf16 %v602, %v601
    %v901 = vpack.c.bf16 %v683, %v682
    %v902 = vpack.c.bf16 %v195, %v194
    %v903 = vpack.c.bf16 %v276, %v275
    %v904 = vpack.c.bf16 %v359, %v358
    %v905 = vpack.c.bf16 %v440, %v439
    %v906 = vpack.c.bf16 %v523, %v522
    %v907 = vpack.c.bf16 %v604, %v603
    %v908 = vpack.c.bf16 %v685, %v684
    %v909 = vpack.c.bf16 %v197, %v196
    %v910 = vpack.c.bf16 %v278, %v277
    %v911 = vpack.c.bf16 %v361, %v360
    %v912 = vpack.c.bf16 %v442, %v441
    %v913 = vpack.c.bf16 %v525, %v524
    %v914 = vpack.c.bf16 %v606, %v605
    %v915 = vpack.c.bf16 %v687, %v686
    %v916 = vpack.c.bf16 %v199, %v198
    %v917 = vpack.c.bf16 %v280, %v279
    %v918 = vpack.c.bf16 %v363, %v362
    %v919 = vpack.c.bf16 %v444, %v443
    %v920 = vpack.c.bf16 %v527, %v526
    %v921 = vpack.c.bf16 %v608, %v607
    %v922 = vpack.c.bf16 %v689, %v688
    %v923 = vpack.c.bf16 %v201, %v200
    %v924 = vpack.c.bf16 %v282, %v281
    %v925 = vpack.c.bf16 %v365, %v364
    %v926 = vpack.c.bf16 %v446, %v445
    %v927 = vpack.c.bf16 %v529, %v528
    %v928 = vpack.c.bf16 %v610, %v609
    %v929 = vpack.c.bf16 %v691, %v690
    %v930 = vpack.c.bf16 %v203, %v202
    %v931 = vpack.c.bf16 %v284, %v283
    %v932 = vpack.c.bf16 %v367, %v366
    %v933 = vpack.c.bf16 %v448, %v447
    %v934 = vpack.c.bf16 %v531, %v530
    %v935 = vpack.c.bf16 %v612, %v611
    %v936 = vpack.c.bf16 %v693, %v692
    %v937 = vpack.c.bf16 %v205, %v204
    %v938 = vpack.c.bf16 %v286, %v285
    %v939 = vpack.c.bf16 %v369, %v368
    %v940 = vpack.c.bf16 %v450, %v449
    %v941 = vpack.c.bf16 %v533, %v532
    %v942 = vpack.c.bf16 %v614, %v613
    %v943 = vpack.c.bf16 %v695, %v694
    %v944 = vpack.c.bf16 %v207, %v206
    %v945 = vpack.c.bf16 %v288, %v287
    %v946 = vpack.c.bf16 %v371, %v370
    %v947 = vpack.c.bf16 %v452, %v451
    %v948 = vpack.c.bf16 %v535, %v534
    %v949 = vpack.c.bf16 %v616, %v615
    %v950 = vpack.c.bf16 %v697, %v696
    %v951 = vpack.c.bf16 %v209, %v208
    %v952 = vpack.c.bf16 %v290, %v289
    %v953 = vpack.c.bf16 %v373, %v372
    %v954 = vpack.c.bf16 %v454, %v453
    %v955 = vpack.c.bf16 %v537, %v536
    %v956 = vpack.c.bf16 %v618, %v617
    %v957 = vpack.c.bf16 %v699, %v698
    %v958 = vpack.c.bf16 %v211, %v210
    %v959 = vpack.c.bf16 %v292, %v291
    %v960 = vpack.c.bf16 %v375, %v374
    %v961 = vpack.c.bf16 %v456, %v455
    %v962 = vpack.c.bf16 %v539, %v538
    %v963 = vpack.c.bf16 %v620, %v619
    %v964 = vpack.c.bf16 %v701, %v700
    %v965 = vpack.c.bf16 %v213, %v212
    %v966 = vpack.c.bf16 %v294, %v293
    %v967 = vpack.c.bf16 %v377, %v376
    %v968 = vpack.c.bf16 %v458, %v457
    %v969 = vpack.c.bf16 %v541, %v540
    %v970 = vpack.c.bf16 %v622, %v621
    %v971 = vpack.c.bf16 %v703, %v702
    %v972 = vpack.c.bf16 %v215, %v214
    %v973 = vpack.c.bf16 %v296, %v295
    %v974 = vpack.c.bf16 %v379, %v378
    %v975 = vpack.c.bf16 %v460, %v459
    %v976 = vpack.c.bf16 %v543, %v542
    %v977 = vpack.c.bf16 %v624, %v623
    %v978 = vpack.c.bf16 %v705, %v704
    %v979 = vpack.c.bf16 %v217, %v216
    %v980 = vpack.c.bf16 %v298, %v297
    %v981 = vpack.c.bf16 %v381, %v380
    %v982 = vpack.c.bf16 %v462, %v461
    %v983 = vpack.c.bf16 %v545, %v544
    %v984 = vpack.c.bf16 %v626, %v625
    %v985 = vpack.c.bf16 %v707, %v706
    %v986 = vpack.c.bf16 %v219, %v218
    %v987 = vpack.c.bf16 %v300, %v299
    %v988 = vpack.c.bf16 %v383, %v382
    %v989 = vpack.c.bf16 %v464, %v463
    %v990 = vpack.c.bf16 %v547, %v546
    %v991 = vpack.c.bf16 %v628, %v627
    %v992 = vpack.c.bf16 %v709, %v708
    %v993 = vpack.c.bf16 %v220, %v220
    %v994 = vpack.c.bf16 %v301, %v301
    %v995 = vpack.c.bf16 %v382, %v382
    %v996 = vpack.c.bf16 %v384, %v384
    %v997 = vpack.c.bf16 %v465, %v465
    %v998 = vpack.c.bf16 %v546, %v546
    %v999 = vpack.c.bf16 %v548, %v548
    %v1000 = vpack.c.bf16 %v629, %v629
    %v1001 = vpack.c.bf16 %v710, %v710
    %v1002 = vld [vmem:[%s1] sm:$0xf]
    %v1003 = vld [vmem:[%s1 + $0x4] sm:$0xf]
    %v1004 = vld [vmem:[%s1 + $0x8] sm:$0xf]
    %v1005 = vld [vmem:[%s1 + $0xc] sm:$0xf]
    %v1006 = vld [vmem:[%s1 + $0x10] sm:$0xf]
    %v1007 = vld [vmem:[%s1 + $0x14] sm:$0xf]
    %v1008 = vld [vmem:[%s1 + $0x18] sm:$0xf]
    %v1009 = vld [vmem:[%s1 + $0x1c] sm:$0xf]
    %v1010 = vld [vmem:[%s1 + $0x20] sm:$0xf]
    %v1011 = vld [vmem:[%s1 + $0x24] sm:$0xf]
    %v1012 = vld [vmem:[%s1 + $0x28] sm:$0xf]
    %v1013 = vld [vmem:[%s1 + $0x2c] sm:$0xf]
    %v1014 = vld [vmem:[%s1 + $0x30] sm:$0xf]
    %v1015 = vld [vmem:[%s1 + $0x34] sm:$0xf]
    %v1016 = vld [vmem:[%s1 + $0x38] sm:$0xf]
    %v1017 = vld [vmem:[%s1 + $0x3c] sm:$0xf]
    %v1018 = vld [vmem:[%s1 + $0x40] sm:$0xf]
    %v1019 = vld [vmem:[%s1 + $0x44] sm:$0xf]
    %v1020 = vld [vmem:[%s1 + $0x48] sm:$0xf]
    %v1021 = vld [vmem:[%s1 + $0x4c] sm:$0xf]
    %v1022 = vld [vmem:[%s1 + $0x50] sm:$0xf]
    %v1023 = vld [vmem:[%s1 + $0x54] sm:$0xf]
    %v1024 = vld [vmem:[%s1 + $0x58] sm:$0xf]
    %v1025 = vld [vmem:[%s1 + $0x5c] sm:$0xf]
    %v1026 = vld [vmem:[%s1 + $0x60] sm:$0xf]
    %v1027 = vld [vmem:[%s1 + $0x64] sm:$0xf]
    %v1028 = vld [vmem:[%s1 + $0x68] sm:$0xf]
    %v1029 = vld [vmem:[%s1 + $0x6c] sm:$0xf]
    %v1030 = vld [vmem:[%s1 + $0x70] sm:$0xf]
    %v1031 = vld [vmem:[%s1 + $0x74] sm:$0xf]
    %v1032 = vld [vmem:[%s1 + $0x78] sm:$0xf]
    %v1033 = vld [vmem:[%s1 + $0x7c] sm:$0xf]
    %v1034 = vld [vmem:[%s1 + $0x80] sm:$0xf]
    %v1035 = vld [vmem:[%s1 + $0x84] sm:$0xf]
    %v1036 = vld [vmem:[%s1 + $0x88] sm:$0xf]
    %v1037 = vld [vmem:[%s1 + $0x8c] sm:$0xf]
    %v1038 = vld [vmem:[%s1 + $0x90] sm:$0xf]
    %v1039 = vld [vmem:[%s1 + $0x94] sm:$0xf]
    %v1040 = vld [vmem:[%s1 + $0x98] sm:$0xf]
    %v1041 = vld [vmem:[%s1 + $0x9c] sm:$0xf]
    %v1042 = vld [vmem:[%s1 + $0xa0] sm:$0xf]
    %v1043 = vld [vmem:[%s1 + $0xa4] sm:$0xf]
    %v1044 = vld [vmem:[%s1 + $0xa8] sm:$0xf]
    %v1045 = vld [vmem:[%s1 + $0xac] sm:$0xf]
    %v1046 = vld [vmem:[%s1 + $0xb0] sm:$0xf]
    %v1047 = vld [vmem:[%s1 + $0xb4] sm:$0xf]
    %v1048 = vld [vmem:[%s1 + $0xb8] sm:$0xf]
    %v1049 = vld [vmem:[%s1 + $0xbc] sm:$0xf]
    %v1050 = vld [vmem:[%s1 + $0xc0] sm:$0xf]
    %v1051 = vld [vmem:[%s1 + $0xc4] sm:$0xf]
    %v1052 = vld [vmem:[%s1 + $0xc8] sm:$0xf]
    %v1053 = vld [vmem:[%s1 + $0xcc] sm:$0xf]
    %v1054 = vld [vmem:[%s1 + $0xd0] sm:$0xf]
    %v1055 = vld [vmem:[%s1 + $0xd4] sm:$0xf]
    %v1056 = vld [vmem:[%s1 + $0xd8] sm:$0xf]
    %v1057 = vld [vmem:[%s1 + $0xdc] sm:$0xf]
    %v1058 = vld [vmem:[%s1 + $0xe0] sm:$0xf]
    %v1059 = vld [vmem:[%s1 + $0xe4] sm:$0xf]
    %v1060 = vld [vmem:[%s1 + $0xe8] sm:$0xf]
    %v1061 = vld [vmem:[%s1 + $0xec] sm:$0xf]
    %v1062 = vld [vmem:[%s1 + $0xf0] sm:$0xf]
    %v1063 = vld [vmem:[%s1 + $0xf4] sm:$0xf]
    %v1064 = vld [vmem:[%s1 + $0xf8] sm:$0xf]
    %v1065 = vld [vmem:[%s1 + $0xfc] sm:$0xf]
    %v1066 = vld [vmem:[%s1 + $0x100] sm:$0xf]
    %v1067 = vld [vmem:[%s1 + $0x104] sm:$0xf]
    %v1068 = vld [vmem:[%s1 + $0x108] sm:$0xf]
    %v1069 = vld [vmem:[%s1 + $0x10c] sm:$0xf]
    %v1070 = vld [vmem:[%s1 + $0x110] sm:$0xf]
    %v1071 = vld [vmem:[%s1 + $0x114] sm:$0xf]
    %v1072 = vld [vmem:[%s1 + $0x118] sm:$0xf]
    %v1073 = vld [vmem:[%s1 + $0x11c] sm:$0xf]
    %v1074 = vld [vmem:[%s1 + $0x120] sm:$0xf]
    %v1075 = vld [vmem:[%s1 + $0x124] sm:$0xf]
    %v1076 = vld [vmem:[%s1 + $0x128] sm:$0xf]
    %v1077 = vld [vmem:[%s1 + $0x12c] sm:$0xf]
    %v1078 = vld [vmem:[%s1 + $0x130] sm:$0xf]
    %v1079 = vld [vmem:[%s1 + $0x134] sm:$0xf]
    %v1080 = vld [vmem:[%s1 + $0x138] sm:$0xf]
    %v1081 = vld [vmem:[%s1 + $0x13c] sm:$0xf]
    %v1082 = vld [vmem:[%s1 + $0x140] sm:$0xf]
    %v1083 = vld [vmem:[%s1 + $0x144] sm:$0xf]
    %v1084 = vld [vmem:[%s1 + $0x148] sm:$0xf]
    %v1085 = vld [vmem:[%s1 + $0x14c] sm:$0xf]
    %v1086 = vld [vmem:[%s1 + $0x150] sm:$0xf]
    %v1087 = vld [vmem:[%s1 + $0x154] sm:$0xf]
    %v1088 = vld [vmem:[%s1 + $0x158] sm:$0xf]
    %v1089 = vld [vmem:[%s1 + $0x15c] sm:$0xf]
    %v1090 = vld [vmem:[%s1 + $0x160] sm:$0xf]
    %v1091 = vld [vmem:[%s1 + $0x164] sm:$0xf]
    %v1092 = vld [vmem:[%s1 + $0x168] sm:$0xf]
    %v1093 = vld [vmem:[%s1 + $0x16c] sm:$0xf]
    %v1094 = vld [vmem:[%s1 + $0x170] sm:$0xf]
    %v1095 = vld [vmem:[%s1 + $0x174] sm:$0xf]
    %v1096 = vld [vmem:[%s1 + $0x178] sm:$0xf]
    %v1097 = vld [vmem:[%s1 + $0x17c] sm:$0xf]
    %v1098 = vld [vmem:[%s1 + $0x180] sm:$0xf]
    %v1099 = vld [vmem:[%s1 + $0x184] sm:$0xf]
    %v1100 = vld [vmem:[%s1 + $0x188] sm:$0xf]
    %v1101 = vld [vmem:[%s1 + $0x18c] sm:$0xf]
    %v1102 = vld [vmem:[%s1 + $0x190] sm:$0xf]
    %v1103 = vld [vmem:[%s1 + $0x194] sm:$0xf]
    %v1104 = vld [vmem:[%s1 + $0x198] sm:$0xf]
    %v1105 = vld [vmem:[%s1 + $0x19c] sm:$0xf]
    %v1106 = vld [vmem:[%s1 + $0x1a0] sm:$0xf]
    %v1107 = vld [vmem:[%s1 + $0x1a4] sm:$0xf]
    %v1108 = vld [vmem:[%s1 + $0x1a8] sm:$0xf]
    %v1109 = vld [vmem:[%s1 + $0x1ac] sm:$0xf]
    %v1110 = vld [vmem:[%s1 + $0x1b0] sm:$0xf]
    %v1111 = vld [vmem:[%s1 + $0x1b4] sm:$0xf]
    %v1112 = vld [vmem:[%s1 + $0x1b8] sm:$0xf]
    %v1113 = vld [vmem:[%s1 + $0x1bc] sm:$0xf]
    %v1114 = vld [vmem:[%s1 + $0x1c0] sm:$0xf]
    %v1115 = vld [vmem:[%s1 + $0x1c4] sm:$0xf]
    %v1116 = vld [vmem:[%s1 + $0x1c8] sm:$0xf]
    %v1117 = vld [vmem:[%s1 + $0x1cc] sm:$0xf]
    %v1118 = vld [vmem:[%s1 + $0x1d0] sm:$0xf]
    %v1119 = vld [vmem:[%s1 + $0x1d4] sm:$0xf]
    %v1120 = vld [vmem:[%s1 + $0x1d8] sm:$0xf]
    %v1121 = vld [vmem:[%s1 + $0x1dc] sm:$0xf]
    %v1122 = vld [vmem:[%s1 + $0x1e0] sm:$0xf]
    %v1123 = vld [vmem:[%s1 + $0x1e4] sm:$0xf]
    %v1124 = vld [vmem:[%s1 + $0x1e8] sm:$0xf]
    %v1125 = vld [vmem:[%s1 + $0x1ec] sm:$0xf]
    %v1126 = vld [vmem:[%s1 + $0x1f0] sm:$0xf]
    %v1127 = vld [vmem:[%s1 + $0x1f4] sm:$0xf]
    %v1128 = vld [vmem:[%s1 + $0x1f8] sm:$0xf]
    %v1129 = vld [vmem:[%s1 + $0x1fc] sm:$0xf]
    %v1130 = vld [vmem:[%s1 + $0x200] sm:$0xf]
    %v1131 = vld [vmem:[%s1 + $0x204] sm:$0xf]
    %v1132 = vld [vmem:[%s1 + $0x208] sm:$0xf]
    %v1133 = vld [vmem:[%s1 + $0x20c] sm:$0xf]
    %v1134 = vld [vmem:[%s1 + $0x210] sm:$0xf]
    %v1135 = vld [vmem:[%s1 + $0x214] sm:$0xf]
    %v1136 = vld [vmem:[%s1 + $0x218] sm:$0xf]
    %v1137 = vld [vmem:[%s1 + $0x21c] sm:$0xf]
    %v1138 = vld [vmem:[%s1 + $0x220] sm:$0xf]
    %v1139 = vld [vmem:[%s1 + $0x224] sm:$0xf]
    %v1140 = vld [vmem:[%s1 + $0x228] sm:$0xf]
    %v1141 = vld [vmem:[%s1 + $0x22c] sm:$0xf]
    %v1142 = vld [vmem:[%s1 + $0x230] sm:$0xf]
    %v1143 = vld [vmem:[%s1 + $0x234] sm:$0xf]
    %v1144 = vld [vmem:[%s1 + $0x238] sm:$0xf]
    %v1145 = vld [vmem:[%s1 + $0x23c] sm:$0xf]
    %v1290 = vunpack.c.l.b16 %v1002
    %v1291 = vunpack.c.l.b16 %v1003
    %v1292 = vunpack.c.l.b16 %v1004
    %v1293 = vunpack.c.l.b16 %v1005
    %v1294 = vunpack.c.l.b16 %v1006
    %v1295 = vunpack.c.l.b16 %v1007
    %v1296 = vunpack.c.l.b16 %v1008
    %v1297 = vunpack.c.l.b16 %v1009
    %v1298 = vunpack.c.l.b16 %v1010
    %v1299 = vunpack.c.l.b16 %v1011
    %v1300 = vunpack.c.l.b16 %v1012
    %v1301 = vunpack.c.l.b16 %v1013
    %v1302 = vunpack.c.l.b16 %v1014
    %v1303 = vunpack.c.l.b16 %v1015
    %v1304 = vunpack.c.l.b16 %v1016
    %v1305 = vunpack.c.l.b16 %v1017
    %v1306 = vunpack.c.l.b16 %v1018
    %v1307 = vunpack.c.l.b16 %v1019
    %v1308 = vunpack.c.l.b16 %v1020
    %v1309 = vunpack.c.l.b16 %v1021
    %v1310 = vunpack.c.l.b16 %v1022
    %v1311 = vunpack.c.l.b16 %v1023
    %v1312 = vunpack.c.l.b16 %v1024
    %v1313 = vunpack.c.l.b16 %v1025
    %v1314 = vunpack.c.l.b16 %v1026
    %v1315 = vunpack.c.l.b16 %v1027
    %v1316 = vunpack.c.l.b16 %v1028
    %v1317 = vunpack.c.l.b16 %v1029
    %v1318 = vunpack.c.l.b16 %v1030
    %v1319 = vunpack.c.l.b16 %v1031
    %v1320 = vunpack.c.l.b16 %v1032
    %v1321 = vunpack.c.l.b16 %v1033
    %v1322 = vunpack.c.l.b16 %v1034
    %v1323 = vunpack.c.l.b16 %v1035
    %v1324 = vunpack.c.l.b16 %v1036
    %v1325 = vunpack.c.l.b16 %v1037
    %v1326 = vunpack.c.l.b16 %v1038
    %v1327 = vunpack.c.l.b16 %v1039
    %v1328 = vunpack.c.l.b16 %v1040
    %v1329 = vunpack.c.l.b16 %v1041
    %v1330 = vunpack.c.l.b16 %v1042
    %v1331 = vunpack.c.l.b16 %v1043
    %v1332 = vunpack.c.l.b16 %v1044
    %v1333 = vunpack.c.l.b16 %v1045
    %v1334 = vunpack.c.l.b16 %v1046
    %v1335 = vunpack.c.l.b16 %v1047
    %v1336 = vunpack.c.l.b16 %v1048
    %v1337 = vunpack.c.l.b16 %v1049
    %v1338 = vunpack.c.l.b16 %v1050
    %v1339 = vunpack.c.l.b16 %v1051
    %v1340 = vunpack.c.l.b16 %v1052
    %v1341 = vunpack.c.l.b16 %v1053
    %v1342 = vunpack.c.l.b16 %v1054
    %v1343 = vunpack.c.l.b16 %v1055
    %v1344 = vunpack.c.l.b16 %v1056
    %v1345 = vunpack.c.l.b16 %v1057
    %v1346 = vunpack.c.l.b16 %v1058
    %v1347 = vunpack.c.l.b16 %v1059
    %v1348 = vunpack.c.l.b16 %v1060
    %v1349 = vunpack.c.l.b16 %v1061
    %v1350 = vunpack.c.l.b16 %v1062
    %v1351 = vunpack.c.l.b16 %v1063
    %v1352 = vunpack.c.l.b16 %v1064
    %v1353 = vunpack.c.l.b16 %v1065
    %v1354 = vunpack.c.l.b16 %v1066
    %v1355 = vunpack.c.l.b16 %v1067
    %v1356 = vunpack.c.l.b16 %v1068
    %v1357 = vunpack.c.l.b16 %v1069
    %v1358 = vunpack.c.l.b16 %v1070
    %v1359 = vunpack.c.l.b16 %v1071
    %v1360 = vunpack.c.l.b16 %v1072
    %v1361 = vunpack.c.l.b16 %v1073
    %v1362 = vunpack.c.l.b16 %v1074
    %v1363 = vunpack.c.l.b16 %v1075
    %v1364 = vunpack.c.l.b16 %v1076
    %v1365 = vunpack.c.l.b16 %v1077
    %v1366 = vunpack.c.l.b16 %v1078
    %v1367 = vunpack.c.l.b16 %v1079
    %v1368 = vunpack.c.l.b16 %v1080
    %v1369 = vunpack.c.l.b16 %v1081
    %v1370 = vunpack.c.l.b16 %v1082
    %v1371 = vunpack.c.l.b16 %v1083
    %v1372 = vunpack.c.l.b16 %v1084
    %v1373 = vunpack.c.l.b16 %v1085
    %v1374 = vunpack.c.l.b16 %v1086
    %v1375 = vunpack.c.l.b16 %v1087
    %v1376 = vunpack.c.l.b16 %v1088
    %v1377 = vunpack.c.l.b16 %v1089
    %v1378 = vunpack.c.l.b16 %v1090
    %v1379 = vunpack.c.l.b16 %v1091
    %v1380 = vunpack.c.l.b16 %v1092
    %v1381 = vunpack.c.l.b16 %v1093
    %v1382 = vunpack.c.l.b16 %v1094
    %v1383 = vunpack.c.l.b16 %v1095
    %v1384 = vunpack.c.l.b16 %v1096
    %v1385 = vunpack.c.l.b16 %v1097
    %v1386 = vunpack.c.l.b16 %v1098
    %v1387 = vunpack.c.l.b16 %v1099
    %v1388 = vunpack.c.l.b16 %v1100
    %v1389 = vunpack.c.l.b16 %v1101
    %v1390 = vunpack.c.l.b16 %v1102
    %v1391 = vunpack.c.l.b16 %v1103
    %v1392 = vunpack.c.l.b16 %v1104
    %v1393 = vunpack.c.l.b16 %v1105
    %v1394 = vunpack.c.l.b16 %v1106
    %v1395 = vunpack.c.l.b16 %v1107
    %v1396 = vunpack.c.l.b16 %v1108
    %v1397 = vunpack.c.l.b16 %v1109
    %v1398 = vunpack.c.l.b16 %v1110
    %v1399 = vunpack.c.l.b16 %v1111
    %v1400 = vunpack.c.l.b16 %v1112
    %v1401 = vunpack.c.l.b16 %v1113
    %v1402 = vunpack.c.l.b16 %v1114
    %v1403 = vunpack.c.l.b16 %v1115
    %v1404 = vunpack.c.l.b16 %v1116
    %v1405 = vunpack.c.l.b16 %v1117
    %v1406 = vunpack.c.l.b16 %v1118
    %v1407 = vunpack.c.l.b16 %v1119
    %v1408 = vunpack.c.l.b16 %v1120
    %v1409 = vunpack.c.l.b16 %v1121
    %v1410 = vunpack.c.l.b16 %v1122
    %v1411 = vunpack.c.l.b16 %v1123
    %v1412 = vunpack.c.l.b16 %v1124
    %v1413 = vunpack.c.l.b16 %v1125
    %v1414 = vunpack.c.l.b16 %v1126
    %v1415 = vunpack.c.l.b16 %v1127
    %v1416 = vunpack.c.l.b16 %v1128
    %v1417 = vunpack.c.l.b16 %v1129
    %v1418 = vunpack.c.l.b16 %v1130
    %v1419 = vunpack.c.l.b16 %v1131
    %v1420 = vunpack.c.l.b16 %v1132
    %v1421 = vunpack.c.l.b16 %v1133
    %v1422 = vunpack.c.l.b16 %v1134
    %v1423 = vunpack.c.l.b16 %v1135
    %v1424 = vunpack.c.l.b16 %v1136
    %v1425 = vunpack.c.l.b16 %v1137
    %v1426 = vunpack.c.l.b16 %v1138
    %v1427 = vunpack.c.l.b16 %v1139
    %v1428 = vunpack.c.l.b16 %v1140
    %v1429 = vunpack.c.l.b16 %v1141
    %v1430 = vunpack.c.l.b16 %v1142
    %v1431 = vunpack.c.l.b16 %v1143
    %v1432 = vunpack.c.l.b16 %v1144
    %v1433 = vunpack.c.l.b16 %v1145
    %v1434 = vpack.c.b16 %v1291, %v1290
    %v1435 = vpack.c.b16 %v1293, %v1292
    %v1436 = vpack.c.b16 %v1295, %v1294
    %v1437 = vpack.c.b16 %v1297, %v1296
    %v1438 = vpack.c.b16 %v1299, %v1298
    %v1439 = vpack.c.b16 %v1301, %v1300
    %v1440 = vpack.c.b16 %v1303, %v1302
    %v1441 = vpack.c.b16 %v1305, %v1304
    %v1442 = vpack.c.b16 %v1307, %v1306
    %v1443 = vpack.c.b16 %v1309, %v1308
    %v1444 = vpack.c.b16 %v1311, %v1310
    %v1445 = vpack.c.b16 %v1313, %v1312
    %v1446 = vpack.c.b16 %v1315, %v1314
    %v1447 = vpack.c.b16 %v1317, %v1316
    %v1448 = vpack.c.b16 %v1319, %v1318
    %v1449 = vpack.c.b16 %v1321, %v1320
    %v1450 = vpack.c.b16 %v1323, %v1322
    %v1451 = vpack.c.b16 %v1325, %v1324
    %v1452 = vpack.c.b16 %v1327, %v1326
    %v1453 = vpack.c.b16 %v1329, %v1328
    %v1454 = vpack.c.b16 %v1331, %v1330
    %v1455 = vpack.c.b16 %v1333, %v1332
    %v1456 = vpack.c.b16 %v1335, %v1334
    %v1457 = vpack.c.b16 %v1337, %v1336
    %v1458 = vpack.c.b16 %v1339, %v1338
    %v1459 = vpack.c.b16 %v1341, %v1340
    %v1460 = vpack.c.b16 %v1343, %v1342
    %v1461 = vpack.c.b16 %v1345, %v1344
    %v1462 = vpack.c.b16 %v1347, %v1346
    %v1463 = vpack.c.b16 %v1349, %v1348
    %v1464 = vpack.c.b16 %v1351, %v1350
    %v1465 = vpack.c.b16 %v1353, %v1352
    %v1466 = vpack.c.b16 %v1355, %v1354
    %v1467 = vpack.c.b16 %v1357, %v1356
    %v1468 = vpack.c.b16 %v1359, %v1358
    %v1469 = vpack.c.b16 %v1361, %v1360
    %v1470 = vpack.c.b16 %v1363, %v1362
    %v1471 = vpack.c.b16 %v1365, %v1364
    %v1472 = vpack.c.b16 %v1367, %v1366
    %v1473 = vpack.c.b16 %v1369, %v1368
    %v1474 = vpack.c.b16 %v1371, %v1370
    %v1475 = vpack.c.b16 %v1373, %v1372
    %v1476 = vpack.c.b16 %v1375, %v1374
    %v1477 = vpack.c.b16 %v1377, %v1376
    %v1478 = vpack.c.b16 %v1379, %v1378
    %v1479 = vpack.c.b16 %v1381, %v1380
    %v1480 = vpack.c.b16 %v1383, %v1382
    %v1481 = vpack.c.b16 %v1385, %v1384
    %v1482 = vpack.c.b16 %v1387, %v1386
    %v1483 = vpack.c.b16 %v1389, %v1388
    %v1484 = vpack.c.b16 %v1391, %v1390
    %v1485 = vpack.c.b16 %v1393, %v1392
    %v1486 = vpack.c.b16 %v1395, %v1394
    %v1487 = vpack.c.b16 %v1397, %v1396
    %v1488 = vpack.c.b16 %v1399, %v1398
    %v1489 = vpack.c.b16 %v1401, %v1400
    %v1490 = vpack.c.b16 %v1403, %v1402
    %v1491 = vpack.c.b16 %v1405, %v1404
    %v1492 = vpack.c.b16 %v1407, %v1406
    %v1493 = vpack.c.b16 %v1409, %v1408
    %v1494 = vpack.c.b16 %v1411, %v1410
    %v1495 = vpack.c.b16 %v1413, %v1412
    %v1496 = vpack.c.b16 %v1415, %v1414
    %v1497 = vpack.c.b16 %v1417, %v1416
    %v1498 = vpack.c.b16 %v1419, %v1418
    %v1499 = vpack.c.b16 %v1421, %v1420
    %v1500 = vpack.c.b16 %v1423, %v1422
    %v1501 = vpack.c.b16 %v1425, %v1424
    %v1502 = vpack.c.b16 %v1427, %v1426
    %v1503 = vpack.c.b16 %v1429, %v1428
    %v1504 = vpack.c.b16 %v1431, %v1430
    %v1505 = vpack.c.b16 %v1433, %v1432
    %1578 = vmatprep.subr.bf16.mxu0 0
    %1579 = vmatpush1.bf16.msra.mxu0 %v1441
    %1580 = vmatprep.subr.bf16.mxu0 0
    %1581 = vmatpush1.bf16.msra.mxu0 %v1440
    %1582 = vmatprep.subr.bf16.mxu0 0
    %1583 = vmatpush1.bf16.msra.mxu0 %v1439
    %1584 = vmatprep.subr.bf16.mxu0 0
    %1585 = vmatpush1.bf16.msra.mxu0 %v1438
    %1586 = vmatprep.subr.bf16.mxu0 0
    %1587 = vmatpush1.bf16.msra.mxu0 %v1437
    %1588 = vmatprep.subr.bf16.mxu0 0
    %1589 = vmatpush1.bf16.msra.mxu0 %v1436
    %1590 = vmatprep.subr.bf16.mxu0 0
    %1591 = vmatpush1.bf16.msra.mxu0 %v1435
    %1592 = vmatprep.subr.bf16.mxu0 0
    %1593 = vmatpush1.bf16.msra.mxu0 %v1434
    %1594 = vmatprep.subr.bf16.mxu0 0
    %1595 = vmatpush2.bf16.msra.mxu0 %v1449
    %1596 = vmatprep.subr.bf16.mxu0 0
    %1597 = vmatpush2.bf16.msra.mxu0 %v1448
    %1598 = vmatprep.subr.bf16.mxu0 0
    %1599 = vmatpush2.bf16.msra.mxu0 %v1447
    %1600 = vmatprep.subr.bf16.mxu0 0
    %1601 = vmatpush2.bf16.msra.mxu0 %v1446
    %1602 = vmatprep.subr.bf16.mxu0 0
    %1603 = vmatpush2.bf16.msra.mxu0 %v1445
    %1604 = vmatprep.subr.bf16.mxu0 0
    %1605 = vmatpush2.bf16.msra.mxu0 %v1444
    %1606 = vmatprep.subr.bf16.mxu0 0
    %1607 = vmatpush2.bf16.msra.mxu0 %v1443
    %1608 = vmatprep.subr.bf16.mxu0 0
    %1609 = vmatpush2.bf16.msra.mxu0 %v1442
    %1610 = vmatprep.mubr.bf16.mxu0 %v712
    %1611 = vmatmul.mubr.bf16.gmra.mxu0 %v711
    %v1612 = vpop.f32.mrf.mxu0
    %v1613 = vadd.f32 0.0, %v1612
    %v1614 = vpop.f32.mrf.mxu0
    %v1615 = vpop.f32.mrf.mxu0
    %v1616 = vadd.f32 0.0, %v1615
    %v1617 = vpop.f32.mrf.mxu0
    %1618 = vmatprep.mubr.bf16.mxu0 %v721
    %1619 = vmatmul.mubr.bf16.gmra.mxu0 %v720
    %v1620 = vpop.f32.mrf.mxu0
    %v1621 = vadd.f32 0.0, %v1620
    %v1622 = vpop.f32.mrf.mxu0
    %v1623 = vpop.f32.mrf.mxu0
    %v1624 = vadd.f32 0.0, %v1623
    %v1625 = vpop.f32.mrf.mxu0
    %1626 = vmatprep.mubr.bf16.mxu0 %v728
    %1627 = vmatmul.mubr.bf16.gmra.mxu0 %v727
    %v1628 = vpop.f32.mrf.mxu0
    %v1629 = vadd.f32 0.0, %v1628
    %v1630 = vpop.f32.mrf.mxu0
    %v1631 = vpop.f32.mrf.mxu0
    %v1632 = vadd.f32 0.0, %v1631
    %v1633 = vpop.f32.mrf.mxu0
    %1634 = vmatprep.mubr.bf16.mxu0 %v735
    %1635 = vmatmul.mubr.bf16.gmra.mxu0 %v734
    %v1636 = vpop.f32.mrf.mxu0
    %v1637 = vadd.f32 0.0, %v1636
    %v1638 = vpop.f32.mrf.mxu0
    %v1639 = vpop.f32.mrf.mxu0
    %v1640 = vadd.f32 0.0, %v1639
    %v1641 = vpop.f32.mrf.mxu0
    %1642 = vmatprep.mubr.bf16.mxu0 %v742
    %1643 = vmatmul.mubr.bf16.gmra.mxu0 %v741
    %v1644 = vpop.f32.mrf.mxu0
    %v1645 = vadd.f32 0.0, %v1644
    %v1646 = vpop.f32.mrf.mxu0
    %v1647 = vpop.f32.mrf.mxu0
    %v1648 = vadd.f32 0.0, %v1647
    %v1649 = vpop.f32.mrf.mxu0
    %1650 = vmatprep.mubr.bf16.mxu0 %v749
    %1651 = vmatmul.mubr.bf16.gmra.mxu0 %v748
    %v1652 = vpop.f32.mrf.mxu0
    %v1653 = vadd.f32 0.0, %v1652
    %v1654 = vpop.f32.mrf.mxu0
    %v1655 = vpop.f32.mrf.mxu0
    %v1656 = vadd.f32 0.0, %v1655
    %v1657 = vpop.f32.mrf.mxu0
    %1658 = vmatprep.mubr.bf16.mxu0 %v756
    %1659 = vmatmul.mubr.bf16.gmra.mxu0 %v755
    %v1660 = vpop.f32.mrf.mxu0
    %v1661 = vadd.f32 0.0, %v1660
    %v1662 = vpop.f32.mrf.mxu0
    %v1663 = vpop.f32.mrf.mxu0
    %v1664 = vadd.f32 0.0, %v1663
    %v1665 = vpop.f32.mrf.mxu0
    %1666 = vmatprep.mubr.bf16.mxu0 %v763
    %1667 = vmatmul.mubr.bf16.gmra.mxu0 %v762
    %v1668 = vpop.f32.mrf.mxu0
    %v1669 = vadd.f32 0.0, %v1668
    %v1670 = vpop.f32.mrf.mxu0
    %v1671 = vpop.f32.mrf.mxu0
    %v1672 = vadd.f32 0.0, %v1671
    %v1673 = vpop.f32.mrf.mxu0
    %1674 = vmatprep.mubr.bf16.mxu0 %v770
    %1675 = vmatmul.mubr.bf16.gmra.mxu0 %v769
    %v1676 = vpop.f32.mrf.mxu0
    %v1677 = vadd.f32 0.0, %v1676
    %v1678 = vpop.f32.mrf.mxu0
    %v1679 = vpop.f32.mrf.mxu0
    %v1680 = vadd.f32 0.0, %v1679
    %v1681 = vpop.f32.mrf.mxu0
    %1682 = vmatprep.mubr.bf16.mxu0 %v777
    %1683 = vmatmul.mubr.bf16.gmra.mxu0 %v776
    %v1684 = vpop.f32.mrf.mxu0
    %v1685 = vadd.f32 0.0, %v1684
    %v1686 = vpop.f32.mrf.mxu0
    %v1687 = vpop.f32.mrf.mxu0
    %v1688 = vadd.f32 0.0, %v1687
    %v1689 = vpop.f32.mrf.mxu0
    %1690 = vmatprep.mubr.bf16.mxu0 %v784
    %1691 = vmatmul.mubr.bf16.gmra.mxu0 %v783
    %v1692 = vpop.f32.mrf.mxu0
    %v1693 = vadd.f32 0.0, %v1692
    %v1694 = vpop.f32.mrf.mxu0
    %v1695 = vpop.f32.mrf.mxu0
    %v1696 = vadd.f32 0.0, %v1695
    %v1697 = vpop.f32.mrf.mxu0
    %1698 = vmatprep.mubr.bf16.mxu0 %v791
    %1699 = vmatmul.mubr.bf16.gmra.mxu0 %v790
    %v1700 = vpop.f32.mrf.mxu0
    %v1701 = vadd.f32 0.0, %v1700
    %v1702 = vpop.f32.mrf.mxu0
    %v1703 = vpop.f32.mrf.mxu0
    %v1704 = vadd.f32 0.0, %v1703
    %v1705 = vpop.f32.mrf.mxu0
    %1706 = vmatprep.mubr.bf16.mxu0 %v798
    %1707 = vmatmul.mubr.bf16.gmra.mxu0 %v797
    %v1708 = vpop.f32.mrf.mxu0
    %v1709 = vadd.f32 0.0, %v1708
    %v1710 = vpop.f32.mrf.mxu0
    %v1711 = vpop.f32.mrf.mxu0
    %v1712 = vadd.f32 0.0, %v1711
    %v1713 = vpop.f32.mrf.mxu0
    %1714 = vmatprep.mubr.bf16.mxu0 %v805
    %1715 = vmatmul.mubr.bf16.gmra.mxu0 %v804
    %v1716 = vpop.f32.mrf.mxu0
    %v1717 = vadd.f32 0.0, %v1716
    %v1718 = vpop.f32.mrf.mxu0
    %v1719 = vpop.f32.mrf.mxu0
    %v1720 = vadd.f32 0.0, %v1719
    %v1721 = vpop.f32.mrf.mxu0
    %1722 = vmatprep.mubr.bf16.mxu0 %v812
    %1723 = vmatmul.mubr.bf16.gmra.mxu0 %v811
    %v1724 = vpop.f32.mrf.mxu0
    %v1725 = vadd.f32 0.0, %v1724
    %v1726 = vpop.f32.mrf.mxu0
    %v1727 = vpop.f32.mrf.mxu0
    %v1728 = vadd.f32 0.0, %v1727
    %v1729 = vpop.f32.mrf.mxu0
    %1730 = vmatprep.mubr.bf16.mxu0 %v819
    %1731 = vmatmul.mubr.bf16.gmra.mxu0 %v818
    %v1732 = vpop.f32.mrf.mxu0
    %v1733 = vadd.f32 0.0, %v1732
    %v1734 = vpop.f32.mrf.mxu0
    %v1735 = vpop.f32.mrf.mxu0
    %v1736 = vadd.f32 0.0, %v1735
    %v1737 = vpop.f32.mrf.mxu0
    %1738 = vmatprep.mubr.bf16.mxu0 %v826
    %1739 = vmatmul.mubr.bf16.gmra.mxu0 %v825
    %v1740 = vpop.f32.mrf.mxu0
    %v1741 = vadd.f32 0.0, %v1740
    %v1742 = vpop.f32.mrf.mxu0
    %v1743 = vpop.f32.mrf.mxu0
    %v1744 = vadd.f32 0.0, %v1743
    %v1745 = vpop.f32.mrf.mxu0
    %1746 = vmatprep.mubr.bf16.mxu0 %v833
    %1747 = vmatmul.mubr.bf16.gmra.mxu0 %v832
    %v1748 = vpop.f32.mrf.mxu0
    %v1749 = vadd.f32 0.0, %v1748
    %v1750 = vpop.f32.mrf.mxu0
    %v1751 = vpop.f32.mrf.mxu0
    %v1752 = vadd.f32 0.0, %v1751
    %v1753 = vpop.f32.mrf.mxu0
    %1754 = vmatprep.mubr.bf16.mxu0 %v840
    %1755 = vmatmul.mubr.bf16.gmra.mxu0 %v839
    %v1756 = vpop.f32.mrf.mxu0
    %v1757 = vadd.f32 0.0, %v1756
    %v1758 = vpop.f32.mrf.mxu0
    %v1759 = vpop.f32.mrf.mxu0
    %v1760 = vadd.f32 0.0, %v1759
    %v1761 = vpop.f32.mrf.mxu0
    %1762 = vmatprep.mubr.bf16.mxu0 %v847
    %1763 = vmatmul.mubr.bf16.gmra.mxu0 %v846
    %v1764 = vpop.f32.mrf.mxu0
    %v1765 = vadd.f32 0.0, %v1764
    %v1766 = vpop.f32.mrf.mxu0
    %v1767 = vpop.f32.mrf.mxu0
    %v1768 = vadd.f32 0.0, %v1767
    %v1769 = vpop.f32.mrf.mxu0
    %1770 = vmatprep.mubr.bf16.mxu0 %v854
    %1771 = vmatmul.mubr.bf16.gmra.mxu0 %v853
    %v1772 = vpop.f32.mrf.mxu0
    %v1773 = vadd.f32 0.0, %v1772
    %v1774 = vpop.f32.mrf.mxu0
    %v1775 = vpop.f32.mrf.mxu0
    %v1776 = vadd.f32 0.0, %v1775
    %v1777 = vpop.f32.mrf.mxu0
    %1778 = vmatprep.mubr.bf16.mxu0 %v861
    %1779 = vmatmul.mubr.bf16.gmra.mxu0 %v860
    %v1780 = vpop.f32.mrf.mxu0
    %v1781 = vadd.f32 0.0, %v1780
    %v1782 = vpop.f32.mrf.mxu0
    %v1783 = vpop.f32.mrf.mxu0
    %v1784 = vadd.f32 0.0, %v1783
    %v1785 = vpop.f32.mrf.mxu0
    %1786 = vmatprep.mubr.bf16.mxu0 %v868
    %1787 = vmatmul.mubr.bf16.gmra.mxu0 %v867
    %v1788 = vpop.f32.mrf.mxu0
    %v1789 = vadd.f32 0.0, %v1788
    %v1790 = vpop.f32.mrf.mxu0
    %v1791 = vpop.f32.mrf.mxu0
    %v1792 = vadd.f32 0.0, %v1791
    %v1793 = vpop.f32.mrf.mxu0
    %1794 = vmatprep.mubr.bf16.mxu0 %v875
    %1795 = vmatmul.mubr.bf16.gmra.mxu0 %v874
    %v1796 = vpop.f32.mrf.mxu0
    %v1797 = vadd.f32 0.0, %v1796
    %v1798 = vpop.f32.mrf.mxu0
    %v1799 = vpop.f32.mrf.mxu0
    %v1800 = vadd.f32 0.0, %v1799
    %v1801 = vpop.f32.mrf.mxu0
    %1802 = vmatprep.mubr.bf16.mxu0 %v882
    %1803 = vmatmul.mubr.bf16.gmra.mxu0 %v881
    %v1804 = vpop.f32.mrf.mxu0
    %v1805 = vadd.f32 0.0, %v1804
    %v1806 = vpop.f32.mrf.mxu0
    %v1807 = vpop.f32.mrf.mxu0
    %v1808 = vadd.f32 0.0, %v1807
    %v1809 = vpop.f32.mrf.mxu0
    %1810 = vmatprep.mubr.bf16.mxu0 %v889
    %1811 = vmatmul.mubr.bf16.gmra.mxu0 %v888
    %v1812 = vpop.f32.mrf.mxu0
    %v1813 = vadd.f32 0.0, %v1812
    %v1814 = vpop.f32.mrf.mxu0
    %v1815 = vpop.f32.mrf.mxu0
    %v1816 = vadd.f32 0.0, %v1815
    %v1817 = vpop.f32.mrf.mxu0
    %1818 = vmatprep.mubr.bf16.mxu0 %v896
    %1819 = vmatmul.mubr.bf16.gmra.mxu0 %v895
    %v1820 = vpop.f32.mrf.mxu0
    %v1821 = vadd.f32 0.0, %v1820
    %v1822 = vpop.f32.mrf.mxu0
    %v1823 = vpop.f32.mrf.mxu0
    %v1824 = vadd.f32 0.0, %v1823
    %v1825 = vpop.f32.mrf.mxu0
    %1826 = vmatprep.mubr.bf16.mxu0 %v903
    %1827 = vmatmul.mubr.bf16.gmra.mxu0 %v902
    %v1828 = vpop.f32.mrf.mxu0
    %v1829 = vadd.f32 0.0, %v1828
    %v1830 = vpop.f32.mrf.mxu0
    %v1831 = vpop.f32.mrf.mxu0
    %v1832 = vadd.f32 0.0, %v1831
    %v1833 = vpop.f32.mrf.mxu0
    %1834 = vmatprep.mubr.bf16.mxu0 %v910
    %1835 = vmatmul.mubr.bf16.gmra.mxu0 %v909
    %v1836 = vpop.f32.mrf.mxu0
    %v1837 = vadd.f32 0.0, %v1836
    %v1838 = vpop.f32.mrf.mxu0
    %v1839 = vpop.f32.mrf.mxu0
    %v1840 = vadd.f32 0.0, %v1839
    %v1841 = vpop.f32.mrf.mxu0
    %1842 = vmatprep.mubr.bf16.mxu0 %v917
    %1843 = vmatmul.mubr.bf16.gmra.mxu0 %v916
    %v1844 = vpop.f32.mrf.mxu0
    %v1845 = vadd.f32 0.0, %v1844
    %v1846 = vpop.f32.mrf.mxu0
    %v1847 = vpop.f32.mrf.mxu0
    %v1848 = vadd.f32 0.0, %v1847
    %v1849 = vpop.f32.mrf.mxu0
    %1850 = vmatprep.mubr.bf16.mxu0 %v924
    %1851 = vmatmul.mubr.bf16.gmra.mxu0 %v923
    %v1852 = vpop.f32.mrf.mxu0
    %v1853 = vadd.f32 0.0, %v1852
    %v1854 = vpop.f32.mrf.mxu0
    %v1855 = vpop.f32.mrf.mxu0
    %v1856 = vadd.f32 0.0, %v1855
    %v1857 = vpop.f32.mrf.mxu0
    %1858 = vmatprep.mubr.bf16.mxu0 %v931
    %1859 = vmatmul.mubr.bf16.gmra.mxu0 %v930
    %v1860 = vpop.f32.mrf.mxu0
    %v1861 = vadd.f32 0.0, %v1860
    %v1862 = vpop.f32.mrf.mxu0
    %v1863 = vpop.f32.mrf.mxu0
    %v1864 = vadd.f32 0.0, %v1863
    %v1865 = vpop.f32.mrf.mxu0
    %1866 = vmatprep.mubr.bf16.mxu0 %v938
    %1867 = vmatmul.mubr.bf16.gmra.mxu0 %v937
    %v1868 = vpop.f32.mrf.mxu0
    %v1869 = vadd.f32 0.0, %v1868
    %v1870 = vpop.f32.mrf.mxu0
    %v1871 = vpop.f32.mrf.mxu0
    %v1872 = vadd.f32 0.0, %v1871
    %v1873 = vpop.f32.mrf.mxu0
    %1874 = vmatprep.mubr.bf16.mxu0 %v945
    %1875 = vmatmul.mubr.bf16.gmra.mxu0 %v944
    %v1876 = vpop.f32.mrf.mxu0
    %v1877 = vadd.f32 0.0, %v1876
    %v1878 = vpop.f32.mrf.mxu0
    %v1879 = vpop.f32.mrf.mxu0
    %v1880 = vadd.f32 0.0, %v1879
    %v1881 = vpop.f32.mrf.mxu0
    %1882 = vmatprep.mubr.bf16.mxu0 %v952
    %1883 = vmatmul.mubr.bf16.gmra.mxu0 %v951
    %v1884 = vpop.f32.mrf.mxu0
    %v1885 = vadd.f32 0.0, %v1884
    %v1886 = vpop.f32.mrf.mxu0
    %v1887 = vpop.f32.mrf.mxu0
    %v1888 = vadd.f32 0.0, %v1887
    %v1889 = vpop.f32.mrf.mxu0
    %1890 = vmatprep.mubr.bf16.mxu0 %v959
    %1891 = vmatmul.mubr.bf16.gmra.mxu0 %v958
    %v1892 = vpop.f32.mrf.mxu0
    %v1893 = vadd.f32 0.0, %v1892
    %v1894 = vpop.f32.mrf.mxu0
    %v1895 = vpop.f32.mrf.mxu0
    %v1896 = vadd.f32 0.0, %v1895
    %v1897 = vpop.f32.mrf.mxu0
    %1898 = vmatprep.mubr.bf16.mxu0 %v966
    %1899 = vmatmul.mubr.bf16.gmra.mxu0 %v965
    %v1900 = vpop.f32.mrf.mxu0
    %v1901 = vadd.f32 0.0, %v1900
    %v1902 = vpop.f32.mrf.mxu0
    %v1903 = vpop.f32.mrf.mxu0
    %v1904 = vadd.f32 0.0, %v1903
    %v1905 = vpop.f32.mrf.mxu0
    %1906 = vmatprep.mubr.bf16.mxu0 %v973
    %1907 = vmatmul.mubr.bf16.gmra.mxu0 %v972
    %v1908 = vpop.f32.mrf.mxu0
    %v1909 = vadd.f32 0.0, %v1908
    %v1910 = vpop.f32.mrf.mxu0
    %v1911 = vpop.f32.mrf.mxu0
    %v1912 = vadd.f32 0.0, %v1911
    %v1913 = vpop.f32.mrf.mxu0
    %1914 = vmatprep.mubr.bf16.mxu0 %v980
    %1915 = vmatmul.mubr.bf16.gmra.mxu0 %v979
    %v1916 = vpop.f32.mrf.mxu0
    %v1917 = vadd.f32 0.0, %v1916
    %v1918 = vpop.f32.mrf.mxu0
    %v1919 = vpop.f32.mrf.mxu0
    %v1920 = vadd.f32 0.0, %v1919
    %v1921 = vpop.f32.mrf.mxu0
    %1922 = vmatprep.mubr.bf16.mxu0 %v987
    %1923 = vmatmul.mubr.bf16.gmra.mxu0 %v986
    %v1924 = vpop.f32.mrf.mxu0
    %v1925 = vadd.f32 0.0, %v1924
    %v1926 = vpop.f32.mrf.mxu0
    %v1927 = vpop.f32.mrf.mxu0
    %v1928 = vadd.f32 0.0, %v1927
    %v1929 = vpop.f32.mrf.mxu0
    %1930 = vmatprep.mubr.bf16.mxu0 %v994
    %1931 = vmatmul.mubr.bf16.gmra.mxu0 %v993
    %v1932 = vpop.f32.mrf.mxu0
    %v1933 = vadd.f32 0.0, %v1932
    %v1934 = vpop.f32.mrf.mxu0
    %v1935 = vpop.f32.mrf.mxu0
    %v1936 = vpop.f32.mrf.mxu0
    %1937 = vdwg.mxu0
    %1938 = vmatprep.subr.bf16.mxu0 0
    %1939 = vmatpush1.bf16.msra.mxu0 %v1457
    %1940 = vmatprep.subr.bf16.mxu0 0
    %1941 = vmatpush1.bf16.msra.mxu0 %v1456
    %1942 = vmatprep.subr.bf16.mxu0 0
    %1943 = vmatpush1.bf16.msra.mxu0 %v1455
    %1944 = vmatprep.subr.bf16.mxu0 0
    %1945 = vmatpush1.bf16.msra.mxu0 %v1454
    %1946 = vmatprep.subr.bf16.mxu0 0
    %1947 = vmatpush1.bf16.msra.mxu0 %v1453
    %1948 = vmatprep.subr.bf16.mxu0 0
    %1949 = vmatpush1.bf16.msra.mxu0 %v1452
    %1950 = vmatprep.subr.bf16.mxu0 0
    %1951 = vmatpush1.bf16.msra.mxu0 %v1451
    %1952 = vmatprep.subr.bf16.mxu0 0
    %1953 = vmatpush1.bf16.msra.mxu0 %v1450
    %1954 = vmatprep.subr.bf16.mxu0 0
    %1955 = vmatpush2.bf16.msra.mxu0 %v1465
    %1956 = vmatprep.subr.bf16.mxu0 0
    %1957 = vmatpush2.bf16.msra.mxu0 %v1464
    %1958 = vmatprep.subr.bf16.mxu0 0
    %1959 = vmatpush2.bf16.msra.mxu0 %v1463
    %1960 = vmatprep.subr.bf16.mxu0 0
    %1961 = vmatpush2.bf16.msra.mxu0 %v1462
    %1962 = vmatprep.subr.bf16.mxu0 0
    %1963 = vmatpush2.bf16.msra.mxu0 %v1461
    %1964 = vmatprep.subr.bf16.mxu0 0
    %1965 = vmatpush2.bf16.msra.mxu0 %v1460
    %1966 = vmatprep.subr.bf16.mxu0 0
    %1967 = vmatpush2.bf16.msra.mxu0 %v1459
    %1968 = vmatprep.subr.bf16.mxu0 0
    %1969 = vmatpush2.bf16.msra.mxu0 %v1458
    %1970 = vmatprep.mubr.bf16.mxu0 %v714
    %1971 = vmatmul.mubr.bf16.gmra.mxu0 %v713
    %v1972 = vpop.f32.mrf.mxu0
    %v1973 = vadd.f32 %v1613, %v1972
    %v1974 = vpop.f32.mrf.mxu0
    %v1975 = vpop.f32.mrf.mxu0
    %v1976 = vadd.f32 %v1616, %v1975
    %v1977 = vpop.f32.mrf.mxu0
    %1978 = vmatprep.mubr.bf16.mxu0 %v722
    %1979 = vmatmul.mubr.bf16.gmra.mxu0 %v714
    %v1980 = vpop.f32.mrf.mxu0
    %v1981 = vadd.f32 %v1621, %v1980
    %v1982 = vpop.f32.mrf.mxu0
    %v1983 = vpop.f32.mrf.mxu0
    %v1984 = vadd.f32 %v1624, %v1983
    %v1985 = vpop.f32.mrf.mxu0
    %1986 = vmatprep.mubr.bf16.mxu0 %v729
    %1987 = vmatmul.mubr.bf16.gmra.mxu0 %v722
    %v1988 = vpop.f32.mrf.mxu0
    %v1989 = vadd.f32 %v1629, %v1988
    %v1990 = vpop.f32.mrf.mxu0
    %v1991 = vpop.f32.mrf.mxu0
    %v1992 = vadd.f32 %v1632, %v1991
    %v1993 = vpop.f32.mrf.mxu0
    %1994 = vmatprep.mubr.bf16.mxu0 %v736
    %1995 = vmatmul.mubr.bf16.gmra.mxu0 %v729
    %v1996 = vpop.f32.mrf.mxu0
    %v1997 = vadd.f32 %v1637, %v1996
    %v1998 = vpop.f32.mrf.mxu0
    %v1999 = vpop.f32.mrf.mxu0
    %v2000 = vadd.f32 %v1640, %v1999
    %v2001 = vpop.f32.mrf.mxu0
    %2002 = vmatprep.mubr.bf16.mxu0 %v743
    %2003 = vmatmul.mubr.bf16.gmra.mxu0 %v736
    %v2004 = vpop.f32.mrf.mxu0
    %v2005 = vadd.f32 %v1645, %v2004
    %v2006 = vpop.f32.mrf.mxu0
    %v2007 = vpop.f32.mrf.mxu0
    %v2008 = vadd.f32 %v1648, %v2007
    %v2009 = vpop.f32.mrf.mxu0
    %2010 = vmatprep.mubr.bf16.mxu0 %v750
    %2011 = vmatmul.mubr.bf16.gmra.mxu0 %v743
    %v2012 = vpop.f32.mrf.mxu0
    %v2013 = vadd.f32 %v1653, %v2012
    %v2014 = vpop.f32.mrf.mxu0
    %v2015 = vpop.f32.mrf.mxu0
    %v2016 = vadd.f32 %v1656, %v2015
    %v2017 = vpop.f32.mrf.mxu0
    %2018 = vmatprep.mubr.bf16.mxu0 %v757
    %2019 = vmatmul.mubr.bf16.gmra.mxu0 %v750
    %v2020 = vpop.f32.mrf.mxu0
    %v2021 = vadd.f32 %v1661, %v2020
    %v2022 = vpop.f32.mrf.mxu0
    %v2023 = vpop.f32.mrf.mxu0
    %v2024 = vadd.f32 %v1664, %v2023
    %v2025 = vpop.f32.mrf.mxu0
    %2026 = vmatprep.mubr.bf16.mxu0 %v764
    %2027 = vmatmul.mubr.bf16.gmra.mxu0 %v757
    %v2028 = vpop.f32.mrf.mxu0
    %v2029 = vadd.f32 %v1669, %v2028
    %v2030 = vpop.f32.mrf.mxu0
    %v2031 = vpop.f32.mrf.mxu0
    %v2032 = vadd.f32 %v1672, %v2031
    %v2033 = vpop.f32.mrf.mxu0
    %2034 = vmatprep.mubr.bf16.mxu0 %v771
    %2035 = vmatmul.mubr.bf16.gmra.mxu0 %v764
    %v2036 = vpop.f32.mrf.mxu0
    %v2037 = vadd.f32 %v1677, %v2036
    %v2038 = vpop.f32.mrf.mxu0
    %v2039 = vpop.f32.mrf.mxu0
    %v2040 = vadd.f32 %v1680, %v2039
    %v2041 = vpop.f32.mrf.mxu0
    %2042 = vmatprep.mubr.bf16.mxu0 %v778
    %2043 = vmatmul.mubr.bf16.gmra.mxu0 %v771
    %v2044 = vpop.f32.mrf.mxu0
    %v2045 = vadd.f32 %v1685, %v2044
    %v2046 = vpop.f32.mrf.mxu0
    %v2047 = vpop.f32.mrf.mxu0
    %v2048 = vadd.f32 %v1688, %v2047
    %v2049 = vpop.f32.mrf.mxu0
    %2050 = vmatprep.mubr.bf16.mxu0 %v785
    %2051 = vmatmul.mubr.bf16.gmra.mxu0 %v778
    %v2052 = vpop.f32.mrf.mxu0
    %v2053 = vadd.f32 %v1693, %v2052
    %v2054 = vpop.f32.mrf.mxu0
    %v2055 = vpop.f32.mrf.mxu0
    %v2056 = vadd.f32 %v1696, %v2055
    %v2057 = vpop.f32.mrf.mxu0
    %2058 = vmatprep.mubr.bf16.mxu0 %v792
    %2059 = vmatmul.mubr.bf16.gmra.mxu0 %v785
    %v2060 = vpop.f32.mrf.mxu0
    %v2061 = vadd.f32 %v1701, %v2060
    %v2062 = vpop.f32.mrf.mxu0
    %v2063 = vpop.f32.mrf.mxu0
    %v2064 = vadd.f32 %v1704, %v2063
    %v2065 = vpop.f32.mrf.mxu0
    %2066 = vmatprep.mubr.bf16.mxu0 %v799
    %2067 = vmatmul.mubr.bf16.gmra.mxu0 %v792
    %v2068 = vpop.f32.mrf.mxu0
    %v2069 = vadd.f32 %v1709, %v2068
    %v2070 = vpop.f32.mrf.mxu0
    %v2071 = vpop.f32.mrf.mxu0
    %v2072 = vadd.f32 %v1712, %v2071
    %v2073 = vpop.f32.mrf.mxu0
    %2074 = vmatprep.mubr.bf16.mxu0 %v806
    %2075 = vmatmul.mubr.bf16.gmra.mxu0 %v799
    %v2076 = vpop.f32.mrf.mxu0
    %v2077 = vadd.f32 %v1717, %v2076
    %v2078 = vpop.f32.mrf.mxu0
    %v2079 = vpop.f32.mrf.mxu0
    %v2080 = vadd.f32 %v1720, %v2079
    %v2081 = vpop.f32.mrf.mxu0
    %2082 = vmatprep.mubr.bf16.mxu0 %v813
    %2083 = vmatmul.mubr.bf16.gmra.mxu0 %v806
    %v2084 = vpop.f32.mrf.mxu0
    %v2085 = vadd.f32 %v1725, %v2084
    %v2086 = vpop.f32.mrf.mxu0
    %v2087 = vpop.f32.mrf.mxu0
    %v2088 = vadd.f32 %v1728, %v2087
    %v2089 = vpop.f32.mrf.mxu0
    %2090 = vmatprep.mubr.bf16.mxu0 %v820
    %2091 = vmatmul.mubr.bf16.gmra.mxu0 %v813
    %v2092 = vpop.f32.mrf.mxu0
    %v2093 = vadd.f32 %v1733, %v2092
    %v2094 = vpop.f32.mrf.mxu0
    %v2095 = vpop.f32.mrf.mxu0
    %v2096 = vadd.f32 %v1736, %v2095
    %v2097 = vpop.f32.mrf.mxu0
    %2098 = vmatprep.mubr.bf16.mxu0 %v827
    %2099 = vmatmul.mubr.bf16.gmra.mxu0 %v820
    %v2100 = vpop.f32.mrf.mxu0
    %v2101 = vadd.f32 %v1741, %v2100
    %v2102 = vpop.f32.mrf.mxu0
    %v2103 = vpop.f32.mrf.mxu0
    %v2104 = vadd.f32 %v1744, %v2103
    %v2105 = vpop.f32.mrf.mxu0
    %2106 = vmatprep.mubr.bf16.mxu0 %v834
    %2107 = vmatmul.mubr.bf16.gmra.mxu0 %v827
    %v2108 = vpop.f32.mrf.mxu0
    %v2109 = vadd.f32 %v1749, %v2108
    %v2110 = vpop.f32.mrf.mxu0
    %v2111 = vpop.f32.mrf.mxu0
    %v2112 = vadd.f32 %v1752, %v2111
    %v2113 = vpop.f32.mrf.mxu0
    %2114 = vmatprep.mubr.bf16.mxu0 %v841
    %2115 = vmatmul.mubr.bf16.gmra.mxu0 %v834
    %v2116 = vpop.f32.mrf.mxu0
    %v2117 = vadd.f32 %v1757, %v2116
    %v2118 = vpop.f32.mrf.mxu0
    %v2119 = vpop.f32.mrf.mxu0
    %v2120 = vadd.f32 %v1760, %v2119
    %v2121 = vpop.f32.mrf.mxu0
    %2122 = vmatprep.mubr.bf16.mxu0 %v848
    %2123 = vmatmul.mubr.bf16.gmra.mxu0 %v841
    %v2124 = vpop.f32.mrf.mxu0
    %v2125 = vadd.f32 %v1765, %v2124
    %v2126 = vpop.f32.mrf.mxu0
    %v2127 = vpop.f32.mrf.mxu0
    %v2128 = vadd.f32 %v1768, %v2127
    %v2129 = vpop.f32.mrf.mxu0
    %2130 = vmatprep.mubr.bf16.mxu0 %v855
    %2131 = vmatmul.mubr.bf16.gmra.mxu0 %v848
    %v2132 = vpop.f32.mrf.mxu0
    %v2133 = vadd.f32 %v1773, %v2132
    %v2134 = vpop.f32.mrf.mxu0
    %v2135 = vpop.f32.mrf.mxu0
    %v2136 = vadd.f32 %v1776, %v2135
    %v2137 = vpop.f32.mrf.mxu0
    %2138 = vmatprep.mubr.bf16.mxu0 %v862
    %2139 = vmatmul.mubr.bf16.gmra.mxu0 %v855
    %v2140 = vpop.f32.mrf.mxu0
    %v2141 = vadd.f32 %v1781, %v2140
    %v2142 = vpop.f32.mrf.mxu0
    %v2143 = vpop.f32.mrf.mxu0
    %v2144 = vadd.f32 %v1784, %v2143
    %v2145 = vpop.f32.mrf.mxu0
    %2146 = vmatprep.mubr.bf16.mxu0 %v869
    %2147 = vmatmul.mubr.bf16.gmra.mxu0 %v862
    %v2148 = vpop.f32.mrf.mxu0
    %v2149 = vadd.f32 %v1789, %v2148
    %v2150 = vpop.f32.mrf.mxu0
    %v2151 = vpop.f32.mrf.mxu0
    %v2152 = vadd.f32 %v1792, %v2151
    %v2153 = vpop.f32.mrf.mxu0
    %2154 = vmatprep.mubr.bf16.mxu0 %v876
    %2155 = vmatmul.mubr.bf16.gmra.mxu0 %v869
    %v2156 = vpop.f32.mrf.mxu0
    %v2157 = vadd.f32 %v1797, %v2156
    %v2158 = vpop.f32.mrf.mxu0
    %v2159 = vpop.f32.mrf.mxu0
    %v2160 = vadd.f32 %v1800, %v2159
    %v2161 = vpop.f32.mrf.mxu0
    %2162 = vmatprep.mubr.bf16.mxu0 %v883
    %2163 = vmatmul.mubr.bf16.gmra.mxu0 %v876
    %v2164 = vpop.f32.mrf.mxu0
    %v2165 = vadd.f32 %v1805, %v2164
    %v2166 = vpop.f32.mrf.mxu0
    %v2167 = vpop.f32.mrf.mxu0
    %v2168 = vadd.f32 %v1808, %v2167
    %v2169 = vpop.f32.mrf.mxu0
    %2170 = vmatprep.mubr.bf16.mxu0 %v890
    %2171 = vmatmul.mubr.bf16.gmra.mxu0 %v883
    %v2172 = vpop.f32.mrf.mxu0
    %v2173 = vadd.f32 %v1813, %v2172
    %v2174 = vpop.f32.mrf.mxu0
    %v2175 = vpop.f32.mrf.mxu0
    %v2176 = vadd.f32 %v1816, %v2175
    %v2177 = vpop.f32.mrf.mxu0
    %2178 = vmatprep.mubr.bf16.mxu0 %v897
    %2179 = vmatmul.mubr.bf16.gmra.mxu0 %v890
    %v2180 = vpop.f32.mrf.mxu0
    %v2181 = vadd.f32 %v1821, %v2180
    %v2182 = vpop.f32.mrf.mxu0
    %v2183 = vpop.f32.mrf.mxu0
    %v2184 = vadd.f32 %v1824, %v2183
    %v2185 = vpop.f32.mrf.mxu0
    %2186 = vmatprep.mubr.bf16.mxu0 %v904
    %2187 = vmatmul.mubr.bf16.gmra.mxu0 %v897
    %v2188 = vpop.f32.mrf.mxu0
    %v2189 = vadd.f32 %v1829, %v2188
    %v2190 = vpop.f32.mrf.mxu0
    %v2191 = vpop.f32.mrf.mxu0
    %v2192 = vadd.f32 %v1832, %v2191
    %v2193 = vpop.f32.mrf.mxu0
    %2194 = vmatprep.mubr.bf16.mxu0 %v911
    %2195 = vmatmul.mubr.bf16.gmra.mxu0 %v904
    %v2196 = vpop.f32.mrf.mxu0
    %v2197 = vadd.f32 %v1837, %v2196
    %v2198 = vpop.f32.mrf.mxu0
    %v2199 = vpop.f32.mrf.mxu0
    %v2200 = vadd.f32 %v1840, %v2199
    %v2201 = vpop.f32.mrf.mxu0
    %2202 = vmatprep.mubr.bf16.mxu0 %v918
    %2203 = vmatmul.mubr.bf16.gmra.mxu0 %v911
    %v2204 = vpop.f32.mrf.mxu0
    %v2205 = vadd.f32 %v1845, %v2204
    %v2206 = vpop.f32.mrf.mxu0
    %v2207 = vpop.f32.mrf.mxu0
    %v2208 = vadd.f32 %v1848, %v2207
    %v2209 = vpop.f32.mrf.mxu0
    %2210 = vmatprep.mubr.bf16.mxu0 %v925
    %2211 = vmatmul.mubr.bf16.gmra.mxu0 %v918
    %v2212 = vpop.f32.mrf.mxu0
    %v2213 = vadd.f32 %v1853, %v2212
    %v2214 = vpop.f32.mrf.mxu0
    %v2215 = vpop.f32.mrf.mxu0
    %v2216 = vadd.f32 %v1856, %v2215
    %v2217 = vpop.f32.mrf.mxu0
    %2218 = vmatprep.mubr.bf16.mxu0 %v932
    %2219 = vmatmul.mubr.bf16.gmra.mxu0 %v925
    %v2220 = vpop.f32.mrf.mxu0
    %v2221 = vadd.f32 %v1861, %v2220
    %v2222 = vpop.f32.mrf.mxu0
    %v2223 = vpop.f32.mrf.mxu0
    %v2224 = vadd.f32 %v1864, %v2223
    %v2225 = vpop.f32.mrf.mxu0
    %2226 = vmatprep.mubr.bf16.mxu0 %v939
    %2227 = vmatmul.mubr.bf16.gmra.mxu0 %v932
    %v2228 = vpop.f32.mrf.mxu0
    %v2229 = vadd.f32 %v1869, %v2228
    %v2230 = vpop.f32.mrf.mxu0
    %v2231 = vpop.f32.mrf.mxu0
    %v2232 = vadd.f32 %v1872, %v2231
    %v2233 = vpop.f32.mrf.mxu0
    %2234 = vmatprep.mubr.bf16.mxu0 %v946
    %2235 = vmatmul.mubr.bf16.gmra.mxu0 %v939
    %v2236 = vpop.f32.mrf.mxu0
    %v2237 = vadd.f32 %v1877, %v2236
    %v2238 = vpop.f32.mrf.mxu0
    %v2239 = vpop.f32.mrf.mxu0
    %v2240 = vadd.f32 %v1880, %v2239
    %v2241 = vpop.f32.mrf.mxu0
    %2242 = vmatprep.mubr.bf16.mxu0 %v953
    %2243 = vmatmul.mubr.bf16.gmra.mxu0 %v946
    %v2244 = vpop.f32.mrf.mxu0
    %v2245 = vadd.f32 %v1885, %v2244
    %v2246 = vpop.f32.mrf.mxu0
    %v2247 = vpop.f32.mrf.mxu0
    %v2248 = vadd.f32 %v1888, %v2247
    %v2249 = vpop.f32.mrf.mxu0
    %2250 = vmatprep.mubr.bf16.mxu0 %v960
    %2251 = vmatmul.mubr.bf16.gmra.mxu0 %v953
    %v2252 = vpop.f32.mrf.mxu0
    %v2253 = vadd.f32 %v1893, %v2252
    %v2254 = vpop.f32.mrf.mxu0
    %v2255 = vpop.f32.mrf.mxu0
    %v2256 = vadd.f32 %v1896, %v2255
    %v2257 = vpop.f32.mrf.mxu0
    %2258 = vmatprep.mubr.bf16.mxu0 %v967
    %2259 = vmatmul.mubr.bf16.gmra.mxu0 %v960
    %v2260 = vpop.f32.mrf.mxu0
    %v2261 = vadd.f32 %v1901, %v2260
    %v2262 = vpop.f32.mrf.mxu0
    %v2263 = vpop.f32.mrf.mxu0
    %v2264 = vadd.f32 %v1904, %v2263
    %v2265 = vpop.f32.mrf.mxu0
    %2266 = vmatprep.mubr.bf16.mxu0 %v974
    %2267 = vmatmul.mubr.bf16.gmra.mxu0 %v967
    %v2268 = vpop.f32.mrf.mxu0
    %v2269 = vadd.f32 %v1909, %v2268
    %v2270 = vpop.f32.mrf.mxu0
    %v2271 = vpop.f32.mrf.mxu0
    %v2272 = vadd.f32 %v1912, %v2271
    %v2273 = vpop.f32.mrf.mxu0
    %2274 = vmatprep.mubr.bf16.mxu0 %v981
    %2275 = vmatmul.mubr.bf16.gmra.mxu0 %v974
    %v2276 = vpop.f32.mrf.mxu0
    %v2277 = vadd.f32 %v1917, %v2276
    %v2278 = vpop.f32.mrf.mxu0
    %v2279 = vpop.f32.mrf.mxu0
    %v2280 = vadd.f32 %v1920, %v2279
    %v2281 = vpop.f32.mrf.mxu0
    %2282 = vmatprep.mubr.bf16.mxu0 %v988
    %2283 = vmatmul.mubr.bf16.gmra.mxu0 %v981
    %v2284 = vpop.f32.mrf.mxu0
    %v2285 = vadd.f32 %v1925, %v2284
    %v2286 = vpop.f32.mrf.mxu0
    %v2287 = vpop.f32.mrf.mxu0
    %v2288 = vadd.f32 %v1928, %v2287
    %v2289 = vpop.f32.mrf.mxu0
    %2290 = vmatprep.mubr.bf16.mxu0 %v996
    %2291 = vmatmul.mubr.bf16.gmra.mxu0 %v995
    %v2292 = vpop.f32.mrf.mxu0
    %v2293 = vadd.f32 %v1933, %v2292
    %v2294 = vpop.f32.mrf.mxu0
    %v2295 = vpop.f32.mrf.mxu0
    %v2296 = vpop.f32.mrf.mxu0
    %2297 = vdwg.mxu0
    %2298 = vmatprep.subr.bf16.mxu0 0
    %2299 = vmatpush1.bf16.msra.mxu0 %v1473
    %2300 = vmatprep.subr.bf16.mxu0 0
    %2301 = vmatpush1.bf16.msra.mxu0 %v1472
    %2302 = vmatprep.subr.bf16.mxu0 0
    %2303 = vmatpush1.bf16.msra.mxu0 %v1471
    %2304 = vmatprep.subr.bf16.mxu0 0
    %2305 = vmatpush1.bf16.msra.mxu0 %v1470
    %2306 = vmatprep.subr.bf16.mxu0 0
    %2307 = vmatpush1.bf16.msra.mxu0 %v1469
    %2308 = vmatprep.subr.bf16.mxu0 0
    %2309 = vmatpush1.bf16.msra.mxu0 %v1468
    %2310 = vmatprep.subr.bf16.mxu0 0
    %2311 = vmatpush1.bf16.msra.mxu0 %v1467
    %2312 = vmatprep.subr.bf16.mxu0 0
    %2313 = vmatpush1.bf16.msra.mxu0 %v1466
    %2314 = vmatprep.subr.bf16.mxu0 0
    %2315 = vmatpush2.bf16.msra.mxu0 %v1481
    %2316 = vmatprep.subr.bf16.mxu0 0
    %2317 = vmatpush2.bf16.msra.mxu0 %v1480
    %2318 = vmatprep.subr.bf16.mxu0 0
    %2319 = vmatpush2.bf16.msra.mxu0 %v1479
    %2320 = vmatprep.subr.bf16.mxu0 0
    %2321 = vmatpush2.bf16.msra.mxu0 %v1478
    %2322 = vmatprep.subr.bf16.mxu0 0
    %2323 = vmatpush2.bf16.msra.mxu0 %v1477
    %2324 = vmatprep.subr.bf16.mxu0 0
    %2325 = vmatpush2.bf16.msra.mxu0 %v1476
    %2326 = vmatprep.subr.bf16.mxu0 0
    %2327 = vmatpush2.bf16.msra.mxu0 %v1475
    %2328 = vmatprep.subr.bf16.mxu0 0
    %2329 = vmatpush2.bf16.msra.mxu0 %v1474
    %2330 = vmatprep.mubr.bf16.mxu0 %v716
    %2331 = vmatmul.mubr.bf16.gmra.mxu0 %v715
    %v2332 = vpop.f32.mrf.mxu0
    %v2333 = vadd.f32 %v1973, %v2332
    %v2334 = vpop.f32.mrf.mxu0
    %v2335 = vpop.f32.mrf.mxu0
    %v2336 = vadd.f32 %v1976, %v2335
    %v2337 = vpop.f32.mrf.mxu0
    %2338 = vmatprep.mubr.bf16.mxu0 %v717
    %2339 = vmatmul.mubr.bf16.gmra.mxu0 %v723
    %v2340 = vpop.f32.mrf.mxu0
    %v2341 = vadd.f32 %v1981, %v2340
    %v2342 = vpop.f32.mrf.mxu0
    %v2343 = vpop.f32.mrf.mxu0
    %v2344 = vadd.f32 %v1984, %v2343
    %v2345 = vpop.f32.mrf.mxu0
    %2346 = vmatprep.mubr.bf16.mxu0 %v724
    %2347 = vmatmul.mubr.bf16.gmra.mxu0 %v730
    %v2348 = vpop.f32.mrf.mxu0
    %v2349 = vadd.f32 %v1989, %v2348
    %v2350 = vpop.f32.mrf.mxu0
    %v2351 = vpop.f32.mrf.mxu0
    %v2352 = vadd.f32 %v1992, %v2351
    %v2353 = vpop.f32.mrf.mxu0
    %2354 = vmatprep.mubr.bf16.mxu0 %v731
    %2355 = vmatmul.mubr.bf16.gmra.mxu0 %v737
    %v2356 = vpop.f32.mrf.mxu0
    %v2357 = vadd.f32 %v1997, %v2356
    %v2358 = vpop.f32.mrf.mxu0
    %v2359 = vpop.f32.mrf.mxu0
    %v2360 = vadd.f32 %v2000, %v2359
    %v2361 = vpop.f32.mrf.mxu0
    %2362 = vmatprep.mubr.bf16.mxu0 %v738
    %2363 = vmatmul.mubr.bf16.gmra.mxu0 %v744
    %v2364 = vpop.f32.mrf.mxu0
    %v2365 = vadd.f32 %v2005, %v2364
    %v2366 = vpop.f32.mrf.mxu0
    %v2367 = vpop.f32.mrf.mxu0
    %v2368 = vadd.f32 %v2008, %v2367
    %v2369 = vpop.f32.mrf.mxu0
    %2370 = vmatprep.mubr.bf16.mxu0 %v745
    %2371 = vmatmul.mubr.bf16.gmra.mxu0 %v751
    %v2372 = vpop.f32.mrf.mxu0
    %v2373 = vadd.f32 %v2013, %v2372
    %v2374 = vpop.f32.mrf.mxu0
    %v2375 = vpop.f32.mrf.mxu0
    %v2376 = vadd.f32 %v2016, %v2375
    %v2377 = vpop.f32.mrf.mxu0
    %2378 = vmatprep.mubr.bf16.mxu0 %v752
    %2379 = vmatmul.mubr.bf16.gmra.mxu0 %v758
    %v2380 = vpop.f32.mrf.mxu0
    %v2381 = vadd.f32 %v2021, %v2380
    %v2382 = vpop.f32.mrf.mxu0
    %v2383 = vpop.f32.mrf.mxu0
    %v2384 = vadd.f32 %v2024, %v2383
    %v2385 = vpop.f32.mrf.mxu0
    %2386 = vmatprep.mubr.bf16.mxu0 %v759
    %2387 = vmatmul.mubr.bf16.gmra.mxu0 %v765
    %v2388 = vpop.f32.mrf.mxu0
    %v2389 = vadd.f32 %v2029, %v2388
    %v2390 = vpop.f32.mrf.mxu0
    %v2391 = vpop.f32.mrf.mxu0
    %v2392 = vadd.f32 %v2032, %v2391
    %v2393 = vpop.f32.mrf.mxu0
    %2394 = vmatprep.mubr.bf16.mxu0 %v766
    %2395 = vmatmul.mubr.bf16.gmra.mxu0 %v772
    %v2396 = vpop.f32.mrf.mxu0
    %v2397 = vadd.f32 %v2037, %v2396
    %v2398 = vpop.f32.mrf.mxu0
    %v2399 = vpop.f32.mrf.mxu0
    %v2400 = vadd.f32 %v2040, %v2399
    %v2401 = vpop.f32.mrf.mxu0
    %2402 = vmatprep.mubr.bf16.mxu0 %v773
    %2403 = vmatmul.mubr.bf16.gmra.mxu0 %v779
    %v2404 = vpop.f32.mrf.mxu0
    %v2405 = vadd.f32 %v2045, %v2404
    %v2406 = vpop.f32.mrf.mxu0
    %v2407 = vpop.f32.mrf.mxu0
    %v2408 = vadd.f32 %v2048, %v2407
    %v2409 = vpop.f32.mrf.mxu0
    %2410 = vmatprep.mubr.bf16.mxu0 %v780
    %2411 = vmatmul.mubr.bf16.gmra.mxu0 %v786
    %v2412 = vpop.f32.mrf.mxu0
    %v2413 = vadd.f32 %v2053, %v2412
    %v2414 = vpop.f32.mrf.mxu0
    %v2415 = vpop.f32.mrf.mxu0
    %v2416 = vadd.f32 %v2056, %v2415
    %v2417 = vpop.f32.mrf.mxu0
    %2418 = vmatprep.mubr.bf16.mxu0 %v787
    %2419 = vmatmul.mubr.bf16.gmra.mxu0 %v793
    %v2420 = vpop.f32.mrf.mxu0
    %v2421 = vadd.f32 %v2061, %v2420
    %v2422 = vpop.f32.mrf.mxu0
    %v2423 = vpop.f32.mrf.mxu0
    %v2424 = vadd.f32 %v2064, %v2423
    %v2425 = vpop.f32.mrf.mxu0
    %2426 = vmatprep.mubr.bf16.mxu0 %v794
    %2427 = vmatmul.mubr.bf16.gmra.mxu0 %v800
    %v2428 = vpop.f32.mrf.mxu0
    %v2429 = vadd.f32 %v2069, %v2428
    %v2430 = vpop.f32.mrf.mxu0
    %v2431 = vpop.f32.mrf.mxu0
    %v2432 = vadd.f32 %v2072, %v2431
    %v2433 = vpop.f32.mrf.mxu0
    %2434 = vmatprep.mubr.bf16.mxu0 %v801
    %2435 = vmatmul.mubr.bf16.gmra.mxu0 %v807
    %v2436 = vpop.f32.mrf.mxu0
    %v2437 = vadd.f32 %v2077, %v2436
    %v2438 = vpop.f32.mrf.mxu0
    %v2439 = vpop.f32.mrf.mxu0
    %v2440 = vadd.f32 %v2080, %v2439
    %v2441 = vpop.f32.mrf.mxu0
    %2442 = vmatprep.mubr.bf16.mxu0 %v808
    %2443 = vmatmul.mubr.bf16.gmra.mxu0 %v814
    %v2444 = vpop.f32.mrf.mxu0
    %v2445 = vadd.f32 %v2085, %v2444
    %v2446 = vpop.f32.mrf.mxu0
    %v2447 = vpop.f32.mrf.mxu0
    %v2448 = vadd.f32 %v2088, %v2447
    %v2449 = vpop.f32.mrf.mxu0
    %2450 = vmatprep.mubr.bf16.mxu0 %v815
    %2451 = vmatmul.mubr.bf16.gmra.mxu0 %v821
    %v2452 = vpop.f32.mrf.mxu0
    %v2453 = vadd.f32 %v2093, %v2452
    %v2454 = vpop.f32.mrf.mxu0
    %v2455 = vpop.f32.mrf.mxu0
    %v2456 = vadd.f32 %v2096, %v2455
    %v2457 = vpop.f32.mrf.mxu0
    %2458 = vmatprep.mubr.bf16.mxu0 %v822
    %2459 = vmatmul.mubr.bf16.gmra.mxu0 %v828
    %v2460 = vpop.f32.mrf.mxu0
    %v2461 = vadd.f32 %v2101, %v2460
    %v2462 = vpop.f32.mrf.mxu0
    %v2463 = vpop.f32.mrf.mxu0
    %v2464 = vadd.f32 %v2104, %v2463
    %v2465 = vpop.f32.mrf.mxu0
    %2466 = vmatprep.mubr.bf16.mxu0 %v829
    %2467 = vmatmul.mubr.bf16.gmra.mxu0 %v835
    %v2468 = vpop.f32.mrf.mxu0
    %v2469 = vadd.f32 %v2109, %v2468
    %v2470 = vpop.f32.mrf.mxu0
    %v2471 = vpop.f32.mrf.mxu0
    %v2472 = vadd.f32 %v2112, %v2471
    %v2473 = vpop.f32.mrf.mxu0
    %2474 = vmatprep.mubr.bf16.mxu0 %v836
    %2475 = vmatmul.mubr.bf16.gmra.mxu0 %v842
    %v2476 = vpop.f32.mrf.mxu0
    %v2477 = vadd.f32 %v2117, %v2476
    %v2478 = vpop.f32.mrf.mxu0
    %v2479 = vpop.f32.mrf.mxu0
    %v2480 = vadd.f32 %v2120, %v2479
    %v2481 = vpop.f32.mrf.mxu0
    %2482 = vmatprep.mubr.bf16.mxu0 %v843
    %2483 = vmatmul.mubr.bf16.gmra.mxu0 %v849
    %v2484 = vpop.f32.mrf.mxu0
    %v2485 = vadd.f32 %v2125, %v2484
    %v2486 = vpop.f32.mrf.mxu0
    %v2487 = vpop.f32.mrf.mxu0
    %v2488 = vadd.f32 %v2128, %v2487
    %v2489 = vpop.f32.mrf.mxu0
    %2490 = vmatprep.mubr.bf16.mxu0 %v850
    %2491 = vmatmul.mubr.bf16.gmra.mxu0 %v856
    %v2492 = vpop.f32.mrf.mxu0
    %v2493 = vadd.f32 %v2133, %v2492
    %v2494 = vpop.f32.mrf.mxu0
    %v2495 = vpop.f32.mrf.mxu0
    %v2496 = vadd.f32 %v2136, %v2495
    %v2497 = vpop.f32.mrf.mxu0
    %2498 = vmatprep.mubr.bf16.mxu0 %v857
    %2499 = vmatmul.mubr.bf16.gmra.mxu0 %v863
    %v2500 = vpop.f32.mrf.mxu0
    %v2501 = vadd.f32 %v2141, %v2500
    %v2502 = vpop.f32.mrf.mxu0
    %v2503 = vpop.f32.mrf.mxu0
    %v2504 = vadd.f32 %v2144, %v2503
    %v2505 = vpop.f32.mrf.mxu0
    %2506 = vmatprep.mubr.bf16.mxu0 %v864
    %2507 = vmatmul.mubr.bf16.gmra.mxu0 %v870
    %v2508 = vpop.f32.mrf.mxu0
    %v2509 = vadd.f32 %v2149, %v2508
    %v2510 = vpop.f32.mrf.mxu0
    %v2511 = vpop.f32.mrf.mxu0
    %v2512 = vadd.f32 %v2152, %v2511
    %v2513 = vpop.f32.mrf.mxu0
    %2514 = vmatprep.mubr.bf16.mxu0 %v871
    %2515 = vmatmul.mubr.bf16.gmra.mxu0 %v877
    %v2516 = vpop.f32.mrf.mxu0
    %v2517 = vadd.f32 %v2157, %v2516
    %v2518 = vpop.f32.mrf.mxu0
    %v2519 = vpop.f32.mrf.mxu0
    %v2520 = vadd.f32 %v2160, %v2519
    %v2521 = vpop.f32.mrf.mxu0
    %2522 = vmatprep.mubr.bf16.mxu0 %v878
    %2523 = vmatmul.mubr.bf16.gmra.mxu0 %v884
    %v2524 = vpop.f32.mrf.mxu0
    %v2525 = vadd.f32 %v2165, %v2524
    %v2526 = vpop.f32.mrf.mxu0
    %v2527 = vpop.f32.mrf.mxu0
    %v2528 = vadd.f32 %v2168, %v2527
    %v2529 = vpop.f32.mrf.mxu0
    %2530 = vmatprep.mubr.bf16.mxu0 %v885
    %2531 = vmatmul.mubr.bf16.gmra.mxu0 %v891
    %v2532 = vpop.f32.mrf.mxu0
    %v2533 = vadd.f32 %v2173, %v2532
    %v2534 = vpop.f32.mrf.mxu0
    %v2535 = vpop.f32.mrf.mxu0
    %v2536 = vadd.f32 %v2176, %v2535
    %v2537 = vpop.f32.mrf.mxu0
    %2538 = vmatprep.mubr.bf16.mxu0 %v892
    %2539 = vmatmul.mubr.bf16.gmra.mxu0 %v898
    %v2540 = vpop.f32.mrf.mxu0
    %v2541 = vadd.f32 %v2181, %v2540
    %v2542 = vpop.f32.mrf.mxu0
    %v2543 = vpop.f32.mrf.mxu0
    %v2544 = vadd.f32 %v2184, %v2543
    %v2545 = vpop.f32.mrf.mxu0
    %2546 = vmatprep.mubr.bf16.mxu0 %v899
    %2547 = vmatmul.mubr.bf16.gmra.mxu0 %v905
    %v2548 = vpop.f32.mrf.mxu0
    %v2549 = vadd.f32 %v2189, %v2548
    %v2550 = vpop.f32.mrf.mxu0
    %v2551 = vpop.f32.mrf.mxu0
    %v2552 = vadd.f32 %v2192, %v2551
    %v2553 = vpop.f32.mrf.mxu0
    %2554 = vmatprep.mubr.bf16.mxu0 %v906
    %2555 = vmatmul.mubr.bf16.gmra.mxu0 %v912
    %v2556 = vpop.f32.mrf.mxu0
    %v2557 = vadd.f32 %v2197, %v2556
    %v2558 = vpop.f32.mrf.mxu0
    %v2559 = vpop.f32.mrf.mxu0
    %v2560 = vadd.f32 %v2200, %v2559
    %v2561 = vpop.f32.mrf.mxu0
    %2562 = vmatprep.mubr.bf16.mxu0 %v913
    %2563 = vmatmul.mubr.bf16.gmra.mxu0 %v919
    %v2564 = vpop.f32.mrf.mxu0
    %v2565 = vadd.f32 %v2205, %v2564
    %v2566 = vpop.f32.mrf.mxu0
    %v2567 = vpop.f32.mrf.mxu0
    %v2568 = vadd.f32 %v2208, %v2567
    %v2569 = vpop.f32.mrf.mxu0
    %2570 = vmatprep.mubr.bf16.mxu0 %v920
    %2571 = vmatmul.mubr.bf16.gmra.mxu0 %v926
    %v2572 = vpop.f32.mrf.mxu0
    %v2573 = vadd.f32 %v2213, %v2572
    %v2574 = vpop.f32.mrf.mxu0
    %v2575 = vpop.f32.mrf.mxu0
    %v2576 = vadd.f32 %v2216, %v2575
    %v2577 = vpop.f32.mrf.mxu0
    %2578 = vmatprep.mubr.bf16.mxu0 %v927
    %2579 = vmatmul.mubr.bf16.gmra.mxu0 %v933
    %v2580 = vpop.f32.mrf.mxu0
    %v2581 = vadd.f32 %v2221, %v2580
    %v2582 = vpop.f32.mrf.mxu0
    %v2583 = vpop.f32.mrf.mxu0
    %v2584 = vadd.f32 %v2224, %v2583
    %v2585 = vpop.f32.mrf.mxu0
    %2586 = vmatprep.mubr.bf16.mxu0 %v934
    %2587 = vmatmul.mubr.bf16.gmra.mxu0 %v940
    %v2588 = vpop.f32.mrf.mxu0
    %v2589 = vadd.f32 %v2229, %v2588
    %v2590 = vpop.f32.mrf.mxu0
    %v2591 = vpop.f32.mrf.mxu0
    %v2592 = vadd.f32 %v2232, %v2591
    %v2593 = vpop.f32.mrf.mxu0
    %2594 = vmatprep.mubr.bf16.mxu0 %v941
    %2595 = vmatmul.mubr.bf16.gmra.mxu0 %v947
    %v2596 = vpop.f32.mrf.mxu0
    %v2597 = vadd.f32 %v2237, %v2596
    %v2598 = vpop.f32.mrf.mxu0
    %v2599 = vpop.f32.mrf.mxu0
    %v2600 = vadd.f32 %v2240, %v2599
    %v2601 = vpop.f32.mrf.mxu0
    %2602 = vmatprep.mubr.bf16.mxu0 %v948
    %2603 = vmatmul.mubr.bf16.gmra.mxu0 %v954
    %v2604 = vpop.f32.mrf.mxu0
    %v2605 = vadd.f32 %v2245, %v2604
    %v2606 = vpop.f32.mrf.mxu0
    %v2607 = vpop.f32.mrf.mxu0
    %v2608 = vadd.f32 %v2248, %v2607
    %v2609 = vpop.f32.mrf.mxu0
    %2610 = vmatprep.mubr.bf16.mxu0 %v955
    %2611 = vmatmul.mubr.bf16.gmra.mxu0 %v961
    %v2612 = vpop.f32.mrf.mxu0
    %v2613 = vadd.f32 %v2253, %v2612
    %v2614 = vpop.f32.mrf.mxu0
    %v2615 = vpop.f32.mrf.mxu0
    %v2616 = vadd.f32 %v2256, %v2615
    %v2617 = vpop.f32.mrf.mxu0
    %2618 = vmatprep.mubr.bf16.mxu0 %v962
    %2619 = vmatmul.mubr.bf16.gmra.mxu0 %v968
    %v2620 = vpop.f32.mrf.mxu0
    %v2621 = vadd.f32 %v2261, %v2620
    %v2622 = vpop.f32.mrf.mxu0
    %v2623 = vpop.f32.mrf.mxu0
    %v2624 = vadd.f32 %v2264, %v2623
    %v2625 = vpop.f32.mrf.mxu0
    %2626 = vmatprep.mubr.bf16.mxu0 %v969
    %2627 = vmatmul.mubr.bf16.gmra.mxu0 %v975
    %v2628 = vpop.f32.mrf.mxu0
    %v2629 = vadd.f32 %v2269, %v2628
    %v2630 = vpop.f32.mrf.mxu0
    %v2631 = vpop.f32.mrf.mxu0
    %v2632 = vadd.f32 %v2272, %v2631
    %v2633 = vpop.f32.mrf.mxu0
    %2634 = vmatprep.mubr.bf16.mxu0 %v976
    %2635 = vmatmul.mubr.bf16.gmra.mxu0 %v982
    %v2636 = vpop.f32.mrf.mxu0
    %v2637 = vadd.f32 %v2277, %v2636
    %v2638 = vpop.f32.mrf.mxu0
    %v2639 = vpop.f32.mrf.mxu0
    %v2640 = vadd.f32 %v2280, %v2639
    %v2641 = vpop.f32.mrf.mxu0
    %2642 = vmatprep.mubr.bf16.mxu0 %v983
    %2643 = vmatmul.mubr.bf16.gmra.mxu0 %v989
    %v2644 = vpop.f32.mrf.mxu0
    %v2645 = vadd.f32 %v2285, %v2644
    %v2646 = vpop.f32.mrf.mxu0
    %v2647 = vpop.f32.mrf.mxu0
    %v2648 = vadd.f32 %v2288, %v2647
    %v2649 = vpop.f32.mrf.mxu0
    %2650 = vmatprep.mubr.bf16.mxu0 %v998
    %2651 = vmatmul.mubr.bf16.gmra.mxu0 %v997
    %v2652 = vpop.f32.mrf.mxu0
    %v2653 = vadd.f32 %v2293, %v2652
    %v2654 = vpop.f32.mrf.mxu0
    %v2655 = vpop.f32.mrf.mxu0
    %v2656 = vpop.f32.mrf.mxu0
    %2657 = vdwg.mxu0
    %2658 = vmatprep.subr.bf16.mxu0 0
    %2659 = vmatpush1.bf16.msra.mxu0 %v1489
    %2660 = vmatprep.subr.bf16.mxu0 0
    %2661 = vmatpush1.bf16.msra.mxu0 %v1488
    %2662 = vmatprep.subr.bf16.mxu0 0
    %2663 = vmatpush1.bf16.msra.mxu0 %v1487
    %2664 = vmatprep.subr.bf16.mxu0 0
    %2665 = vmatpush1.bf16.msra.mxu0 %v1486
    %2666 = vmatprep.subr.bf16.mxu0 0
    %2667 = vmatpush1.bf16.msra.mxu0 %v1485
    %2668 = vmatprep.subr.bf16.mxu0 0
    %2669 = vmatpush1.bf16.msra.mxu0 %v1484
    %2670 = vmatprep.subr.bf16.mxu0 0
    %2671 = vmatpush1.bf16.msra.mxu0 %v1483
    %2672 = vmatprep.subr.bf16.mxu0 0
    %2673 = vmatpush1.bf16.msra.mxu0 %v1482
    %2674 = vmatprep.subr.bf16.mxu0 0
    %2675 = vmatpush2.bf16.msra.mxu0 %v1497
    %2676 = vmatprep.subr.bf16.mxu0 0
    %2677 = vmatpush2.bf16.msra.mxu0 %v1496
    %2678 = vmatprep.subr.bf16.mxu0 0
    %2679 = vmatpush2.bf16.msra.mxu0 %v1495
    %2680 = vmatprep.subr.bf16.mxu0 0
    %2681 = vmatpush2.bf16.msra.mxu0 %v1494
    %2682 = vmatprep.subr.bf16.mxu0 0
    %2683 = vmatpush2.bf16.msra.mxu0 %v1493
    %2684 = vmatprep.subr.bf16.mxu0 0
    %2685 = vmatpush2.bf16.msra.mxu0 %v1492
    %2686 = vmatprep.subr.bf16.mxu0 0
    %2687 = vmatpush2.bf16.msra.mxu0 %v1491
    %2688 = vmatprep.subr.bf16.mxu0 0
    %2689 = vmatpush2.bf16.msra.mxu0 %v1490
    %2690 = vmatprep.mubr.bf16.mxu0 %v718
    %2691 = vmatmul.mubr.bf16.gmra.mxu0 %v717
    %v2692 = vpop.f32.mrf.mxu0
    %v2693 = vadd.f32 %v2333, %v2692
    %v2694 = vpop.f32.mrf.mxu0
    %v2695 = vpop.f32.mrf.mxu0
    %v2696 = vadd.f32 %v2336, %v2695
    %v2697 = vpop.f32.mrf.mxu0
    %2698 = vmatprep.mubr.bf16.mxu0 %v725
    %2699 = vmatmul.mubr.bf16.gmra.mxu0 %v724
    %v2700 = vpop.f32.mrf.mxu0
    %v2701 = vadd.f32 %v2341, %v2700
    %v2702 = vpop.f32.mrf.mxu0
    %v2703 = vpop.f32.mrf.mxu0
    %v2704 = vadd.f32 %v2344, %v2703
    %v2705 = vpop.f32.mrf.mxu0
    %2706 = vmatprep.mubr.bf16.mxu0 %v732
    %2707 = vmatmul.mubr.bf16.gmra.mxu0 %v731
    %v2708 = vpop.f32.mrf.mxu0
    %v2709 = vadd.f32 %v2349, %v2708
    %v2710 = vpop.f32.mrf.mxu0
    %v2711 = vpop.f32.mrf.mxu0
    %v2712 = vadd.f32 %v2352, %v2711
    %v2713 = vpop.f32.mrf.mxu0
    %2714 = vmatprep.mubr.bf16.mxu0 %v739
    %2715 = vmatmul.mubr.bf16.gmra.mxu0 %v738
    %v2716 = vpop.f32.mrf.mxu0
    %v2717 = vadd.f32 %v2357, %v2716
    %v2718 = vpop.f32.mrf.mxu0
    %v2719 = vpop.f32.mrf.mxu0
    %v2720 = vadd.f32 %v2360, %v2719
    %v2721 = vpop.f32.mrf.mxu0
    %2722 = vmatprep.mubr.bf16.mxu0 %v746
    %2723 = vmatmul.mubr.bf16.gmra.mxu0 %v745
    %v2724 = vpop.f32.mrf.mxu0
    %v2725 = vadd.f32 %v2365, %v2724
    %v2726 = vpop.f32.mrf.mxu0
    %v2727 = vpop.f32.mrf.mxu0
    %v2728 = vadd.f32 %v2368, %v2727
    %v2729 = vpop.f32.mrf.mxu0
    %2730 = vmatprep.mubr.bf16.mxu0 %v753
    %2731 = vmatmul.mubr.bf16.gmra.mxu0 %v752
    %v2732 = vpop.f32.mrf.mxu0
    %v2733 = vadd.f32 %v2373, %v2732
    %v2734 = vpop.f32.mrf.mxu0
    %v2735 = vpop.f32.mrf.mxu0
    %v2736 = vadd.f32 %v2376, %v2735
    %v2737 = vpop.f32.mrf.mxu0
    %2738 = vmatprep.mubr.bf16.mxu0 %v760
    %2739 = vmatmul.mubr.bf16.gmra.mxu0 %v759
    %v2740 = vpop.f32.mrf.mxu0
    %v2741 = vadd.f32 %v2381, %v2740
    %v2742 = vpop.f32.mrf.mxu0
    %v2743 = vpop.f32.mrf.mxu0
    %v2744 = vadd.f32 %v2384, %v2743
    %v2745 = vpop.f32.mrf.mxu0
    %2746 = vmatprep.mubr.bf16.mxu0 %v767
    %2747 = vmatmul.mubr.bf16.gmra.mxu0 %v766
    %v2748 = vpop.f32.mrf.mxu0
    %v2749 = vadd.f32 %v2389, %v2748
    %v2750 = vpop.f32.mrf.mxu0
    %v2751 = vpop.f32.mrf.mxu0
    %v2752 = vadd.f32 %v2392, %v2751
    %v2753 = vpop.f32.mrf.mxu0
    %2754 = vmatprep.mubr.bf16.mxu0 %v774
    %2755 = vmatmul.mubr.bf16.gmra.mxu0 %v773
    %v2756 = vpop.f32.mrf.mxu0
    %v2757 = vadd.f32 %v2397, %v2756
    %v2758 = vpop.f32.mrf.mxu0
    %v2759 = vpop.f32.mrf.mxu0
    %v2760 = vadd.f32 %v2400, %v2759
    %v2761 = vpop.f32.mrf.mxu0
    %2762 = vmatprep.mubr.bf16.mxu0 %v781
    %2763 = vmatmul.mubr.bf16.gmra.mxu0 %v780
    %v2764 = vpop.f32.mrf.mxu0
    %v2765 = vadd.f32 %v2405, %v2764
    %v2766 = vpop.f32.mrf.mxu0
    %v2767 = vpop.f32.mrf.mxu0
    %v2768 = vadd.f32 %v2408, %v2767
    %v2769 = vpop.f32.mrf.mxu0
    %2770 = vmatprep.mubr.bf16.mxu0 %v788
    %2771 = vmatmul.mubr.bf16.gmra.mxu0 %v787
    %v2772 = vpop.f32.mrf.mxu0
    %v2773 = vadd.f32 %v2413, %v2772
    %v2774 = vpop.f32.mrf.mxu0
    %v2775 = vpop.f32.mrf.mxu0
    %v2776 = vadd.f32 %v2416, %v2775
    %v2777 = vpop.f32.mrf.mxu0
    %2778 = vmatprep.mubr.bf16.mxu0 %v795
    %2779 = vmatmul.mubr.bf16.gmra.mxu0 %v794
    %v2780 = vpop.f32.mrf.mxu0
    %v2781 = vadd.f32 %v2421, %v2780
    %v2782 = vpop.f32.mrf.mxu0
    %v2783 = vpop.f32.mrf.mxu0
    %v2784 = vadd.f32 %v2424, %v2783
    %v2785 = vpop.f32.mrf.mxu0
    %2786 = vmatprep.mubr.bf16.mxu0 %v802
    %2787 = vmatmul.mubr.bf16.gmra.mxu0 %v801
    %v2788 = vpop.f32.mrf.mxu0
    %v2789 = vadd.f32 %v2429, %v2788
    %v2790 = vpop.f32.mrf.mxu0
    %v2791 = vpop.f32.mrf.mxu0
    %v2792 = vadd.f32 %v2432, %v2791
    %v2793 = vpop.f32.mrf.mxu0
    %2794 = vmatprep.mubr.bf16.mxu0 %v809
    %2795 = vmatmul.mubr.bf16.gmra.mxu0 %v808
    %v2796 = vpop.f32.mrf.mxu0
    %v2797 = vadd.f32 %v2437, %v2796
    %v2798 = vpop.f32.mrf.mxu0
    %v2799 = vpop.f32.mrf.mxu0
    %v2800 = vadd.f32 %v2440, %v2799
    %v2801 = vpop.f32.mrf.mxu0
    %2802 = vmatprep.mubr.bf16.mxu0 %v816
    %2803 = vmatmul.mubr.bf16.gmra.mxu0 %v815
    %v2804 = vpop.f32.mrf.mxu0
    %v2805 = vadd.f32 %v2445, %v2804
    %v2806 = vpop.f32.mrf.mxu0
    %v2807 = vpop.f32.mrf.mxu0
    %v2808 = vadd.f32 %v2448, %v2807
    %v2809 = vpop.f32.mrf.mxu0
    %2810 = vmatprep.mubr.bf16.mxu0 %v823
    %2811 = vmatmul.mubr.bf16.gmra.mxu0 %v822
    %v2812 = vpop.f32.mrf.mxu0
    %v2813 = vadd.f32 %v2453, %v2812
    %v2814 = vpop.f32.mrf.mxu0
    %v2815 = vpop.f32.mrf.mxu0
    %v2816 = vadd.f32 %v2456, %v2815
    %v2817 = vpop.f32.mrf.mxu0
    %2818 = vmatprep.mubr.bf16.mxu0 %v830
    %2819 = vmatmul.mubr.bf16.gmra.mxu0 %v829
    %v2820 = vpop.f32.mrf.mxu0
    %v2821 = vadd.f32 %v2461, %v2820
    %v2822 = vpop.f32.mrf.mxu0
    %v2823 = vpop.f32.mrf.mxu0
    %v2824 = vadd.f32 %v2464, %v2823
    %v2825 = vpop.f32.mrf.mxu0
    %2826 = vmatprep.mubr.bf16.mxu0 %v837
    %2827 = vmatmul.mubr.bf16.gmra.mxu0 %v836
    %v2828 = vpop.f32.mrf.mxu0
    %v2829 = vadd.f32 %v2469, %v2828
    %v2830 = vpop.f32.mrf.mxu0
    %v2831 = vpop.f32.mrf.mxu0
    %v2832 = vadd.f32 %v2472, %v2831
    %v2833 = vpop.f32.mrf.mxu0
    %2834 = vmatprep.mubr.bf16.mxu0 %v844
    %2835 = vmatmul.mubr.bf16.gmra.mxu0 %v843
    %v2836 = vpop.f32.mrf.mxu0
    %v2837 = vadd.f32 %v2477, %v2836
    %v2838 = vpop.f32.mrf.mxu0
    %v2839 = vpop.f32.mrf.mxu0
    %v2840 = vadd.f32 %v2480, %v2839
    %v2841 = vpop.f32.mrf.mxu0
    %2842 = vmatprep.mubr.bf16.mxu0 %v851
    %2843 = vmatmul.mubr.bf16.gmra.mxu0 %v850
    %v2844 = vpop.f32.mrf.mxu0
    %v2845 = vadd.f32 %v2485, %v2844
    %v2846 = vpop.f32.mrf.mxu0
    %v2847 = vpop.f32.mrf.mxu0
    %v2848 = vadd.f32 %v2488, %v2847
    %v2849 = vpop.f32.mrf.mxu0
    %2850 = vmatprep.mubr.bf16.mxu0 %v858
    %2851 = vmatmul.mubr.bf16.gmra.mxu0 %v857
    %v2852 = vpop.f32.mrf.mxu0
    %v2853 = vadd.f32 %v2493, %v2852
    %v2854 = vpop.f32.mrf.mxu0
    %v2855 = vpop.f32.mrf.mxu0
    %v2856 = vadd.f32 %v2496, %v2855
    %v2857 = vpop.f32.mrf.mxu0
    %2858 = vmatprep.mubr.bf16.mxu0 %v865
    %2859 = vmatmul.mubr.bf16.gmra.mxu0 %v864
    %v2860 = vpop.f32.mrf.mxu0
    %v2861 = vadd.f32 %v2501, %v2860
    %v2862 = vpop.f32.mrf.mxu0
    %v2863 = vpop.f32.mrf.mxu0
    %v2864 = vadd.f32 %v2504, %v2863
    %v2865 = vpop.f32.mrf.mxu0
    %2866 = vmatprep.mubr.bf16.mxu0 %v872
    %2867 = vmatmul.mubr.bf16.gmra.mxu0 %v871
    %v2868 = vpop.f32.mrf.mxu0
    %v2869 = vadd.f32 %v2509, %v2868
    %v2870 = vpop.f32.mrf.mxu0
    %v2871 = vpop.f32.mrf.mxu0
    %v2872 = vadd.f32 %v2512, %v2871
    %v2873 = vpop.f32.mrf.mxu0
    %2874 = vmatprep.mubr.bf16.mxu0 %v879
    %2875 = vmatmul.mubr.bf16.gmra.mxu0 %v878
    %v2876 = vpop.f32.mrf.mxu0
    %v2877 = vadd.f32 %v2517, %v2876
    %v2878 = vpop.f32.mrf.mxu0
    %v2879 = vpop.f32.mrf.mxu0
    %v2880 = vadd.f32 %v2520, %v2879
    %v2881 = vpop.f32.mrf.mxu0
    %2882 = vmatprep.mubr.bf16.mxu0 %v886
    %2883 = vmatmul.mubr.bf16.gmra.mxu0 %v885
    %v2884 = vpop.f32.mrf.mxu0
    %v2885 = vadd.f32 %v2525, %v2884
    %v2886 = vpop.f32.mrf.mxu0
    %v2887 = vpop.f32.mrf.mxu0
    %v2888 = vadd.f32 %v2528, %v2887
    %v2889 = vpop.f32.mrf.mxu0
    %2890 = vmatprep.mubr.bf16.mxu0 %v893
    %2891 = vmatmul.mubr.bf16.gmra.mxu0 %v892
    %v2892 = vpop.f32.mrf.mxu0
    %v2893 = vadd.f32 %v2533, %v2892
    %v2894 = vpop.f32.mrf.mxu0
    %v2895 = vpop.f32.mrf.mxu0
    %v2896 = vadd.f32 %v2536, %v2895
    %v2897 = vpop.f32.mrf.mxu0
    %2898 = vmatprep.mubr.bf16.mxu0 %v900
    %2899 = vmatmul.mubr.bf16.gmra.mxu0 %v899
    %v2900 = vpop.f32.mrf.mxu0
    %v2901 = vadd.f32 %v2541, %v2900
    %v2902 = vpop.f32.mrf.mxu0
    %v2903 = vpop.f32.mrf.mxu0
    %v2904 = vadd.f32 %v2544, %v2903
    %v2905 = vpop.f32.mrf.mxu0
    %2906 = vmatprep.mubr.bf16.mxu0 %v907
    %2907 = vmatmul.mubr.bf16.gmra.mxu0 %v906
    %v2908 = vpop.f32.mrf.mxu0
    %v2909 = vadd.f32 %v2549, %v2908
    %v2910 = vpop.f32.mrf.mxu0
    %v2911 = vpop.f32.mrf.mxu0
    %v2912 = vadd.f32 %v2552, %v2911
    %v2913 = vpop.f32.mrf.mxu0
    %2914 = vmatprep.mubr.bf16.mxu0 %v914
    %2915 = vmatmul.mubr.bf16.gmra.mxu0 %v913
    %v2916 = vpop.f32.mrf.mxu0
    %v2917 = vadd.f32 %v2557, %v2916
    %v2918 = vpop.f32.mrf.mxu0
    %v2919 = vpop.f32.mrf.mxu0
    %v2920 = vadd.f32 %v2560, %v2919
    %v2921 = vpop.f32.mrf.mxu0
    %2922 = vmatprep.mubr.bf16.mxu0 %v921
    %2923 = vmatmul.mubr.bf16.gmra.mxu0 %v920
    %v2924 = vpop.f32.mrf.mxu0
    %v2925 = vadd.f32 %v2565, %v2924
    %v2926 = vpop.f32.mrf.mxu0
    %v2927 = vpop.f32.mrf.mxu0
    %v2928 = vadd.f32 %v2568, %v2927
    %v2929 = vpop.f32.mrf.mxu0
    %2930 = vmatprep.mubr.bf16.mxu0 %v928
    %2931 = vmatmul.mubr.bf16.gmra.mxu0 %v927
    %v2932 = vpop.f32.mrf.mxu0
    %v2933 = vadd.f32 %v2573, %v2932
    %v2934 = vpop.f32.mrf.mxu0
    %v2935 = vpop.f32.mrf.mxu0
    %v2936 = vadd.f32 %v2576, %v2935
    %v2937 = vpop.f32.mrf.mxu0
    %2938 = vmatprep.mubr.bf16.mxu0 %v935
    %2939 = vmatmul.mubr.bf16.gmra.mxu0 %v934
    %v2940 = vpop.f32.mrf.mxu0
    %v2941 = vadd.f32 %v2581, %v2940
    %v2942 = vpop.f32.mrf.mxu0
    %v2943 = vpop.f32.mrf.mxu0
    %v2944 = vadd.f32 %v2584, %v2943
    %v2945 = vpop.f32.mrf.mxu0
    %2946 = vmatprep.mubr.bf16.mxu0 %v942
    %2947 = vmatmul.mubr.bf16.gmra.mxu0 %v941
    %v2948 = vpop.f32.mrf.mxu0
    %v2949 = vadd.f32 %v2589, %v2948
    %v2950 = vpop.f32.mrf.mxu0
    %v2951 = vpop.f32.mrf.mxu0
    %v2952 = vadd.f32 %v2592, %v2951
    %v2953 = vpop.f32.mrf.mxu0
    %2954 = vmatprep.mubr.bf16.mxu0 %v949
    %2955 = vmatmul.mubr.bf16.gmra.mxu0 %v948
    %v2956 = vpop.f32.mrf.mxu0
    %v2957 = vadd.f32 %v2597, %v2956
    %v2958 = vpop.f32.mrf.mxu0
    %v2959 = vpop.f32.mrf.mxu0
    %v2960 = vadd.f32 %v2600, %v2959
    %v2961 = vpop.f32.mrf.mxu0
    %2962 = vmatprep.mubr.bf16.mxu0 %v956
    %2963 = vmatmul.mubr.bf16.gmra.mxu0 %v955
    %v2964 = vpop.f32.mrf.mxu0
    %v2965 = vadd.f32 %v2605, %v2964
    %v2966 = vpop.f32.mrf.mxu0
    %v2967 = vpop.f32.mrf.mxu0
    %v2968 = vadd.f32 %v2608, %v2967
    %v2969 = vpop.f32.mrf.mxu0
    %2970 = vmatprep.mubr.bf16.mxu0 %v963
    %2971 = vmatmul.mubr.bf16.gmra.mxu0 %v962
    %v2972 = vpop.f32.mrf.mxu0
    %v2973 = vadd.f32 %v2613, %v2972
    %v2974 = vpop.f32.mrf.mxu0
    %v2975 = vpop.f32.mrf.mxu0
    %v2976 = vadd.f32 %v2616, %v2975
    %v2977 = vpop.f32.mrf.mxu0
    %2978 = vmatprep.mubr.bf16.mxu0 %v970
    %2979 = vmatmul.mubr.bf16.gmra.mxu0 %v969
    %v2980 = vpop.f32.mrf.mxu0
    %v2981 = vadd.f32 %v2621, %v2980
    %v2982 = vpop.f32.mrf.mxu0
    %v2983 = vpop.f32.mrf.mxu0
    %v2984 = vadd.f32 %v2624, %v2983
    %v2985 = vpop.f32.mrf.mxu0
    %2986 = vmatprep.mubr.bf16.mxu0 %v977
    %2987 = vmatmul.mubr.bf16.gmra.mxu0 %v976
    %v2988 = vpop.f32.mrf.mxu0
    %v2989 = vadd.f32 %v2629, %v2988
    %v2990 = vpop.f32.mrf.mxu0
    %v2991 = vpop.f32.mrf.mxu0
    %v2992 = vadd.f32 %v2632, %v2991
    %v2993 = vpop.f32.mrf.mxu0
    %2994 = vmatprep.mubr.bf16.mxu0 %v984
    %2995 = vmatmul.mubr.bf16.gmra.mxu0 %v983
    %v2996 = vpop.f32.mrf.mxu0
    %v2997 = vadd.f32 %v2637, %v2996
    %v2998 = vpop.f32.mrf.mxu0
    %v2999 = vpop.f32.mrf.mxu0
    %v3000 = vadd.f32 %v2640, %v2999
    %v3001 = vpop.f32.mrf.mxu0
    %3002 = vmatprep.mubr.bf16.mxu0 %v991
    %3003 = vmatmul.mubr.bf16.gmra.mxu0 %v990
    %v3004 = vpop.f32.mrf.mxu0
    %v3005 = vadd.f32 %v2645, %v3004
    %v3006 = vpop.f32.mrf.mxu0
    %v3007 = vpop.f32.mrf.mxu0
    %v3008 = vadd.f32 %v2648, %v3007
    %v3009 = vpop.f32.mrf.mxu0
    %3010 = vmatprep.mubr.bf16.mxu0 %v1000
    %3011 = vmatmul.mubr.bf16.gmra.mxu0 %v999
    %v3012 = vpop.f32.mrf.mxu0
    %v3013 = vadd.f32 %v2653, %v3012
    %v3014 = vpop.f32.mrf.mxu0
    %v3015 = vpop.f32.mrf.mxu0
    %v3016 = vpop.f32.mrf.mxu0
    %3017 = vdwg.mxu0
    %3018 = vmatprep.subr.bf16.mxu0 0
    %3019 = vmatpush1.bf16.msra.mxu0 %v1505
    %3020 = vmatprep.subr.bf16.mxu0 0
    %3021 = vmatpush1.bf16.msra.mxu0 %v1504
    %3022 = vmatprep.subr.bf16.mxu0 0
    %3023 = vmatpush1.bf16.msra.mxu0 %v1503
    %3024 = vmatprep.subr.bf16.mxu0 0
    %3025 = vmatpush1.bf16.msra.mxu0 %v1502
    %3026 = vmatprep.subr.bf16.mxu0 0
    %3027 = vmatpush1.bf16.msra.mxu0 %v1501
    %3028 = vmatprep.subr.bf16.mxu0 0
    %3029 = vmatpush1.bf16.msra.mxu0 %v1500
    %3030 = vmatprep.subr.bf16.mxu0 0
    %3031 = vmatpush1.bf16.msra.mxu0 %v1499
    %3032 = vmatprep.subr.bf16.mxu0 0
    %3033 = vmatpush1.bf16.msra.mxu0 %v1498
    %3034 = vmatprep.subr.bf16.mxu0 0
    %3035 = vmatpush2.bf16.msra.mxu0 0
    %3036 = vmatprep.subr.bf16.mxu0 0
    %3037 = vmatpush2.bf16.msra.mxu0 0
    %3038 = vmatprep.subr.bf16.mxu0 0
    %3039 = vmatpush2.bf16.msra.mxu0 0
    %3040 = vmatprep.subr.bf16.mxu0 0
    %3041 = vmatpush2.bf16.msra.mxu0 0
    %3042 = vmatprep.subr.bf16.mxu0 0
    %3043 = vmatpush2.bf16.msra.mxu0 0
    %3044 = vmatprep.subr.bf16.mxu0 0
    %3045 = vmatpush2.bf16.msra.mxu0 0
    %3046 = vmatprep.subr.bf16.mxu0 0
    %3047 = vmatpush2.bf16.msra.mxu0 0
    %3048 = vmatprep.subr.bf16.mxu0 0
    %3049 = vmatpush2.bf16.msra.mxu0 0
    %3050 = vmatprep.mubr.bf16.mxu0 0
    %3051 = vmatmul.mubr.bf16.gmra.mxu0 %v719
    %v3052 = vpop.f32.mrf.mxu0
    %v3053 = vadd.f32 %v2693, %v3052
    %v3054 = vpop.f32.mrf.mxu0
    %v3055 = vpop.f32.mrf.mxu0
    %v3056 = vadd.f32 %v2696, %v3055
    %v3057 = vpop.f32.mrf.mxu0
    %3058 = vmatprep.mubr.bf16.mxu0 0
    %3059 = vmatmul.mubr.bf16.gmra.mxu0 %v726
    %v3060 = vpop.f32.mrf.mxu0
    %v3061 = vadd.f32 %v2701, %v3060
    %v3062 = vpop.f32.mrf.mxu0
    %v3063 = vpop.f32.mrf.mxu0
    %v3064 = vadd.f32 %v2704, %v3063
    %v3065 = vpop.f32.mrf.mxu0
    %3066 = vmatprep.mubr.bf16.mxu0 0
    %3067 = vmatmul.mubr.bf16.gmra.mxu0 %v733
    %v3068 = vpop.f32.mrf.mxu0
    %v3069 = vadd.f32 %v2709, %v3068
    %v3070 = vpop.f32.mrf.mxu0
    %v3071 = vpop.f32.mrf.mxu0
    %v3072 = vadd.f32 %v2712, %v3071
    %v3073 = vpop.f32.mrf.mxu0
    %3074 = vmatprep.mubr.bf16.mxu0 0
    %3075 = vmatmul.mubr.bf16.gmra.mxu0 %v740
    %v3076 = vpop.f32.mrf.mxu0
    %v3077 = vadd.f32 %v2717, %v3076
    %v3078 = vpop.f32.mrf.mxu0
    %v3079 = vpop.f32.mrf.mxu0
    %v3080 = vadd.f32 %v2720, %v3079
    %v3081 = vpop.f32.mrf.mxu0
    %3082 = vmatprep.mubr.bf16.mxu0 0
    %3083 = vmatmul.mubr.bf16.gmra.mxu0 %v747
    %v3084 = vpop.f32.mrf.mxu0
    %v3085 = vadd.f32 %v2725, %v3084
    %v3086 = vpop.f32.mrf.mxu0
    %v3087 = vpop.f32.mrf.mxu0
    %v3088 = vadd.f32 %v2728, %v3087
    %v3089 = vpop.f32.mrf.mxu0
    %3090 = vmatprep.mubr.bf16.mxu0 0
    %3091 = vmatmul.mubr.bf16.gmra.mxu0 %v754
    %v3092 = vpop.f32.mrf.mxu0
    %v3093 = vadd.f32 %v2733, %v3092
    %v3094 = vpop.f32.mrf.mxu0
    %v3095 = vpop.f32.mrf.mxu0
    %v3096 = vadd.f32 %v2736, %v3095
    %v3097 = vpop.f32.mrf.mxu0
    %3098 = vmatprep.mubr.bf16.mxu0 0
    %3099 = vmatmul.mubr.bf16.gmra.mxu0 %v761
    %v3100 = vpop.f32.mrf.mxu0
    %v3101 = vadd.f32 %v2741, %v3100
    %v3102 = vpop.f32.mrf.mxu0
    %v3103 = vpop.f32.mrf.mxu0
    %v3104 = vadd.f32 %v2744, %v3103
    %v3105 = vpop.f32.mrf.mxu0
    %3106 = vmatprep.mubr.bf16.mxu0 0
    %3107 = vmatmul.mubr.bf16.gmra.mxu0 %v768
    %v3108 = vpop.f32.mrf.mxu0
    %v3109 = vadd.f32 %v2749, %v3108
    %v3110 = vpop.f32.mrf.mxu0
    %v3111 = vpop.f32.mrf.mxu0
    %v3112 = vadd.f32 %v2752, %v3111
    %v3113 = vpop.f32.mrf.mxu0
    %3114 = vmatprep.mubr.bf16.mxu0 0
    %3115 = vmatmul.mubr.bf16.gmra.mxu0 %v775
    %v3116 = vpop.f32.mrf.mxu0
    %v3117 = vadd.f32 %v2757, %v3116
    %v3118 = vpop.f32.mrf.mxu0
    %v3119 = vpop.f32.mrf.mxu0
    %v3120 = vadd.f32 %v2760, %v3119
    %v3121 = vpop.f32.mrf.mxu0
    %3122 = vmatprep.mubr.bf16.mxu0 0
    %3123 = vmatmul.mubr.bf16.gmra.mxu0 %v782
    %v3124 = vpop.f32.mrf.mxu0
    %v3125 = vadd.f32 %v2765, %v3124
    %v3126 = vpop.f32.mrf.mxu0
    %v3127 = vpop.f32.mrf.mxu0
    %v3128 = vadd.f32 %v2768, %v3127
    %v3129 = vpop.f32.mrf.mxu0
    %3130 = vmatprep.mubr.bf16.mxu0 0
    %3131 = vmatmul.mubr.bf16.gmra.mxu0 %v789
    %v3132 = vpop.f32.mrf.mxu0
    %v3133 = vadd.f32 %v2773, %v3132
    %v3134 = vpop.f32.mrf.mxu0
    %v3135 = vpop.f32.mrf.mxu0
    %v3136 = vadd.f32 %v2776, %v3135
    %v3137 = vpop.f32.mrf.mxu0
    %3138 = vmatprep.mubr.bf16.mxu0 0
    %3139 = vmatmul.mubr.bf16.gmra.mxu0 %v796
    %v3140 = vpop.f32.mrf.mxu0
    %v3141 = vadd.f32 %v2781, %v3140
    %v3142 = vpop.f32.mrf.mxu0
    %v3143 = vpop.f32.mrf.mxu0
    %v3144 = vadd.f32 %v2784, %v3143
    %v3145 = vpop.f32.mrf.mxu0
    %3146 = vmatprep.mubr.bf16.mxu0 0
    %3147 = vmatmul.mubr.bf16.gmra.mxu0 %v803
    %v3148 = vpop.f32.mrf.mxu0
    %v3149 = vadd.f32 %v2789, %v3148
    %v3150 = vpop.f32.mrf.mxu0
    %v3151 = vpop.f32.mrf.mxu0
    %v3152 = vadd.f32 %v2792, %v3151
    %v3153 = vpop.f32.mrf.mxu0
    %3154 = vmatprep.mubr.bf16.mxu0 0
    %3155 = vmatmul.mubr.bf16.gmra.mxu0 %v810
    %v3156 = vpop.f32.mrf.mxu0
    %v3157 = vadd.f32 %v2797, %v3156
    %v3158 = vpop.f32.mrf.mxu0
    %v3159 = vpop.f32.mrf.mxu0
    %v3160 = vadd.f32 %v2800, %v3159
    %v3161 = vpop.f32.mrf.mxu0
    %3162 = vmatprep.mubr.bf16.mxu0 0
    %3163 = vmatmul.mubr.bf16.gmra.mxu0 %v817
    %v3164 = vpop.f32.mrf.mxu0
    %v3165 = vadd.f32 %v2805, %v3164
    %v3166 = vpop.f32.mrf.mxu0
    %v3167 = vpop.f32.mrf.mxu0
    %v3168 = vadd.f32 %v2808, %v3167
    %v3169 = vpop.f32.mrf.mxu0
    %3170 = vmatprep.mubr.bf16.mxu0 0
    %3171 = vmatmul.mubr.bf16.gmra.mxu0 %v824
    %v3172 = vpop.f32.mrf.mxu0
    %v3173 = vadd.f32 %v2813, %v3172
    %v3174 = vpop.f32.mrf.mxu0
    %v3175 = vpop.f32.mrf.mxu0
    %v3176 = vadd.f32 %v2816, %v3175
    %v3177 = vpop.f32.mrf.mxu0
    %3178 = vmatprep.mubr.bf16.mxu0 0
    %3179 = vmatmul.mubr.bf16.gmra.mxu0 %v831
    %v3180 = vpop.f32.mrf.mxu0
    %v3181 = vadd.f32 %v2821, %v3180
    %v3182 = vpop.f32.mrf.mxu0
    %v3183 = vpop.f32.mrf.mxu0
    %v3184 = vadd.f32 %v2824, %v3183
    %v3185 = vpop.f32.mrf.mxu0
    %3186 = vmatprep.mubr.bf16.mxu0 0
    %3187 = vmatmul.mubr.bf16.gmra.mxu0 %v838
    %v3188 = vpop.f32.mrf.mxu0
    %v3189 = vadd.f32 %v2829, %v3188
    %v3190 = vpop.f32.mrf.mxu0
    %v3191 = vpop.f32.mrf.mxu0
    %v3192 = vadd.f32 %v2832, %v3191
    %v3193 = vpop.f32.mrf.mxu0
    %3194 = vmatprep.mubr.bf16.mxu0 0
    %3195 = vmatmul.mubr.bf16.gmra.mxu0 %v845
    %v3196 = vpop.f32.mrf.mxu0
    %v3197 = vadd.f32 %v2837, %v3196
    %v3198 = vpop.f32.mrf.mxu0
    %v3199 = vpop.f32.mrf.mxu0
    %v3200 = vadd.f32 %v2840, %v3199
    %v3201 = vpop.f32.mrf.mxu0
    %3202 = vmatprep.mubr.bf16.mxu0 0
    %3203 = vmatmul.mubr.bf16.gmra.mxu0 %v852
    %v3204 = vpop.f32.mrf.mxu0
    %v3205 = vadd.f32 %v2845, %v3204
    %v3206 = vpop.f32.mrf.mxu0
    %v3207 = vpop.f32.mrf.mxu0
    %v3208 = vadd.f32 %v2848, %v3207
    %v3209 = vpop.f32.mrf.mxu0
    %3210 = vmatprep.mubr.bf16.mxu0 0
    %3211 = vmatmul.mubr.bf16.gmra.mxu0 %v859
    %v3212 = vpop.f32.mrf.mxu0
    %v3213 = vadd.f32 %v2853, %v3212
    %v3214 = vpop.f32.mrf.mxu0
    %v3215 = vpop.f32.mrf.mxu0
    %v3216 = vadd.f32 %v2856, %v3215
    %v3217 = vpop.f32.mrf.mxu0
    %3218 = vmatprep.mubr.bf16.mxu0 0
    %3219 = vmatmul.mubr.bf16.gmra.mxu0 %v866
    %v3220 = vpop.f32.mrf.mxu0
    %v3221 = vadd.f32 %v2861, %v3220
    %v3222 = vpop.f32.mrf.mxu0
    %v3223 = vpop.f32.mrf.mxu0
    %v3224 = vadd.f32 %v2864, %v3223
    %v3225 = vpop.f32.mrf.mxu0
    %3226 = vmatprep.mubr.bf16.mxu0 0
    %3227 = vmatmul.mubr.bf16.gmra.mxu0 %v873
    %v3228 = vpop.f32.mrf.mxu0
    %v3229 = vadd.f32 %v2869, %v3228
    %v3230 = vpop.f32.mrf.mxu0
    %v3231 = vpop.f32.mrf.mxu0
    %v3232 = vadd.f32 %v2872, %v3231
    %v3233 = vpop.f32.mrf.mxu0
    %3234 = vmatprep.mubr.bf16.mxu0 0
    %3235 = vmatmul.mubr.bf16.gmra.mxu0 %v880
    %v3236 = vpop.f32.mrf.mxu0
    %v3237 = vadd.f32 %v2877, %v3236
    %v3238 = vpop.f32.mrf.mxu0
    %v3239 = vpop.f32.mrf.mxu0
    %v3240 = vadd.f32 %v2880, %v3239
    %v3241 = vpop.f32.mrf.mxu0
    %3242 = vmatprep.mubr.bf16.mxu0 0
    %3243 = vmatmul.mubr.bf16.gmra.mxu0 %v887
    %v3244 = vpop.f32.mrf.mxu0
    %v3245 = vadd.f32 %v2885, %v3244
    %v3246 = vpop.f32.mrf.mxu0
    %v3247 = vpop.f32.mrf.mxu0
    %v3248 = vadd.f32 %v2888, %v3247
    %v3249 = vpop.f32.mrf.mxu0
    %3250 = vmatprep.mubr.bf16.mxu0 0
    %3251 = vmatmul.mubr.bf16.gmra.mxu0 %v894
    %v3252 = vpop.f32.mrf.mxu0
    %v3253 = vadd.f32 %v2893, %v3252
    %v3254 = vpop.f32.mrf.mxu0
    %v3255 = vpop.f32.mrf.mxu0
    %v3256 = vadd.f32 %v2896, %v3255
    %v3257 = vpop.f32.mrf.mxu0
    %3258 = vmatprep.mubr.bf16.mxu0 0
    %3259 = vmatmul.mubr.bf16.gmra.mxu0 %v901
    %v3260 = vpop.f32.mrf.mxu0
    %v3261 = vadd.f32 %v2901, %v3260
    %v3262 = vpop.f32.mrf.mxu0
    %v3263 = vpop.f32.mrf.mxu0
    %v3264 = vadd.f32 %v2904, %v3263
    %v3265 = vpop.f32.mrf.mxu0
    %3266 = vmatprep.mubr.bf16.mxu0 0
    %3267 = vmatmul.mubr.bf16.gmra.mxu0 %v908
    %v3268 = vpop.f32.mrf.mxu0
    %v3269 = vadd.f32 %v2909, %v3268
    %v3270 = vpop.f32.mrf.mxu0
    %v3271 = vpop.f32.mrf.mxu0
    %v3272 = vadd.f32 %v2912, %v3271
    %v3273 = vpop.f32.mrf.mxu0
    %3274 = vmatprep.mubr.bf16.mxu0 0
    %3275 = vmatmul.mubr.bf16.gmra.mxu0 %v915
    %v3276 = vpop.f32.mrf.mxu0
    %v3277 = vadd.f32 %v2917, %v3276
    %v3278 = vpop.f32.mrf.mxu0
    %v3279 = vpop.f32.mrf.mxu0
    %v3280 = vadd.f32 %v2920, %v3279
    %v3281 = vpop.f32.mrf.mxu0
    %3282 = vmatprep.mubr.bf16.mxu0 0
    %3283 = vmatmul.mubr.bf16.gmra.mxu0 %v922
    %v3284 = vpop.f32.mrf.mxu0
    %v3285 = vadd.f32 %v2925, %v3284
    %v3286 = vpop.f32.mrf.mxu0
    %v3287 = vpop.f32.mrf.mxu0
    %v3288 = vadd.f32 %v2928, %v3287
    %v3289 = vpop.f32.mrf.mxu0
    %3290 = vmatprep.mubr.bf16.mxu0 0
    %3291 = vmatmul.mubr.bf16.gmra.mxu0 %v929
    %v3292 = vpop.f32.mrf.mxu0
    %v3293 = vadd.f32 %v2933, %v3292
    %v3294 = vpop.f32.mrf.mxu0
    %v3295 = vpop.f32.mrf.mxu0
    %v3296 = vadd.f32 %v2936, %v3295
    %v3297 = vpop.f32.mrf.mxu0
    %3298 = vmatprep.mubr.bf16.mxu0 0
    %3299 = vmatmul.mubr.bf16.gmra.mxu0 %v936
    %v3300 = vpop.f32.mrf.mxu0
    %v3301 = vadd.f32 %v2941, %v3300
    %v3302 = vpop.f32.mrf.mxu0
    %v3303 = vpop.f32.mrf.mxu0
    %v3304 = vadd.f32 %v2944, %v3303
    %v3305 = vpop.f32.mrf.mxu0
    %3306 = vmatprep.mubr.bf16.mxu0 0
    %3307 = vmatmul.mubr.bf16.gmra.mxu0 %v943
    %v3308 = vpop.f32.mrf.mxu0
    %v3309 = vadd.f32 %v2949, %v3308
    %v3310 = vpop.f32.mrf.mxu0
    %v3311 = vpop.f32.mrf.mxu0
    %v3312 = vadd.f32 %v2952, %v3311
    %v3313 = vpop.f32.mrf.mxu0
    %3314 = vmatprep.mubr.bf16.mxu0 0
    %3315 = vmatmul.mubr.bf16.gmra.mxu0 %v950
    %v3316 = vpop.f32.mrf.mxu0
    %v3317 = vadd.f32 %v2957, %v3316
    %v3318 = vpop.f32.mrf.mxu0
    %v3319 = vpop.f32.mrf.mxu0
    %v3320 = vadd.f32 %v2960, %v3319
    %v3321 = vpop.f32.mrf.mxu0
    %3322 = vmatprep.mubr.bf16.mxu0 0
    %3323 = vmatmul.mubr.bf16.gmra.mxu0 %v957
    %v3324 = vpop.f32.mrf.mxu0
    %v3325 = vadd.f32 %v2965, %v3324
    %v3326 = vpop.f32.mrf.mxu0
    %v3327 = vpop.f32.mrf.mxu0
    %v3328 = vadd.f32 %v2968, %v3327
    %v3329 = vpop.f32.mrf.mxu0
    %3330 = vmatprep.mubr.bf16.mxu0 0
    %3331 = vmatmul.mubr.bf16.gmra.mxu0 %v964
    %v3332 = vpop.f32.mrf.mxu0
    %v3333 = vadd.f32 %v2973, %v3332
    %v3334 = vpop.f32.mrf.mxu0
    %v3335 = vpop.f32.mrf.mxu0
    %v3336 = vadd.f32 %v2976, %v3335
    %v3337 = vpop.f32.mrf.mxu0
    %3338 = vmatprep.mubr.bf16.mxu0 0
    %3339 = vmatmul.mubr.bf16.gmra.mxu0 %v971
    %v3340 = vpop.f32.mrf.mxu0
    %v3341 = vadd.f32 %v2981, %v3340
    %v3342 = vpop.f32.mrf.mxu0
    %v3343 = vpop.f32.mrf.mxu0
    %v3344 = vadd.f32 %v2984, %v3343
    %v3345 = vpop.f32.mrf.mxu0
    %3346 = vmatprep.mubr.bf16.mxu0 0
    %3347 = vmatmul.mubr.bf16.gmra.mxu0 %v978
    %v3348 = vpop.f32.mrf.mxu0
    %v3349 = vadd.f32 %v2989, %v3348
    %v3350 = vpop.f32.mrf.mxu0
    %v3351 = vpop.f32.mrf.mxu0
    %v3352 = vadd.f32 %v2992, %v3351
    %v3353 = vpop.f32.mrf.mxu0
    %3354 = vmatprep.mubr.bf16.mxu0 0
    %3355 = vmatmul.mubr.bf16.gmra.mxu0 %v985
    %v3356 = vpop.f32.mrf.mxu0
    %v3357 = vadd.f32 %v2997, %v3356
    %v3358 = vpop.f32.mrf.mxu0
    %v3359 = vpop.f32.mrf.mxu0
    %v3360 = vadd.f32 %v3000, %v3359
    %v3361 = vpop.f32.mrf.mxu0
    %3362 = vmatprep.mubr.bf16.mxu0 0
    %3363 = vmatmul.mubr.bf16.gmra.mxu0 %v992
    %v3364 = vpop.f32.mrf.mxu0
    %v3365 = vadd.f32 %v3005, %v3364
    %v3366 = vpop.f32.mrf.mxu0
    %v3367 = vpop.f32.mrf.mxu0
    %v3368 = vadd.f32 %v3008, %v3367
    %v3369 = vpop.f32.mrf.mxu0
    %3370 = vmatprep.mubr.bf16.mxu0 0
    %3371 = vmatmul.mubr.bf16.gmra.mxu0 %v1001
    %v3372 = vpop.f32.mrf.mxu0
    %v3373 = vadd.f32 %v3013, %v3372
    %v3374 = vpop.f32.mrf.mxu0
    %v3375 = vpop.f32.mrf.mxu0
    %v3376 = vpop.f32.mrf.mxu0
    %3377 = vdwg.mxu0
    %v3378 = vld [vmem:[%s3] sm:$0x1]
    %v3379 = vld [vmem:[%s4] sm:$0x1]
    %3381 = vset.pattern.permute.xlu0 0
    %3382 = vperm.xlu0 %3381, %v59
    %v3383 = vpop.permute.xlu0 %3382
    %3386 = vset.pattern.permute.xlu0 0
    %3387 = vperm.xlu0 %3386, %v60
    %v3388 = vpop.permute.xlu0 %3387
    %3391 = vset.pattern.permute.xlu0 0
    %3392 = vperm.xlu0 %3391, %v61
    %v3393 = vpop.permute.xlu0 %3392
    %3396 = vset.pattern.permute.xlu0 0
    %3397 = vperm.xlu0 %3396, %v62
    %v3398 = vpop.permute.xlu0 %3397
    %3401 = vset.pattern.permute.xlu0 0
    %3402 = vperm.xlu0 %3401, %v63
    %v3403 = vpop.permute.xlu0 %3402
    %3406 = vset.pattern.permute.xlu0 0
    %3407 = vperm.xlu0 %3406, %v64
    %v3408 = vpop.permute.xlu0 %3407
    %3411 = vset.pattern.permute.xlu0 0
    %3412 = vperm.xlu0 %3411, %v65
    %v3413 = vpop.permute.xlu0 %3412
    %3416 = vset.pattern.permute.xlu0 0
    %3417 = vperm.xlu0 %3416, %v66
    %v3418 = vpop.permute.xlu0 %3417
    %3421 = vset.pattern.permute.xlu0 0
    %3422 = vperm.xlu0 %3421, %v67
    %v3423 = vpop.permute.xlu0 %3422
    %3426 = vset.pattern.permute.xlu0 0
    %3427 = vperm.xlu0 %3426, %v68
    %v3428 = vpop.permute.xlu0 %3427
    %3431 = vset.pattern.permute.xlu0 0
    %3432 = vperm.xlu0 %3431, %v69
    %v3433 = vpop.permute.xlu0 %3432
    %3436 = vset.pattern.permute.xlu0 0
    %3437 = vperm.xlu0 %3436, %v70
    %v3438 = vpop.permute.xlu0 %3437
    %3441 = vset.pattern.permute.xlu0 0
    %3442 = vperm.xlu0 %3441, %v71
    %v3443 = vpop.permute.xlu0 %3442
    %3446 = vset.pattern.permute.xlu0 0
    %3447 = vperm.xlu0 %3446, %v72
    %v3448 = vpop.permute.xlu0 %3447
    %3451 = vset.pattern.permute.xlu0 0
    %3452 = vperm.xlu0 %3451, %v73
    %v3453 = vpop.permute.xlu0 %3452
    %3456 = vset.pattern.permute.xlu0 0
    %3457 = vperm.xlu0 %3456, %v74
    %v3458 = vpop.permute.xlu0 %3457
    %3461 = vset.pattern.permute.xlu0 0
    %3462 = vperm.xlu0 %3461, %v75
    %v3463 = vpop.permute.xlu0 %3462
    %3466 = vset.pattern.permute.xlu0 0
    %3467 = vperm.xlu0 %3466, %v76
    %v3468 = vpop.permute.xlu0 %3467
    %3471 = vset.pattern.permute.xlu0 0
    %3472 = vperm.xlu0 %3471, %v77
    %v3473 = vpop.permute.xlu0 %3472
    %3476 = vset.pattern.permute.xlu0 0
    %3477 = vperm.xlu0 %3476, %v78
    %v3478 = vpop.permute.xlu0 %3477
    %3481 = vset.pattern.permute.xlu0 0
    %3482 = vperm.xlu0 %3481, %v79
    %v3483 = vpop.permute.xlu0 %3482
    %3486 = vset.pattern.permute.xlu0 0
    %3487 = vperm.xlu0 %3486, %v80
    %v3488 = vpop.permute.xlu0 %3487
    %3491 = vset.pattern.permute.xlu0 0
    %3492 = vperm.xlu0 %3491, %v81
    %v3493 = vpop.permute.xlu0 %3492
    %3496 = vset.pattern.permute.xlu0 0
    %3497 = vperm.xlu0 %3496, %v82
    %v3498 = vpop.permute.xlu0 %3497
    %3501 = vset.pattern.permute.xlu0 0
    %3502 = vperm.xlu0 %3501, %v83
    %v3503 = vpop.permute.xlu0 %3502
    %3506 = vset.pattern.permute.xlu0 0
    %3507 = vperm.xlu0 %3506, %v84
    %v3508 = vpop.permute.xlu0 %3507
    %3511 = vset.pattern.permute.xlu0 0
    %3512 = vperm.xlu0 %3511, %v85
    %v3513 = vpop.permute.xlu0 %3512
    %3516 = vset.pattern.permute.xlu0 0
    %3517 = vperm.xlu0 %3516, %v86
    %v3518 = vpop.permute.xlu0 %3517
    %3521 = vset.pattern.permute.xlu0 0
    %3522 = vperm.xlu0 %3521, %v87
    %v3523 = vpop.permute.xlu0 %3522
    %3526 = vset.pattern.permute.xlu0 0
    %3527 = vperm.xlu0 %3526, %v88
    %v3528 = vpop.permute.xlu0 %3527
    %3531 = vset.pattern.permute.xlu0 0
    %3532 = vperm.xlu0 %3531, %v89
    %v3533 = vpop.permute.xlu0 %3532
    %3536 = vset.pattern.permute.xlu0 0
    %3537 = vperm.xlu0 %3536, %v90
    %v3538 = vpop.permute.xlu0 %3537
    %3541 = vset.pattern.permute.xlu0 0
    %3542 = vperm.xlu0 %3541, %v91
    %v3543 = vpop.permute.xlu0 %3542
    %3546 = vset.pattern.permute.xlu0 0
    %3547 = vperm.xlu0 %3546, %v92
    %v3548 = vpop.permute.xlu0 %3547
    %3551 = vset.pattern.permute.xlu0 0
    %3552 = vperm.xlu0 %3551, %v93
    %v3553 = vpop.permute.xlu0 %3552
    %3556 = vset.pattern.permute.xlu0 0
    %3557 = vperm.xlu0 %3556, %v94
    %v3558 = vpop.permute.xlu0 %3557
    %3561 = vset.pattern.permute.xlu0 0
    %3562 = vperm.xlu0 %3561, %v95
    %v3563 = vpop.permute.xlu0 %3562
    %3566 = vset.pattern.permute.xlu0 0
    %3567 = vperm.xlu0 %3566, %v96
    %v3568 = vpop.permute.xlu0 %3567
    %3571 = vset.pattern.permute.xlu0 0
    %3572 = vperm.xlu0 %3571, %v97
    %v3573 = vpop.permute.xlu0 %3572
    %3576 = vset.pattern.permute.xlu0 0
    %3577 = vperm.xlu0 %3576, %v98
    %v3578 = vpop.permute.xlu0 %3577
    %3581 = vset.pattern.permute.xlu0 0
    %3582 = vperm.xlu0 %3581, %v99
    %v3583 = vpop.permute.xlu0 %3582
    %3586 = vset.pattern.permute.xlu0 0
    %3587 = vperm.xlu0 %3586, %v100
    %v3588 = vpop.permute.xlu0 %3587
    %3591 = vset.pattern.permute.xlu0 0
    %3592 = vperm.xlu0 %3591, %v101
    %v3593 = vpop.permute.xlu0 %3592
    %3596 = vset.pattern.permute.xlu0 0
    %3597 = vperm.xlu0 %3596, %v102
    %v3598 = vpop.permute.xlu0 %3597
    %3601 = vset.pattern.permute.xlu0 0
    %3602 = vperm.xlu0 %3601, %v103
    %v3603 = vpop.permute.xlu0 %3602
    %3606 = vset.pattern.permute.xlu0 0
    %3607 = vperm.xlu0 %3606, %v104
    %v3608 = vpop.permute.xlu0 %3607
    %3611 = vset.pattern.permute.xlu0 0
    %3612 = vperm.xlu0 %3611, %v105
    %v3613 = vpop.permute.xlu0 %3612
    %3616 = vset.pattern.permute.xlu0 0
    %3617 = vperm.xlu0 %3616, %v106
    %v3618 = vpop.permute.xlu0 %3617
    %3621 = vset.pattern.permute.xlu0 0
    %3622 = vperm.xlu0 %3621, %v107
    %v3623 = vpop.permute.xlu0 %3622
    %3626 = vset.pattern.permute.xlu0 0
    %3627 = vperm.xlu0 %3626, %v108
    %v3628 = vpop.permute.xlu0 %3627
    %3631 = vset.pattern.permute.xlu0 0
    %3632 = vperm.xlu0 %3631, %v109
    %v3633 = vpop.permute.xlu0 %3632
    %3636 = vset.pattern.permute.xlu0 0
    %3637 = vperm.xlu0 %3636, %v110
    %v3638 = vpop.permute.xlu0 %3637
    %3641 = vset.pattern.permute.xlu0 0
    %3642 = vperm.xlu0 %3641, %v111
    %v3643 = vpop.permute.xlu0 %3642
    %3646 = vset.pattern.permute.xlu0 0
    %3647 = vperm.xlu0 %3646, %v112
    %v3648 = vpop.permute.xlu0 %3647
    %3651 = vset.pattern.permute.xlu0 0
    %3652 = vperm.xlu0 %3651, %v113
    %v3653 = vpop.permute.xlu0 %3652
    %3656 = vset.pattern.permute.xlu0 0
    %3657 = vperm.xlu0 %3656, %v114
    %v3658 = vpop.permute.xlu0 %3657
    %3661 = vset.pattern.permute.xlu0 0
    %3662 = vperm.xlu0 %3661, %v115
    %v3663 = vpop.permute.xlu0 %3662
    %3666 = vset.pattern.permute.xlu0 0
    %3667 = vperm.xlu0 %3666, %v116
    %v3668 = vpop.permute.xlu0 %3667
    %3671 = vset.pattern.permute.xlu0 0
    %3672 = vperm.xlu0 %3671, %v117
    %v3673 = vpop.permute.xlu0 %3672
    %3676 = vset.pattern.permute.xlu0 0
    %3677 = vperm.xlu0 %3676, %v118
    %v3678 = vpop.permute.xlu0 %3677
    %3681 = vset.pattern.permute.xlu0 0
    %3682 = vperm.xlu0 %3681, %v119
    %v3683 = vpop.permute.xlu0 %3682
    %3686 = vset.pattern.permute.xlu0 0
    %3687 = vperm.xlu0 %3686, %v120
    %v3688 = vpop.permute.xlu0 %3687
    %3691 = vset.pattern.permute.xlu0 0
    %3692 = vperm.xlu0 %3691, %v121
    %v3693 = vpop.permute.xlu0 %3692
    %3696 = vset.pattern.permute.xlu0 0
    %3697 = vperm.xlu0 %3696, %v122
    %v3698 = vpop.permute.xlu0 %3697
    %3701 = vset.pattern.permute.xlu0 0
    %3702 = vperm.xlu0 %3701, %v123
    %v3703 = vpop.permute.xlu0 %3702
    %3706 = vset.pattern.permute.xlu0 0
    %3707 = vperm.xlu0 %3706, %v124
    %v3708 = vpop.permute.xlu0 %3707
    %3711 = vset.pattern.permute.xlu0 0
    %3712 = vperm.xlu0 %3711, %v125
    %v3713 = vpop.permute.xlu0 %3712
    %3716 = vset.pattern.permute.xlu0 0
    %3717 = vperm.xlu0 %3716, %v126
    %v3718 = vpop.permute.xlu0 %3717
    %3721 = vset.pattern.permute.xlu0 0
    %3722 = vperm.xlu0 %3721, %v127
    %v3723 = vpop.permute.xlu0 %3722
    %3726 = vset.pattern.permute.xlu0 0
    %3727 = vperm.xlu0 %3726, %v128
    %v3728 = vpop.permute.xlu0 %3727
    %3731 = vset.pattern.permute.xlu0 0
    %3732 = vperm.xlu0 %3731, %v129
    %v3733 = vpop.permute.xlu0 %3732
    %3736 = vset.pattern.permute.xlu0 0
    %3737 = vperm.xlu0 %3736, %v130
    %v3738 = vpop.permute.xlu0 %3737
    %3741 = vset.pattern.permute.xlu0 0
    %3742 = vperm.xlu0 %3741, %v131
    %v3743 = vpop.permute.xlu0 %3742
    %3746 = vset.pattern.permute.xlu0 0
    %3747 = vperm.xlu0 %3746, %v132
    %v3748 = vpop.permute.xlu0 %3747
    %3751 = vset.pattern.permute.xlu0 0
    %3752 = vperm.xlu0 %3751, %v133
    %v3753 = vpop.permute.xlu0 %3752
    %3756 = vset.pattern.permute.xlu0 0
    %3757 = vperm.xlu0 %3756, %v134
    %v3758 = vpop.permute.xlu0 %3757
    %3761 = vset.pattern.permute.xlu0 0
    %3762 = vperm.xlu0 %3761, %v135
    %v3763 = vpop.permute.xlu0 %3762
    %3766 = vset.pattern.permute.xlu0 0
    %3767 = vperm.xlu0 %3766, %v136
    %v3768 = vpop.permute.xlu0 %3767
    %3771 = vset.pattern.permute.xlu0 0
    %3772 = vperm.xlu0 %3771, %v137
    %v3773 = vpop.permute.xlu0 %3772
    %3776 = vset.pattern.permute.xlu0 0
    %3777 = vperm.xlu0 %3776, %v138
    %v3778 = vpop.permute.xlu0 %3777
    %3781 = vset.pattern.permute.xlu0 0
    %3782 = vperm.xlu0 %3781, %v139
    %v3783 = vpop.permute.xlu0 %3782
    %v3785 = vmul.f32 %v3053, %v3383
    %v3786 = vmul.f32 %v3056, %v3388
    %v3787 = vmul.f32 %v3061, %v3393
    %v3788 = vmul.f32 %v3064, %v3398
    %v3789 = vmul.f32 %v3069, %v3403
    %v3790 = vmul.f32 %v3072, %v3408
    %v3791 = vmul.f32 %v3077, %v3413
    %v3792 = vmul.f32 %v3080, %v3418
    %v3793 = vmul.f32 %v3085, %v3423
    %v3794 = vmul.f32 %v3088, %v3428
    %v3795 = vmul.f32 %v3093, %v3433
    %v3796 = vmul.f32 %v3096, %v3438
    %v3797 = vmul.f32 %v3101, %v3443
    %v3798 = vmul.f32 %v3104, %v3448
    %v3799 = vmul.f32 %v3109, %v3453
    %v3800 = vmul.f32 %v3112, %v3458
    %v3801 = vmul.f32 %v3117, %v3463
    %v3802 = vmul.f32 %v3120, %v3468
    %v3803 = vmul.f32 %v3125, %v3473
    %v3804 = vmul.f32 %v3128, %v3478
    %v3805 = vmul.f32 %v3133, %v3483
    %v3806 = vmul.f32 %v3136, %v3488
    %v3807 = vmul.f32 %v3141, %v3493
    %v3808 = vmul.f32 %v3144, %v3498
    %v3809 = vmul.f32 %v3149, %v3503
    %v3810 = vmul.f32 %v3152, %v3508
    %v3811 = vmul.f32 %v3157, %v3513
    %v3812 = vmul.f32 %v3160, %v3518
    %v3813 = vmul.f32 %v3165, %v3523
    %v3814 = vmul.f32 %v3168, %v3528
    %v3815 = vmul.f32 %v3173, %v3533
    %v3816 = vmul.f32 %v3176, %v3538
    %v3817 = vmul.f32 %v3181, %v3543
    %v3818 = vmul.f32 %v3184, %v3548
    %v3819 = vmul.f32 %v3189, %v3553
    %v3820 = vmul.f32 %v3192, %v3558
    %v3821 = vmul.f32 %v3197, %v3563
    %v3822 = vmul.f32 %v3200, %v3568
    %v3823 = vmul.f32 %v3205, %v3573
    %v3824 = vmul.f32 %v3208, %v3578
    %v3825 = vmul.f32 %v3213, %v3583
    %v3826 = vmul.f32 %v3216, %v3588
    %v3827 = vmul.f32 %v3221, %v3593
    %v3828 = vmul.f32 %v3224, %v3598
    %v3829 = vmul.f32 %v3229, %v3603
    %v3830 = vmul.f32 %v3232, %v3608
    %v3831 = vmul.f32 %v3237, %v3613
    %v3832 = vmul.f32 %v3240, %v3618
    %v3833 = vmul.f32 %v3245, %v3623
    %v3834 = vmul.f32 %v3248, %v3628
    %v3835 = vmul.f32 %v3253, %v3633
    %v3836 = vmul.f32 %v3256, %v3638
    %v3837 = vmul.f32 %v3261, %v3643
    %v3838 = vmul.f32 %v3264, %v3648
    %v3839 = vmul.f32 %v3269, %v3653
    %v3840 = vmul.f32 %v3272, %v3658
    %v3841 = vmul.f32 %v3277, %v3663
    %v3842 = vmul.f32 %v3280, %v3668
    %v3843 = vmul.f32 %v3285, %v3673
    %v3844 = vmul.f32 %v3288, %v3678
    %v3845 = vmul.f32 %v3293, %v3683
    %v3846 = vmul.f32 %v3296, %v3688
    %v3847 = vmul.f32 %v3301, %v3693
    %v3848 = vmul.f32 %v3304, %v3698
    %v3849 = vmul.f32 %v3309, %v3703
    %v3850 = vmul.f32 %v3312, %v3708
    %v3851 = vmul.f32 %v3317, %v3713
    %v3852 = vmul.f32 %v3320, %v3718
    %v3853 = vmul.f32 %v3325, %v3723
    %v3854 = vmul.f32 %v3328, %v3728
    %v3855 = vmul.f32 %v3333, %v3733
    %v3856 = vmul.f32 %v3336, %v3738
    %v3857 = vmul.f32 %v3341, %v3743
    %v3858 = vmul.f32 %v3344, %v3748
    %v3859 = vmul.f32 %v3349, %v3753
    %v3860 = vmul.f32 %v3352, %v3758
    %v3861 = vmul.f32 %v3357, %v3763
    %v3862 = vmul.f32 %v3360, %v3768
    %v3863 = vmul.f32 %v3365, %v3773
    %v3864 = vmul.f32 %v3368, %v3778
    %v3865 = vmul.f32 %v3373, %v3783
    %v3866 = vadd.f32 %v3785, %v3786
    %v3867 = vadd.f32 %v3866, %v3787
    %v3868 = vadd.f32 %v3867, %v3788
    %v3869 = vadd.f32 %v3868, %v3789
    %v3870 = vadd.f32 %v3869, %v3790
    %v3871 = vadd.f32 %v3870, %v3791
    %v3872 = vadd.f32 %v3871, %v3792
    %v3873 = vadd.f32 %v3872, %v3793
    %v3874 = vadd.f32 %v3873, %v3794
    %v3875 = vadd.f32 %v3874, %v3795
    %v3876 = vadd.f32 %v3875, %v3796
    %v3877 = vadd.f32 %v3876, %v3797
    %v3878 = vadd.f32 %v3877, %v3798
    %v3879 = vadd.f32 %v3878, %v3799
    %v3880 = vadd.f32 %v3879, %v3800
    %v3881 = vadd.f32 %v3880, %v3801
    %v3882 = vadd.f32 %v3881, %v3802
    %v3883 = vadd.f32 %v3882, %v3803
    %v3884 = vadd.f32 %v3883, %v3804
    %v3885 = vadd.f32 %v3884, %v3805
    %v3886 = vadd.f32 %v3885, %v3806
    %v3887 = vadd.f32 %v3886, %v3807
    %v3888 = vadd.f32 %v3887, %v3808
    %v3889 = vadd.f32 %v3888, %v3809
    %v3890 = vadd.f32 %v3889, %v3810
    %v3891 = vadd.f32 %v3890, %v3811
    %v3892 = vadd.f32 %v3891, %v3812
    %v3893 = vadd.f32 %v3892, %v3813
    %v3894 = vadd.f32 %v3893, %v3814
    %v3895 = vadd.f32 %v3894, %v3815
    %v3896 = vadd.f32 %v3895, %v3816
    %v3897 = vadd.f32 %v3896, %v3817
    %v3898 = vadd.f32 %v3897, %v3818
    %v3899 = vadd.f32 %v3898, %v3819
    %v3900 = vadd.f32 %v3899, %v3820
    %v3901 = vadd.f32 %v3900, %v3821
    %v3902 = vadd.f32 %v3901, %v3822
    %v3903 = vadd.f32 %v3902, %v3823
    %v3904 = vadd.f32 %v3903, %v3824
    %v3905 = vadd.f32 %v3904, %v3825
    %v3906 = vadd.f32 %v3905, %v3826
    %v3907 = vadd.f32 %v3906, %v3827
    %v3908 = vadd.f32 %v3907, %v3828
    %v3909 = vadd.f32 %v3908, %v3829
    %v3910 = vadd.f32 %v3909, %v3830
    %v3911 = vadd.f32 %v3910, %v3831
    %v3912 = vadd.f32 %v3911, %v3832
    %v3913 = vadd.f32 %v3912, %v3833
    %v3914 = vadd.f32 %v3913, %v3834
    %v3915 = vadd.f32 %v3914, %v3835
    %v3916 = vadd.f32 %v3915, %v3836
    %v3917 = vadd.f32 %v3916, %v3837
    %v3918 = vadd.f32 %v3917, %v3838
    %v3919 = vadd.f32 %v3918, %v3839
    %v3920 = vadd.f32 %v3919, %v3840
    %v3921 = vadd.f32 %v3920, %v3841
    %v3922 = vadd.f32 %v3921, %v3842
    %v3923 = vadd.f32 %v3922, %v3843
    %v3924 = vadd.f32 %v3923, %v3844
    %v3925 = vadd.f32 %v3924, %v3845
    %v3926 = vadd.f32 %v3925, %v3846
    %v3927 = vadd.f32 %v3926, %v3847
    %v3928 = vadd.f32 %v3927, %v3848
    %v3929 = vadd.f32 %v3928, %v3849
    %v3930 = vadd.f32 %v3929, %v3850
    %v3931 = vadd.f32 %v3930, %v3851
    %v3932 = vadd.f32 %v3931, %v3852
    %v3933 = vadd.f32 %v3932, %v3853
    %v3934 = vadd.f32 %v3933, %v3854
    %v3935 = vadd.f32 %v3934, %v3855
    %v3936 = vadd.f32 %v3935, %v3856
    %v3937 = vadd.f32 %v3936, %v3857
    %v3938 = vadd.f32 %v3937, %v3858
    %v3939 = vadd.f32 %v3938, %v3859
    %v3940 = vadd.f32 %v3939, %v3860
    %v3941 = vadd.f32 %v3940, %v3861
    %v3942 = vadd.f32 %v3941, %v3862
    %v3943 = vadd.f32 %v3942, %v3863
    %v3944 = vadd.f32 %v3943, %v3864
    %v3945 = vadd.f32 %v3944, %v3865
    %v3946 = vrot.slane %v3945, 4
    %v3947 = vadd.f32 %v3945, %v3946
    %v3948 = vrot.slane %v3947, 2
    %v3949 = vadd.f32 %v3947, %v3948
    %v3950 = vrot.slane %v3949, 1
    %v3951 = vadd.f32 %v3949, %v3950
    %v3952 = vmul.f32 %v3951, 0.001953125
    %v3953 = vsub.f32 %v3053, %v3952
    %v3954 = vsub.f32 %v3056, %v3952
    %v3955 = vsub.f32 %v3061, %v3952
    %v3956 = vsub.f32 %v3064, %v3952
    %v3957 = vsub.f32 %v3069, %v3952
    %v3958 = vsub.f32 %v3072, %v3952
    %v3959 = vsub.f32 %v3077, %v3952
    %v3960 = vsub.f32 %v3080, %v3952
    %v3961 = vsub.f32 %v3085, %v3952
    %v3962 = vsub.f32 %v3088, %v3952
    %v3963 = vsub.f32 %v3093, %v3952
    %v3964 = vsub.f32 %v3096, %v3952
    %v3965 = vsub.f32 %v3101, %v3952
    %v3966 = vsub.f32 %v3104, %v3952
    %v3967 = vsub.f32 %v3109, %v3952
    %v3968 = vsub.f32 %v3112, %v3952
    %v3969 = vsub.f32 %v3117, %v3952
    %v3970 = vsub.f32 %v3120, %v3952
    %v3971 = vsub.f32 %v3125, %v3952
    %v3972 = vsub.f32 %v3128, %v3952
    %v3973 = vsub.f32 %v3133, %v3952
    %v3974 = vsub.f32 %v3136, %v3952
    %v3975 = vsub.f32 %v3141, %v3952
    %v3976 = vsub.f32 %v3144, %v3952
    %v3977 = vsub.f32 %v3149, %v3952
    %v3978 = vsub.f32 %v3152, %v3952
    %v3979 = vsub.f32 %v3157, %v3952
    %v3980 = vsub.f32 %v3160, %v3952
    %v3981 = vsub.f32 %v3165, %v3952
    %v3982 = vsub.f32 %v3168, %v3952
    %v3983 = vsub.f32 %v3173, %v3952
    %v3984 = vsub.f32 %v3176, %v3952
    %v3985 = vsub.f32 %v3181, %v3952
    %v3986 = vsub.f32 %v3184, %v3952
    %v3987 = vsub.f32 %v3189, %v3952
    %v3988 = vsub.f32 %v3192, %v3952
    %v3989 = vsub.f32 %v3197, %v3952
    %v3990 = vsub.f32 %v3200, %v3952
    %v3991 = vsub.f32 %v3205, %v3952
    %v3992 = vsub.f32 %v3208, %v3952
    %v3993 = vsub.f32 %v3213, %v3952
    %v3994 = vsub.f32 %v3216, %v3952
    %v3995 = vsub.f32 %v3221, %v3952
    %v3996 = vsub.f32 %v3224, %v3952
    %v3997 = vsub.f32 %v3229, %v3952
    %v3998 = vsub.f32 %v3232, %v3952
    %v3999 = vsub.f32 %v3237, %v3952
    %v4000 = vsub.f32 %v3240, %v3952
    %v4001 = vsub.f32 %v3245, %v3952
    %v4002 = vsub.f32 %v3248, %v3952
    %v4003 = vsub.f32 %v3253, %v3952
    %v4004 = vsub.f32 %v3256, %v3952
    %v4005 = vsub.f32 %v3261, %v3952
    %v4006 = vsub.f32 %v3264, %v3952
    %v4007 = vsub.f32 %v3269, %v3952
    %v4008 = vsub.f32 %v3272, %v3952
    %v4009 = vsub.f32 %v3277, %v3952
    %v4010 = vsub.f32 %v3280, %v3952
    %v4011 = vsub.f32 %v3285, %v3952
    %v4012 = vsub.f32 %v3288, %v3952
    %v4013 = vsub.f32 %v3293, %v3952
    %v4014 = vsub.f32 %v3296, %v3952
    %v4015 = vsub.f32 %v3301, %v3952
    %v4016 = vsub.f32 %v3304, %v3952
    %v4017 = vsub.f32 %v3309, %v3952
    %v4018 = vsub.f32 %v3312, %v3952
    %v4019 = vsub.f32 %v3317, %v3952
    %v4020 = vsub.f32 %v3320, %v3952
    %v4021 = vsub.f32 %v3325, %v3952
    %v4022 = vsub.f32 %v3328, %v3952
    %v4023 = vsub.f32 %v3333, %v3952
    %v4024 = vsub.f32 %v3336, %v3952
    %v4025 = vsub.f32 %v3341, %v3952
    %v4026 = vsub.f32 %v3344, %v3952
    %v4027 = vsub.f32 %v3349, %v3952
    %v4028 = vsub.f32 %v3352, %v3952
    %v4029 = vsub.f32 %v3357, %v3952
    %v4030 = vsub.f32 %v3360, %v3952
    %v4031 = vsub.f32 %v3365, %v3952
    %v4032 = vsub.f32 %v3368, %v3952
    %v4033 = vsub.f32 %v3373, %v3952
    %v4034 = vmul.f32 %v3953, %v3383
    %v4035 = vmul.f32 %v3954, %v3388
    %v4036 = vmul.f32 %v3955, %v3393
    %v4037 = vmul.f32 %v3956, %v3398
    %v4038 = vmul.f32 %v3957, %v3403
    %v4039 = vmul.f32 %v3958, %v3408
    %v4040 = vmul.f32 %v3959, %v3413
    %v4041 = vmul.f32 %v3960, %v3418
    %v4042 = vmul.f32 %v3961, %v3423
    %v4043 = vmul.f32 %v3962, %v3428
    %v4044 = vmul.f32 %v3963, %v3433
    %v4045 = vmul.f32 %v3964, %v3438
    %v4046 = vmul.f32 %v3965, %v3443
    %v4047 = vmul.f32 %v3966, %v3448
    %v4048 = vmul.f32 %v3967, %v3453
    %v4049 = vmul.f32 %v3968, %v3458
    %v4050 = vmul.f32 %v3969, %v3463
    %v4051 = vmul.f32 %v3970, %v3468
    %v4052 = vmul.f32 %v3971, %v3473
    %v4053 = vmul.f32 %v3972, %v3478
    %v4054 = vmul.f32 %v3973, %v3483
    %v4055 = vmul.f32 %v3974, %v3488
    %v4056 = vmul.f32 %v3975, %v3493
    %v4057 = vmul.f32 %v3976, %v3498
    %v4058 = vmul.f32 %v3977, %v3503
    %v4059 = vmul.f32 %v3978, %v3508
    %v4060 = vmul.f32 %v3979, %v3513
    %v4061 = vmul.f32 %v3980, %v3518
    %v4062 = vmul.f32 %v3981, %v3523
    %v4063 = vmul.f32 %v3982, %v3528
    %v4064 = vmul.f32 %v3983, %v3533
    %v4065 = vmul.f32 %v3984, %v3538
    %v4066 = vmul.f32 %v3985, %v3543
    %v4067 = vmul.f32 %v3986, %v3548
    %v4068 = vmul.f32 %v3987, %v3553
    %v4069 = vmul.f32 %v3988, %v3558
    %v4070 = vmul.f32 %v3989, %v3563
    %v4071 = vmul.f32 %v3990, %v3568
    %v4072 = vmul.f32 %v3991, %v3573
    %v4073 = vmul.f32 %v3992, %v3578
    %v4074 = vmul.f32 %v3993, %v3583
    %v4075 = vmul.f32 %v3994, %v3588
    %v4076 = vmul.f32 %v3995, %v3593
    %v4077 = vmul.f32 %v3996, %v3598
    %v4078 = vmul.f32 %v3997, %v3603
    %v4079 = vmul.f32 %v3998, %v3608
    %v4080 = vmul.f32 %v3999, %v3613
    %v4081 = vmul.f32 %v4000, %v3618
    %v4082 = vmul.f32 %v4001, %v3623
    %v4083 = vmul.f32 %v4002, %v3628
    %v4084 = vmul.f32 %v4003, %v3633
    %v4085 = vmul.f32 %v4004, %v3638
    %v4086 = vmul.f32 %v4005, %v3643
    %v4087 = vmul.f32 %v4006, %v3648
    %v4088 = vmul.f32 %v4007, %v3653
    %v4089 = vmul.f32 %v4008, %v3658
    %v4090 = vmul.f32 %v4009, %v3663
    %v4091 = vmul.f32 %v4010, %v3668
    %v4092 = vmul.f32 %v4011, %v3673
    %v4093 = vmul.f32 %v4012, %v3678
    %v4094 = vmul.f32 %v4013, %v3683
    %v4095 = vmul.f32 %v4014, %v3688
    %v4096 = vmul.f32 %v4015, %v3693
    %v4097 = vmul.f32 %v4016, %v3698
    %v4098 = vmul.f32 %v4017, %v3703
    %v4099 = vmul.f32 %v4018, %v3708
    %v4100 = vmul.f32 %v4019, %v3713
    %v4101 = vmul.f32 %v4020, %v3718
    %v4102 = vmul.f32 %v4021, %v3723
    %v4103 = vmul.f32 %v4022, %v3728
    %v4104 = vmul.f32 %v4023, %v3733
    %v4105 = vmul.f32 %v4024, %v3738
    %v4106 = vmul.f32 %v4025, %v3743
    %v4107 = vmul.f32 %v4026, %v3748
    %v4108 = vmul.f32 %v4027, %v3753
    %v4109 = vmul.f32 %v4028, %v3758
    %v4110 = vmul.f32 %v4029, %v3763
    %v4111 = vmul.f32 %v4030, %v3768
    %v4112 = vmul.f32 %v4031, %v3773
    %v4113 = vmul.f32 %v4032, %v3778
    %v4114 = vmul.f32 %v4033, %v3783
    %v4115 = vmul.f32 %v4034, %v4034
    %v4116 = vmul.f32 %v4035, %v4035
    %v4117 = vmul.f32 %v4036, %v4036
    %v4118 = vmul.f32 %v4037, %v4037
    %v4119 = vmul.f32 %v4038, %v4038
    %v4120 = vmul.f32 %v4039, %v4039
    %v4121 = vmul.f32 %v4040, %v4040
    %v4122 = vmul.f32 %v4041, %v4041
    %v4123 = vmul.f32 %v4042, %v4042
    %v4124 = vmul.f32 %v4043, %v4043
    %v4125 = vmul.f32 %v4044, %v4044
    %v4126 = vmul.f32 %v4045, %v4045
    %v4127 = vmul.f32 %v4046, %v4046
    %v4128 = vmul.f32 %v4047, %v4047
    %v4129 = vmul.f32 %v4048, %v4048
    %v4130 = vmul.f32 %v4049, %v4049
    %v4131 = vmul.f32 %v4050, %v4050
    %v4132 = vmul.f32 %v4051, %v4051
    %v4133 = vmul.f32 %v4052, %v4052
    %v4134 = vmul.f32 %v4053, %v4053
    %v4135 = vmul.f32 %v4054, %v4054
    %v4136 = vmul.f32 %v4055, %v4055
    %v4137 = vmul.f32 %v4056, %v4056
    %v4138 = vmul.f32 %v4057, %v4057
    %v4139 = vmul.f32 %v4058, %v4058
    %v4140 = vmul.f32 %v4059, %v4059
    %v4141 = vmul.f32 %v4060, %v4060
    %v4142 = vmul.f32 %v4061, %v4061
    %v4143 = vmul.f32 %v4062, %v4062
    %v4144 = vmul.f32 %v4063, %v4063
    %v4145 = vmul.f32 %v4064, %v4064
    %v4146 = vmul.f32 %v4065, %v4065
    %v4147 = vmul.f32 %v4066, %v4066
    %v4148 = vmul.f32 %v4067, %v4067
    %v4149 = vmul.f32 %v4068, %v4068
    %v4150 = vmul.f32 %v4069, %v4069
    %v4151 = vmul.f32 %v4070, %v4070
    %v4152 = vmul.f32 %v4071, %v4071
    %v4153 = vmul.f32 %v4072, %v4072
    %v4154 = vmul.f32 %v4073, %v4073
    %v4155 = vmul.f32 %v4074, %v4074
    %v4156 = vmul.f32 %v4075, %v4075
    %v4157 = vmul.f32 %v4076, %v4076
    %v4158 = vmul.f32 %v4077, %v4077
    %v4159 = vmul.f32 %v4078, %v4078
    %v4160 = vmul.f32 %v4079, %v4079
    %v4161 = vmul.f32 %v4080, %v4080
    %v4162 = vmul.f32 %v4081, %v4081
    %v4163 = vmul.f32 %v4082, %v4082
    %v4164 = vmul.f32 %v4083, %v4083
    %v4165 = vmul.f32 %v4084, %v4084
    %v4166 = vmul.f32 %v4085, %v4085
    %v4167 = vmul.f32 %v4086, %v4086
    %v4168 = vmul.f32 %v4087, %v4087
    %v4169 = vmul.f32 %v4088, %v4088
    %v4170 = vmul.f32 %v4089, %v4089
    %v4171 = vmul.f32 %v4090, %v4090
    %v4172 = vmul.f32 %v4091, %v4091
    %v4173 = vmul.f32 %v4092, %v4092
    %v4174 = vmul.f32 %v4093, %v4093
    %v4175 = vmul.f32 %v4094, %v4094
    %v4176 = vmul.f32 %v4095, %v4095
    %v4177 = vmul.f32 %v4096, %v4096
    %v4178 = vmul.f32 %v4097, %v4097
    %v4179 = vmul.f32 %v4098, %v4098
    %v4180 = vmul.f32 %v4099, %v4099
    %v4181 = vmul.f32 %v4100, %v4100
    %v4182 = vmul.f32 %v4101, %v4101
    %v4183 = vmul.f32 %v4102, %v4102
    %v4184 = vmul.f32 %v4103, %v4103
    %v4185 = vmul.f32 %v4104, %v4104
    %v4186 = vmul.f32 %v4105, %v4105
    %v4187 = vmul.f32 %v4106, %v4106
    %v4188 = vmul.f32 %v4107, %v4107
    %v4189 = vmul.f32 %v4108, %v4108
    %v4190 = vmul.f32 %v4109, %v4109
    %v4191 = vmul.f32 %v4110, %v4110
    %v4192 = vmul.f32 %v4111, %v4111
    %v4193 = vmul.f32 %v4112, %v4112
    %v4194 = vmul.f32 %v4113, %v4113
    %v4195 = vmul.f32 %v4114, %v4114
    %v4196 = vadd.f32 %v4115, %v4116
    %v4197 = vadd.f32 %v4196, %v4117
    %v4198 = vadd.f32 %v4197, %v4118
    %v4199 = vadd.f32 %v4198, %v4119
    %v4200 = vadd.f32 %v4199, %v4120
    %v4201 = vadd.f32 %v4200, %v4121
    %v4202 = vadd.f32 %v4201, %v4122
    %v4203 = vadd.f32 %v4202, %v4123
    %v4204 = vadd.f32 %v4203, %v4124
    %v4205 = vadd.f32 %v4204, %v4125
    %v4206 = vadd.f32 %v4205, %v4126
    %v4207 = vadd.f32 %v4206, %v4127
    %v4208 = vadd.f32 %v4207, %v4128
    %v4209 = vadd.f32 %v4208, %v4129
    %v4210 = vadd.f32 %v4209, %v4130
    %v4211 = vadd.f32 %v4210, %v4131
    %v4212 = vadd.f32 %v4211, %v4132
    %v4213 = vadd.f32 %v4212, %v4133
    %v4214 = vadd.f32 %v4213, %v4134
    %v4215 = vadd.f32 %v4214, %v4135
    %v4216 = vadd.f32 %v4215, %v4136
    %v4217 = vadd.f32 %v4216, %v4137
    %v4218 = vadd.f32 %v4217, %v4138
    %v4219 = vadd.f32 %v4218, %v4139
    %v4220 = vadd.f32 %v4219, %v4140
    %v4221 = vadd.f32 %v4220, %v4141
    %v4222 = vadd.f32 %v4221, %v4142
    %v4223 = vadd.f32 %v4222, %v4143
    %v4224 = vadd.f32 %v4223, %v4144
    %v4225 = vadd.f32 %v4224, %v4145
    %v4226 = vadd.f32 %v4225, %v4146
    %v4227 = vadd.f32 %v4226, %v4147
    %v4228 = vadd.f32 %v4227, %v4148
    %v4229 = vadd.f32 %v4228, %v4149
    %v4230 = vadd.f32 %v4229, %v4150
    %v4231 = vadd.f32 %v4230, %v4151
    %v4232 = vadd.f32 %v4231, %v4152
    %v4233 = vadd.f32 %v4232, %v4153
    %v4234 = vadd.f32 %v4233, %v4154
    %v4235 = vadd.f32 %v4234, %v4155
    %v4236 = vadd.f32 %v4235, %v4156
    %v4237 = vadd.f32 %v4236, %v4157
    %v4238 = vadd.f32 %v4237, %v4158
    %v4239 = vadd.f32 %v4238, %v4159
    %v4240 = vadd.f32 %v4239, %v4160
    %v4241 = vadd.f32 %v4240, %v4161
    %v4242 = vadd.f32 %v4241, %v4162
    %v4243 = vadd.f32 %v4242, %v4163
    %v4244 = vadd.f32 %v4243, %v4164
    %v4245 = vadd.f32 %v4244, %v4165
    %v4246 = vadd.f32 %v4245, %v4166
    %v4247 = vadd.f32 %v4246, %v4167
    %v4248 = vadd.f32 %v4247, %v4168
    %v4249 = vadd.f32 %v4248, %v4169
    %v4250 = vadd.f32 %v4249, %v4170
    %v4251 = vadd.f32 %v4250, %v4171
    %v4252 = vadd.f32 %v4251, %v4172
    %v4253 = vadd.f32 %v4252, %v4173
    %v4254 = vadd.f32 %v4253, %v4174
    %v4255 = vadd.f32 %v4254, %v4175
    %v4256 = vadd.f32 %v4255, %v4176
    %v4257 = vadd.f32 %v4256, %v4177
    %v4258 = vadd.f32 %v4257, %v4178
    %v4259 = vadd.f32 %v4258, %v4179
    %v4260 = vadd.f32 %v4259, %v4180
    %v4261 = vadd.f32 %v4260, %v4181
    %v4262 = vadd.f32 %v4261, %v4182
    %v4263 = vadd.f32 %v4262, %v4183
    %v4264 = vadd.f32 %v4263, %v4184
    %v4265 = vadd.f32 %v4264, %v4185
    %v4266 = vadd.f32 %v4265, %v4186
    %v4267 = vadd.f32 %v4266, %v4187
    %v4268 = vadd.f32 %v4267, %v4188
    %v4269 = vadd.f32 %v4268, %v4189
    %v4270 = vadd.f32 %v4269, %v4190
    %v4271 = vadd.f32 %v4270, %v4191
    %v4272 = vadd.f32 %v4271, %v4192
    %v4273 = vadd.f32 %v4272, %v4193
    %v4274 = vadd.f32 %v4273, %v4194
    %v4275 = vadd.f32 %v4274, %v4195
    %v4276 = vrot.slane %v4275, 4
    %v4277 = vadd.f32 %v4275, %v4276
    %v4278 = vrot.slane %v4277, 2
    %v4279 = vadd.f32 %v4277, %v4278
    %v4280 = vrot.slane %v4279, 1
    %v4281 = vadd.f32 %v4279, %v4280
    %v4282 = vmul.f32 %v4281, 0.001953125
    %v4283 = vadd.f32 %v4282, 1e-05
    %v4284 = vrsqrt.pop %v4283
    %v4285 = vmul.f32 %v3378, %v4284
    %v4286 = vmul.f32 %v3952, %v4285
    %v4287 = vsub.f32 %v3379, %v4286
    %v4289 = vlaneseq
    %v4290 = vshrl.u32 %v4289, 7
    %v4291 = vsub.s32 0, %v4290
    %v4292 = vrot.slane %v4285, %v4291
    %v4294 = vmul.f32 %v3053, %v4292
    %v4295 = vmul.f32 %v3056, %v4292
    %v4296 = vmul.f32 %v3061, %v4292
    %v4297 = vmul.f32 %v3064, %v4292
    %v4298 = vmul.f32 %v3069, %v4292
    %v4299 = vmul.f32 %v3072, %v4292
    %v4300 = vmul.f32 %v3077, %v4292
    %v4301 = vmul.f32 %v3080, %v4292
    %v4302 = vmul.f32 %v3085, %v4292
    %v4303 = vmul.f32 %v3088, %v4292
    %v4304 = vmul.f32 %v3093, %v4292
    %v4305 = vmul.f32 %v3096, %v4292
    %v4306 = vmul.f32 %v3101, %v4292
    %v4307 = vmul.f32 %v3104, %v4292
    %v4308 = vmul.f32 %v3109, %v4292
    %v4309 = vmul.f32 %v3112, %v4292
    %v4310 = vmul.f32 %v3117, %v4292
    %v4311 = vmul.f32 %v3120, %v4292
    %v4312 = vmul.f32 %v3125, %v4292
    %v4313 = vmul.f32 %v3128, %v4292
    %v4314 = vmul.f32 %v3133, %v4292
    %v4315 = vmul.f32 %v3136, %v4292
    %v4316 = vmul.f32 %v3141, %v4292
    %v4317 = vmul.f32 %v3144, %v4292
    %v4318 = vmul.f32 %v3149, %v4292
    %v4319 = vmul.f32 %v3152, %v4292
    %v4320 = vmul.f32 %v3157, %v4292
    %v4321 = vmul.f32 %v3160, %v4292
    %v4322 = vmul.f32 %v3165, %v4292
    %v4323 = vmul.f32 %v3168, %v4292
    %v4324 = vmul.f32 %v3173, %v4292
    %v4325 = vmul.f32 %v3176, %v4292
    %v4326 = vmul.f32 %v3181, %v4292
    %v4327 = vmul.f32 %v3184, %v4292
    %v4328 = vmul.f32 %v3189, %v4292
    %v4329 = vmul.f32 %v3192, %v4292
    %v4330 = vmul.f32 %v3197, %v4292
    %v4331 = vmul.f32 %v3200, %v4292
    %v4332 = vmul.f32 %v3205, %v4292
    %v4333 = vmul.f32 %v3208, %v4292
    %v4334 = vmul.f32 %v3213, %v4292
    %v4335 = vmul.f32 %v3216, %v4292
    %v4336 = vmul.f32 %v3221, %v4292
    %v4337 = vmul.f32 %v3224, %v4292
    %v4338 = vmul.f32 %v3229, %v4292
    %v4339 = vmul.f32 %v3232, %v4292
    %v4340 = vmul.f32 %v3237, %v4292
    %v4341 = vmul.f32 %v3240, %v4292
    %v4342 = vmul.f32 %v3245, %v4292
    %v4343 = vmul.f32 %v3248, %v4292
    %v4344 = vmul.f32 %v3253, %v4292
    %v4345 = vmul.f32 %v3256, %v4292
    %v4346 = vmul.f32 %v3261, %v4292
    %v4347 = vmul.f32 %v3264, %v4292
    %v4348 = vmul.f32 %v3269, %v4292
    %v4349 = vmul.f32 %v3272, %v4292
    %v4350 = vmul.f32 %v3277, %v4292
    %v4351 = vmul.f32 %v3280, %v4292
    %v4352 = vmul.f32 %v3285, %v4292
    %v4353 = vmul.f32 %v3288, %v4292
    %v4354 = vmul.f32 %v3293, %v4292
    %v4355 = vmul.f32 %v3296, %v4292
    %v4356 = vmul.f32 %v3301, %v4292
    %v4357 = vmul.f32 %v3304, %v4292
    %v4358 = vmul.f32 %v3309, %v4292
    %v4359 = vmul.f32 %v3312, %v4292
    %v4360 = vmul.f32 %v3317, %v4292
    %v4361 = vmul.f32 %v3320, %v4292
    %v4362 = vmul.f32 %v3325, %v4292
    %v4363 = vmul.f32 %v3328, %v4292
    %v4364 = vmul.f32 %v3333, %v4292
    %v4365 = vmul.f32 %v3336, %v4292
    %v4366 = vmul.f32 %v3341, %v4292
    %v4367 = vmul.f32 %v3344, %v4292
    %v4368 = vmul.f32 %v3349, %v4292
    %v4369 = vmul.f32 %v3352, %v4292
    %v4370 = vmul.f32 %v3357, %v4292
    %v4371 = vmul.f32 %v3360, %v4292
    %v4372 = vmul.f32 %v3365, %v4292
    %v4373 = vmul.f32 %v3368, %v4292
    %v4374 = vmul.f32 %v3373, %v4292
    %v4376 = vlaneseq
    %v4377 = vshrl.u32 %v4376, 7
    %v4378 = vsub.s32 0, %v4377
    %v4379 = vrot.slane %v4287, %v4378
    %v4381 = vadd.f32 %v4294, %v4379
    %v4382 = vadd.f32 %v4295, %v4379
    %v4383 = vadd.f32 %v4296, %v4379
    %v4384 = vadd.f32 %v4297, %v4379
    %v4385 = vadd.f32 %v4298, %v4379
    %v4386 = vadd.f32 %v4299, %v4379
    %v4387 = vadd.f32 %v4300, %v4379
    %v4388 = vadd.f32 %v4301, %v4379
    %v4389 = vadd.f32 %v4302, %v4379
    %v4390 = vadd.f32 %v4303, %v4379
    %v4391 = vadd.f32 %v4304, %v4379
    %v4392 = vadd.f32 %v4305, %v4379
    %v4393 = vadd.f32 %v4306, %v4379
    %v4394 = vadd.f32 %v4307, %v4379
    %v4395 = vadd.f32 %v4308, %v4379
    %v4396 = vadd.f32 %v4309, %v4379
    %v4397 = vadd.f32 %v4310, %v4379
    %v4398 = vadd.f32 %v4311, %v4379
    %v4399 = vadd.f32 %v4312, %v4379
    %v4400 = vadd.f32 %v4313, %v4379
    %v4401 = vadd.f32 %v4314, %v4379
    %v4402 = vadd.f32 %v4315, %v4379
    %v4403 = vadd.f32 %v4316, %v4379
    %v4404 = vadd.f32 %v4317, %v4379
    %v4405 = vadd.f32 %v4318, %v4379
    %v4406 = vadd.f32 %v4319, %v4379
    %v4407 = vadd.f32 %v4320, %v4379
    %v4408 = vadd.f32 %v4321, %v4379
    %v4409 = vadd.f32 %v4322, %v4379
    %v4410 = vadd.f32 %v4323, %v4379
    %v4411 = vadd.f32 %v4324, %v4379
    %v4412 = vadd.f32 %v4325, %v4379
    %v4413 = vadd.f32 %v4326, %v4379
    %v4414 = vadd.f32 %v4327, %v4379
    %v4415 = vadd.f32 %v4328, %v4379
    %v4416 = vadd.f32 %v4329, %v4379
    %v4417 = vadd.f32 %v4330, %v4379
    %v4418 = vadd.f32 %v4331, %v4379
    %v4419 = vadd.f32 %v4332, %v4379
    %v4420 = vadd.f32 %v4333, %v4379
    %v4421 = vadd.f32 %v4334, %v4379
    %v4422 = vadd.f32 %v4335, %v4379
    %v4423 = vadd.f32 %v4336, %v4379
    %v4424 = vadd.f32 %v4337, %v4379
    %v4425 = vadd.f32 %v4338, %v4379
    %v4426 = vadd.f32 %v4339, %v4379
    %v4427 = vadd.f32 %v4340, %v4379
    %v4428 = vadd.f32 %v4341, %v4379
    %v4429 = vadd.f32 %v4342, %v4379
    %v4430 = vadd.f32 %v4343, %v4379
    %v4431 = vadd.f32 %v4344, %v4379
    %v4432 = vadd.f32 %v4345, %v4379
    %v4433 = vadd.f32 %v4346, %v4379
    %v4434 = vadd.f32 %v4347, %v4379
    %v4435 = vadd.f32 %v4348, %v4379
    %v4436 = vadd.f32 %v4349, %v4379
    %v4437 = vadd.f32 %v4350, %v4379
    %v4438 = vadd.f32 %v4351, %v4379
    %v4439 = vadd.f32 %v4352, %v4379
    %v4440 = vadd.f32 %v4353, %v4379
    %v4441 = vadd.f32 %v4354, %v4379
    %v4442 = vadd.f32 %v4355, %v4379
    %v4443 = vadd.f32 %v4356, %v4379
    %v4444 = vadd.f32 %v4357, %v4379
    %v4445 = vadd.f32 %v4358, %v4379
    %v4446 = vadd.f32 %v4359, %v4379
    %v4447 = vadd.f32 %v4360, %v4379
    %v4448 = vadd.f32 %v4361, %v4379
    %v4449 = vadd.f32 %v4362, %v4379
    %v4450 = vadd.f32 %v4363, %v4379
    %v4451 = vadd.f32 %v4364, %v4379
    %v4452 = vadd.f32 %v4365, %v4379
    %v4453 = vadd.f32 %v4366, %v4379
    %v4454 = vadd.f32 %v4367, %v4379
    %v4455 = vadd.f32 %v4368, %v4379
    %v4456 = vadd.f32 %v4369, %v4379
    %v4457 = vadd.f32 %v4370, %v4379
    %v4458 = vadd.f32 %v4371, %v4379
    %v4459 = vadd.f32 %v4372, %v4379
    %v4460 = vadd.f32 %v4373, %v4379
    %v4461 = vadd.f32 %v4374, %v4379
    %v4462 = vmax.f32 %v4381, 0.0
    %v4463 = vmax.f32 %v4382, 0.0
    %v4464 = vmax.f32 %v4383, 0.0
    %v4465 = vmax.f32 %v4384, 0.0
    %v4466 = vmax.f32 %v4385, 0.0
    %v4467 = vmax.f32 %v4386, 0.0
    %v4468 = vmax.f32 %v4387, 0.0
    %v4469 = vmax.f32 %v4388, 0.0
    %v4470 = vmax.f32 %v4389, 0.0
    %v4471 = vmax.f32 %v4390, 0.0
    %v4472 = vmax.f32 %v4391, 0.0
    %v4473 = vmax.f32 %v4392, 0.0
    %v4474 = vmax.f32 %v4393, 0.0
    %v4475 = vmax.f32 %v4394, 0.0
    %v4476 = vmax.f32 %v4395, 0.0
    %v4477 = vmax.f32 %v4396, 0.0
    %v4478 = vmax.f32 %v4397, 0.0
    %v4479 = vmax.f32 %v4398, 0.0
    %v4480 = vmax.f32 %v4399, 0.0
    %v4481 = vmax.f32 %v4400, 0.0
    %v4482 = vmax.f32 %v4401, 0.0
    %v4483 = vmax.f32 %v4402, 0.0
    %v4484 = vmax.f32 %v4403, 0.0
    %v4485 = vmax.f32 %v4404, 0.0
    %v4486 = vmax.f32 %v4405, 0.0
    %v4487 = vmax.f32 %v4406, 0.0
    %v4488 = vmax.f32 %v4407, 0.0
    %v4489 = vmax.f32 %v4408, 0.0
    %v4490 = vmax.f32 %v4409, 0.0
    %v4491 = vmax.f32 %v4410, 0.0
    %v4492 = vmax.f32 %v4411, 0.0
    %v4493 = vmax.f32 %v4412, 0.0
    %v4494 = vmax.f32 %v4413, 0.0
    %v4495 = vmax.f32 %v4414, 0.0
    %v4496 = vmax.f32 %v4415, 0.0
    %v4497 = vmax.f32 %v4416, 0.0
    %v4498 = vmax.f32 %v4417, 0.0
    %v4499 = vmax.f32 %v4418, 0.0
    %v4500 = vmax.f32 %v4419, 0.0
    %v4501 = vmax.f32 %v4420, 0.0
    %v4502 = vmax.f32 %v4421, 0.0
    %v4503 = vmax.f32 %v4422, 0.0
    %v4504 = vmax.f32 %v4423, 0.0
    %v4505 = vmax.f32 %v4424, 0.0
    %v4506 = vmax.f32 %v4425, 0.0
    %v4507 = vmax.f32 %v4426, 0.0
    %v4508 = vmax.f32 %v4427, 0.0
    %v4509 = vmax.f32 %v4428, 0.0
    %v4510 = vmax.f32 %v4429, 0.0
    %v4511 = vmax.f32 %v4430, 0.0
    %v4512 = vmax.f32 %v4431, 0.0
    %v4513 = vmax.f32 %v4432, 0.0
    %v4514 = vmax.f32 %v4433, 0.0
    %v4515 = vmax.f32 %v4434, 0.0
    %v4516 = vmax.f32 %v4435, 0.0
    %v4517 = vmax.f32 %v4436, 0.0
    %v4518 = vmax.f32 %v4437, 0.0
    %v4519 = vmax.f32 %v4438, 0.0
    %v4520 = vmax.f32 %v4439, 0.0
    %v4521 = vmax.f32 %v4440, 0.0
    %v4522 = vmax.f32 %v4441, 0.0
    %v4523 = vmax.f32 %v4442, 0.0
    %v4524 = vmax.f32 %v4443, 0.0
    %v4525 = vmax.f32 %v4444, 0.0
    %v4526 = vmax.f32 %v4445, 0.0
    %v4527 = vmax.f32 %v4446, 0.0
    %v4528 = vmax.f32 %v4447, 0.0
    %v4529 = vmax.f32 %v4448, 0.0
    %v4530 = vmax.f32 %v4449, 0.0
    %v4531 = vmax.f32 %v4450, 0.0
    %v4532 = vmax.f32 %v4451, 0.0
    %v4533 = vmax.f32 %v4452, 0.0
    %v4534 = vmax.f32 %v4453, 0.0
    %v4535 = vmax.f32 %v4454, 0.0
    %v4536 = vmax.f32 %v4455, 0.0
    %v4537 = vmax.f32 %v4456, 0.0
    %v4538 = vmax.f32 %v4457, 0.0
    %v4539 = vmax.f32 %v4458, 0.0
    %v4540 = vmax.f32 %v4459, 0.0
    %v4541 = vmax.f32 %v4460, 0.0
    %v4542 = vmax.f32 %v4461, 0.0
    %v4543 = vmul.f32 %v4462, %v3383
    %v4544 = vmul.f32 %v4463, %v3388
    %v4545 = vmul.f32 %v4464, %v3393
    %v4546 = vmul.f32 %v4465, %v3398
    %v4547 = vmul.f32 %v4466, %v3403
    %v4548 = vmul.f32 %v4467, %v3408
    %v4549 = vmul.f32 %v4468, %v3413
    %v4550 = vmul.f32 %v4469, %v3418
    %v4551 = vmul.f32 %v4470, %v3423
    %v4552 = vmul.f32 %v4471, %v3428
    %v4553 = vmul.f32 %v4472, %v3433
    %v4554 = vmul.f32 %v4473, %v3438
    %v4555 = vmul.f32 %v4474, %v3443
    %v4556 = vmul.f32 %v4475, %v3448
    %v4557 = vmul.f32 %v4476, %v3453
    %v4558 = vmul.f32 %v4477, %v3458
    %v4559 = vmul.f32 %v4478, %v3463
    %v4560 = vmul.f32 %v4479, %v3468
    %v4561 = vmul.f32 %v4480, %v3473
    %v4562 = vmul.f32 %v4481, %v3478
    %v4563 = vmul.f32 %v4482, %v3483
    %v4564 = vmul.f32 %v4483, %v3488
    %v4565 = vmul.f32 %v4484, %v3493
    %v4566 = vmul.f32 %v4485, %v3498
    %v4567 = vmul.f32 %v4486, %v3503
    %v4568 = vmul.f32 %v4487, %v3508
    %v4569 = vmul.f32 %v4488, %v3513
    %v4570 = vmul.f32 %v4489, %v3518
    %v4571 = vmul.f32 %v4490, %v3523
    %v4572 = vmul.f32 %v4491, %v3528
    %v4573 = vmul.f32 %v4492, %v3533
    %v4574 = vmul.f32 %v4493, %v3538
    %v4575 = vmul.f32 %v4494, %v3543
    %v4576 = vmul.f32 %v4495, %v3548
    %v4577 = vmul.f32 %v4496, %v3553
    %v4578 = vmul.f32 %v4497, %v3558
    %v4579 = vmul.f32 %v4498, %v3563
    %v4580 = vmul.f32 %v4499, %v3568
    %v4581 = vmul.f32 %v4500, %v3573
    %v4582 = vmul.f32 %v4501, %v3578
    %v4583 = vmul.f32 %v4502, %v3583
    %v4584 = vmul.f32 %v4503, %v3588
    %v4585 = vmul.f32 %v4504, %v3593
    %v4586 = vmul.f32 %v4505, %v3598
    %v4587 = vmul.f32 %v4506, %v3603
    %v4588 = vmul.f32 %v4507, %v3608
    %v4589 = vmul.f32 %v4508, %v3613
    %v4590 = vmul.f32 %v4509, %v3618
    %v4591 = vmul.f32 %v4510, %v3623
    %v4592 = vmul.f32 %v4511, %v3628
    %v4593 = vmul.f32 %v4512, %v3633
    %v4594 = vmul.f32 %v4513, %v3638
    %v4595 = vmul.f32 %v4514, %v3643
    %v4596 = vmul.f32 %v4515, %v3648
    %v4597 = vmul.f32 %v4516, %v3653
    %v4598 = vmul.f32 %v4517, %v3658
    %v4599 = vmul.f32 %v4518, %v3663
    %v4600 = vmul.f32 %v4519, %v3668
    %v4601 = vmul.f32 %v4520, %v3673
    %v4602 = vmul.f32 %v4521, %v3678
    %v4603 = vmul.f32 %v4522, %v3683
    %v4604 = vmul.f32 %v4523, %v3688
    %v4605 = vmul.f32 %v4524, %v3693
    %v4606 = vmul.f32 %v4525, %v3698
    %v4607 = vmul.f32 %v4526, %v3703
    %v4608 = vmul.f32 %v4527, %v3708
    %v4609 = vmul.f32 %v4528, %v3713
    %v4610 = vmul.f32 %v4529, %v3718
    %v4611 = vmul.f32 %v4530, %v3723
    %v4612 = vmul.f32 %v4531, %v3728
    %v4613 = vmul.f32 %v4532, %v3733
    %v4614 = vmul.f32 %v4533, %v3738
    %v4615 = vmul.f32 %v4534, %v3743
    %v4616 = vmul.f32 %v4535, %v3748
    %v4617 = vmul.f32 %v4536, %v3753
    %v4618 = vmul.f32 %v4537, %v3758
    %v4619 = vmul.f32 %v4538, %v3763
    %v4620 = vmul.f32 %v4539, %v3768
    %v4621 = vmul.f32 %v4540, %v3773
    %v4622 = vmul.f32 %v4541, %v3778
    %v4623 = vmul.f32 %v4542, %v3783
    %4624 = vst [vmem:[#allocation2] sm:$0xff] 0.0
    %4625 = vst [vmem:[#allocation2 + $0x8] sm:$0xff] 0.0
    %4626 = vst [vmem:[#allocation2 + $0x10] sm:$0xff] 0.0
    %4627 = vst [vmem:[#allocation2 + $0x2a0] sm:$0xff] 0.0
    %4628 = vst [vmem:[#allocation2 + $0x2a8] sm:$0xff] 0.0
    %4629 = vst [vmem:[#allocation2 + $0x2b0] sm:$0xff] 0.0
    %4630 = vst [vmem:[#allocation2 + $0x18] sm:$0xff] %v4543
    %4631 = vst [vmem:[#allocation2 + $0x20] sm:$0xff] %v4544
    %4632 = vst [vmem:[#allocation2 + $0x28] sm:$0xff] %v4545
    %4633 = vst [vmem:[#allocation2 + $0x30] sm:$0xff] %v4546
    %4634 = vst [vmem:[#allocation2 + $0x38] sm:$0xff] %v4547
    %4635 = vst [vmem:[#allocation2 + $0x40] sm:$0xff] %v4548
    %4636 = vst [vmem:[#allocation2 + $0x48] sm:$0xff] %v4549
    %4637 = vst [vmem:[#allocation2 + $0x50] sm:$0xff] %v4550
    %4638 = vst [vmem:[#allocation2 + $0x58] sm:$0xff] %v4551
    %4639 = vst [vmem:[#allocation2 + $0x60] sm:$0xff] %v4552
    %4640 = vst [vmem:[#allocation2 + $0x68] sm:$0xff] %v4553
    %4641 = vst [vmem:[#allocation2 + $0x70] sm:$0xff] %v4554
    %4642 = vst [vmem:[#allocation2 + $0x78] sm:$0xff] %v4555
    %4643 = vst [vmem:[#allocation2 + $0x80] sm:$0xff] %v4556
    %4644 = vst [vmem:[#allocation2 + $0x88] sm:$0xff] %v4557
    %4645 = vst [vmem:[#allocation2 + $0x90] sm:$0xff] %v4558
    %4646 = vst [vmem:[#allocation2 + $0x98] sm:$0xff] %v4559
    %4647 = vst [vmem:[#allocation2 + $0xa0] sm:$0xff] %v4560
    %4648 = vst [vmem:[#allocation2 + $0xa8] sm:$0xff] %v4561
    %4649 = vst [vmem:[#allocation2 + $0xb0] sm:$0xff] %v4562
    %4650 = vst [vmem:[#allocation2 + $0xb8] sm:$0xff] %v4563
    %4651 = vst [vmem:[#allocation2 + $0xc0] sm:$0xff] %v4564
    %4652 = vst [vmem:[#allocation2 + $0xc8] sm:$0xff] %v4565
    %4653 = vst [vmem:[#allocation2 + $0xd0] sm:$0xff] %v4566
    %4654 = vst [vmem:[#allocation2 + $0xd8] sm:$0xff] %v4567
    %4655 = vst [vmem:[#allocation2 + $0xe0] sm:$0xff] %v4568
    %4656 = vst [vmem:[#allocation2 + $0xe8] sm:$0xff] %v4569
    %4657 = vst [vmem:[#allocation2 + $0xf0] sm:$0xff] %v4570
    %4658 = vst [vmem:[#allocation2 + $0xf8] sm:$0xff] %v4571
    %4659 = vst [vmem:[#allocation2 + $0x100] sm:$0xff] %v4572
    %4660 = vst [vmem:[#allocation2 + $0x108] sm:$0xff] %v4573
    %4661 = vst [vmem:[#allocation2 + $0x110] sm:$0xff] %v4574
    %4662 = vst [vmem:[#allocation2 + $0x118] sm:$0xff] %v4575
    %4663 = vst [vmem:[#allocation2 + $0x120] sm:$0xff] %v4576
    %4664 = vst [vmem:[#allocation2 + $0x128] sm:$0xff] %v4577
    %4665 = vst [vmem:[#allocation2 + $0x130] sm:$0xff] %v4578
    %4666 = vst [vmem:[#allocation2 + $0x138] sm:$0xff] %v4579
    %4667 = vst [vmem:[#allocation2 + $0x140] sm:$0xff] %v4580
    %4668 = vst [vmem:[#allocation2 + $0x148] sm:$0xff] %v4581
    %4669 = vst [vmem:[#allocation2 + $0x150] sm:$0xff] %v4582
    %4670 = vst [vmem:[#allocation2 + $0x158] sm:$0xff] %v4583
    %4671 = vst [vmem:[#allocation2 + $0x160] sm:$0xff] %v4584
    %4672 = vst [vmem:[#allocation2 + $0x168] sm:$0xff] %v4585
    %4673 = vst [vmem:[#allocation2 + $0x170] sm:$0xff] %v4586
    %4674 = vst [vmem:[#allocation2 + $0x178] sm:$0xff] %v4587
    %4675 = vst [vmem:[#allocation2 + $0x180] sm:$0xff] %v4588
    %4676 = vst [vmem:[#allocation2 + $0x188] sm:$0xff] %v4589
    %4677 = vst [vmem:[#allocation2 + $0x190] sm:$0xff] %v4590
    %4678 = vst [vmem:[#allocation2 + $0x198] sm:$0xff] %v4591
    %4679 = vst [vmem:[#allocation2 + $0x1a0] sm:$0xff] %v4592
    %4680 = vst [vmem:[#allocation2 + $0x1a8] sm:$0xff] %v4593
    %4681 = vst [vmem:[#allocation2 + $0x1b0] sm:$0xff] %v4594
    %4682 = vst [vmem:[#allocation2 + $0x1b8] sm:$0xff] %v4595
    %4683 = vst [vmem:[#allocation2 + $0x1c0] sm:$0xff] %v4596
    %4684 = vst [vmem:[#allocation2 + $0x1c8] sm:$0xff] %v4597
    %4685 = vst [vmem:[#allocation2 + $0x1d0] sm:$0xff] %v4598
    %4686 = vst [vmem:[#allocation2 + $0x1d8] sm:$0xff] %v4599
    %4687 = vst [vmem:[#allocation2 + $0x1e0] sm:$0xff] %v4600
    %4688 = vst [vmem:[#allocation2 + $0x1e8] sm:$0xff] %v4601
    %4689 = vst [vmem:[#allocation2 + $0x1f0] sm:$0xff] %v4602
    %4690 = vst [vmem:[#allocation2 + $0x1f8] sm:$0xff] %v4603
    %4691 = vst [vmem:[#allocation2 + $0x200] sm:$0xff] %v4604
    %4692 = vst [vmem:[#allocation2 + $0x208] sm:$0xff] %v4605
    %4693 = vst [vmem:[#allocation2 + $0x210] sm:$0xff] %v4606
    %4694 = vst [vmem:[#allocation2 + $0x218] sm:$0xff] %v4607
    %4695 = vst [vmem:[#allocation2 + $0x220] sm:$0xff] %v4608
    %4696 = vst [vmem:[#allocation2 + $0x228] sm:$0xff] %v4609
    %4697 = vst [vmem:[#allocation2 + $0x230] sm:$0xff] %v4610
    %4698 = vst [vmem:[#allocation2 + $0x238] sm:$0xff] %v4611
    %4699 = vst [vmem:[#allocation2 + $0x240] sm:$0xff] %v4612
    %4700 = vst [vmem:[#allocation2 + $0x248] sm:$0xff] %v4613
    %4701 = vst [vmem:[#allocation2 + $0x250] sm:$0xff] %v4614
    %4702 = vst [vmem:[#allocation2 + $0x258] sm:$0xff] %v4615
    %4703 = vst [vmem:[#allocation2 + $0x260] sm:$0xff] %v4616
    %4704 = vst [vmem:[#allocation2 + $0x268] sm:$0xff] %v4617
    %4705 = vst [vmem:[#allocation2 + $0x270] sm:$0xff] %v4618
    %4706 = vst [vmem:[#allocation2 + $0x278] sm:$0xff] %v4619
    %4707 = vst [vmem:[#allocation2 + $0x280] sm:$0xff] %v4620
    %4708 = vst [vmem:[#allocation2 + $0x288] sm:$0xff] %v4621
    %4709 = vst [vmem:[#allocation2 + $0x290] sm:$0xff] %v4622
    %4710 = vst [vmem:[#allocation2 + $0x298] sm:$0xff] %v4623
    %v4711 = vld [vmem:[#allocation2 + $0x5] sm:$0xff]
    %v4712 = vld [vmem:[#allocation2 + $0xd] sm:$0xff]
    %v4713 = vld [vmem:[#allocation2 + $0x15] sm:$0xff]
    %v4714 = vld [vmem:[#allocation2 + $0x1d] sm:$0xff]
    %v4715 = vld [vmem:[#allocation2 + $0x25] sm:$0xff]
    %v4716 = vld [vmem:[#allocation2 + $0x2d] sm:$0xff]
    %v4717 = vld [vmem:[#allocation2 + $0x35] sm:$0xff]
    %v4718 = vld [vmem:[#allocation2 + $0x3d] sm:$0xff]
    %v4719 = vld [vmem:[#allocation2 + $0x45] sm:$0xff]
    %v4720 = vld [vmem:[#allocation2 + $0x4d] sm:$0xff]
    %v4721 = vld [vmem:[#allocation2 + $0x55] sm:$0xff]
    %v4722 = vld [vmem:[#allocation2 + $0x5d] sm:$0xff]
    %v4723 = vld [vmem:[#allocation2 + $0x65] sm:$0xff]
    %v4724 = vld [vmem:[#allocation2 + $0x6d] sm:$0xff]
    %v4725 = vld [vmem:[#allocation2 + $0x75] sm:$0xff]
    %v4726 = vld [vmem:[#allocation2 + $0x7d] sm:$0xff]
    %v4727 = vld [vmem:[#allocation2 + $0x85] sm:$0xff]
    %v4728 = vld [vmem:[#allocation2 + $0x8d] sm:$0xff]
    %v4729 = vld [vmem:[#allocation2 + $0x95] sm:$0xff]
    %v4730 = vld [vmem:[#allocation2 + $0x9d] sm:$0xff]
    %v4731 = vld [vmem:[#allocation2 + $0xa5] sm:$0xff]
    %v4732 = vld [vmem:[#allocation2 + $0xad] sm:$0xff]
    %v4733 = vld [vmem:[#allocation2 + $0xb5] sm:$0xff]
    %v4734 = vld [vmem:[#allocation2 + $0xbd] sm:$0xff]
    %v4735 = vld [vmem:[#allocation2 + $0xc5] sm:$0xff]
    %v4736 = vld [vmem:[#allocation2 + $0xcd] sm:$0xff]
    %v4737 = vld [vmem:[#allocation2 + $0xd5] sm:$0xff]
    %v4738 = vld [vmem:[#allocation2 + $0xdd] sm:$0xff]
    %v4739 = vld [vmem:[#allocation2 + $0xe5] sm:$0xff]
    %v4740 = vld [vmem:[#allocation2 + $0xed] sm:$0xff]
    %v4741 = vld [vmem:[#allocation2 + $0xf5] sm:$0xff]
    %v4742 = vld [vmem:[#allocation2 + $0xfd] sm:$0xff]
    %v4743 = vld [vmem:[#allocation2 + $0x105] sm:$0xff]
    %v4744 = vld [vmem:[#allocation2 + $0x10d] sm:$0xff]
    %v4745 = vld [vmem:[#allocation2 + $0x115] sm:$0xff]
    %v4746 = vld [vmem:[#allocation2 + $0x11d] sm:$0xff]
    %v4747 = vld [vmem:[#allocation2 + $0x125] sm:$0xff]
    %v4748 = vld [vmem:[#allocation2 + $0x12d] sm:$0xff]
    %v4749 = vld [vmem:[#allocation2 + $0x135] sm:$0xff]
    %v4750 = vld [vmem:[#allocation2 + $0x13d] sm:$0xff]
    %v4751 = vld [vmem:[#allocation2 + $0x145] sm:$0xff]
    %v4752 = vld [vmem:[#allocation2 + $0x14d] sm:$0xff]
    %v4753 = vld [vmem:[#allocation2 + $0x155] sm:$0xff]
    %v4754 = vld [vmem:[#allocation2 + $0x15d] sm:$0xff]
    %v4755 = vld [vmem:[#allocation2 + $0x165] sm:$0xff]
    %v4756 = vld [vmem:[#allocation2 + $0x16d] sm:$0xff]
    %v4757 = vld [vmem:[#allocation2 + $0x175] sm:$0xff]
    %v4758 = vld [vmem:[#allocation2 + $0x17d] sm:$0xff]
    %v4759 = vld [vmem:[#allocation2 + $0x185] sm:$0xff]
    %v4760 = vld [vmem:[#allocation2 + $0x18d] sm:$0xff]
    %v4761 = vld [vmem:[#allocation2 + $0x195] sm:$0xff]
    %v4762 = vld [vmem:[#allocation2 + $0x19d] sm:$0xff]
    %v4763 = vld [vmem:[#allocation2 + $0x1a5] sm:$0xff]
    %v4764 = vld [vmem:[#allocation2 + $0x1ad] sm:$0xff]
    %v4765 = vld [vmem:[#allocation2 + $0x1b5] sm:$0xff]
    %v4766 = vld [vmem:[#allocation2 + $0x1bd] sm:$0xff]
    %v4767 = vld [vmem:[#allocation2 + $0x1c5] sm:$0xff]
    %v4768 = vld [vmem:[#allocation2 + $0x1cd] sm:$0xff]
    %v4769 = vld [vmem:[#allocation2 + $0x1d5] sm:$0xff]
    %v4770 = vld [vmem:[#allocation2 + $0x1dd] sm:$0xff]
    %v4771 = vld [vmem:[#allocation2 + $0x1e5] sm:$0xff]
    %v4772 = vld [vmem:[#allocation2 + $0x1ed] sm:$0xff]
    %v4773 = vld [vmem:[#allocation2 + $0x1f5] sm:$0xff]
    %v4774 = vld [vmem:[#allocation2 + $0x1fd] sm:$0xff]
    %v4775 = vld [vmem:[#allocation2 + $0x205] sm:$0xff]
    %v4776 = vld [vmem:[#allocation2 + $0x20d] sm:$0xff]
    %v4777 = vld [vmem:[#allocation2 + $0x215] sm:$0xff]
    %v4778 = vld [vmem:[#allocation2 + $0x21d] sm:$0xff]
    %v4779 = vld [vmem:[#allocation2 + $0x225] sm:$0xff]
    %v4780 = vld [vmem:[#allocation2 + $0x22d] sm:$0xff]
    %v4781 = vld [vmem:[#allocation2 + $0x235] sm:$0xff]
    %v4782 = vld [vmem:[#allocation2 + $0x23d] sm:$0xff]
    %v4783 = vld [vmem:[#allocation2 + $0x245] sm:$0xff]
    %v4784 = vld [vmem:[#allocation2 + $0x24d] sm:$0xff]
    %v4785 = vld [vmem:[#allocation2 + $0x255] sm:$0xff]
    %v4786 = vld [vmem:[#allocation2 + $0x25d] sm:$0xff]
    %v4787 = vld [vmem:[#allocation2 + $0x265] sm:$0xff]
    %v4788 = vld [vmem:[#allocation2 + $0x26d] sm:$0xff]
    %v4789 = vld [vmem:[#allocation2 + $0x275] sm:$0xff]
    %v4790 = vld [vmem:[#allocation2 + $0x27d] sm:$0xff]
    %v4791 = vld [vmem:[#allocation2 + $0x285] sm:$0xff]
    %v4792 = vld [vmem:[#allocation2 + $0x6] sm:$0xff]
    %v4793 = vld [vmem:[#allocation2 + $0xe] sm:$0xff]
    %v4794 = vld [vmem:[#allocation2 + $0x16] sm:$0xff]
    %v4795 = vld [vmem:[#allocation2 + $0x1e] sm:$0xff]
    %v4796 = vld [vmem:[#allocation2 + $0x26] sm:$0xff]
    %v4797 = vld [vmem:[#allocation2 + $0x2e] sm:$0xff]
    %v4798 = vld [vmem:[#allocation2 + $0x36] sm:$0xff]
    %v4799 = vld [vmem:[#allocation2 + $0x3e] sm:$0xff]
    %v4800 = vld [vmem:[#allocation2 + $0x46] sm:$0xff]
    %v4801 = vld [vmem:[#allocation2 + $0x4e] sm:$0xff]
    %v4802 = vld [vmem:[#allocation2 + $0x56] sm:$0xff]
    %v4803 = vld [vmem:[#allocation2 + $0x5e] sm:$0xff]
    %v4804 = vld [vmem:[#allocation2 + $0x66] sm:$0xff]
    %v4805 = vld [vmem:[#allocation2 + $0x6e] sm:$0xff]
    %v4806 = vld [vmem:[#allocation2 + $0x76] sm:$0xff]
    %v4807 = vld [vmem:[#allocation2 + $0x7e] sm:$0xff]
    %v4808 = vld [vmem:[#allocation2 + $0x86] sm:$0xff]
    %v4809 = vld [vmem:[#allocation2 + $0x8e] sm:$0xff]
    %v4810 = vld [vmem:[#allocation2 + $0x96] sm:$0xff]
    %v4811 = vld [vmem:[#allocation2 + $0x9e] sm:$0xff]
    %v4812 = vld [vmem:[#allocation2 + $0xa6] sm:$0xff]
    %v4813 = vld [vmem:[#allocation2 + $0xae] sm:$0xff]
    %v4814 = vld [vmem:[#allocation2 + $0xb6] sm:$0xff]
    %v4815 = vld [vmem:[#allocation2 + $0xbe] sm:$0xff]
    %v4816 = vld [vmem:[#allocation2 + $0xc6] sm:$0xff]
    %v4817 = vld [vmem:[#allocation2 + $0xce] sm:$0xff]
    %v4818 = vld [vmem:[#allocation2 + $0xd6] sm:$0xff]
    %v4819 = vld [vmem:[#allocation2 + $0xde] sm:$0xff]
    %v4820 = vld [vmem:[#allocation2 + $0xe6] sm:$0xff]
    %v4821 = vld [vmem:[#allocation2 + $0xee] sm:$0xff]
    %v4822 = vld [vmem:[#allocation2 + $0xf6] sm:$0xff]
    %v4823 = vld [vmem:[#allocation2 + $0xfe] sm:$0xff]
    %v4824 = vld [vmem:[#allocation2 + $0x106] sm:$0xff]
    %v4825 = vld [vmem:[#allocation2 + $0x10e] sm:$0xff]
    %v4826 = vld [vmem:[#allocation2 + $0x116] sm:$0xff]
    %v4827 = vld [vmem:[#allocation2 + $0x11e] sm:$0xff]
    %v4828 = vld [vmem:[#allocation2 + $0x126] sm:$0xff]
    %v4829 = vld [vmem:[#allocation2 + $0x12e] sm:$0xff]
    %v4830 = vld [vmem:[#allocation2 + $0x136] sm:$0xff]
    %v4831 = vld [vmem:[#allocation2 + $0x13e] sm:$0xff]
    %v4832 = vld [vmem:[#allocation2 + $0x146] sm:$0xff]
    %v4833 = vld [vmem:[#allocation2 + $0x14e] sm:$0xff]
    %v4834 = vld [vmem:[#allocation2 + $0x156] sm:$0xff]
    %v4835 = vld [vmem:[#allocation2 + $0x15e] sm:$0xff]
    %v4836 = vld [vmem:[#allocation2 + $0x166] sm:$0xff]
    %v4837 = vld [vmem:[#allocation2 + $0x16e] sm:$0xff]
    %v4838 = vld [vmem:[#allocation2 + $0x176] sm:$0xff]
    %v4839 = vld [vmem:[#allocation2 + $0x17e] sm:$0xff]
    %v4840 = vld [vmem:[#allocation2 + $0x186] sm:$0xff]
    %v4841 = vld [vmem:[#allocation2 + $0x18e] sm:$0xff]
    %v4842 = vld [vmem:[#allocation2 + $0x196] sm:$0xff]
    %v4843 = vld [vmem:[#allocation2 + $0x19e] sm:$0xff]
    %v4844 = vld [vmem:[#allocation2 + $0x1a6] sm:$0xff]
    %v4845 = vld [vmem:[#allocation2 + $0x1ae] sm:$0xff]
    %v4846 = vld [vmem:[#allocation2 + $0x1b6] sm:$0xff]
    %v4847 = vld [vmem:[#allocation2 + $0x1be] sm:$0xff]
    %v4848 = vld [vmem:[#allocation2 + $0x1c6] sm:$0xff]
    %v4849 = vld [vmem:[#allocation2 + $0x1ce] sm:$0xff]
    %v4850 = vld [vmem:[#allocation2 + $0x1d6] sm:$0xff]
    %v4851 = vld [vmem:[#allocation2 + $0x1de] sm:$0xff]
    %v4852 = vld [vmem:[#allocation2 + $0x1e6] sm:$0xff]
    %v4853 = vld [vmem:[#allocation2 + $0x1ee] sm:$0xff]
    %v4854 = vld [vmem:[#allocation2 + $0x1f6] sm:$0xff]
    %v4855 = vld [vmem:[#allocation2 + $0x1fe] sm:$0xff]
    %v4856 = vld [vmem:[#allocation2 + $0x206] sm:$0xff]
    %v4857 = vld [vmem:[#allocation2 + $0x20e] sm:$0xff]
    %v4858 = vld [vmem:[#allocation2 + $0x216] sm:$0xff]
    %v4859 = vld [vmem:[#allocation2 + $0x21e] sm:$0xff]
    %v4860 = vld [vmem:[#allocation2 + $0x226] sm:$0xff]
    %v4861 = vld [vmem:[#allocation2 + $0x22e] sm:$0xff]
    %v4862 = vld [vmem:[#allocation2 + $0x236] sm:$0xff]
    %v4863 = vld [vmem:[#allocation2 + $0x23e] sm:$0xff]
    %v4864 = vld [vmem:[#allocation2 + $0x246] sm:$0xff]
    %v4865 = vld [vmem:[#allocation2 + $0x24e] sm:$0xff]
    %v4866 = vld [vmem:[#allocation2 + $0x256] sm:$0xff]
    %v4867 = vld [vmem:[#allocation2 + $0x25e] sm:$0xff]
    %v4868 = vld [vmem:[#allocation2 + $0x266] sm:$0xff]
    %v4869 = vld [vmem:[#allocation2 + $0x26e] sm:$0xff]
    %v4870 = vld [vmem:[#allocation2 + $0x276] sm:$0xff]
    %v4871 = vld [vmem:[#allocation2 + $0x27e] sm:$0xff]
    %v4872 = vld [vmem:[#allocation2 + $0x286] sm:$0xff]
    %v4873 = vld [vmem:[#allocation2 + $0x7] sm:$0xff]
    %v4874 = vld [vmem:[#allocation2 + $0xf] sm:$0xff]
    %v4875 = vld [vmem:[#allocation2 + $0x17] sm:$0xff]
    %v4876 = vld [vmem:[#allocation2 + $0x1f] sm:$0xff]
    %v4877 = vld [vmem:[#allocation2 + $0x27] sm:$0xff]
    %v4878 = vld [vmem:[#allocation2 + $0x2f] sm:$0xff]
    %v4879 = vld [vmem:[#allocation2 + $0x37] sm:$0xff]
    %v4880 = vld [vmem:[#allocation2 + $0x3f] sm:$0xff]
    %v4881 = vld [vmem:[#allocation2 + $0x47] sm:$0xff]
    %v4882 = vld [vmem:[#allocation2 + $0x4f] sm:$0xff]
    %v4883 = vld [vmem:[#allocation2 + $0x57] sm:$0xff]
    %v4884 = vld [vmem:[#allocation2 + $0x5f] sm:$0xff]
    %v4885 = vld [vmem:[#allocation2 + $0x67] sm:$0xff]
    %v4886 = vld [vmem:[#allocation2 + $0x6f] sm:$0xff]
    %v4887 = vld [vmem:[#allocation2 + $0x77] sm:$0xff]
    %v4888 = vld [vmem:[#allocation2 + $0x7f] sm:$0xff]
    %v4889 = vld [vmem:[#allocation2 + $0x87] sm:$0xff]
    %v4890 = vld [vmem:[#allocation2 + $0x8f] sm:$0xff]
    %v4891 = vld [vmem:[#allocation2 + $0x97] sm:$0xff]
    %v4892 = vld [vmem:[#allocation2 + $0x9f] sm:$0xff]
    %v4893 = vld [vmem:[#allocation2 + $0xa7] sm:$0xff]
    %v4894 = vld [vmem:[#allocation2 + $0xaf] sm:$0xff]
    %v4895 = vld [vmem:[#allocation2 + $0xb7] sm:$0xff]
    %v4896 = vld [vmem:[#allocation2 + $0xbf] sm:$0xff]
    %v4897 = vld [vmem:[#allocation2 + $0xc7] sm:$0xff]
    %v4898 = vld [vmem:[#allocation2 + $0xcf] sm:$0xff]
    %v4899 = vld [vmem:[#allocation2 + $0xd7] sm:$0xff]
    %v4900 = vld [vmem:[#allocation2 + $0xdf] sm:$0xff]
    %v4901 = vld [vmem:[#allocation2 + $0xe7] sm:$0xff]
    %v4902 = vld [vmem:[#allocation2 + $0xef] sm:$0xff]
    %v4903 = vld [vmem:[#allocation2 + $0xf7] sm:$0xff]
    %v4904 = vld [vmem:[#allocation2 + $0xff] sm:$0xff]
    %v4905 = vld [vmem:[#allocation2 + $0x107] sm:$0xff]
    %v4906 = vld [vmem:[#allocation2 + $0x10f] sm:$0xff]
    %v4907 = vld [vmem:[#allocation2 + $0x117] sm:$0xff]
    %v4908 = vld [vmem:[#allocation2 + $0x11f] sm:$0xff]
    %v4909 = vld [vmem:[#allocation2 + $0x127] sm:$0xff]
    %v4910 = vld [vmem:[#allocation2 + $0x12f] sm:$0xff]
    %v4911 = vld [vmem:[#allocation2 + $0x137] sm:$0xff]
    %v4912 = vld [vmem:[#allocation2 + $0x13f] sm:$0xff]
    %v4913 = vld [vmem:[#allocation2 + $0x147] sm:$0xff]
    %v4914 = vld [vmem:[#allocation2 + $0x14f] sm:$0xff]
    %v4915 = vld [vmem:[#allocation2 + $0x157] sm:$0xff]
    %v4916 = vld [vmem:[#allocation2 + $0x15f] sm:$0xff]
    %v4917 = vld [vmem:[#allocation2 + $0x167] sm:$0xff]
    %v4918 = vld [vmem:[#allocation2 + $0x16f] sm:$0xff]
    %v4919 = vld [vmem:[#allocation2 + $0x177] sm:$0xff]
    %v4920 = vld [vmem:[#allocation2 + $0x17f] sm:$0xff]
    %v4921 = vld [vmem:[#allocation2 + $0x187] sm:$0xff]
    %v4922 = vld [vmem:[#allocation2 + $0x18f] sm:$0xff]
    %v4923 = vld [vmem:[#allocation2 + $0x197] sm:$0xff]
    %v4924 = vld [vmem:[#allocation2 + $0x19f] sm:$0xff]
    %v4925 = vld [vmem:[#allocation2 + $0x1a7] sm:$0xff]
    %v4926 = vld [vmem:[#allocation2 + $0x1af] sm:$0xff]
    %v4927 = vld [vmem:[#allocation2 + $0x1b7] sm:$0xff]
    %v4928 = vld [vmem:[#allocation2 + $0x1bf] sm:$0xff]
    %v4929 = vld [vmem:[#allocation2 + $0x1c7] sm:$0xff]
    %v4930 = vld [vmem:[#allocation2 + $0x1cf] sm:$0xff]
    %v4931 = vld [vmem:[#allocation2 + $0x1d7] sm:$0xff]
    %v4932 = vld [vmem:[#allocation2 + $0x1df] sm:$0xff]
    %v4933 = vld [vmem:[#allocation2 + $0x1e7] sm:$0xff]
    %v4934 = vld [vmem:[#allocation2 + $0x1ef] sm:$0xff]
    %v4935 = vld [vmem:[#allocation2 + $0x1f7] sm:$0xff]
    %v4936 = vld [vmem:[#allocation2 + $0x1ff] sm:$0xff]
    %v4937 = vld [vmem:[#allocation2 + $0x207] sm:$0xff]
    %v4938 = vld [vmem:[#allocation2 + $0x20f] sm:$0xff]
    %v4939 = vld [vmem:[#allocation2 + $0x217] sm:$0xff]
    %v4940 = vld [vmem:[#allocation2 + $0x21f] sm:$0xff]
    %v4941 = vld [vmem:[#allocation2 + $0x227] sm:$0xff]
    %v4942 = vld [vmem:[#allocation2 + $0x22f] sm:$0xff]
    %v4943 = vld [vmem:[#allocation2 + $0x237] sm:$0xff]
    %v4944 = vld [vmem:[#allocation2 + $0x23f] sm:$0xff]
    %v4945 = vld [vmem:[#allocation2 + $0x247] sm:$0xff]
    %v4946 = vld [vmem:[#allocation2 + $0x24f] sm:$0xff]
    %v4947 = vld [vmem:[#allocation2 + $0x257] sm:$0xff]
    %v4948 = vld [vmem:[#allocation2 + $0x25f] sm:$0xff]
    %v4949 = vld [vmem:[#allocation2 + $0x267] sm:$0xff]
    %v4950 = vld [vmem:[#allocation2 + $0x26f] sm:$0xff]
    %v4951 = vld [vmem:[#allocation2 + $0x277] sm:$0xff]
    %v4952 = vld [vmem:[#allocation2 + $0x27f] sm:$0xff]
    %v4953 = vld [vmem:[#allocation2 + $0x287] sm:$0xff]
    %v4954 = vld [vmem:[#allocation2 + $0x28f] sm:$0xff]
    %v4955 = vld [vmem:[#allocation2 + $0x297] sm:$0xff]
    %v4956 = vld [vmem:[#allocation2 + $0x18] sm:$0xff]
    %v4957 = vld [vmem:[#allocation2 + $0x20] sm:$0xff]
    %v4958 = vld [vmem:[#allocation2 + $0x28] sm:$0xff]
    %v4959 = vld [vmem:[#allocation2 + $0x30] sm:$0xff]
    %v4960 = vld [vmem:[#allocation2 + $0x38] sm:$0xff]
    %v4961 = vld [vmem:[#allocation2 + $0x40] sm:$0xff]
    %v4962 = vld [vmem:[#allocation2 + $0x48] sm:$0xff]
    %v4963 = vld [vmem:[#allocation2 + $0x50] sm:$0xff]
    %v4964 = vld [vmem:[#allocation2 + $0x58] sm:$0xff]
    %v4965 = vld [vmem:[#allocation2 + $0x60] sm:$0xff]
    %v4966 = vld [vmem:[#allocation2 + $0x68] sm:$0xff]
    %v4967 = vld [vmem:[#allocation2 + $0x70] sm:$0xff]
    %v4968 = vld [vmem:[#allocation2 + $0x78] sm:$0xff]
    %v4969 = vld [vmem:[#allocation2 + $0x80] sm:$0xff]
    %v4970 = vld [vmem:[#allocation2 + $0x88] sm:$0xff]
    %v4971 = vld [vmem:[#allocation2 + $0x90] sm:$0xff]
    %v4972 = vld [vmem:[#allocation2 + $0x98] sm:$0xff]
    %v4973 = vld [vmem:[#allocation2 + $0xa0] sm:$0xff]
    %v4974 = vld [vmem:[#allocation2 + $0xa8] sm:$0xff]
    %v4975 = vld [vmem:[#allocation2 + $0xb0] sm:$0xff]
    %v4976 = vld [vmem:[#allocation2 + $0xb8] sm:$0xff]
    %v4977 = vld [vmem:[#allocation2 + $0xc0] sm:$0xff]
    %v4978 = vld [vmem:[#allocation2 + $0xc8] sm:$0xff]
    %v4979 = vld [vmem:[#allocation2 + $0xd0] sm:$0xff]
    %v4980 = vld [vmem:[#allocation2 + $0xd8] sm:$0xff]
    %v4981 = vld [vmem:[#allocation2 + $0xe0] sm:$0xff]
    %v4982 = vld [vmem:[#allocation2 + $0xe8] sm:$0xff]
    %v4983 = vld [vmem:[#allocation2 + $0xf0] sm:$0xff]
    %v4984 = vld [vmem:[#allocation2 + $0xf8] sm:$0xff]
    %v4985 = vld [vmem:[#allocation2 + $0x100] sm:$0xff]
    %v4986 = vld [vmem:[#allocation2 + $0x108] sm:$0xff]
    %v4987 = vld [vmem:[#allocation2 + $0x110] sm:$0xff]
    %v4988 = vld [vmem:[#allocation2 + $0x118] sm:$0xff]
    %v4989 = vld [vmem:[#allocation2 + $0x120] sm:$0xff]
    %v4990 = vld [vmem:[#allocation2 + $0x128] sm:$0xff]
    %v4991 = vld [vmem:[#allocation2 + $0x130] sm:$0xff]
    %v4992 = vld [vmem:[#allocation2 + $0x138] sm:$0xff]
    %v4993 = vld [vmem:[#allocation2 + $0x140] sm:$0xff]
    %v4994 = vld [vmem:[#allocation2 + $0x148] sm:$0xff]
    %v4995 = vld [vmem:[#allocation2 + $0x150] sm:$0xff]
    %v4996 = vld [vmem:[#allocation2 + $0x158] sm:$0xff]
    %v4997 = vld [vmem:[#allocation2 + $0x160] sm:$0xff]
    %v4998 = vld [vmem:[#allocation2 + $0x168] sm:$0xff]
    %v4999 = vld [vmem:[#allocation2 + $0x170] sm:$0xff]
    %v5000 = vld [vmem:[#allocation2 + $0x178] sm:$0xff]
    %v5001 = vld [vmem:[#allocation2 + $0x180] sm:$0xff]
    %v5002 = vld [vmem:[#allocation2 + $0x188] sm:$0xff]
    %v5003 = vld [vmem:[#allocation2 + $0x190] sm:$0xff]
    %v5004 = vld [vmem:[#allocation2 + $0x198] sm:$0xff]
    %v5005 = vld [vmem:[#allocation2 + $0x1a0] sm:$0xff]
    %v5006 = vld [vmem:[#allocation2 + $0x1a8] sm:$0xff]
    %v5007 = vld [vmem:[#allocation2 + $0x1b0] sm:$0xff]
    %v5008 = vld [vmem:[#allocation2 + $0x1b8] sm:$0xff]
    %v5009 = vld [vmem:[#allocation2 + $0x1c0] sm:$0xff]
    %v5010 = vld [vmem:[#allocation2 + $0x1c8] sm:$0xff]
    %v5011 = vld [vmem:[#allocation2 + $0x1d0] sm:$0xff]
    %v5012 = vld [vmem:[#allocation2 + $0x1d8] sm:$0xff]
    %v5013 = vld [vmem:[#allocation2 + $0x1e0] sm:$0xff]
    %v5014 = vld [vmem:[#allocation2 + $0x1e8] sm:$0xff]
    %v5015 = vld [vmem:[#allocation2 + $0x1f0] sm:$0xff]
    %v5016 = vld [vmem:[#allocation2 + $0x1f8] sm:$0xff]
    %v5017 = vld [vmem:[#allocation2 + $0x200] sm:$0xff]
    %v5018 = vld [vmem:[#allocation2 + $0x208] sm:$0xff]
    %v5019 = vld [vmem:[#allocation2 + $0x210] sm:$0xff]
    %v5020 = vld [vmem:[#allocation2 + $0x218] sm:$0xff]
    %v5021 = vld [vmem:[#allocation2 + $0x220] sm:$0xff]
    %v5022 = vld [vmem:[#allocation2 + $0x228] sm:$0xff]
    %v5023 = vld [vmem:[#allocation2 + $0x230] sm:$0xff]
    %v5024 = vld [vmem:[#allocation2 + $0x238] sm:$0xff]
    %v5025 = vld [vmem:[#allocation2 + $0x240] sm:$0xff]
    %v5026 = vld [vmem:[#allocation2 + $0x248] sm:$0xff]
    %v5027 = vld [vmem:[#allocation2 + $0x250] sm:$0xff]
    %v5028 = vld [vmem:[#allocation2 + $0x258] sm:$0xff]
    %v5029 = vld [vmem:[#allocation2 + $0x260] sm:$0xff]
    %v5030 = vld [vmem:[#allocation2 + $0x268] sm:$0xff]
    %v5031 = vld [vmem:[#allocation2 + $0x270] sm:$0xff]
    %v5032 = vld [vmem:[#allocation2 + $0x278] sm:$0xff]
    %v5033 = vld [vmem:[#allocation2 + $0x280] sm:$0xff]
    %v5034 = vld [vmem:[#allocation2 + $0x288] sm:$0xff]
    %v5035 = vld [vmem:[#allocation2 + $0x290] sm:$0xff]
    %v5036 = vld [vmem:[#allocation2 + $0x298] sm:$0xff]
    %v5037 = vld [vmem:[#allocation2 + $0x19] sm:$0xff]
    %v5038 = vld [vmem:[#allocation2 + $0x21] sm:$0xff]
    %v5039 = vld [vmem:[#allocation2 + $0x29] sm:$0xff]
    %v5040 = vld [vmem:[#allocation2 + $0x31] sm:$0xff]
    %v5041 = vld [vmem:[#allocation2 + $0x39] sm:$0xff]
    %v5042 = vld [vmem:[#allocation2 + $0x41] sm:$0xff]
    %v5043 = vld [vmem:[#allocation2 + $0x49] sm:$0xff]
    %v5044 = vld [vmem:[#allocation2 + $0x51] sm:$0xff]
    %v5045 = vld [vmem:[#allocation2 + $0x59] sm:$0xff]
    %v5046 = vld [vmem:[#allocation2 + $0x61] sm:$0xff]
    %v5047 = vld [vmem:[#allocation2 + $0x69] sm:$0xff]
    %v5048 = vld [vmem:[#allocation2 + $0x71] sm:$0xff]
    %v5049 = vld [vmem:[#allocation2 + $0x79] sm:$0xff]
    %v5050 = vld [vmem:[#allocation2 + $0x81] sm:$0xff]
    %v5051 = vld [vmem:[#allocation2 + $0x89] sm:$0xff]
    %v5052 = vld [vmem:[#allocation2 + $0x91] sm:$0xff]
    %v5053 = vld [vmem:[#allocation2 + $0x99] sm:$0xff]
    %v5054 = vld [vmem:[#allocation2 + $0xa1] sm:$0xff]
    %v5055 = vld [vmem:[#allocation2 + $0xa9] sm:$0xff]
    %v5056 = vld [vmem:[#allocation2 + $0xb1] sm:$0xff]
    %v5057 = vld [vmem:[#allocation2 + $0xb9] sm:$0xff]
    %v5058 = vld [vmem:[#allocation2 + $0xc1] sm:$0xff]
    %v5059 = vld [vmem:[#allocation2 + $0xc9] sm:$0xff]
    %v5060 = vld [vmem:[#allocation2 + $0xd1] sm:$0xff]
    %v5061 = vld [vmem:[#allocation2 + $0xd9] sm:$0xff]
    %v5062 = vld [vmem:[#allocation2 + $0xe1] sm:$0xff]
    %v5063 = vld [vmem:[#allocation2 + $0xe9] sm:$0xff]
    %v5064 = vld [vmem:[#allocation2 + $0xf1] sm:$0xff]
    %v5065 = vld [vmem:[#allocation2 + $0xf9] sm:$0xff]
    %v5066 = vld [vmem:[#allocation2 + $0x101] sm:$0xff]
    %v5067 = vld [vmem:[#allocation2 + $0x109] sm:$0xff]
    %v5068 = vld [vmem:[#allocation2 + $0x111] sm:$0xff]
    %v5069 = vld [vmem:[#allocation2 + $0x119] sm:$0xff]
    %v5070 = vld [vmem:[#allocation2 + $0x121] sm:$0xff]
    %v5071 = vld [vmem:[#allocation2 + $0x129] sm:$0xff]
    %v5072 = vld [vmem:[#allocation2 + $0x131] sm:$0xff]
    %v5073 = vld [vmem:[#allocation2 + $0x139] sm:$0xff]
    %v5074 = vld [vmem:[#allocation2 + $0x141] sm:$0xff]
    %v5075 = vld [vmem:[#allocation2 + $0x149] sm:$0xff]
    %v5076 = vld [vmem:[#allocation2 + $0x151] sm:$0xff]
    %v5077 = vld [vmem:[#allocation2 + $0x159] sm:$0xff]
    %v5078 = vld [vmem:[#allocation2 + $0x161] sm:$0xff]
    %v5079 = vld [vmem:[#allocation2 + $0x169] sm:$0xff]
    %v5080 = vld [vmem:[#allocation2 + $0x171] sm:$0xff]
    %v5081 = vld [vmem:[#allocation2 + $0x179] sm:$0xff]
    %v5082 = vld [vmem:[#allocation2 + $0x181] sm:$0xff]
    %v5083 = vld [vmem:[#allocation2 + $0x189] sm:$0xff]
    %v5084 = vld [vmem:[#allocation2 + $0x191] sm:$0xff]
    %v5085 = vld [vmem:[#allocation2 + $0x199] sm:$0xff]
    %v5086 = vld [vmem:[#allocation2 + $0x1a1] sm:$0xff]
    %v5087 = vld [vmem:[#allocation2 + $0x1a9] sm:$0xff]
    %v5088 = vld [vmem:[#allocation2 + $0x1b1] sm:$0xff]
    %v5089 = vld [vmem:[#allocation2 + $0x1b9] sm:$0xff]
    %v5090 = vld [vmem:[#allocation2 + $0x1c1] sm:$0xff]
    %v5091 = vld [vmem:[#allocation2 + $0x1c9] sm:$0xff]
    %v5092 = vld [vmem:[#allocation2 + $0x1d1] sm:$0xff]
    %v5093 = vld [vmem:[#allocation2 + $0x1d9] sm:$0xff]
    %v5094 = vld [vmem:[#allocation2 + $0x1e1] sm:$0xff]
    %v5095 = vld [vmem:[#allocation2 + $0x1e9] sm:$0xff]
    %v5096 = vld [vmem:[#allocation2 + $0x1f1] sm:$0xff]
    %v5097 = vld [vmem:[#allocation2 + $0x1f9] sm:$0xff]
    %v5098 = vld [vmem:[#allocation2 + $0x201] sm:$0xff]
    %v5099 = vld [vmem:[#allocation2 + $0x209] sm:$0xff]
    %v5100 = vld [vmem:[#allocation2 + $0x211] sm:$0xff]
    %v5101 = vld [vmem:[#allocation2 + $0x219] sm:$0xff]
    %v5102 = vld [vmem:[#allocation2 + $0x221] sm:$0xff]
    %v5103 = vld [vmem:[#allocation2 + $0x229] sm:$0xff]
    %v5104 = vld [vmem:[#allocation2 + $0x231] sm:$0xff]
    %v5105 = vld [vmem:[#allocation2 + $0x239] sm:$0xff]
    %v5106 = vld [vmem:[#allocation2 + $0x241] sm:$0xff]
    %v5107 = vld [vmem:[#allocation2 + $0x249] sm:$0xff]
    %v5108 = vld [vmem:[#allocation2 + $0x251] sm:$0xff]
    %v5109 = vld [vmem:[#allocation2 + $0x259] sm:$0xff]
    %v5110 = vld [vmem:[#allocation2 + $0x261] sm:$0xff]
    %v5111 = vld [vmem:[#allocation2 + $0x269] sm:$0xff]
    %v5112 = vld [vmem:[#allocation2 + $0x271] sm:$0xff]
    %v5113 = vld [vmem:[#allocation2 + $0x279] sm:$0xff]
    %v5114 = vld [vmem:[#allocation2 + $0x281] sm:$0xff]
    %v5115 = vld [vmem:[#allocation2 + $0x289] sm:$0xff]
    %v5116 = vld [vmem:[#allocation2 + $0x291] sm:$0xff]
    %v5117 = vld [vmem:[#allocation2 + $0x299] sm:$0xff]
    %v5118 = vld [vmem:[#allocation2 + $0x2a1] sm:$0xff]
    %v5119 = vld [vmem:[#allocation2 + $0x2a9] sm:$0xff]
    %v5120 = vld [vmem:[#allocation2 + $0x2a] sm:$0xff]
    %v5121 = vld [vmem:[#allocation2 + $0x32] sm:$0xff]
    %v5122 = vld [vmem:[#allocation2 + $0x3a] sm:$0xff]
    %v5123 = vld [vmem:[#allocation2 + $0x42] sm:$0xff]
    %v5124 = vld [vmem:[#allocation2 + $0x4a] sm:$0xff]
    %v5125 = vld [vmem:[#allocation2 + $0x52] sm:$0xff]
    %v5126 = vld [vmem:[#allocation2 + $0x5a] sm:$0xff]
    %v5127 = vld [vmem:[#allocation2 + $0x62] sm:$0xff]
    %v5128 = vld [vmem:[#allocation2 + $0x6a] sm:$0xff]
    %v5129 = vld [vmem:[#allocation2 + $0x72] sm:$0xff]
    %v5130 = vld [vmem:[#allocation2 + $0x7a] sm:$0xff]
    %v5131 = vld [vmem:[#allocation2 + $0x82] sm:$0xff]
    %v5132 = vld [vmem:[#allocation2 + $0x8a] sm:$0xff]
    %v5133 = vld [vmem:[#allocation2 + $0x92] sm:$0xff]
    %v5134 = vld [vmem:[#allocation2 + $0x9a] sm:$0xff]
    %v5135 = vld [vmem:[#allocation2 + $0xa2] sm:$0xff]
    %v5136 = vld [vmem:[#allocation2 + $0xaa] sm:$0xff]
    %v5137 = vld [vmem:[#allocation2 + $0xb2] sm:$0xff]
    %v5138 = vld [vmem:[#allocation2 + $0xba] sm:$0xff]
    %v5139 = vld [vmem:[#allocation2 + $0xc2] sm:$0xff]
    %v5140 = vld [vmem:[#allocation2 + $0xca] sm:$0xff]
    %v5141 = vld [vmem:[#allocation2 + $0xd2] sm:$0xff]
    %v5142 = vld [vmem:[#allocation2 + $0xda] sm:$0xff]
    %v5143 = vld [vmem:[#allocation2 + $0xe2] sm:$0xff]
    %v5144 = vld [vmem:[#allocation2 + $0xea] sm:$0xff]
    %v5145 = vld [vmem:[#allocation2 + $0xf2] sm:$0xff]
    %v5146 = vld [vmem:[#allocation2 + $0xfa] sm:$0xff]
    %v5147 = vld [vmem:[#allocation2 + $0x102] sm:$0xff]
    %v5148 = vld [vmem:[#allocation2 + $0x10a] sm:$0xff]
    %v5149 = vld [vmem:[#allocation2 + $0x112] sm:$0xff]
    %v5150 = vld [vmem:[#allocation2 + $0x11a] sm:$0xff]
    %v5151 = vld [vmem:[#allocation2 + $0x122] sm:$0xff]
    %v5152 = vld [vmem:[#allocation2 + $0x12a] sm:$0xff]
    %v5153 = vld [vmem:[#allocation2 + $0x132] sm:$0xff]
    %v5154 = vld [vmem:[#allocation2 + $0x13a] sm:$0xff]
    %v5155 = vld [vmem:[#allocation2 + $0x142] sm:$0xff]
    %v5156 = vld [vmem:[#allocation2 + $0x14a] sm:$0xff]
    %v5157 = vld [vmem:[#allocation2 + $0x152] sm:$0xff]
    %v5158 = vld [vmem:[#allocation2 + $0x15a] sm:$0xff]
    %v5159 = vld [vmem:[#allocation2 + $0x162] sm:$0xff]
    %v5160 = vld [vmem:[#allocation2 + $0x16a] sm:$0xff]
    %v5161 = vld [vmem:[#allocation2 + $0x172] sm:$0xff]
    %v5162 = vld [vmem:[#allocation2 + $0x17a] sm:$0xff]
    %v5163 = vld [vmem:[#allocation2 + $0x182] sm:$0xff]
    %v5164 = vld [vmem:[#allocation2 + $0x18a] sm:$0xff]
    %v5165 = vld [vmem:[#allocation2 + $0x192] sm:$0xff]
    %v5166 = vld [vmem:[#allocation2 + $0x19a] sm:$0xff]
    %v5167 = vld [vmem:[#allocation2 + $0x1a2] sm:$0xff]
    %v5168 = vld [vmem:[#allocation2 + $0x1aa] sm:$0xff]
    %v5169 = vld [vmem:[#allocation2 + $0x1b2] sm:$0xff]
    %v5170 = vld [vmem:[#allocation2 + $0x1ba] sm:$0xff]
    %v5171 = vld [vmem:[#allocation2 + $0x1c2] sm:$0xff]
    %v5172 = vld [vmem:[#allocation2 + $0x1ca] sm:$0xff]
    %v5173 = vld [vmem:[#allocation2 + $0x1d2] sm:$0xff]
    %v5174 = vld [vmem:[#allocation2 + $0x1da] sm:$0xff]
    %v5175 = vld [vmem:[#allocation2 + $0x1e2] sm:$0xff]
    %v5176 = vld [vmem:[#allocation2 + $0x1ea] sm:$0xff]
    %v5177 = vld [vmem:[#allocation2 + $0x1f2] sm:$0xff]
    %v5178 = vld [vmem:[#allocation2 + $0x1fa] sm:$0xff]
    %v5179 = vld [vmem:[#allocation2 + $0x202] sm:$0xff]
    %v5180 = vld [vmem:[#allocation2 + $0x20a] sm:$0xff]
    %v5181 = vld [vmem:[#allocation2 + $0x212] sm:$0xff]
    %v5182 = vld [vmem:[#allocation2 + $0x21a] sm:$0xff]
    %v5183 = vld [vmem:[#allocation2 + $0x222] sm:$0xff]
    %v5184 = vld [vmem:[#allocation2 + $0x22a] sm:$0xff]
    %v5185 = vld [vmem:[#allocation2 + $0x232] sm:$0xff]
    %v5186 = vld [vmem:[#allocation2 + $0x23a] sm:$0xff]
    %v5187 = vld [vmem:[#allocation2 + $0x242] sm:$0xff]
    %v5188 = vld [vmem:[#allocation2 + $0x24a] sm:$0xff]
    %v5189 = vld [vmem:[#allocation2 + $0x252] sm:$0xff]
    %v5190 = vld [vmem:[#allocation2 + $0x25a] sm:$0xff]
    %v5191 = vld [vmem:[#allocation2 + $0x262] sm:$0xff]
    %v5192 = vld [vmem:[#allocation2 + $0x26a] sm:$0xff]
    %v5193 = vld [vmem:[#allocation2 + $0x272] sm:$0xff]
    %v5194 = vld [vmem:[#allocation2 + $0x27a] sm:$0xff]
    %v5195 = vld [vmem:[#allocation2 + $0x282] sm:$0xff]
    %v5196 = vld [vmem:[#allocation2 + $0x28a] sm:$0xff]
    %v5197 = vld [vmem:[#allocation2 + $0x292] sm:$0xff]
    %v5198 = vld [vmem:[#allocation2 + $0x29a] sm:$0xff]
    %v5199 = vld [vmem:[#allocation2 + $0x2a2] sm:$0xff]
    %v5200 = vld [vmem:[#allocation2 + $0x2aa] sm:$0xff]
    %v5201 = vld [vmem:[#allocation2 + $0x2b] sm:$0xff]
    %v5202 = vld [vmem:[#allocation2 + $0x33] sm:$0xff]
    %v5203 = vld [vmem:[#allocation2 + $0x3b] sm:$0xff]
    %v5204 = vld [vmem:[#allocation2 + $0x43] sm:$0xff]
    %v5205 = vld [vmem:[#allocation2 + $0x4b] sm:$0xff]
    %v5206 = vld [vmem:[#allocation2 + $0x53] sm:$0xff]
    %v5207 = vld [vmem:[#allocation2 + $0x5b] sm:$0xff]
    %v5208 = vld [vmem:[#allocation2 + $0x63] sm:$0xff]
    %v5209 = vld [vmem:[#allocation2 + $0x6b] sm:$0xff]
    %v5210 = vld [vmem:[#allocation2 + $0x73] sm:$0xff]
    %v5211 = vld [vmem:[#allocation2 + $0x7b] sm:$0xff]
    %v5212 = vld [vmem:[#allocation2 + $0x83] sm:$0xff]
    %v5213 = vld [vmem:[#allocation2 + $0x8b] sm:$0xff]
    %v5214 = vld [vmem:[#allocation2 + $0x93] sm:$0xff]
    %v5215 = vld [vmem:[#allocation2 + $0x9b] sm:$0xff]
    %v5216 = vld [vmem:[#allocation2 + $0xa3] sm:$0xff]
    %v5217 = vld [vmem:[#allocation2 + $0xab] sm:$0xff]
    %v5218 = vld [vmem:[#allocation2 + $0xb3] sm:$0xff]
    %v5219 = vld [vmem:[#allocation2 + $0xbb] sm:$0xff]
    %v5220 = vld [vmem:[#allocation2 + $0xc3] sm:$0xff]
    %v5221 = vld [vmem:[#allocation2 + $0xcb] sm:$0xff]
    %v5222 = vld [vmem:[#allocation2 + $0xd3] sm:$0xff]
    %v5223 = vld [vmem:[#allocation2 + $0xdb] sm:$0xff]
    %v5224 = vld [vmem:[#allocation2 + $0xe3] sm:$0xff]
    %v5225 = vld [vmem:[#allocation2 + $0xeb] sm:$0xff]
    %v5226 = vld [vmem:[#allocation2 + $0xf3] sm:$0xff]
    %v5227 = vld [vmem:[#allocation2 + $0xfb] sm:$0xff]
    %v5228 = vld [vmem:[#allocation2 + $0x103] sm:$0xff]
    %v5229 = vld [vmem:[#allocation2 + $0x10b] sm:$0xff]
    %v5230 = vld [vmem:[#allocation2 + $0x113] sm:$0xff]
    %v5231 = vld [vmem:[#allocation2 + $0x11b] sm:$0xff]
    %v5232 = vld [vmem:[#allocation2 + $0x123] sm:$0xff]
    %v5233 = vld [vmem:[#allocation2 + $0x12b] sm:$0xff]
    %v5234 = vld [vmem:[#allocation2 + $0x133] sm:$0xff]
    %v5235 = vld [vmem:[#allocation2 + $0x13b] sm:$0xff]
    %v5236 = vld [vmem:[#allocation2 + $0x143] sm:$0xff]
    %v5237 = vld [vmem:[#allocation2 + $0x14b] sm:$0xff]
    %v5238 = vld [vmem:[#allocation2 + $0x153] sm:$0xff]
    %v5239 = vld [vmem:[#allocation2 + $0x15b] sm:$0xff]
    %v5240 = vld [vmem:[#allocation2 + $0x163] sm:$0xff]
    %v5241 = vld [vmem:[#allocation2 + $0x16b] sm:$0xff]
    %v5242 = vld [vmem:[#allocation2 + $0x173] sm:$0xff]
    %v5243 = vld [vmem:[#allocation2 + $0x17b] sm:$0xff]
    %v5244 = vld [vmem:[#allocation2 + $0x183] sm:$0xff]
    %v5245 = vld [vmem:[#allocation2 + $0x18b] sm:$0xff]
    %v5246 = vld [vmem:[#allocation2 + $0x193] sm:$0xff]
    %v5247 = vld [vmem:[#allocation2 + $0x19b] sm:$0xff]
    %v5248 = vld [vmem:[#allocation2 + $0x1a3] sm:$0xff]
    %v5249 = vld [vmem:[#allocation2 + $0x1ab] sm:$0xff]
    %v5250 = vld [vmem:[#allocation2 + $0x1b3] sm:$0xff]
    %v5251 = vld [vmem:[#allocation2 + $0x1bb] sm:$0xff]
    %v5252 = vld [vmem:[#allocation2 + $0x1c3] sm:$0xff]
    %v5253 = vld [vmem:[#allocation2 + $0x1cb] sm:$0xff]
    %v5254 = vld [vmem:[#allocation2 + $0x1d3] sm:$0xff]
    %v5255 = vld [vmem:[#allocation2 + $0x1db] sm:$0xff]
    %v5256 = vld [vmem:[#allocation2 + $0x1e3] sm:$0xff]
    %v5257 = vld [vmem:[#allocation2 + $0x1eb] sm:$0xff]
    %v5258 = vld [vmem:[#allocation2 + $0x1f3] sm:$0xff]
    %v5259 = vld [vmem:[#allocation2 + $0x1fb] sm:$0xff]
    %v5260 = vld [vmem:[#allocation2 + $0x203] sm:$0xff]
    %v5261 = vld [vmem:[#allocation2 + $0x20b] sm:$0xff]
    %v5262 = vld [vmem:[#allocation2 + $0x213] sm:$0xff]
    %v5263 = vld [vmem:[#allocation2 + $0x21b] sm:$0xff]
    %v5264 = vld [vmem:[#allocation2 + $0x223] sm:$0xff]
    %v5265 = vld [vmem:[#allocation2 + $0x22b] sm:$0xff]
    %v5266 = vld [vmem:[#allocation2 + $0x233] sm:$0xff]
    %v5267 = vld [vmem:[#allocation2 + $0x23b] sm:$0xff]
    %v5268 = vld [vmem:[#allocation2 + $0x243] sm:$0xff]
    %v5269 = vld [vmem:[#allocation2 + $0x24b] sm:$0xff]
    %v5270 = vld [vmem:[#allocation2 + $0x253] sm:$0xff]
    %v5271 = vld [vmem:[#allocation2 + $0x25b] sm:$0xff]
    %v5272 = vld [vmem:[#allocation2 + $0x263] sm:$0xff]
    %v5273 = vld [vmem:[#allocation2 + $0x26b] sm:$0xff]
    %v5274 = vld [vmem:[#allocation2 + $0x273] sm:$0xff]
    %v5275 = vld [vmem:[#allocation2 + $0x27b] sm:$0xff]
    %v5276 = vld [vmem:[#allocation2 + $0x283] sm:$0xff]
    %v5277 = vld [vmem:[#allocation2 + $0x28b] sm:$0xff]
    %v5278 = vld [vmem:[#allocation2 + $0x293] sm:$0xff]
    %v5279 = vld [vmem:[#allocation2 + $0x29b] sm:$0xff]
    %v5280 = vld [vmem:[#allocation2 + $0x2a3] sm:$0xff]
    %v5281 = vld [vmem:[#allocation2 + $0x2ab] sm:$0xff]
    %v5282 = vpack.c.bf16 %v4712, %v4711
    %v5283 = vpack.c.bf16 %v4793, %v4792
    %v5284 = vpack.c.bf16 %v4874, %v4873
    %v5285 = vpack.c.bf16 %v4876, %v4875
    %v5286 = vpack.c.bf16 %v4957, %v4956
    %v5287 = vpack.c.bf16 %v5038, %v5037
    %v5288 = vpack.c.bf16 %v5040, %v5039
    %v5289 = vpack.c.bf16 %v5121, %v5120
    %v5290 = vpack.c.bf16 %v5202, %v5201
    %v5291 = vpack.c.bf16 %v4714, %v4713
    %v5292 = vpack.c.bf16 %v4795, %v4794
    %v5293 = vpack.c.bf16 %v4878, %v4877
    %v5294 = vpack.c.bf16 %v4959, %v4958
    %v5295 = vpack.c.bf16 %v5042, %v5041
    %v5296 = vpack.c.bf16 %v5123, %v5122
    %v5297 = vpack.c.bf16 %v5204, %v5203
    %v5298 = vpack.c.bf16 %v4716, %v4715
    %v5299 = vpack.c.bf16 %v4797, %v4796
    %v5300 = vpack.c.bf16 %v4880, %v4879
    %v5301 = vpack.c.bf16 %v4961, %v4960
    %v5302 = vpack.c.bf16 %v5044, %v5043
    %v5303 = vpack.c.bf16 %v5125, %v5124
    %v5304 = vpack.c.bf16 %v5206, %v5205
    %v5305 = vpack.c.bf16 %v4718, %v4717
    %v5306 = vpack.c.bf16 %v4799, %v4798
    %v5307 = vpack.c.bf16 %v4882, %v4881
    %v5308 = vpack.c.bf16 %v4963, %v4962
    %v5309 = vpack.c.bf16 %v5046, %v5045
    %v5310 = vpack.c.bf16 %v5127, %v5126
    %v5311 = vpack.c.bf16 %v5208, %v5207
    %v5312 = vpack.c.bf16 %v4720, %v4719
    %v5313 = vpack.c.bf16 %v4801, %v4800
    %v5314 = vpack.c.bf16 %v4884, %v4883
    %v5315 = vpack.c.bf16 %v4965, %v4964
    %v5316 = vpack.c.bf16 %v5048, %v5047
    %v5317 = vpack.c.bf16 %v5129, %v5128
    %v5318 = vpack.c.bf16 %v5210, %v5209
    %v5319 = vpack.c.bf16 %v4722, %v4721
    %v5320 = vpack.c.bf16 %v4803, %v4802
    %v5321 = vpack.c.bf16 %v4886, %v4885
    %v5322 = vpack.c.bf16 %v4967, %v4966
    %v5323 = vpack.c.bf16 %v5050, %v5049
    %v5324 = vpack.c.bf16 %v5131, %v5130
    %v5325 = vpack.c.bf16 %v5212, %v5211
    %v5326 = vpack.c.bf16 %v4724, %v4723
    %v5327 = vpack.c.bf16 %v4805, %v4804
    %v5328 = vpack.c.bf16 %v4888, %v4887
    %v5329 = vpack.c.bf16 %v4969, %v4968
    %v5330 = vpack.c.bf16 %v5052, %v5051
    %v5331 = vpack.c.bf16 %v5133, %v5132
    %v5332 = vpack.c.bf16 %v5214, %v5213
    %v5333 = vpack.c.bf16 %v4726, %v4725
    %v5334 = vpack.c.bf16 %v4807, %v4806
    %v5335 = vpack.c.bf16 %v4890, %v4889
    %v5336 = vpack.c.bf16 %v4971, %v4970
    %v5337 = vpack.c.bf16 %v5054, %v5053
    %v5338 = vpack.c.bf16 %v5135, %v5134
    %v5339 = vpack.c.bf16 %v5216, %v5215
    %v5340 = vpack.c.bf16 %v4728, %v4727
    %v5341 = vpack.c.bf16 %v4809, %v4808
    %v5342 = vpack.c.bf16 %v4892, %v4891
    %v5343 = vpack.c.bf16 %v4973, %v4972
    %v5344 = vpack.c.bf16 %v5056, %v5055
    %v5345 = vpack.c.bf16 %v5137, %v5136
    %v5346 = vpack.c.bf16 %v5218, %v5217
    %v5347 = vpack.c.bf16 %v4730, %v4729
    %v5348 = vpack.c.bf16 %v4811, %v4810
    %v5349 = vpack.c.bf16 %v4894, %v4893
    %v5350 = vpack.c.bf16 %v4975, %v4974
    %v5351 = vpack.c.bf16 %v5058, %v5057
    %v5352 = vpack.c.bf16 %v5139, %v5138
    %v5353 = vpack.c.bf16 %v5220, %v5219
    %v5354 = vpack.c.bf16 %v4732, %v4731
    %v5355 = vpack.c.bf16 %v4813, %v4812
    %v5356 = vpack.c.bf16 %v4896, %v4895
    %v5357 = vpack.c.bf16 %v4977, %v4976
    %v5358 = vpack.c.bf16 %v5060, %v5059
    %v5359 = vpack.c.bf16 %v5141, %v5140
    %v5360 = vpack.c.bf16 %v5222, %v5221
    %v5361 = vpack.c.bf16 %v4734, %v4733
    %v5362 = vpack.c.bf16 %v4815, %v4814
    %v5363 = vpack.c.bf16 %v4898, %v4897
    %v5364 = vpack.c.bf16 %v4979, %v4978
    %v5365 = vpack.c.bf16 %v5062, %v5061
    %v5366 = vpack.c.bf16 %v5143, %v5142
    %v5367 = vpack.c.bf16 %v5224, %v5223
    %v5368 = vpack.c.bf16 %v4736, %v4735
    %v5369 = vpack.c.bf16 %v4817, %v4816
    %v5370 = vpack.c.bf16 %v4900, %v4899
    %v5371 = vpack.c.bf16 %v4981, %v4980
    %v5372 = vpack.c.bf16 %v5064, %v5063
    %v5373 = vpack.c.bf16 %v5145, %v5144
    %v5374 = vpack.c.bf16 %v5226, %v5225
    %v5375 = vpack.c.bf16 %v4738, %v4737
    %v5376 = vpack.c.bf16 %v4819, %v4818
    %v5377 = vpack.c.bf16 %v4902, %v4901
    %v5378 = vpack.c.bf16 %v4983, %v4982
    %v5379 = vpack.c.bf16 %v5066, %v5065
    %v5380 = vpack.c.bf16 %v5147, %v5146
    %v5381 = vpack.c.bf16 %v5228, %v5227
    %v5382 = vpack.c.bf16 %v4740, %v4739
    %v5383 = vpack.c.bf16 %v4821, %v4820
    %v5384 = vpack.c.bf16 %v4904, %v4903
    %v5385 = vpack.c.bf16 %v4985, %v4984
    %v5386 = vpack.c.bf16 %v5068, %v5067
    %v5387 = vpack.c.bf16 %v5149, %v5148
    %v5388 = vpack.c.bf16 %v5230, %v5229
    %v5389 = vpack.c.bf16 %v4742, %v4741
    %v5390 = vpack.c.bf16 %v4823, %v4822
    %v5391 = vpack.c.bf16 %v4906, %v4905
    %v5392 = vpack.c.bf16 %v4987, %v4986
    %v5393 = vpack.c.bf16 %v5070, %v5069
    %v5394 = vpack.c.bf16 %v5151, %v5150
    %v5395 = vpack.c.bf16 %v5232, %v5231
    %v5396 = vpack.c.bf16 %v4744, %v4743
    %v5397 = vpack.c.bf16 %v4825, %v4824
    %v5398 = vpack.c.bf16 %v4908, %v4907
    %v5399 = vpack.c.bf16 %v4989, %v4988
    %v5400 = vpack.c.bf16 %v5072, %v5071
    %v5401 = vpack.c.bf16 %v5153, %v5152
    %v5402 = vpack.c.bf16 %v5234, %v5233
    %v5403 = vpack.c.bf16 %v4746, %v4745
    %v5404 = vpack.c.bf16 %v4827, %v4826
    %v5405 = vpack.c.bf16 %v4910, %v4909
    %v5406 = vpack.c.bf16 %v4991, %v4990
    %v5407 = vpack.c.bf16 %v5074, %v5073
    %v5408 = vpack.c.bf16 %v5155, %v5154
    %v5409 = vpack.c.bf16 %v5236, %v5235
    %v5410 = vpack.c.bf16 %v4748, %v4747
    %v5411 = vpack.c.bf16 %v4829, %v4828
    %v5412 = vpack.c.bf16 %v4912, %v4911
    %v5413 = vpack.c.bf16 %v4993, %v4992
    %v5414 = vpack.c.bf16 %v5076, %v5075
    %v5415 = vpack.c.bf16 %v5157, %v5156
    %v5416 = vpack.c.bf16 %v5238, %v5237
    %v5417 = vpack.c.bf16 %v4750, %v4749
    %v5418 = vpack.c.bf16 %v4831, %v4830
    %v5419 = vpack.c.bf16 %v4914, %v4913
    %v5420 = vpack.c.bf16 %v4995, %v4994
    %v5421 = vpack.c.bf16 %v5078, %v5077
    %v5422 = vpack.c.bf16 %v5159, %v5158
    %v5423 = vpack.c.bf16 %v5240, %v5239
    %v5424 = vpack.c.bf16 %v4752, %v4751
    %v5425 = vpack.c.bf16 %v4833, %v4832
    %v5426 = vpack.c.bf16 %v4916, %v4915
    %v5427 = vpack.c.bf16 %v4997, %v4996
    %v5428 = vpack.c.bf16 %v5080, %v5079
    %v5429 = vpack.c.bf16 %v5161, %v5160
    %v5430 = vpack.c.bf16 %v5242, %v5241
    %v5431 = vpack.c.bf16 %v4754, %v4753
    %v5432 = vpack.c.bf16 %v4835, %v4834
    %v5433 = vpack.c.bf16 %v4918, %v4917
    %v5434 = vpack.c.bf16 %v4999, %v4998
    %v5435 = vpack.c.bf16 %v5082, %v5081
    %v5436 = vpack.c.bf16 %v5163, %v5162
    %v5437 = vpack.c.bf16 %v5244, %v5243
    %v5438 = vpack.c.bf16 %v4756, %v4755
    %v5439 = vpack.c.bf16 %v4837, %v4836
    %v5440 = vpack.c.bf16 %v4920, %v4919
    %v5441 = vpack.c.bf16 %v5001, %v5000
    %v5442 = vpack.c.bf16 %v5084, %v5083
    %v5443 = vpack.c.bf16 %v5165, %v5164
    %v5444 = vpack.c.bf16 %v5246, %v5245
    %v5445 = vpack.c.bf16 %v4758, %v4757
    %v5446 = vpack.c.bf16 %v4839, %v4838
    %v5447 = vpack.c.bf16 %v4922, %v4921
    %v5448 = vpack.c.bf16 %v5003, %v5002
    %v5449 = vpack.c.bf16 %v5086, %v5085
    %v5450 = vpack.c.bf16 %v5167, %v5166
    %v5451 = vpack.c.bf16 %v5248, %v5247
    %v5452 = vpack.c.bf16 %v4760, %v4759
    %v5453 = vpack.c.bf16 %v4841, %v4840
    %v5454 = vpack.c.bf16 %v4924, %v4923
    %v5455 = vpack.c.bf16 %v5005, %v5004
    %v5456 = vpack.c.bf16 %v5088, %v5087
    %v5457 = vpack.c.bf16 %v5169, %v5168
    %v5458 = vpack.c.bf16 %v5250, %v5249
    %v5459 = vpack.c.bf16 %v4762, %v4761
    %v5460 = vpack.c.bf16 %v4843, %v4842
    %v5461 = vpack.c.bf16 %v4926, %v4925
    %v5462 = vpack.c.bf16 %v5007, %v5006
    %v5463 = vpack.c.bf16 %v5090, %v5089
    %v5464 = vpack.c.bf16 %v5171, %v5170
    %v5465 = vpack.c.bf16 %v5252, %v5251
    %v5466 = vpack.c.bf16 %v4764, %v4763
    %v5467 = vpack.c.bf16 %v4845, %v4844
    %v5468 = vpack.c.bf16 %v4928, %v4927
    %v5469 = vpack.c.bf16 %v5009, %v5008
    %v5470 = vpack.c.bf16 %v5092, %v5091
    %v5471 = vpack.c.bf16 %v5173, %v5172
    %v5472 = vpack.c.bf16 %v5254, %v5253
    %v5473 = vpack.c.bf16 %v4766, %v4765
    %v5474 = vpack.c.bf16 %v4847, %v4846
    %v5475 = vpack.c.bf16 %v4930, %v4929
    %v5476 = vpack.c.bf16 %v5011, %v5010
    %v5477 = vpack.c.bf16 %v5094, %v5093
    %v5478 = vpack.c.bf16 %v5175, %v5174
    %v5479 = vpack.c.bf16 %v5256, %v5255
    %v5480 = vpack.c.bf16 %v4768, %v4767
    %v5481 = vpack.c.bf16 %v4849, %v4848
    %v5482 = vpack.c.bf16 %v4932, %v4931
    %v5483 = vpack.c.bf16 %v5013, %v5012
    %v5484 = vpack.c.bf16 %v5096, %v5095
    %v5485 = vpack.c.bf16 %v5177, %v5176
    %v5486 = vpack.c.bf16 %v5258, %v5257
    %v5487 = vpack.c.bf16 %v4770, %v4769
    %v5488 = vpack.c.bf16 %v4851, %v4850
    %v5489 = vpack.c.bf16 %v4934, %v4933
    %v5490 = vpack.c.bf16 %v5015, %v5014
    %v5491 = vpack.c.bf16 %v5098, %v5097
    %v5492 = vpack.c.bf16 %v5179, %v5178
    %v5493 = vpack.c.bf16 %v5260, %v5259
    %v5494 = vpack.c.bf16 %v4772, %v4771
    %v5495 = vpack.c.bf16 %v4853, %v4852
    %v5496 = vpack.c.bf16 %v4936, %v4935
    %v5497 = vpack.c.bf16 %v5017, %v5016
    %v5498 = vpack.c.bf16 %v5100, %v5099
    %v5499 = vpack.c.bf16 %v5181, %v5180
    %v5500 = vpack.c.bf16 %v5262, %v5261
    %v5501 = vpack.c.bf16 %v4774, %v4773
    %v5502 = vpack.c.bf16 %v4855, %v4854
    %v5503 = vpack.c.bf16 %v4938, %v4937
    %v5504 = vpack.c.bf16 %v5019, %v5018
    %v5505 = vpack.c.bf16 %v5102, %v5101
    %v5506 = vpack.c.bf16 %v5183, %v5182
    %v5507 = vpack.c.bf16 %v5264, %v5263
    %v5508 = vpack.c.bf16 %v4776, %v4775
    %v5509 = vpack.c.bf16 %v4857, %v4856
    %v5510 = vpack.c.bf16 %v4940, %v4939
    %v5511 = vpack.c.bf16 %v5021, %v5020
    %v5512 = vpack.c.bf16 %v5104, %v5103
    %v5513 = vpack.c.bf16 %v5185, %v5184
    %v5514 = vpack.c.bf16 %v5266, %v5265
    %v5515 = vpack.c.bf16 %v4778, %v4777
    %v5516 = vpack.c.bf16 %v4859, %v4858
    %v5517 = vpack.c.bf16 %v4942, %v4941
    %v5518 = vpack.c.bf16 %v5023, %v5022
    %v5519 = vpack.c.bf16 %v5106, %v5105
    %v5520 = vpack.c.bf16 %v5187, %v5186
    %v5521 = vpack.c.bf16 %v5268, %v5267
    %v5522 = vpack.c.bf16 %v4780, %v4779
    %v5523 = vpack.c.bf16 %v4861, %v4860
    %v5524 = vpack.c.bf16 %v4944, %v4943
    %v5525 = vpack.c.bf16 %v5025, %v5024
    %v5526 = vpack.c.bf16 %v5108, %v5107
    %v5527 = vpack.c.bf16 %v5189, %v5188
    %v5528 = vpack.c.bf16 %v5270, %v5269
    %v5529 = vpack.c.bf16 %v4782, %v4781
    %v5530 = vpack.c.bf16 %v4863, %v4862
    %v5531 = vpack.c.bf16 %v4946, %v4945
    %v5532 = vpack.c.bf16 %v5027, %v5026
    %v5533 = vpack.c.bf16 %v5110, %v5109
    %v5534 = vpack.c.bf16 %v5191, %v5190
    %v5535 = vpack.c.bf16 %v5272, %v5271
    %v5536 = vpack.c.bf16 %v4784, %v4783
    %v5537 = vpack.c.bf16 %v4865, %v4864
    %v5538 = vpack.c.bf16 %v4948, %v4947
    %v5539 = vpack.c.bf16 %v5029, %v5028
    %v5540 = vpack.c.bf16 %v5112, %v5111
    %v5541 = vpack.c.bf16 %v5193, %v5192
    %v5542 = vpack.c.bf16 %v5274, %v5273
    %v5543 = vpack.c.bf16 %v4786, %v4785
    %v5544 = vpack.c.bf16 %v4867, %v4866
    %v5545 = vpack.c.bf16 %v4950, %v4949
    %v5546 = vpack.c.bf16 %v5031, %v5030
    %v5547 = vpack.c.bf16 %v5114, %v5113
    %v5548 = vpack.c.bf16 %v5195, %v5194
    %v5549 = vpack.c.bf16 %v5276, %v5275
    %v5550 = vpack.c.bf16 %v4788, %v4787
    %v5551 = vpack.c.bf16 %v4869, %v4868
    %v5552 = vpack.c.bf16 %v4952, %v4951
    %v5553 = vpack.c.bf16 %v5033, %v5032
    %v5554 = vpack.c.bf16 %v5116, %v5115
    %v5555 = vpack.c.bf16 %v5197, %v5196
    %v5556 = vpack.c.bf16 %v5278, %v5277
    %v5557 = vpack.c.bf16 %v4790, %v4789
    %v5558 = vpack.c.bf16 %v4871, %v4870
    %v5559 = vpack.c.bf16 %v4954, %v4953
    %v5560 = vpack.c.bf16 %v5035, %v5034
    %v5561 = vpack.c.bf16 %v5118, %v5117
    %v5562 = vpack.c.bf16 %v5199, %v5198
    %v5563 = vpack.c.bf16 %v5280, %v5279
    %v5564 = vpack.c.bf16 %v4791, %v4791
    %v5565 = vpack.c.bf16 %v4872, %v4872
    %v5566 = vpack.c.bf16 %v4953, %v4953
    %v5567 = vpack.c.bf16 %v4955, %v4955
    %v5568 = vpack.c.bf16 %v5036, %v5036
    %v5569 = vpack.c.bf16 %v5117, %v5117
    %v5570 = vpack.c.bf16 %v5119, %v5119
    %v5571 = vpack.c.bf16 %v5200, %v5200
    %v5572 = vpack.c.bf16 %v5281, %v5281
    %v5573 = vld [vmem:[#allocation6] sm:$0xf]
    %v5574 = vld [vmem:[#allocation6 + $0x4] sm:$0xf]
    %v5575 = vld [vmem:[#allocation6 + $0x8] sm:$0xf]
    %v5576 = vld [vmem:[#allocation6 + $0xc] sm:$0xf]
    %v5577 = vld [vmem:[#allocation6 + $0x10] sm:$0xf]
    %v5578 = vld [vmem:[#allocation6 + $0x14] sm:$0xf]
    %v5579 = vld [vmem:[#allocation6 + $0x18] sm:$0xf]
    %v5580 = vld [vmem:[#allocation6 + $0x1c] sm:$0xf]
    %v5581 = vld [vmem:[#allocation6 + $0x20] sm:$0xf]
    %v5582 = vld [vmem:[#allocation6 + $0x24] sm:$0xf]
    %v5583 = vld [vmem:[#allocation6 + $0x28] sm:$0xf]
    %v5584 = vld [vmem:[#allocation6 + $0x2c] sm:$0xf]
    %v5585 = vld [vmem:[#allocation6 + $0x30] sm:$0xf]
    %v5586 = vld [vmem:[#allocation6 + $0x34] sm:$0xf]
    %v5587 = vld [vmem:[#allocation6 + $0x38] sm:$0xf]
    %v5588 = vld [vmem:[#allocation6 + $0x3c] sm:$0xf]
    %v5589 = vld [vmem:[#allocation6 + $0x40] sm:$0xf]
    %v5590 = vld [vmem:[#allocation6 + $0x44] sm:$0xf]
    %v5591 = vld [vmem:[#allocation6 + $0x48] sm:$0xf]
    %v5592 = vld [vmem:[#allocation6 + $0x4c] sm:$0xf]
    %v5593 = vld [vmem:[#allocation6 + $0x50] sm:$0xf]
    %v5594 = vld [vmem:[#allocation6 + $0x54] sm:$0xf]
    %v5595 = vld [vmem:[#allocation6 + $0x58] sm:$0xf]
    %v5596 = vld [vmem:[#allocation6 + $0x5c] sm:$0xf]
    %v5597 = vld [vmem:[#allocation6 + $0x60] sm:$0xf]
    %v5598 = vld [vmem:[#allocation6 + $0x64] sm:$0xf]
    %v5599 = vld [vmem:[#allocation6 + $0x68] sm:$0xf]
    %v5600 = vld [vmem:[#allocation6 + $0x6c] sm:$0xf]
    %v5601 = vld [vmem:[#allocation6 + $0x70] sm:$0xf]
    %v5602 = vld [vmem:[#allocation6 + $0x74] sm:$0xf]
    %v5603 = vld [vmem:[#allocation6 + $0x78] sm:$0xf]
    %v5604 = vld [vmem:[#allocation6 + $0x7c] sm:$0xf]
    %v5605 = vld [vmem:[#allocation6 + $0x80] sm:$0xf]
    %v5606 = vld [vmem:[#allocation6 + $0x84] sm:$0xf]
    %v5607 = vld [vmem:[#allocation6 + $0x88] sm:$0xf]
    %v5608 = vld [vmem:[#allocation6 + $0x8c] sm:$0xf]
    %v5609 = vld [vmem:[#allocation6 + $0x90] sm:$0xf]
    %v5610 = vld [vmem:[#allocation6 + $0x94] sm:$0xf]
    %v5611 = vld [vmem:[#allocation6 + $0x98] sm:$0xf]
    %v5612 = vld [vmem:[#allocation6 + $0x9c] sm:$0xf]
    %v5613 = vld [vmem:[#allocation6 + $0xa0] sm:$0xf]
    %v5614 = vld [vmem:[#allocation6 + $0xa4] sm:$0xf]
    %v5615 = vld [vmem:[#allocation6 + $0xa8] sm:$0xf]
    %v5616 = vld [vmem:[#allocation6 + $0xac] sm:$0xf]
    %v5617 = vld [vmem:[#allocation6 + $0xb0] sm:$0xf]
    %v5618 = vld [vmem:[#allocation6 + $0xb4] sm:$0xf]
    %v5619 = vld [vmem:[#allocation6 + $0xb8] sm:$0xf]
    %v5620 = vld [vmem:[#allocation6 + $0xbc] sm:$0xf]
    %v5621 = vld [vmem:[#allocation6 + $0xc0] sm:$0xf]
    %v5622 = vld [vmem:[#allocation6 + $0xc4] sm:$0xf]
    %v5623 = vld [vmem:[#allocation6 + $0xc8] sm:$0xf]
    %v5624 = vld [vmem:[#allocation6 + $0xcc] sm:$0xf]
    %v5625 = vld [vmem:[#allocation6 + $0xd0] sm:$0xf]
    %v5626 = vld [vmem:[#allocation6 + $0xd4] sm:$0xf]
    %v5627 = vld [vmem:[#allocation6 + $0xd8] sm:$0xf]
    %v5628 = vld [vmem:[#allocation6 + $0xdc] sm:$0xf]
    %v5629 = vld [vmem:[#allocation6 + $0xe0] sm:$0xf]
    %v5630 = vld [vmem:[#allocation6 + $0xe4] sm:$0xf]
    %v5631 = vld [vmem:[#allocation6 + $0xe8] sm:$0xf]
    %v5632 = vld [vmem:[#allocation6 + $0xec] sm:$0xf]
    %v5633 = vld [vmem:[#allocation6 + $0xf0] sm:$0xf]
    %v5634 = vld [vmem:[#allocation6 + $0xf4] sm:$0xf]
    %v5635 = vld [vmem:[#allocation6 + $0xf8] sm:$0xf]
    %v5636 = vld [vmem:[#allocation6 + $0xfc] sm:$0xf]
    %v5637 = vld [vmem:[#allocation6 + $0x100] sm:$0xf]
    %v5638 = vld [vmem:[#allocation6 + $0x104] sm:$0xf]
    %v5639 = vld [vmem:[#allocation6 + $0x108] sm:$0xf]
    %v5640 = vld [vmem:[#allocation6 + $0x10c] sm:$0xf]
    %v5641 = vld [vmem:[#allocation6 + $0x110] sm:$0xf]
    %v5642 = vld [vmem:[#allocation6 + $0x114] sm:$0xf]
    %v5643 = vld [vmem:[#allocation6 + $0x118] sm:$0xf]
    %v5644 = vld [vmem:[#allocation6 + $0x11c] sm:$0xf]
    %v5645 = vld [vmem:[#allocation6 + $0x120] sm:$0xf]
    %v5646 = vld [vmem:[#allocation6 + $0x124] sm:$0xf]
    %v5647 = vld [vmem:[#allocation6 + $0x128] sm:$0xf]
    %v5648 = vld [vmem:[#allocation6 + $0x12c] sm:$0xf]
    %v5649 = vld [vmem:[#allocation6 + $0x130] sm:$0xf]
    %v5650 = vld [vmem:[#allocation6 + $0x134] sm:$0xf]
    %v5651 = vld [vmem:[#allocation6 + $0x138] sm:$0xf]
    %v5652 = vld [vmem:[#allocation6 + $0x13c] sm:$0xf]
    %v5653 = vld [vmem:[#allocation6 + $0x140] sm:$0xf]
    %v5654 = vld [vmem:[#allocation6 + $0x144] sm:$0xf]
    %v5655 = vld [vmem:[#allocation6 + $0x148] sm:$0xf]
    %v5656 = vld [vmem:[#allocation6 + $0x14c] sm:$0xf]
    %v5657 = vld [vmem:[#allocation6 + $0x150] sm:$0xf]
    %v5658 = vld [vmem:[#allocation6 + $0x154] sm:$0xf]
    %v5659 = vld [vmem:[#allocation6 + $0x158] sm:$0xf]
    %v5660 = vld [vmem:[#allocation6 + $0x15c] sm:$0xf]
    %v5661 = vld [vmem:[#allocation6 + $0x160] sm:$0xf]
    %v5662 = vld [vmem:[#allocation6 + $0x164] sm:$0xf]
    %v5663 = vld [vmem:[#allocation6 + $0x168] sm:$0xf]
    %v5664 = vld [vmem:[#allocation6 + $0x16c] sm:$0xf]
    %v5665 = vld [vmem:[#allocation6 + $0x170] sm:$0xf]
    %v5666 = vld [vmem:[#allocation6 + $0x174] sm:$0xf]
    %v5667 = vld [vmem:[#allocation6 + $0x178] sm:$0xf]
    %v5668 = vld [vmem:[#allocation6 + $0x17c] sm:$0xf]
    %v5669 = vld [vmem:[#allocation6 + $0x180] sm:$0xf]
    %v5670 = vld [vmem:[#allocation6 + $0x184] sm:$0xf]
    %v5671 = vld [vmem:[#allocation6 + $0x188] sm:$0xf]
    %v5672 = vld [vmem:[#allocation6 + $0x18c] sm:$0xf]
    %v5673 = vld [vmem:[#allocation6 + $0x190] sm:$0xf]
    %v5674 = vld [vmem:[#allocation6 + $0x194] sm:$0xf]
    %v5675 = vld [vmem:[#allocation6 + $0x198] sm:$0xf]
    %v5676 = vld [vmem:[#allocation6 + $0x19c] sm:$0xf]
    %v5677 = vld [vmem:[#allocation6 + $0x1a0] sm:$0xf]
    %v5678 = vld [vmem:[#allocation6 + $0x1a4] sm:$0xf]
    %v5679 = vld [vmem:[#allocation6 + $0x1a8] sm:$0xf]
    %v5680 = vld [vmem:[#allocation6 + $0x1ac] sm:$0xf]
    %v5681 = vld [vmem:[#allocation6 + $0x1b0] sm:$0xf]
    %v5682 = vld [vmem:[#allocation6 + $0x1b4] sm:$0xf]
    %v5683 = vld [vmem:[#allocation6 + $0x1b8] sm:$0xf]
    %v5684 = vld [vmem:[#allocation6 + $0x1bc] sm:$0xf]
    %v5685 = vld [vmem:[#allocation6 + $0x1c0] sm:$0xf]
    %v5686 = vld [vmem:[#allocation6 + $0x1c4] sm:$0xf]
    %v5687 = vld [vmem:[#allocation6 + $0x1c8] sm:$0xf]
    %v5688 = vld [vmem:[#allocation6 + $0x1cc] sm:$0xf]
    %v5689 = vld [vmem:[#allocation6 + $0x1d0] sm:$0xf]
    %v5690 = vld [vmem:[#allocation6 + $0x1d4] sm:$0xf]
    %v5691 = vld [vmem:[#allocation6 + $0x1d8] sm:$0xf]
    %v5692 = vld [vmem:[#allocation6 + $0x1dc] sm:$0xf]
    %v5693 = vld [vmem:[#allocation6 + $0x1e0] sm:$0xf]
    %v5694 = vld [vmem:[#allocation6 + $0x1e4] sm:$0xf]
    %v5695 = vld [vmem:[#allocation6 + $0x1e8] sm:$0xf]
    %v5696 = vld [vmem:[#allocation6 + $0x1ec] sm:$0xf]
    %v5697 = vld [vmem:[#allocation6 + $0x1f0] sm:$0xf]
    %v5698 = vld [vmem:[#allocation6 + $0x1f4] sm:$0xf]
    %v5699 = vld [vmem:[#allocation6 + $0x1f8] sm:$0xf]
    %v5700 = vld [vmem:[#allocation6 + $0x1fc] sm:$0xf]
    %v5701 = vld [vmem:[#allocation6 + $0x200] sm:$0xf]
    %v5702 = vld [vmem:[#allocation6 + $0x204] sm:$0xf]
    %v5703 = vld [vmem:[#allocation6 + $0x208] sm:$0xf]
    %v5704 = vld [vmem:[#allocation6 + $0x20c] sm:$0xf]
    %v5705 = vld [vmem:[#allocation6 + $0x210] sm:$0xf]
    %v5706 = vld [vmem:[#allocation6 + $0x214] sm:$0xf]
    %v5707 = vld [vmem:[#allocation6 + $0x218] sm:$0xf]
    %v5708 = vld [vmem:[#allocation6 + $0x21c] sm:$0xf]
    %v5709 = vld [vmem:[#allocation6 + $0x220] sm:$0xf]
    %v5710 = vld [vmem:[#allocation6 + $0x224] sm:$0xf]
    %v5711 = vld [vmem:[#allocation6 + $0x228] sm:$0xf]
    %v5712 = vld [vmem:[#allocation6 + $0x22c] sm:$0xf]
    %v5713 = vld [vmem:[#allocation6 + $0x230] sm:$0xf]
    %v5714 = vld [vmem:[#allocation6 + $0x234] sm:$0xf]
    %v5715 = vld [vmem:[#allocation6 + $0x238] sm:$0xf]
    %v5716 = vld [vmem:[#allocation6 + $0x23c] sm:$0xf]
    %v5861 = vunpack.c.l.b16 %v5573
    %v5862 = vunpack.c.l.b16 %v5574
    %v5863 = vunpack.c.l.b16 %v5575
    %v5864 = vunpack.c.l.b16 %v5576
    %v5865 = vunpack.c.l.b16 %v5577
    %v5866 = vunpack.c.l.b16 %v5578
    %v5867 = vunpack.c.l.b16 %v5579
    %v5868 = vunpack.c.l.b16 %v5580
    %v5869 = vunpack.c.l.b16 %v5581
    %v5870 = vunpack.c.l.b16 %v5582
    %v5871 = vunpack.c.l.b16 %v5583
    %v5872 = vunpack.c.l.b16 %v5584
    %v5873 = vunpack.c.l.b16 %v5585
    %v5874 = vunpack.c.l.b16 %v5586
    %v5875 = vunpack.c.l.b16 %v5587
    %v5876 = vunpack.c.l.b16 %v5588
    %v5877 = vunpack.c.l.b16 %v5589
    %v5878 = vunpack.c.l.b16 %v5590
    %v5879 = vunpack.c.l.b16 %v5591
    %v5880 = vunpack.c.l.b16 %v5592
    %v5881 = vunpack.c.l.b16 %v5593
    %v5882 = vunpack.c.l.b16 %v5594
    %v5883 = vunpack.c.l.b16 %v5595
    %v5884 = vunpack.c.l.b16 %v5596
    %v5885 = vunpack.c.l.b16 %v5597
    %v5886 = vunpack.c.l.b16 %v5598
    %v5887 = vunpack.c.l.b16 %v5599
    %v5888 = vunpack.c.l.b16 %v5600
    %v5889 = vunpack.c.l.b16 %v5601
    %v5890 = vunpack.c.l.b16 %v5602
    %v5891 = vunpack.c.l.b16 %v5603
    %v5892 = vunpack.c.l.b16 %v5604
    %v5893 = vunpack.c.l.b16 %v5605
    %v5894 = vunpack.c.l.b16 %v5606
    %v5895 = vunpack.c.l.b16 %v5607
    %v5896 = vunpack.c.l.b16 %v5608
    %v5897 = vunpack.c.l.b16 %v5609
    %v5898 = vunpack.c.l.b16 %v5610
    %v5899 = vunpack.c.l.b16 %v5611
    %v5900 = vunpack.c.l.b16 %v5612
    %v5901 = vunpack.c.l.b16 %v5613
    %v5902 = vunpack.c.l.b16 %v5614
    %v5903 = vunpack.c.l.b16 %v5615
    %v5904 = vunpack.c.l.b16 %v5616
    %v5905 = vunpack.c.l.b16 %v5617
    %v5906 = vunpack.c.l.b16 %v5618
    %v5907 = vunpack.c.l.b16 %v5619
    %v5908 = vunpack.c.l.b16 %v5620
    %v5909 = vunpack.c.l.b16 %v5621
    %v5910 = vunpack.c.l.b16 %v5622
    %v5911 = vunpack.c.l.b16 %v5623
    %v5912 = vunpack.c.l.b16 %v5624
    %v5913 = vunpack.c.l.b16 %v5625
    %v5914 = vunpack.c.l.b16 %v5626
    %v5915 = vunpack.c.l.b16 %v5627
    %v5916 = vunpack.c.l.b16 %v5628
    %v5917 = vunpack.c.l.b16 %v5629
    %v5918 = vunpack.c.l.b16 %v5630
    %v5919 = vunpack.c.l.b16 %v5631
    %v5920 = vunpack.c.l.b16 %v5632
    %v5921 = vunpack.c.l.b16 %v5633
    %v5922 = vunpack.c.l.b16 %v5634
    %v5923 = vunpack.c.l.b16 %v5635
    %v5924 = vunpack.c.l.b16 %v5636
    %v5925 = vunpack.c.l.b16 %v5637
    %v5926 = vunpack.c.l.b16 %v5638
    %v5927 = vunpack.c.l.b16 %v5639
    %v5928 = vunpack.c.l.b16 %v5640
    %v5929 = vunpack.c.l.b16 %v5641
    %v5930 = vunpack.c.l.b16 %v5642
    %v5931 = vunpack.c.l.b16 %v5643
    %v5932 = vunpack.c.l.b16 %v5644
    %v5933 = vunpack.c.l.b16 %v5645
    %v5934 = vunpack.c.l.b16 %v5646
    %v5935 = vunpack.c.l.b16 %v5647
    %v5936 = vunpack.c.l.b16 %v5648
    %v5937 = vunpack.c.l.b16 %v5649
    %v5938 = vunpack.c.l.b16 %v5650
    %v5939 = vunpack.c.l.b16 %v5651
    %v5940 = vunpack.c.l.b16 %v5652
    %v5941 = vunpack.c.l.b16 %v5653
    %v5942 = vunpack.c.l.b16 %v5654
    %v5943 = vunpack.c.l.b16 %v5655
    %v5944 = vunpack.c.l.b16 %v5656
    %v5945 = vunpack.c.l.b16 %v5657
    %v5946 = vunpack.c.l.b16 %v5658
    %v5947 = vunpack.c.l.b16 %v5659
    %v5948 = vunpack.c.l.b16 %v5660
    %v5949 = vunpack.c.l.b16 %v5661
    %v5950 = vunpack.c.l.b16 %v5662
    %v5951 = vunpack.c.l.b16 %v5663
    %v5952 = vunpack.c.l.b16 %v5664
    %v5953 = vunpack.c.l.b16 %v5665
    %v5954 = vunpack.c.l.b16 %v5666
    %v5955 = vunpack.c.l.b16 %v5667
    %v5956 = vunpack.c.l.b16 %v5668
    %v5957 = vunpack.c.l.b16 %v5669
    %v5958 = vunpack.c.l.b16 %v5670
    %v5959 = vunpack.c.l.b16 %v5671
    %v5960 = vunpack.c.l.b16 %v5672
    %v5961 = vunpack.c.l.b16 %v5673
    %v5962 = vunpack.c.l.b16 %v5674
    %v5963 = vunpack.c.l.b16 %v5675
    %v5964 = vunpack.c.l.b16 %v5676
    %v5965 = vunpack.c.l.b16 %v5677
    %v5966 = vunpack.c.l.b16 %v5678
    %v5967 = vunpack.c.l.b16 %v5679
    %v5968 = vunpack.c.l.b16 %v5680
    %v5969 = vunpack.c.l.b16 %v5681
    %v5970 = vunpack.c.l.b16 %v5682
    %v5971 = vunpack.c.l.b16 %v5683
    %v5972 = vunpack.c.l.b16 %v5684
    %v5973 = vunpack.c.l.b16 %v5685
    %v5974 = vunpack.c.l.b16 %v5686
    %v5975 = vunpack.c.l.b16 %v5687
    %v5976 = vunpack.c.l.b16 %v5688
    %v5977 = vunpack.c.l.b16 %v5689
    %v5978 = vunpack.c.l.b16 %v5690
    %v5979 = vunpack.c.l.b16 %v5691
    %v5980 = vunpack.c.l.b16 %v5692
    %v5981 = vunpack.c.l.b16 %v5693
    %v5982 = vunpack.c.l.b16 %v5694
    %v5983 = vunpack.c.l.b16 %v5695
    %v5984 = vunpack.c.l.b16 %v5696
    %v5985 = vunpack.c.l.b16 %v5697
    %v5986 = vunpack.c.l.b16 %v5698
    %v5987 = vunpack.c.l.b16 %v5699
    %v5988 = vunpack.c.l.b16 %v5700
    %v5989 = vunpack.c.l.b16 %v5701
    %v5990 = vunpack.c.l.b16 %v5702
    %v5991 = vunpack.c.l.b16 %v5703
    %v5992 = vunpack.c.l.b16 %v5704
    %v5993 = vunpack.c.l.b16 %v5705
    %v5994 = vunpack.c.l.b16 %v5706
    %v5995 = vunpack.c.l.b16 %v5707
    %v5996 = vunpack.c.l.b16 %v5708
    %v5997 = vunpack.c.l.b16 %v5709
    %v5998 = vunpack.c.l.b16 %v5710
    %v5999 = vunpack.c.l.b16 %v5711
    %v6000 = vunpack.c.l.b16 %v5712
    %v6001 = vunpack.c.l.b16 %v5713
    %v6002 = vunpack.c.l.b16 %v5714
    %v6003 = vunpack.c.l.b16 %v5715
    %v6004 = vunpack.c.l.b16 %v5716
    %v6005 = vpack.c.b16 %v5862, %v5861
    %v6006 = vpack.c.b16 %v5864, %v5863
    %v6007 = vpack.c.b16 %v5866, %v5865
    %v6008 = vpack.c.b16 %v5868, %v5867
    %v6009 = vpack.c.b16 %v5870, %v5869
    %v6010 = vpack.c.b16 %v5872, %v5871
    %v6011 = vpack.c.b16 %v5874, %v5873
    %v6012 = vpack.c.b16 %v5876, %v5875
    %v6013 = vpack.c.b16 %v5878, %v5877
    %v6014 = vpack.c.b16 %v5880, %v5879
    %v6015 = vpack.c.b16 %v5882, %v5881
    %v6016 = vpack.c.b16 %v5884, %v5883
    %v6017 = vpack.c.b16 %v5886, %v5885
    %v6018 = vpack.c.b16 %v5888, %v5887
    %v6019 = vpack.c.b16 %v5890, %v5889
    %v6020 = vpack.c.b16 %v5892, %v5891
    %v6021 = vpack.c.b16 %v5894, %v5893
    %v6022 = vpack.c.b16 %v5896, %v5895
    %v6023 = vpack.c.b16 %v5898, %v5897
    %v6024 = vpack.c.b16 %v5900, %v5899
    %v6025 = vpack.c.b16 %v5902, %v5901
    %v6026 = vpack.c.b16 %v5904, %v5903
    %v6027 = vpack.c.b16 %v5906, %v5905
    %v6028 = vpack.c.b16 %v5908, %v5907
    %v6029 = vpack.c.b16 %v5910, %v5909
    %v6030 = vpack.c.b16 %v5912, %v5911
    %v6031 = vpack.c.b16 %v5914, %v5913
    %v6032 = vpack.c.b16 %v5916, %v5915
    %v6033 = vpack.c.b16 %v5918, %v5917
    %v6034 = vpack.c.b16 %v5920, %v5919
    %v6035 = vpack.c.b16 %v5922, %v5921
    %v6036 = vpack.c.b16 %v5924, %v5923
    %v6037 = vpack.c.b16 %v5926, %v5925
    %v6038 = vpack.c.b16 %v5928, %v5927
    %v6039 = vpack.c.b16 %v5930, %v5929
    %v6040 = vpack.c.b16 %v5932, %v5931
    %v6041 = vpack.c.b16 %v5934, %v5933
    %v6042 = vpack.c.b16 %v5936, %v5935
    %v6043 = vpack.c.b16 %v5938, %v5937
    %v6044 = vpack.c.b16 %v5940, %v5939
    %v6045 = vpack.c.b16 %v5942, %v5941
    %v6046 = vpack.c.b16 %v5944, %v5943
    %v6047 = vpack.c.b16 %v5946, %v5945
    %v6048 = vpack.c.b16 %v5948, %v5947
    %v6049 = vpack.c.b16 %v5950, %v5949
    %v6050 = vpack.c.b16 %v5952, %v5951
    %v6051 = vpack.c.b16 %v5954, %v5953
    %v6052 = vpack.c.b16 %v5956, %v5955
    %v6053 = vpack.c.b16 %v5958, %v5957
    %v6054 = vpack.c.b16 %v5960, %v5959
    %v6055 = vpack.c.b16 %v5962, %v5961
    %v6056 = vpack.c.b16 %v5964, %v5963
    %v6057 = vpack.c.b16 %v5966, %v5965
    %v6058 = vpack.c.b16 %v5968, %v5967
    %v6059 = vpack.c.b16 %v5970, %v5969
    %v6060 = vpack.c.b16 %v5972, %v5971
    %v6061 = vpack.c.b16 %v5974, %v5973
    %v6062 = vpack.c.b16 %v5976, %v5975
    %v6063 = vpack.c.b16 %v5978, %v5977
    %v6064 = vpack.c.b16 %v5980, %v5979
    %v6065 = vpack.c.b16 %v5982, %v5981
    %v6066 = vpack.c.b16 %v5984, %v5983
    %v6067 = vpack.c.b16 %v5986, %v5985
    %v6068 = vpack.c.b16 %v5988, %v5987
    %v6069 = vpack.c.b16 %v5990, %v5989
    %v6070 = vpack.c.b16 %v5992, %v5991
    %v6071 = vpack.c.b16 %v5994, %v5993
    %v6072 = vpack.c.b16 %v5996, %v5995
    %v6073 = vpack.c.b16 %v5998, %v5997
    %v6074 = vpack.c.b16 %v6000, %v5999
    %v6075 = vpack.c.b16 %v6002, %v6001
    %v6076 = vpack.c.b16 %v6004, %v6003
    %6149 = vmatprep.subr.bf16.mxu0 0
    %6150 = vmatpush1.bf16.msra.mxu0 %v6012
    %6151 = vmatprep.subr.bf16.mxu0 0
    %6152 = vmatpush1.bf16.msra.mxu0 %v6011
    %6153 = vmatprep.subr.bf16.mxu0 0
    %6154 = vmatpush1.bf16.msra.mxu0 %v6010
    %6155 = vmatprep.subr.bf16.mxu0 0
    %6156 = vmatpush1.bf16.msra.mxu0 %v6009
    %6157 = vmatprep.subr.bf16.mxu0 0
    %6158 = vmatpush1.bf16.msra.mxu0 %v6008
    %6159 = vmatprep.subr.bf16.mxu0 0
    %6160 = vmatpush1.bf16.msra.mxu0 %v6007
    %6161 = vmatprep.subr.bf16.mxu0 0
    %6162 = vmatpush1.bf16.msra.mxu0 %v6006
    %6163 = vmatprep.subr.bf16.mxu0 0
    %6164 = vmatpush1.bf16.msra.mxu0 %v6005
    %6165 = vmatprep.subr.bf16.mxu0 0
    %6166 = vmatpush2.bf16.msra.mxu0 %v6020
    %6167 = vmatprep.subr.bf16.mxu0 0
    %6168 = vmatpush2.bf16.msra.mxu0 %v6019
    %6169 = vmatprep.subr.bf16.mxu0 0
    %6170 = vmatpush2.bf16.msra.mxu0 %v6018
    %6171 = vmatprep.subr.bf16.mxu0 0
    %6172 = vmatpush2.bf16.msra.mxu0 %v6017
    %6173 = vmatprep.subr.bf16.mxu0 0
    %6174 = vmatpush2.bf16.msra.mxu0 %v6016
    %6175 = vmatprep.subr.bf16.mxu0 0
    %6176 = vmatpush2.bf16.msra.mxu0 %v6015
    %6177 = vmatprep.subr.bf16.mxu0 0
    %6178 = vmatpush2.bf16.msra.mxu0 %v6014
    %6179 = vmatprep.subr.bf16.mxu0 0
    %6180 = vmatpush2.bf16.msra.mxu0 %v6013
    %6181 = vmatprep.mubr.bf16.mxu0 %v5283
    %6182 = vmatmul.mubr.bf16.gmra.mxu0 %v5282
    %v6183 = vpop.f32.mrf.mxu0
    %v6184 = vadd.f32 0.0, %v6183
    %v6185 = vpop.f32.mrf.mxu0
    %v6186 = vpop.f32.mrf.mxu0
    %v6187 = vadd.f32 0.0, %v6186
    %v6188 = vpop.f32.mrf.mxu0
    %6189 = vmatprep.mubr.bf16.mxu0 %v5292
    %6190 = vmatmul.mubr.bf16.gmra.mxu0 %v5291
    %v6191 = vpop.f32.mrf.mxu0
    %v6192 = vadd.f32 0.0, %v6191
    %v6193 = vpop.f32.mrf.mxu0
    %v6194 = vpop.f32.mrf.mxu0
    %v6195 = vadd.f32 0.0, %v6194
    %v6196 = vpop.f32.mrf.mxu0
    %6197 = vmatprep.mubr.bf16.mxu0 %v5299
    %6198 = vmatmul.mubr.bf16.gmra.mxu0 %v5298
    %v6199 = vpop.f32.mrf.mxu0
    %v6200 = vadd.f32 0.0, %v6199
    %v6201 = vpop.f32.mrf.mxu0
    %v6202 = vpop.f32.mrf.mxu0
    %v6203 = vadd.f32 0.0, %v6202
    %v6204 = vpop.f32.mrf.mxu0
    %6205 = vmatprep.mubr.bf16.mxu0 %v5306
    %6206 = vmatmul.mubr.bf16.gmra.mxu0 %v5305
    %v6207 = vpop.f32.mrf.mxu0
    %v6208 = vadd.f32 0.0, %v6207
    %v6209 = vpop.f32.mrf.mxu0
    %v6210 = vpop.f32.mrf.mxu0
    %v6211 = vadd.f32 0.0, %v6210
    %v6212 = vpop.f32.mrf.mxu0
    %6213 = vmatprep.mubr.bf16.mxu0 %v5313
    %6214 = vmatmul.mubr.bf16.gmra.mxu0 %v5312
    %v6215 = vpop.f32.mrf.mxu0
    %v6216 = vadd.f32 0.0, %v6215
    %v6217 = vpop.f32.mrf.mxu0
    %v6218 = vpop.f32.mrf.mxu0
    %v6219 = vadd.f32 0.0, %v6218
    %v6220 = vpop.f32.mrf.mxu0
    %6221 = vmatprep.mubr.bf16.mxu0 %v5320
    %6222 = vmatmul.mubr.bf16.gmra.mxu0 %v5319
    %v6223 = vpop.f32.mrf.mxu0
    %v6224 = vadd.f32 0.0, %v6223
    %v6225 = vpop.f32.mrf.mxu0
    %v6226 = vpop.f32.mrf.mxu0
    %v6227 = vadd.f32 0.0, %v6226
    %v6228 = vpop.f32.mrf.mxu0
    %6229 = vmatprep.mubr.bf16.mxu0 %v5327
    %6230 = vmatmul.mubr.bf16.gmra.mxu0 %v5326
    %v6231 = vpop.f32.mrf.mxu0
    %v6232 = vadd.f32 0.0, %v6231
    %v6233 = vpop.f32.mrf.mxu0
    %v6234 = vpop.f32.mrf.mxu0
    %v6235 = vadd.f32 0.0, %v6234
    %v6236 = vpop.f32.mrf.mxu0
    %6237 = vmatprep.mubr.bf16.mxu0 %v5334
    %6238 = vmatmul.mubr.bf16.gmra.mxu0 %v5333
    %v6239 = vpop.f32.mrf.mxu0
    %v6240 = vadd.f32 0.0, %v6239
    %v6241 = vpop.f32.mrf.mxu0
    %v6242 = vpop.f32.mrf.mxu0
    %v6243 = vadd.f32 0.0, %v6242
    %v6244 = vpop.f32.mrf.mxu0
    %6245 = vmatprep.mubr.bf16.mxu0 %v5341
    %6246 = vmatmul.mubr.bf16.gmra.mxu0 %v5340
    %v6247 = vpop.f32.mrf.mxu0
    %v6248 = vadd.f32 0.0, %v6247
    %v6249 = vpop.f32.mrf.mxu0
    %v6250 = vpop.f32.mrf.mxu0
    %v6251 = vadd.f32 0.0, %v6250
    %v6252 = vpop.f32.mrf.mxu0
    %6253 = vmatprep.mubr.bf16.mxu0 %v5348
    %6254 = vmatmul.mubr.bf16.gmra.mxu0 %v5347
    %v6255 = vpop.f32.mrf.mxu0
    %v6256 = vadd.f32 0.0, %v6255
    %v6257 = vpop.f32.mrf.mxu0
    %v6258 = vpop.f32.mrf.mxu0
    %v6259 = vadd.f32 0.0, %v6258
    %v6260 = vpop.f32.mrf.mxu0
    %6261 = vmatprep.mubr.bf16.mxu0 %v5355
    %6262 = vmatmul.mubr.bf16.gmra.mxu0 %v5354
    %v6263 = vpop.f32.mrf.mxu0
    %v6264 = vadd.f32 0.0, %v6263
    %v6265 = vpop.f32.mrf.mxu0
    %v6266 = vpop.f32.mrf.mxu0
    %v6267 = vadd.f32 0.0, %v6266
    %v6268 = vpop.f32.mrf.mxu0
    %6269 = vmatprep.mubr.bf16.mxu0 %v5362
    %6270 = vmatmul.mubr.bf16.gmra.mxu0 %v5361
    %v6271 = vpop.f32.mrf.mxu0
    %v6272 = vadd.f32 0.0, %v6271
    %v6273 = vpop.f32.mrf.mxu0
    %v6274 = vpop.f32.mrf.mxu0
    %v6275 = vadd.f32 0.0, %v6274
    %v6276 = vpop.f32.mrf.mxu0
    %6277 = vmatprep.mubr.bf16.mxu0 %v5369
    %6278 = vmatmul.mubr.bf16.gmra.mxu0 %v5368
    %v6279 = vpop.f32.mrf.mxu0
    %v6280 = vadd.f32 0.0, %v6279
    %v6281 = vpop.f32.mrf.mxu0
    %v6282 = vpop.f32.mrf.mxu0
    %v6283 = vadd.f32 0.0, %v6282
    %v6284 = vpop.f32.mrf.mxu0
    %6285 = vmatprep.mubr.bf16.mxu0 %v5376
    %6286 = vmatmul.mubr.bf16.gmra.mxu0 %v5375
    %v6287 = vpop.f32.mrf.mxu0
    %v6288 = vadd.f32 0.0, %v6287
    %v6289 = vpop.f32.mrf.mxu0
    %v6290 = vpop.f32.mrf.mxu0
    %v6291 = vadd.f32 0.0, %v6290
    %v6292 = vpop.f32.mrf.mxu0
    %6293 = vmatprep.mubr.bf16.mxu0 %v5383
    %6294 = vmatmul.mubr.bf16.gmra.mxu0 %v5382
    %v6295 = vpop.f32.mrf.mxu0
    %v6296 = vadd.f32 0.0, %v6295
    %v6297 = vpop.f32.mrf.mxu0
    %v6298 = vpop.f32.mrf.mxu0
    %v6299 = vadd.f32 0.0, %v6298
    %v6300 = vpop.f32.mrf.mxu0
    %6301 = vmatprep.mubr.bf16.mxu0 %v5390
    %6302 = vmatmul.mubr.bf16.gmra.mxu0 %v5389
    %v6303 = vpop.f32.mrf.mxu0
    %v6304 = vadd.f32 0.0, %v6303
    %v6305 = vpop.f32.mrf.mxu0
    %v6306 = vpop.f32.mrf.mxu0
    %v6307 = vadd.f32 0.0, %v6306
    %v6308 = vpop.f32.mrf.mxu0
    %6309 = vmatprep.mubr.bf16.mxu0 %v5397
    %6310 = vmatmul.mubr.bf16.gmra.mxu0 %v5396
    %v6311 = vpop.f32.mrf.mxu0
    %v6312 = vadd.f32 0.0, %v6311
    %v6313 = vpop.f32.mrf.mxu0
    %v6314 = vpop.f32.mrf.mxu0
    %v6315 = vadd.f32 0.0, %v6314
    %v6316 = vpop.f32.mrf.mxu0
    %6317 = vmatprep.mubr.bf16.mxu0 %v5404
    %6318 = vmatmul.mubr.bf16.gmra.mxu0 %v5403
    %v6319 = vpop.f32.mrf.mxu0
    %v6320 = vadd.f32 0.0, %v6319
    %v6321 = vpop.f32.mrf.mxu0
    %v6322 = vpop.f32.mrf.mxu0
    %v6323 = vadd.f32 0.0, %v6322
    %v6324 = vpop.f32.mrf.mxu0
    %6325 = vmatprep.mubr.bf16.mxu0 %v5411
    %6326 = vmatmul.mubr.bf16.gmra.mxu0 %v5410
    %v6327 = vpop.f32.mrf.mxu0
    %v6328 = vadd.f32 0.0, %v6327
    %v6329 = vpop.f32.mrf.mxu0
    %v6330 = vpop.f32.mrf.mxu0
    %v6331 = vadd.f32 0.0, %v6330
    %v6332 = vpop.f32.mrf.mxu0
    %6333 = vmatprep.mubr.bf16.mxu0 %v5418
    %6334 = vmatmul.mubr.bf16.gmra.mxu0 %v5417
    %v6335 = vpop.f32.mrf.mxu0
    %v6336 = vadd.f32 0.0, %v6335
    %v6337 = vpop.f32.mrf.mxu0
    %v6338 = vpop.f32.mrf.mxu0
    %v6339 = vadd.f32 0.0, %v6338
    %v6340 = vpop.f32.mrf.mxu0
    %6341 = vmatprep.mubr.bf16.mxu0 %v5425
    %6342 = vmatmul.mubr.bf16.gmra.mxu0 %v5424
    %v6343 = vpop.f32.mrf.mxu0
    %v6344 = vadd.f32 0.0, %v6343
    %v6345 = vpop.f32.mrf.mxu0
    %v6346 = vpop.f32.mrf.mxu0
    %v6347 = vadd.f32 0.0, %v6346
    %v6348 = vpop.f32.mrf.mxu0
    %6349 = vmatprep.mubr.bf16.mxu0 %v5432
    %6350 = vmatmul.mubr.bf16.gmra.mxu0 %v5431
    %v6351 = vpop.f32.mrf.mxu0
    %v6352 = vadd.f32 0.0, %v6351
    %v6353 = vpop.f32.mrf.mxu0
    %v6354 = vpop.f32.mrf.mxu0
    %v6355 = vadd.f32 0.0, %v6354
    %v6356 = vpop.f32.mrf.mxu0
    %6357 = vmatprep.mubr.bf16.mxu0 %v5439
    %6358 = vmatmul.mubr.bf16.gmra.mxu0 %v5438
    %v6359 = vpop.f32.mrf.mxu0
    %v6360 = vadd.f32 0.0, %v6359
    %v6361 = vpop.f32.mrf.mxu0
    %v6362 = vpop.f32.mrf.mxu0
    %v6363 = vadd.f32 0.0, %v6362
    %v6364 = vpop.f32.mrf.mxu0
    %6365 = vmatprep.mubr.bf16.mxu0 %v5446
    %6366 = vmatmul.mubr.bf16.gmra.mxu0 %v5445
    %v6367 = vpop.f32.mrf.mxu0
    %v6368 = vadd.f32 0.0, %v6367
    %v6369 = vpop.f32.mrf.mxu0
    %v6370 = vpop.f32.mrf.mxu0
    %v6371 = vadd.f32 0.0, %v6370
    %v6372 = vpop.f32.mrf.mxu0
    %6373 = vmatprep.mubr.bf16.mxu0 %v5453
    %6374 = vmatmul.mubr.bf16.gmra.mxu0 %v5452
    %v6375 = vpop.f32.mrf.mxu0
    %v6376 = vadd.f32 0.0, %v6375
    %v6377 = vpop.f32.mrf.mxu0
    %v6378 = vpop.f32.mrf.mxu0
    %v6379 = vadd.f32 0.0, %v6378
    %v6380 = vpop.f32.mrf.mxu0
    %6381 = vmatprep.mubr.bf16.mxu0 %v5460
    %6382 = vmatmul.mubr.bf16.gmra.mxu0 %v5459
    %v6383 = vpop.f32.mrf.mxu0
    %v6384 = vadd.f32 0.0, %v6383
    %v6385 = vpop.f32.mrf.mxu0
    %v6386 = vpop.f32.mrf.mxu0
    %v6387 = vadd.f32 0.0, %v6386
    %v6388 = vpop.f32.mrf.mxu0
    %6389 = vmatprep.mubr.bf16.mxu0 %v5467
    %6390 = vmatmul.mubr.bf16.gmra.mxu0 %v5466
    %v6391 = vpop.f32.mrf.mxu0
    %v6392 = vadd.f32 0.0, %v6391
    %v6393 = vpop.f32.mrf.mxu0
    %v6394 = vpop.f32.mrf.mxu0
    %v6395 = vadd.f32 0.0, %v6394
    %v6396 = vpop.f32.mrf.mxu0
    %6397 = vmatprep.mubr.bf16.mxu0 %v5474
    %6398 = vmatmul.mubr.bf16.gmra.mxu0 %v5473
    %v6399 = vpop.f32.mrf.mxu0
    %v6400 = vadd.f32 0.0, %v6399
    %v6401 = vpop.f32.mrf.mxu0
    %v6402 = vpop.f32.mrf.mxu0
    %v6403 = vadd.f32 0.0, %v6402
    %v6404 = vpop.f32.mrf.mxu0
    %6405 = vmatprep.mubr.bf16.mxu0 %v5481
    %6406 = vmatmul.mubr.bf16.gmra.mxu0 %v5480
    %v6407 = vpop.f32.mrf.mxu0
    %v6408 = vadd.f32 0.0, %v6407
    %v6409 = vpop.f32.mrf.mxu0
    %v6410 = vpop.f32.mrf.mxu0
    %v6411 = vadd.f32 0.0, %v6410
    %v6412 = vpop.f32.mrf.mxu0
    %6413 = vmatprep.mubr.bf16.mxu0 %v5488
    %6414 = vmatmul.mubr.bf16.gmra.mxu0 %v5487
    %v6415 = vpop.f32.mrf.mxu0
    %v6416 = vadd.f32 0.0, %v6415
    %v6417 = vpop.f32.mrf.mxu0
    %v6418 = vpop.f32.mrf.mxu0
    %v6419 = vadd.f32 0.0, %v6418
    %v6420 = vpop.f32.mrf.mxu0
    %6421 = vmatprep.mubr.bf16.mxu0 %v5495
    %6422 = vmatmul.mubr.bf16.gmra.mxu0 %v5494
    %v6423 = vpop.f32.mrf.mxu0
    %v6424 = vadd.f32 0.0, %v6423
    %v6425 = vpop.f32.mrf.mxu0
    %v6426 = vpop.f32.mrf.mxu0
    %v6427 = vadd.f32 0.0, %v6426
    %v6428 = vpop.f32.mrf.mxu0
    %6429 = vmatprep.mubr.bf16.mxu0 %v5502
    %6430 = vmatmul.mubr.bf16.gmra.mxu0 %v5501
    %v6431 = vpop.f32.mrf.mxu0
    %v6432 = vadd.f32 0.0, %v6431
    %v6433 = vpop.f32.mrf.mxu0
    %v6434 = vpop.f32.mrf.mxu0
    %v6435 = vadd.f32 0.0, %v6434
    %v6436 = vpop.f32.mrf.mxu0
    %6437 = vmatprep.mubr.bf16.mxu0 %v5509
    %6438 = vmatmul.mubr.bf16.gmra.mxu0 %v5508
    %v6439 = vpop.f32.mrf.mxu0
    %v6440 = vadd.f32 0.0, %v6439
    %v6441 = vpop.f32.mrf.mxu0
    %v6442 = vpop.f32.mrf.mxu0
    %v6443 = vadd.f32 0.0, %v6442
    %v6444 = vpop.f32.mrf.mxu0
    %6445 = vmatprep.mubr.bf16.mxu0 %v5516
    %6446 = vmatmul.mubr.bf16.gmra.mxu0 %v5515
    %v6447 = vpop.f32.mrf.mxu0
    %v6448 = vadd.f32 0.0, %v6447
    %v6449 = vpop.f32.mrf.mxu0
    %v6450 = vpop.f32.mrf.mxu0
    %v6451 = vadd.f32 0.0, %v6450
    %v6452 = vpop.f32.mrf.mxu0
    %6453 = vmatprep.mubr.bf16.mxu0 %v5523
    %6454 = vmatmul.mubr.bf16.gmra.mxu0 %v5522
    %v6455 = vpop.f32.mrf.mxu0
    %v6456 = vadd.f32 0.0, %v6455
    %v6457 = vpop.f32.mrf.mxu0
    %v6458 = vpop.f32.mrf.mxu0
    %v6459 = vadd.f32 0.0, %v6458
    %v6460 = vpop.f32.mrf.mxu0
    %6461 = vmatprep.mubr.bf16.mxu0 %v5530
    %6462 = vmatmul.mubr.bf16.gmra.mxu0 %v5529
    %v6463 = vpop.f32.mrf.mxu0
    %v6464 = vadd.f32 0.0, %v6463
    %v6465 = vpop.f32.mrf.mxu0
    %v6466 = vpop.f32.mrf.mxu0
    %v6467 = vadd.f32 0.0, %v6466
    %v6468 = vpop.f32.mrf.mxu0
    %6469 = vmatprep.mubr.bf16.mxu0 %v5537
    %6470 = vmatmul.mubr.bf16.gmra.mxu0 %v5536
    %v6471 = vpop.f32.mrf.mxu0
    %v6472 = vadd.f32 0.0, %v6471
    %v6473 = vpop.f32.mrf.mxu0
    %v6474 = vpop.f32.mrf.mxu0
    %v6475 = vadd.f32 0.0, %v6474
    %v6476 = vpop.f32.mrf.mxu0
    %6477 = vmatprep.mubr.bf16.mxu0 %v5544
    %6478 = vmatmul.mubr.bf16.gmra.mxu0 %v5543
    %v6479 = vpop.f32.mrf.mxu0
    %v6480 = vadd.f32 0.0, %v6479
    %v6481 = vpop.f32.mrf.mxu0
    %v6482 = vpop.f32.mrf.mxu0
    %v6483 = vadd.f32 0.0, %v6482
    %v6484 = vpop.f32.mrf.mxu0
    %6485 = vmatprep.mubr.bf16.mxu0 %v5551
    %6486 = vmatmul.mubr.bf16.gmra.mxu0 %v5550
    %v6487 = vpop.f32.mrf.mxu0
    %v6488 = vadd.f32 0.0, %v6487
    %v6489 = vpop.f32.mrf.mxu0
    %v6490 = vpop.f32.mrf.mxu0
    %v6491 = vadd.f32 0.0, %v6490
    %v6492 = vpop.f32.mrf.mxu0
    %6493 = vmatprep.mubr.bf16.mxu0 %v5558
    %6494 = vmatmul.mubr.bf16.gmra.mxu0 %v5557
    %v6495 = vpop.f32.mrf.mxu0
    %v6496 = vadd.f32 0.0, %v6495
    %v6497 = vpop.f32.mrf.mxu0
    %v6498 = vpop.f32.mrf.mxu0
    %v6499 = vadd.f32 0.0, %v6498
    %v6500 = vpop.f32.mrf.mxu0
    %6501 = vmatprep.mubr.bf16.mxu0 %v5565
    %6502 = vmatmul.mubr.bf16.gmra.mxu0 %v5564
    %v6503 = vpop.f32.mrf.mxu0
    %v6504 = vadd.f32 0.0, %v6503
    %v6505 = vpop.f32.mrf.mxu0
    %v6506 = vpop.f32.mrf.mxu0
    %v6507 = vpop.f32.mrf.mxu0
    %6508 = vdwg.mxu0
    %6509 = vmatprep.subr.bf16.mxu0 0
    %6510 = vmatpush1.bf16.msra.mxu0 %v6028
    %6511 = vmatprep.subr.bf16.mxu0 0
    %6512 = vmatpush1.bf16.msra.mxu0 %v6027
    %6513 = vmatprep.subr.bf16.mxu0 0
    %6514 = vmatpush1.bf16.msra.mxu0 %v6026
    %6515 = vmatprep.subr.bf16.mxu0 0
    %6516 = vmatpush1.bf16.msra.mxu0 %v6025
    %6517 = vmatprep.subr.bf16.mxu0 0
    %6518 = vmatpush1.bf16.msra.mxu0 %v6024
    %6519 = vmatprep.subr.bf16.mxu0 0
    %6520 = vmatpush1.bf16.msra.mxu0 %v6023
    %6521 = vmatprep.subr.bf16.mxu0 0
    %6522 = vmatpush1.bf16.msra.mxu0 %v6022
    %6523 = vmatprep.subr.bf16.mxu0 0
    %6524 = vmatpush1.bf16.msra.mxu0 %v6021
    %6525 = vmatprep.subr.bf16.mxu0 0
    %6526 = vmatpush2.bf16.msra.mxu0 %v6036
    %6527 = vmatprep.subr.bf16.mxu0 0
    %6528 = vmatpush2.bf16.msra.mxu0 %v6035
    %6529 = vmatprep.subr.bf16.mxu0 0
    %6530 = vmatpush2.bf16.msra.mxu0 %v6034
    %6531 = vmatprep.subr.bf16.mxu0 0
    %6532 = vmatpush2.bf16.msra.mxu0 %v6033
    %6533 = vmatprep.subr.bf16.mxu0 0
    %6534 = vmatpush2.bf16.msra.mxu0 %v6032
    %6535 = vmatprep.subr.bf16.mxu0 0
    %6536 = vmatpush2.bf16.msra.mxu0 %v6031
    %6537 = vmatprep.subr.bf16.mxu0 0
    %6538 = vmatpush2.bf16.msra.mxu0 %v6030
    %6539 = vmatprep.subr.bf16.mxu0 0
    %6540 = vmatpush2.bf16.msra.mxu0 %v6029
    %6541 = vmatprep.mubr.bf16.mxu0 %v5285
    %6542 = vmatmul.mubr.bf16.gmra.mxu0 %v5284
    %v6543 = vpop.f32.mrf.mxu0
    %v6544 = vadd.f32 %v6184, %v6543
    %v6545 = vpop.f32.mrf.mxu0
    %v6546 = vpop.f32.mrf.mxu0
    %v6547 = vadd.f32 %v6187, %v6546
    %v6548 = vpop.f32.mrf.mxu0
    %6549 = vmatprep.mubr.bf16.mxu0 %v5293
    %6550 = vmatmul.mubr.bf16.gmra.mxu0 %v5285
    %v6551 = vpop.f32.mrf.mxu0
    %v6552 = vadd.f32 %v6192, %v6551
    %v6553 = vpop.f32.mrf.mxu0
    %v6554 = vpop.f32.mrf.mxu0
    %v6555 = vadd.f32 %v6195, %v6554
    %v6556 = vpop.f32.mrf.mxu0
    %6557 = vmatprep.mubr.bf16.mxu0 %v5300
    %6558 = vmatmul.mubr.bf16.gmra.mxu0 %v5293
    %v6559 = vpop.f32.mrf.mxu0
    %v6560 = vadd.f32 %v6200, %v6559
    %v6561 = vpop.f32.mrf.mxu0
    %v6562 = vpop.f32.mrf.mxu0
    %v6563 = vadd.f32 %v6203, %v6562
    %v6564 = vpop.f32.mrf.mxu0
    %6565 = vmatprep.mubr.bf16.mxu0 %v5307
    %6566 = vmatmul.mubr.bf16.gmra.mxu0 %v5300
    %v6567 = vpop.f32.mrf.mxu0
    %v6568 = vadd.f32 %v6208, %v6567
    %v6569 = vpop.f32.mrf.mxu0
    %v6570 = vpop.f32.mrf.mxu0
    %v6571 = vadd.f32 %v6211, %v6570
    %v6572 = vpop.f32.mrf.mxu0
    %6573 = vmatprep.mubr.bf16.mxu0 %v5314
    %6574 = vmatmul.mubr.bf16.gmra.mxu0 %v5307
    %v6575 = vpop.f32.mrf.mxu0
    %v6576 = vadd.f32 %v6216, %v6575
    %v6577 = vpop.f32.mrf.mxu0
    %v6578 = vpop.f32.mrf.mxu0
    %v6579 = vadd.f32 %v6219, %v6578
    %v6580 = vpop.f32.mrf.mxu0
    %6581 = vmatprep.mubr.bf16.mxu0 %v5321
    %6582 = vmatmul.mubr.bf16.gmra.mxu0 %v5314
    %v6583 = vpop.f32.mrf.mxu0
    %v6584 = vadd.f32 %v6224, %v6583
    %v6585 = vpop.f32.mrf.mxu0
    %v6586 = vpop.f32.mrf.mxu0
    %v6587 = vadd.f32 %v6227, %v6586
    %v6588 = vpop.f32.mrf.mxu0
    %6589 = vmatprep.mubr.bf16.mxu0 %v5328
    %6590 = vmatmul.mubr.bf16.gmra.mxu0 %v5321
    %v6591 = vpop.f32.mrf.mxu0
    %v6592 = vadd.f32 %v6232, %v6591
    %v6593 = vpop.f32.mrf.mxu0
    %v6594 = vpop.f32.mrf.mxu0
    %v6595 = vadd.f32 %v6235, %v6594
    %v6596 = vpop.f32.mrf.mxu0
    %6597 = vmatprep.mubr.bf16.mxu0 %v5335
    %6598 = vmatmul.mubr.bf16.gmra.mxu0 %v5328
    %v6599 = vpop.f32.mrf.mxu0
    %v6600 = vadd.f32 %v6240, %v6599
    %v6601 = vpop.f32.mrf.mxu0
    %v6602 = vpop.f32.mrf.mxu0
    %v6603 = vadd.f32 %v6243, %v6602
    %v6604 = vpop.f32.mrf.mxu0
    %6605 = vmatprep.mubr.bf16.mxu0 %v5342
    %6606 = vmatmul.mubr.bf16.gmra.mxu0 %v5335
    %v6607 = vpop.f32.mrf.mxu0
    %v6608 = vadd.f32 %v6248, %v6607
    %v6609 = vpop.f32.mrf.mxu0
    %v6610 = vpop.f32.mrf.mxu0
    %v6611 = vadd.f32 %v6251, %v6610
    %v6612 = vpop.f32.mrf.mxu0
    %6613 = vmatprep.mubr.bf16.mxu0 %v5349
    %6614 = vmatmul.mubr.bf16.gmra.mxu0 %v5342
    %v6615 = vpop.f32.mrf.mxu0
    %v6616 = vadd.f32 %v6256, %v6615
    %v6617 = vpop.f32.mrf.mxu0
    %v6618 = vpop.f32.mrf.mxu0
    %v6619 = vadd.f32 %v6259, %v6618
    %v6620 = vpop.f32.mrf.mxu0
    %6621 = vmatprep.mubr.bf16.mxu0 %v5356
    %6622 = vmatmul.mubr.bf16.gmra.mxu0 %v5349
    %v6623 = vpop.f32.mrf.mxu0
    %v6624 = vadd.f32 %v6264, %v6623
    %v6625 = vpop.f32.mrf.mxu0
    %v6626 = vpop.f32.mrf.mxu0
    %v6627 = vadd.f32 %v6267, %v6626
    %v6628 = vpop.f32.mrf.mxu0
    %6629 = vmatprep.mubr.bf16.mxu0 %v5363
    %6630 = vmatmul.mubr.bf16.gmra.mxu0 %v5356
    %v6631 = vpop.f32.mrf.mxu0
    %v6632 = vadd.f32 %v6272, %v6631
    %v6633 = vpop.f32.mrf.mxu0
    %v6634 = vpop.f32.mrf.mxu0
    %v6635 = vadd.f32 %v6275, %v6634
    %v6636 = vpop.f32.mrf.mxu0
    %6637 = vmatprep.mubr.bf16.mxu0 %v5370
    %6638 = vmatmul.mubr.bf16.gmra.mxu0 %v5363
    %v6639 = vpop.f32.mrf.mxu0
    %v6640 = vadd.f32 %v6280, %v6639
    %v6641 = vpop.f32.mrf.mxu0
    %v6642 = vpop.f32.mrf.mxu0
    %v6643 = vadd.f32 %v6283, %v6642
    %v6644 = vpop.f32.mrf.mxu0
    %6645 = vmatprep.mubr.bf16.mxu0 %v5377
    %6646 = vmatmul.mubr.bf16.gmra.mxu0 %v5370
    %v6647 = vpop.f32.mrf.mxu0
    %v6648 = vadd.f32 %v6288, %v6647
    %v6649 = vpop.f32.mrf.mxu0
    %v6650 = vpop.f32.mrf.mxu0
    %v6651 = vadd.f32 %v6291, %v6650
    %v6652 = vpop.f32.mrf.mxu0
    %6653 = vmatprep.mubr.bf16.mxu0 %v5384
    %6654 = vmatmul.mubr.bf16.gmra.mxu0 %v5377
    %v6655 = vpop.f32.mrf.mxu0
    %v6656 = vadd.f32 %v6296, %v6655
    %v6657 = vpop.f32.mrf.mxu0
    %v6658 = vpop.f32.mrf.mxu0
    %v6659 = vadd.f32 %v6299, %v6658
    %v6660 = vpop.f32.mrf.mxu0
    %6661 = vmatprep.mubr.bf16.mxu0 %v5391
    %6662 = vmatmul.mubr.bf16.gmra.mxu0 %v5384
    %v6663 = vpop.f32.mrf.mxu0
    %v6664 = vadd.f32 %v6304, %v6663
    %v6665 = vpop.f32.mrf.mxu0
    %v6666 = vpop.f32.mrf.mxu0
    %v6667 = vadd.f32 %v6307, %v6666
    %v6668 = vpop.f32.mrf.mxu0
    %6669 = vmatprep.mubr.bf16.mxu0 %v5398
    %6670 = vmatmul.mubr.bf16.gmra.mxu0 %v5391
    %v6671 = vpop.f32.mrf.mxu0
    %v6672 = vadd.f32 %v6312, %v6671
    %v6673 = vpop.f32.mrf.mxu0
    %v6674 = vpop.f32.mrf.mxu0
    %v6675 = vadd.f32 %v6315, %v6674
    %v6676 = vpop.f32.mrf.mxu0
    %6677 = vmatprep.mubr.bf16.mxu0 %v5405
    %6678 = vmatmul.mubr.bf16.gmra.mxu0 %v5398
    %v6679 = vpop.f32.mrf.mxu0
    %v6680 = vadd.f32 %v6320, %v6679
    %v6681 = vpop.f32.mrf.mxu0
    %v6682 = vpop.f32.mrf.mxu0
    %v6683 = vadd.f32 %v6323, %v6682
    %v6684 = vpop.f32.mrf.mxu0
    %6685 = vmatprep.mubr.bf16.mxu0 %v5412
    %6686 = vmatmul.mubr.bf16.gmra.mxu0 %v5405
    %v6687 = vpop.f32.mrf.mxu0
    %v6688 = vadd.f32 %v6328, %v6687
    %v6689 = vpop.f32.mrf.mxu0
    %v6690 = vpop.f32.mrf.mxu0
    %v6691 = vadd.f32 %v6331, %v6690
    %v6692 = vpop.f32.mrf.mxu0
    %6693 = vmatprep.mubr.bf16.mxu0 %v5419
    %6694 = vmatmul.mubr.bf16.gmra.mxu0 %v5412
    %v6695 = vpop.f32.mrf.mxu0
    %v6696 = vadd.f32 %v6336, %v6695
    %v6697 = vpop.f32.mrf.mxu0
    %v6698 = vpop.f32.mrf.mxu0
    %v6699 = vadd.f32 %v6339, %v6698
    %v6700 = vpop.f32.mrf.mxu0
    %6701 = vmatprep.mubr.bf16.mxu0 %v5426
    %6702 = vmatmul.mubr.bf16.gmra.mxu0 %v5419
    %v6703 = vpop.f32.mrf.mxu0
    %v6704 = vadd.f32 %v6344, %v6703
    %v6705 = vpop.f32.mrf.mxu0
    %v6706 = vpop.f32.mrf.mxu0
    %v6707 = vadd.f32 %v6347, %v6706
    %v6708 = vpop.f32.mrf.mxu0
    %6709 = vmatprep.mubr.bf16.mxu0 %v5433
    %6710 = vmatmul.mubr.bf16.gmra.mxu0 %v5426
    %v6711 = vpop.f32.mrf.mxu0
    %v6712 = vadd.f32 %v6352, %v6711
    %v6713 = vpop.f32.mrf.mxu0
    %v6714 = vpop.f32.mrf.mxu0
    %v6715 = vadd.f32 %v6355, %v6714
    %v6716 = vpop.f32.mrf.mxu0
    %6717 = vmatprep.mubr.bf16.mxu0 %v5440
    %6718 = vmatmul.mubr.bf16.gmra.mxu0 %v5433
    %v6719 = vpop.f32.mrf.mxu0
    %v6720 = vadd.f32 %v6360, %v6719
    %v6721 = vpop.f32.mrf.mxu0
    %v6722 = vpop.f32.mrf.mxu0
    %v6723 = vadd.f32 %v6363, %v6722
    %v6724 = vpop.f32.mrf.mxu0
    %6725 = vmatprep.mubr.bf16.mxu0 %v5447
    %6726 = vmatmul.mubr.bf16.gmra.mxu0 %v5440
    %v6727 = vpop.f32.mrf.mxu0
    %v6728 = vadd.f32 %v6368, %v6727
    %v6729 = vpop.f32.mrf.mxu0
    %v6730 = vpop.f32.mrf.mxu0
    %v6731 = vadd.f32 %v6371, %v6730
    %v6732 = vpop.f32.mrf.mxu0
    %6733 = vmatprep.mubr.bf16.mxu0 %v5454
    %6734 = vmatmul.mubr.bf16.gmra.mxu0 %v5447
    %v6735 = vpop.f32.mrf.mxu0
    %v6736 = vadd.f32 %v6376, %v6735
    %v6737 = vpop.f32.mrf.mxu0
    %v6738 = vpop.f32.mrf.mxu0
    %v6739 = vadd.f32 %v6379, %v6738
    %v6740 = vpop.f32.mrf.mxu0
    %6741 = vmatprep.mubr.bf16.mxu0 %v5461
    %6742 = vmatmul.mubr.bf16.gmra.mxu0 %v5454
    %v6743 = vpop.f32.mrf.mxu0
    %v6744 = vadd.f32 %v6384, %v6743
    %v6745 = vpop.f32.mrf.mxu0
    %v6746 = vpop.f32.mrf.mxu0
    %v6747 = vadd.f32 %v6387, %v6746
    %v6748 = vpop.f32.mrf.mxu0
    %6749 = vmatprep.mubr.bf16.mxu0 %v5468
    %6750 = vmatmul.mubr.bf16.gmra.mxu0 %v5461
    %v6751 = vpop.f32.mrf.mxu0
    %v6752 = vadd.f32 %v6392, %v6751
    %v6753 = vpop.f32.mrf.mxu0
    %v6754 = vpop.f32.mrf.mxu0
    %v6755 = vadd.f32 %v6395, %v6754
    %v6756 = vpop.f32.mrf.mxu0
    %6757 = vmatprep.mubr.bf16.mxu0 %v5475
    %6758 = vmatmul.mubr.bf16.gmra.mxu0 %v5468
    %v6759 = vpop.f32.mrf.mxu0
    %v6760 = vadd.f32 %v6400, %v6759
    %v6761 = vpop.f32.mrf.mxu0
    %v6762 = vpop.f32.mrf.mxu0
    %v6763 = vadd.f32 %v6403, %v6762
    %v6764 = vpop.f32.mrf.mxu0
    %6765 = vmatprep.mubr.bf16.mxu0 %v5482
    %6766 = vmatmul.mubr.bf16.gmra.mxu0 %v5475
    %v6767 = vpop.f32.mrf.mxu0
    %v6768 = vadd.f32 %v6408, %v6767
    %v6769 = vpop.f32.mrf.mxu0
    %v6770 = vpop.f32.mrf.mxu0
    %v6771 = vadd.f32 %v6411, %v6770
    %v6772 = vpop.f32.mrf.mxu0
    %6773 = vmatprep.mubr.bf16.mxu0 %v5489
    %6774 = vmatmul.mubr.bf16.gmra.mxu0 %v5482
    %v6775 = vpop.f32.mrf.mxu0
    %v6776 = vadd.f32 %v6416, %v6775
    %v6777 = vpop.f32.mrf.mxu0
    %v6778 = vpop.f32.mrf.mxu0
    %v6779 = vadd.f32 %v6419, %v6778
    %v6780 = vpop.f32.mrf.mxu0
    %6781 = vmatprep.mubr.bf16.mxu0 %v5496
    %6782 = vmatmul.mubr.bf16.gmra.mxu0 %v5489
    %v6783 = vpop.f32.mrf.mxu0
    %v6784 = vadd.f32 %v6424, %v6783
    %v6785 = vpop.f32.mrf.mxu0
    %v6786 = vpop.f32.mrf.mxu0
    %v6787 = vadd.f32 %v6427, %v6786
    %v6788 = vpop.f32.mrf.mxu0
    %6789 = vmatprep.mubr.bf16.mxu0 %v5503
    %6790 = vmatmul.mubr.bf16.gmra.mxu0 %v5496
    %v6791 = vpop.f32.mrf.mxu0
    %v6792 = vadd.f32 %v6432, %v6791
    %v6793 = vpop.f32.mrf.mxu0
    %v6794 = vpop.f32.mrf.mxu0
    %v6795 = vadd.f32 %v6435, %v6794
    %v6796 = vpop.f32.mrf.mxu0
    %6797 = vmatprep.mubr.bf16.mxu0 %v5510
    %6798 = vmatmul.mubr.bf16.gmra.mxu0 %v5503
    %v6799 = vpop.f32.mrf.mxu0
    %v6800 = vadd.f32 %v6440, %v6799
    %v6801 = vpop.f32.mrf.mxu0
    %v6802 = vpop.f32.mrf.mxu0
    %v6803 = vadd.f32 %v6443, %v6802
    %v6804 = vpop.f32.mrf.mxu0
    %6805 = vmatprep.mubr.bf16.mxu0 %v5517
    %6806 = vmatmul.mubr.bf16.gmra.mxu0 %v5510
    %v6807 = vpop.f32.mrf.mxu0
    %v6808 = vadd.f32 %v6448, %v6807
    %v6809 = vpop.f32.mrf.mxu0
    %v6810 = vpop.f32.mrf.mxu0
    %v6811 = vadd.f32 %v6451, %v6810
    %v6812 = vpop.f32.mrf.mxu0
    %6813 = vmatprep.mubr.bf16.mxu0 %v5524
    %6814 = vmatmul.mubr.bf16.gmra.mxu0 %v5517
    %v6815 = vpop.f32.mrf.mxu0
    %v6816 = vadd.f32 %v6456, %v6815
    %v6817 = vpop.f32.mrf.mxu0
    %v6818 = vpop.f32.mrf.mxu0
    %v6819 = vadd.f32 %v6459, %v6818
    %v6820 = vpop.f32.mrf.mxu0
    %6821 = vmatprep.mubr.bf16.mxu0 %v5531
    %6822 = vmatmul.mubr.bf16.gmra.mxu0 %v5524
    %v6823 = vpop.f32.mrf.mxu0
    %v6824 = vadd.f32 %v6464, %v6823
    %v6825 = vpop.f32.mrf.mxu0
    %v6826 = vpop.f32.mrf.mxu0
    %v6827 = vadd.f32 %v6467, %v6826
    %v6828 = vpop.f32.mrf.mxu0
    %6829 = vmatprep.mubr.bf16.mxu0 %v5538
    %6830 = vmatmul.mubr.bf16.gmra.mxu0 %v5531
    %v6831 = vpop.f32.mrf.mxu0
    %v6832 = vadd.f32 %v6472, %v6831
    %v6833 = vpop.f32.mrf.mxu0
    %v6834 = vpop.f32.mrf.mxu0
    %v6835 = vadd.f32 %v6475, %v6834
    %v6836 = vpop.f32.mrf.mxu0
    %6837 = vmatprep.mubr.bf16.mxu0 %v5545
    %6838 = vmatmul.mubr.bf16.gmra.mxu0 %v5538
    %v6839 = vpop.f32.mrf.mxu0
    %v6840 = vadd.f32 %v6480, %v6839
    %v6841 = vpop.f32.mrf.mxu0
    %v6842 = vpop.f32.mrf.mxu0
    %v6843 = vadd.f32 %v6483, %v6842
    %v6844 = vpop.f32.mrf.mxu0
    %6845 = vmatprep.mubr.bf16.mxu0 %v5552
    %6846 = vmatmul.mubr.bf16.gmra.mxu0 %v5545
    %v6847 = vpop.f32.mrf.mxu0
    %v6848 = vadd.f32 %v6488, %v6847
    %v6849 = vpop.f32.mrf.mxu0
    %v6850 = vpop.f32.mrf.mxu0
    %v6851 = vadd.f32 %v6491, %v6850
    %v6852 = vpop.f32.mrf.mxu0
    %6853 = vmatprep.mubr.bf16.mxu0 %v5559
    %6854 = vmatmul.mubr.bf16.gmra.mxu0 %v5552
    %v6855 = vpop.f32.mrf.mxu0
    %v6856 = vadd.f32 %v6496, %v6855
    %v6857 = vpop.f32.mrf.mxu0
    %v6858 = vpop.f32.mrf.mxu0
    %v6859 = vadd.f32 %v6499, %v6858
    %v6860 = vpop.f32.mrf.mxu0
    %6861 = vmatprep.mubr.bf16.mxu0 %v5567
    %6862 = vmatmul.mubr.bf16.gmra.mxu0 %v5566
    %v6863 = vpop.f32.mrf.mxu0
    %v6864 = vadd.f32 %v6504, %v6863
    %v6865 = vpop.f32.mrf.mxu0
    %v6866 = vpop.f32.mrf.mxu0
    %v6867 = vpop.f32.mrf.mxu0
    %6868 = vdwg.mxu0
    %6869 = vmatprep.subr.bf16.mxu0 0
    %6870 = vmatpush1.bf16.msra.mxu0 %v6044
    %6871 = vmatprep.subr.bf16.mxu0 0
    %6872 = vmatpush1.bf16.msra.mxu0 %v6043
    %6873 = vmatprep.subr.bf16.mxu0 0
    %6874 = vmatpush1.bf16.msra.mxu0 %v6042
    %6875 = vmatprep.subr.bf16.mxu0 0
    %6876 = vmatpush1.bf16.msra.mxu0 %v6041
    %6877 = vmatprep.subr.bf16.mxu0 0
    %6878 = vmatpush1.bf16.msra.mxu0 %v6040
    %6879 = vmatprep.subr.bf16.mxu0 0
    %6880 = vmatpush1.bf16.msra.mxu0 %v6039
    %6881 = vmatprep.subr.bf16.mxu0 0
    %6882 = vmatpush1.bf16.msra.mxu0 %v6038
    %6883 = vmatprep.subr.bf16.mxu0 0
    %6884 = vmatpush1.bf16.msra.mxu0 %v6037
    %6885 = vmatprep.subr.bf16.mxu0 0
    %6886 = vmatpush2.bf16.msra.mxu0 %v6052
    %6887 = vmatprep.subr.bf16.mxu0 0
    %6888 = vmatpush2.bf16.msra.mxu0 %v6051
    %6889 = vmatprep.subr.bf16.mxu0 0
    %6890 = vmatpush2.bf16.msra.mxu0 %v6050
    %6891 = vmatprep.subr.bf16.mxu0 0
    %6892 = vmatpush2.bf16.msra.mxu0 %v6049
    %6893 = vmatprep.subr.bf16.mxu0 0
    %6894 = vmatpush2.bf16.msra.mxu0 %v6048
    %6895 = vmatprep.subr.bf16.mxu0 0
    %6896 = vmatpush2.bf16.msra.mxu0 %v6047
    %6897 = vmatprep.subr.bf16.mxu0 0
    %6898 = vmatpush2.bf16.msra.mxu0 %v6046
    %6899 = vmatprep.subr.bf16.mxu0 0
    %6900 = vmatpush2.bf16.msra.mxu0 %v6045
    %6901 = vmatprep.mubr.bf16.mxu0 %v5287
    %6902 = vmatmul.mubr.bf16.gmra.mxu0 %v5286
    %v6903 = vpop.f32.mrf.mxu0
    %v6904 = vadd.f32 %v6544, %v6903
    %v6905 = vpop.f32.mrf.mxu0
    %v6906 = vpop.f32.mrf.mxu0
    %v6907 = vadd.f32 %v6547, %v6906
    %v6908 = vpop.f32.mrf.mxu0
    %6909 = vmatprep.mubr.bf16.mxu0 %v5288
    %6910 = vmatmul.mubr.bf16.gmra.mxu0 %v5294
    %v6911 = vpop.f32.mrf.mxu0
    %v6912 = vadd.f32 %v6552, %v6911
    %v6913 = vpop.f32.mrf.mxu0
    %v6914 = vpop.f32.mrf.mxu0
    %v6915 = vadd.f32 %v6555, %v6914
    %v6916 = vpop.f32.mrf.mxu0
    %6917 = vmatprep.mubr.bf16.mxu0 %v5295
    %6918 = vmatmul.mubr.bf16.gmra.mxu0 %v5301
    %v6919 = vpop.f32.mrf.mxu0
    %v6920 = vadd.f32 %v6560, %v6919
    %v6921 = vpop.f32.mrf.mxu0
    %v6922 = vpop.f32.mrf.mxu0
    %v6923 = vadd.f32 %v6563, %v6922
    %v6924 = vpop.f32.mrf.mxu0
    %6925 = vmatprep.mubr.bf16.mxu0 %v5302
    %6926 = vmatmul.mubr.bf16.gmra.mxu0 %v5308
    %v6927 = vpop.f32.mrf.mxu0
    %v6928 = vadd.f32 %v6568, %v6927
    %v6929 = vpop.f32.mrf.mxu0
    %v6930 = vpop.f32.mrf.mxu0
    %v6931 = vadd.f32 %v6571, %v6930
    %v6932 = vpop.f32.mrf.mxu0
    %6933 = vmatprep.mubr.bf16.mxu0 %v5309
    %6934 = vmatmul.mubr.bf16.gmra.mxu0 %v5315
    %v6935 = vpop.f32.mrf.mxu0
    %v6936 = vadd.f32 %v6576, %v6935
    %v6937 = vpop.f32.mrf.mxu0
    %v6938 = vpop.f32.mrf.mxu0
    %v6939 = vadd.f32 %v6579, %v6938
    %v6940 = vpop.f32.mrf.mxu0
    %6941 = vmatprep.mubr.bf16.mxu0 %v5316
    %6942 = vmatmul.mubr.bf16.gmra.mxu0 %v5322
    %v6943 = vpop.f32.mrf.mxu0
    %v6944 = vadd.f32 %v6584, %v6943
    %v6945 = vpop.f32.mrf.mxu0
    %v6946 = vpop.f32.mrf.mxu0
    %v6947 = vadd.f32 %v6587, %v6946
    %v6948 = vpop.f32.mrf.mxu0
    %6949 = vmatprep.mubr.bf16.mxu0 %v5323
    %6950 = vmatmul.mubr.bf16.gmra.mxu0 %v5329
    %v6951 = vpop.f32.mrf.mxu0
    %v6952 = vadd.f32 %v6592, %v6951
    %v6953 = vpop.f32.mrf.mxu0
    %v6954 = vpop.f32.mrf.mxu0
    %v6955 = vadd.f32 %v6595, %v6954
    %v6956 = vpop.f32.mrf.mxu0
    %6957 = vmatprep.mubr.bf16.mxu0 %v5330
    %6958 = vmatmul.mubr.bf16.gmra.mxu0 %v5336
    %v6959 = vpop.f32.mrf.mxu0
    %v6960 = vadd.f32 %v6600, %v6959
    %v6961 = vpop.f32.mrf.mxu0
    %v6962 = vpop.f32.mrf.mxu0
    %v6963 = vadd.f32 %v6603, %v6962
    %v6964 = vpop.f32.mrf.mxu0
    %6965 = vmatprep.mubr.bf16.mxu0 %v5337
    %6966 = vmatmul.mubr.bf16.gmra.mxu0 %v5343
    %v6967 = vpop.f32.mrf.mxu0
    %v6968 = vadd.f32 %v6608, %v6967
    %v6969 = vpop.f32.mrf.mxu0
    %v6970 = vpop.f32.mrf.mxu0
    %v6971 = vadd.f32 %v6611, %v6970
    %v6972 = vpop.f32.mrf.mxu0
    %6973 = vmatprep.mubr.bf16.mxu0 %v5344
    %6974 = vmatmul.mubr.bf16.gmra.mxu0 %v5350
    %v6975 = vpop.f32.mrf.mxu0
    %v6976 = vadd.f32 %v6616, %v6975
    %v6977 = vpop.f32.mrf.mxu0
    %v6978 = vpop.f32.mrf.mxu0
    %v6979 = vadd.f32 %v6619, %v6978
    %v6980 = vpop.f32.mrf.mxu0
    %6981 = vmatprep.mubr.bf16.mxu0 %v5351
    %6982 = vmatmul.mubr.bf16.gmra.mxu0 %v5357
    %v6983 = vpop.f32.mrf.mxu0
    %v6984 = vadd.f32 %v6624, %v6983
    %v6985 = vpop.f32.mrf.mxu0
    %v6986 = vpop.f32.mrf.mxu0
    %v6987 = vadd.f32 %v6627, %v6986
    %v6988 = vpop.f32.mrf.mxu0
    %6989 = vmatprep.mubr.bf16.mxu0 %v5358
    %6990 = vmatmul.mubr.bf16.gmra.mxu0 %v5364
    %v6991 = vpop.f32.mrf.mxu0
    %v6992 = vadd.f32 %v6632, %v6991
    %v6993 = vpop.f32.mrf.mxu0
    %v6994 = vpop.f32.mrf.mxu0
    %v6995 = vadd.f32 %v6635, %v6994
    %v6996 = vpop.f32.mrf.mxu0
    %6997 = vmatprep.mubr.bf16.mxu0 %v5365
    %6998 = vmatmul.mubr.bf16.gmra.mxu0 %v5371
    %v6999 = vpop.f32.mrf.mxu0
    %v7000 = vadd.f32 %v6640, %v6999
    %v7001 = vpop.f32.mrf.mxu0
    %v7002 = vpop.f32.mrf.mxu0
    %v7003 = vadd.f32 %v6643, %v7002
    %v7004 = vpop.f32.mrf.mxu0
    %7005 = vmatprep.mubr.bf16.mxu0 %v5372
    %7006 = vmatmul.mubr.bf16.gmra.mxu0 %v5378
    %v7007 = vpop.f32.mrf.mxu0
    %v7008 = vadd.f32 %v6648, %v7007
    %v7009 = vpop.f32.mrf.mxu0
    %v7010 = vpop.f32.mrf.mxu0
    %v7011 = vadd.f32 %v6651, %v7010
    %v7012 = vpop.f32.mrf.mxu0
    %7013 = vmatprep.mubr.bf16.mxu0 %v5379
    %7014 = vmatmul.mubr.bf16.gmra.mxu0 %v5385
    %v7015 = vpop.f32.mrf.mxu0
    %v7016 = vadd.f32 %v6656, %v7015
    %v7017 = vpop.f32.mrf.mxu0
    %v7018 = vpop.f32.mrf.mxu0
    %v7019 = vadd.f32 %v6659, %v7018
    %v7020 = vpop.f32.mrf.mxu0
    %7021 = vmatprep.mubr.bf16.mxu0 %v5386
    %7022 = vmatmul.mubr.bf16.gmra.mxu0 %v5392
    %v7023 = vpop.f32.mrf.mxu0
    %v7024 = vadd.f32 %v6664, %v7023
    %v7025 = vpop.f32.mrf.mxu0
    %v7026 = vpop.f32.mrf.mxu0
    %v7027 = vadd.f32 %v6667, %v7026
    %v7028 = vpop.f32.mrf.mxu0
    %7029 = vmatprep.mubr.bf16.mxu0 %v5393
    %7030 = vmatmul.mubr.bf16.gmra.mxu0 %v5399
    %v7031 = vpop.f32.mrf.mxu0
    %v7032 = vadd.f32 %v6672, %v7031
    %v7033 = vpop.f32.mrf.mxu0
    %v7034 = vpop.f32.mrf.mxu0
    %v7035 = vadd.f32 %v6675, %v7034
    %v7036 = vpop.f32.mrf.mxu0
    %7037 = vmatprep.mubr.bf16.mxu0 %v5400
    %7038 = vmatmul.mubr.bf16.gmra.mxu0 %v5406
    %v7039 = vpop.f32.mrf.mxu0
    %v7040 = vadd.f32 %v6680, %v7039
    %v7041 = vpop.f32.mrf.mxu0
    %v7042 = vpop.f32.mrf.mxu0
    %v7043 = vadd.f32 %v6683, %v7042
    %v7044 = vpop.f32.mrf.mxu0
    %7045 = vmatprep.mubr.bf16.mxu0 %v5407
    %7046 = vmatmul.mubr.bf16.gmra.mxu0 %v5413
    %v7047 = vpop.f32.mrf.mxu0
    %v7048 = vadd.f32 %v6688, %v7047
    %v7049 = vpop.f32.mrf.mxu0
    %v7050 = vpop.f32.mrf.mxu0
    %v7051 = vadd.f32 %v6691, %v7050
    %v7052 = vpop.f32.mrf.mxu0
    %7053 = vmatprep.mubr.bf16.mxu0 %v5414
    %7054 = vmatmul.mubr.bf16.gmra.mxu0 %v5420
    %v7055 = vpop.f32.mrf.mxu0
    %v7056 = vadd.f32 %v6696, %v7055
    %v7057 = vpop.f32.mrf.mxu0
    %v7058 = vpop.f32.mrf.mxu0
    %v7059 = vadd.f32 %v6699, %v7058
    %v7060 = vpop.f32.mrf.mxu0
    %7061 = vmatprep.mubr.bf16.mxu0 %v5421
    %7062 = vmatmul.mubr.bf16.gmra.mxu0 %v5427
    %v7063 = vpop.f32.mrf.mxu0
    %v7064 = vadd.f32 %v6704, %v7063
    %v7065 = vpop.f32.mrf.mxu0
    %v7066 = vpop.f32.mrf.mxu0
    %v7067 = vadd.f32 %v6707, %v7066
    %v7068 = vpop.f32.mrf.mxu0
    %7069 = vmatprep.mubr.bf16.mxu0 %v5428
    %7070 = vmatmul.mubr.bf16.gmra.mxu0 %v5434
    %v7071 = vpop.f32.mrf.mxu0
    %v7072 = vadd.f32 %v6712, %v7071
    %v7073 = vpop.f32.mrf.mxu0
    %v7074 = vpop.f32.mrf.mxu0
    %v7075 = vadd.f32 %v6715, %v7074
    %v7076 = vpop.f32.mrf.mxu0
    %7077 = vmatprep.mubr.bf16.mxu0 %v5435
    %7078 = vmatmul.mubr.bf16.gmra.mxu0 %v5441
    %v7079 = vpop.f32.mrf.mxu0
    %v7080 = vadd.f32 %v6720, %v7079
    %v7081 = vpop.f32.mrf.mxu0
    %v7082 = vpop.f32.mrf.mxu0
    %v7083 = vadd.f32 %v6723, %v7082
    %v7084 = vpop.f32.mrf.mxu0
    %7085 = vmatprep.mubr.bf16.mxu0 %v5442
    %7086 = vmatmul.mubr.bf16.gmra.mxu0 %v5448
    %v7087 = vpop.f32.mrf.mxu0
    %v7088 = vadd.f32 %v6728, %v7087
    %v7089 = vpop.f32.mrf.mxu0
    %v7090 = vpop.f32.mrf.mxu0
    %v7091 = vadd.f32 %v6731, %v7090
    %v7092 = vpop.f32.mrf.mxu0
    %7093 = vmatprep.mubr.bf16.mxu0 %v5449
    %7094 = vmatmul.mubr.bf16.gmra.mxu0 %v5455
    %v7095 = vpop.f32.mrf.mxu0
    %v7096 = vadd.f32 %v6736, %v7095
    %v7097 = vpop.f32.mrf.mxu0
    %v7098 = vpop.f32.mrf.mxu0
    %v7099 = vadd.f32 %v6739, %v7098
    %v7100 = vpop.f32.mrf.mxu0
    %7101 = vmatprep.mubr.bf16.mxu0 %v5456
    %7102 = vmatmul.mubr.bf16.gmra.mxu0 %v5462
    %v7103 = vpop.f32.mrf.mxu0
    %v7104 = vadd.f32 %v6744, %v7103
    %v7105 = vpop.f32.mrf.mxu0
    %v7106 = vpop.f32.mrf.mxu0
    %v7107 = vadd.f32 %v6747, %v7106
    %v7108 = vpop.f32.mrf.mxu0
    %7109 = vmatprep.mubr.bf16.mxu0 %v5463
    %7110 = vmatmul.mubr.bf16.gmra.mxu0 %v5469
    %v7111 = vpop.f32.mrf.mxu0
    %v7112 = vadd.f32 %v6752, %v7111
    %v7113 = vpop.f32.mrf.mxu0
    %v7114 = vpop.f32.mrf.mxu0
    %v7115 = vadd.f32 %v6755, %v7114
    %v7116 = vpop.f32.mrf.mxu0
    %7117 = vmatprep.mubr.bf16.mxu0 %v5470
    %7118 = vmatmul.mubr.bf16.gmra.mxu0 %v5476
    %v7119 = vpop.f32.mrf.mxu0
    %v7120 = vadd.f32 %v6760, %v7119
    %v7121 = vpop.f32.mrf.mxu0
    %v7122 = vpop.f32.mrf.mxu0
    %v7123 = vadd.f32 %v6763, %v7122
    %v7124 = vpop.f32.mrf.mxu0
    %7125 = vmatprep.mubr.bf16.mxu0 %v5477
    %7126 = vmatmul.mubr.bf16.gmra.mxu0 %v5483
    %v7127 = vpop.f32.mrf.mxu0
    %v7128 = vadd.f32 %v6768, %v7127
    %v7129 = vpop.f32.mrf.mxu0
    %v7130 = vpop.f32.mrf.mxu0
    %v7131 = vadd.f32 %v6771, %v7130
    %v7132 = vpop.f32.mrf.mxu0
    %7133 = vmatprep.mubr.bf16.mxu0 %v5484
    %7134 = vmatmul.mubr.bf16.gmra.mxu0 %v5490
    %v7135 = vpop.f32.mrf.mxu0
    %v7136 = vadd.f32 %v6776, %v7135
    %v7137 = vpop.f32.mrf.mxu0
    %v7138 = vpop.f32.mrf.mxu0
    %v7139 = vadd.f32 %v6779, %v7138
    %v7140 = vpop.f32.mrf.mxu0
    %7141 = vmatprep.mubr.bf16.mxu0 %v5491
    %7142 = vmatmul.mubr.bf16.gmra.mxu0 %v5497
    %v7143 = vpop.f32.mrf.mxu0
    %v7144 = vadd.f32 %v6784, %v7143
    %v7145 = vpop.f32.mrf.mxu0
    %v7146 = vpop.f32.mrf.mxu0
    %v7147 = vadd.f32 %v6787, %v7146
    %v7148 = vpop.f32.mrf.mxu0
    %7149 = vmatprep.mubr.bf16.mxu0 %v5498
    %7150 = vmatmul.mubr.bf16.gmra.mxu0 %v5504
    %v7151 = vpop.f32.mrf.mxu0
    %v7152 = vadd.f32 %v6792, %v7151
    %v7153 = vpop.f32.mrf.mxu0
    %v7154 = vpop.f32.mrf.mxu0
    %v7155 = vadd.f32 %v6795, %v7154
    %v7156 = vpop.f32.mrf.mxu0
    %7157 = vmatprep.mubr.bf16.mxu0 %v5505
    %7158 = vmatmul.mubr.bf16.gmra.mxu0 %v5511
    %v7159 = vpop.f32.mrf.mxu0
    %v7160 = vadd.f32 %v6800, %v7159
    %v7161 = vpop.f32.mrf.mxu0
    %v7162 = vpop.f32.mrf.mxu0
    %v7163 = vadd.f32 %v6803, %v7162
    %v7164 = vpop.f32.mrf.mxu0
    %7165 = vmatprep.mubr.bf16.mxu0 %v5512
    %7166 = vmatmul.mubr.bf16.gmra.mxu0 %v5518
    %v7167 = vpop.f32.mrf.mxu0
    %v7168 = vadd.f32 %v6808, %v7167
    %v7169 = vpop.f32.mrf.mxu0
    %v7170 = vpop.f32.mrf.mxu0
    %v7171 = vadd.f32 %v6811, %v7170
    %v7172 = vpop.f32.mrf.mxu0
    %7173 = vmatprep.mubr.bf16.mxu0 %v5519
    %7174 = vmatmul.mubr.bf16.gmra.mxu0 %v5525
    %v7175 = vpop.f32.mrf.mxu0
    %v7176 = vadd.f32 %v6816, %v7175
    %v7177 = vpop.f32.mrf.mxu0
    %v7178 = vpop.f32.mrf.mxu0
    %v7179 = vadd.f32 %v6819, %v7178
    %v7180 = vpop.f32.mrf.mxu0
    %7181 = vmatprep.mubr.bf16.mxu0 %v5526
    %7182 = vmatmul.mubr.bf16.gmra.mxu0 %v5532
    %v7183 = vpop.f32.mrf.mxu0
    %v7184 = vadd.f32 %v6824, %v7183
    %v7185 = vpop.f32.mrf.mxu0
    %v7186 = vpop.f32.mrf.mxu0
    %v7187 = vadd.f32 %v6827, %v7186
    %v7188 = vpop.f32.mrf.mxu0
    %7189 = vmatprep.mubr.bf16.mxu0 %v5533
    %7190 = vmatmul.mubr.bf16.gmra.mxu0 %v5539
    %v7191 = vpop.f32.mrf.mxu0
    %v7192 = vadd.f32 %v6832, %v7191
    %v7193 = vpop.f32.mrf.mxu0
    %v7194 = vpop.f32.mrf.mxu0
    %v7195 = vadd.f32 %v6835, %v7194
    %v7196 = vpop.f32.mrf.mxu0
    %7197 = vmatprep.mubr.bf16.mxu0 %v5540
    %7198 = vmatmul.mubr.bf16.gmra.mxu0 %v5546
    %v7199 = vpop.f32.mrf.mxu0
    %v7200 = vadd.f32 %v6840, %v7199
    %v7201 = vpop.f32.mrf.mxu0
    %v7202 = vpop.f32.mrf.mxu0
    %v7203 = vadd.f32 %v6843, %v7202
    %v7204 = vpop.f32.mrf.mxu0
    %7205 = vmatprep.mubr.bf16.mxu0 %v5547
    %7206 = vmatmul.mubr.bf16.gmra.mxu0 %v5553
    %v7207 = vpop.f32.mrf.mxu0
    %v7208 = vadd.f32 %v6848, %v7207
    %v7209 = vpop.f32.mrf.mxu0
    %v7210 = vpop.f32.mrf.mxu0
    %v7211 = vadd.f32 %v6851, %v7210
    %v7212 = vpop.f32.mrf.mxu0
    %7213 = vmatprep.mubr.bf16.mxu0 %v5554
    %7214 = vmatmul.mubr.bf16.gmra.mxu0 %v5560
    %v7215 = vpop.f32.mrf.mxu0
    %v7216 = vadd.f32 %v6856, %v7215
    %v7217 = vpop.f32.mrf.mxu0
    %v7218 = vpop.f32.mrf.mxu0
    %v7219 = vadd.f32 %v6859, %v7218
    %v7220 = vpop.f32.mrf.mxu0
    %7221 = vmatprep.mubr.bf16.mxu0 %v5569
    %7222 = vmatmul.mubr.bf16.gmra.mxu0 %v5568
    %v7223 = vpop.f32.mrf.mxu0
    %v7224 = vadd.f32 %v6864, %v7223
    %v7225 = vpop.f32.mrf.mxu0
    %v7226 = vpop.f32.mrf.mxu0
    %v7227 = vpop.f32.mrf.mxu0
    %7228 = vdwg.mxu0
    %7229 = vmatprep.subr.bf16.mxu0 0
    %7230 = vmatpush1.bf16.msra.mxu0 %v6060
    %7231 = vmatprep.subr.bf16.mxu0 0
    %7232 = vmatpush1.bf16.msra.mxu0 %v6059
    %7233 = vmatprep.subr.bf16.mxu0 0
    %7234 = vmatpush1.bf16.msra.mxu0 %v6058
    %7235 = vmatprep.subr.bf16.mxu0 0
    %7236 = vmatpush1.bf16.msra.mxu0 %v6057
    %7237 = vmatprep.subr.bf16.mxu0 0
    %7238 = vmatpush1.bf16.msra.mxu0 %v6056
    %7239 = vmatprep.subr.bf16.mxu0 0
    %7240 = vmatpush1.bf16.msra.mxu0 %v6055
    %7241 = vmatprep.subr.bf16.mxu0 0
    %7242 = vmatpush1.bf16.msra.mxu0 %v6054
    %7243 = vmatprep.subr.bf16.mxu0 0
    %7244 = vmatpush1.bf16.msra.mxu0 %v6053
    %7245 = vmatprep.subr.bf16.mxu0 0
    %7246 = vmatpush2.bf16.msra.mxu0 %v6068
    %7247 = vmatprep.subr.bf16.mxu0 0
    %7248 = vmatpush2.bf16.msra.mxu0 %v6067
    %7249 = vmatprep.subr.bf16.mxu0 0
    %7250 = vmatpush2.bf16.msra.mxu0 %v6066
    %7251 = vmatprep.subr.bf16.mxu0 0
    %7252 = vmatpush2.bf16.msra.mxu0 %v6065
    %7253 = vmatprep.subr.bf16.mxu0 0
    %7254 = vmatpush2.bf16.msra.mxu0 %v6064
    %7255 = vmatprep.subr.bf16.mxu0 0
    %7256 = vmatpush2.bf16.msra.mxu0 %v6063
    %7257 = vmatprep.subr.bf16.mxu0 0
    %7258 = vmatpush2.bf16.msra.mxu0 %v6062
    %7259 = vmatprep.subr.bf16.mxu0 0
    %7260 = vmatpush2.bf16.msra.mxu0 %v6061
    %7261 = vmatprep.mubr.bf16.mxu0 %v5289
    %7262 = vmatmul.mubr.bf16.gmra.mxu0 %v5288
    %v7263 = vpop.f32.mrf.mxu0
    %v7264 = vadd.f32 %v6904, %v7263
    %v7265 = vpop.f32.mrf.mxu0
    %v7266 = vpop.f32.mrf.mxu0
    %v7267 = vadd.f32 %v6907, %v7266
    %v7268 = vpop.f32.mrf.mxu0
    %7269 = vmatprep.mubr.bf16.mxu0 %v5296
    %7270 = vmatmul.mubr.bf16.gmra.mxu0 %v5295
    %v7271 = vpop.f32.mrf.mxu0
    %v7272 = vadd.f32 %v6912, %v7271
    %v7273 = vpop.f32.mrf.mxu0
    %v7274 = vpop.f32.mrf.mxu0
    %v7275 = vadd.f32 %v6915, %v7274
    %v7276 = vpop.f32.mrf.mxu0
    %7277 = vmatprep.mubr.bf16.mxu0 %v5303
    %7278 = vmatmul.mubr.bf16.gmra.mxu0 %v5302
    %v7279 = vpop.f32.mrf.mxu0
    %v7280 = vadd.f32 %v6920, %v7279
    %v7281 = vpop.f32.mrf.mxu0
    %v7282 = vpop.f32.mrf.mxu0
    %v7283 = vadd.f32 %v6923, %v7282
    %v7284 = vpop.f32.mrf.mxu0
    %7285 = vmatprep.mubr.bf16.mxu0 %v5310
    %7286 = vmatmul.mubr.bf16.gmra.mxu0 %v5309
    %v7287 = vpop.f32.mrf.mxu0
    %v7288 = vadd.f32 %v6928, %v7287
    %v7289 = vpop.f32.mrf.mxu0
    %v7290 = vpop.f32.mrf.mxu0
    %v7291 = vadd.f32 %v6931, %v7290
    %v7292 = vpop.f32.mrf.mxu0
    %7293 = vmatprep.mubr.bf16.mxu0 %v5317
    %7294 = vmatmul.mubr.bf16.gmra.mxu0 %v5316
    %v7295 = vpop.f32.mrf.mxu0
    %v7296 = vadd.f32 %v6936, %v7295
    %v7297 = vpop.f32.mrf.mxu0
    %v7298 = vpop.f32.mrf.mxu0
    %v7299 = vadd.f32 %v6939, %v7298
    %v7300 = vpop.f32.mrf.mxu0
    %7301 = vmatprep.mubr.bf16.mxu0 %v5324
    %7302 = vmatmul.mubr.bf16.gmra.mxu0 %v5323
    %v7303 = vpop.f32.mrf.mxu0
    %v7304 = vadd.f32 %v6944, %v7303
    %v7305 = vpop.f32.mrf.mxu0
    %v7306 = vpop.f32.mrf.mxu0
    %v7307 = vadd.f32 %v6947, %v7306
    %v7308 = vpop.f32.mrf.mxu0
    %7309 = vmatprep.mubr.bf16.mxu0 %v5331
    %7310 = vmatmul.mubr.bf16.gmra.mxu0 %v5330
    %v7311 = vpop.f32.mrf.mxu0
    %v7312 = vadd.f32 %v6952, %v7311
    %v7313 = vpop.f32.mrf.mxu0
    %v7314 = vpop.f32.mrf.mxu0
    %v7315 = vadd.f32 %v6955, %v7314
    %v7316 = vpop.f32.mrf.mxu0
    %7317 = vmatprep.mubr.bf16.mxu0 %v5338
    %7318 = vmatmul.mubr.bf16.gmra.mxu0 %v5337
    %v7319 = vpop.f32.mrf.mxu0
    %v7320 = vadd.f32 %v6960, %v7319
    %v7321 = vpop.f32.mrf.mxu0
    %v7322 = vpop.f32.mrf.mxu0
    %v7323 = vadd.f32 %v6963, %v7322
    %v7324 = vpop.f32.mrf.mxu0
    %7325 = vmatprep.mubr.bf16.mxu0 %v5345
    %7326 = vmatmul.mubr.bf16.gmra.mxu0 %v5344
    %v7327 = vpop.f32.mrf.mxu0
    %v7328 = vadd.f32 %v6968, %v7327
    %v7329 = vpop.f32.mrf.mxu0
    %v7330 = vpop.f32.mrf.mxu0
    %v7331 = vadd.f32 %v6971, %v7330
    %v7332 = vpop.f32.mrf.mxu0
    %7333 = vmatprep.mubr.bf16.mxu0 %v5352
    %7334 = vmatmul.mubr.bf16.gmra.mxu0 %v5351
    %v7335 = vpop.f32.mrf.mxu0
    %v7336 = vadd.f32 %v6976, %v7335
    %v7337 = vpop.f32.mrf.mxu0
    %v7338 = vpop.f32.mrf.mxu0
    %v7339 = vadd.f32 %v6979, %v7338
    %v7340 = vpop.f32.mrf.mxu0
    %7341 = vmatprep.mubr.bf16.mxu0 %v5359
    %7342 = vmatmul.mubr.bf16.gmra.mxu0 %v5358
    %v7343 = vpop.f32.mrf.mxu0
    %v7344 = vadd.f32 %v6984, %v7343
    %v7345 = vpop.f32.mrf.mxu0
    %v7346 = vpop.f32.mrf.mxu0
    %v7347 = vadd.f32 %v6987, %v7346
    %v7348 = vpop.f32.mrf.mxu0
    %7349 = vmatprep.mubr.bf16.mxu0 %v5366
    %7350 = vmatmul.mubr.bf16.gmra.mxu0 %v5365
    %v7351 = vpop.f32.mrf.mxu0
    %v7352 = vadd.f32 %v6992, %v7351
    %v7353 = vpop.f32.mrf.mxu0
    %v7354 = vpop.f32.mrf.mxu0
    %v7355 = vadd.f32 %v6995, %v7354
    %v7356 = vpop.f32.mrf.mxu0
    %7357 = vmatprep.mubr.bf16.mxu0 %v5373
    %7358 = vmatmul.mubr.bf16.gmra.mxu0 %v5372
    %v7359 = vpop.f32.mrf.mxu0
    %v7360 = vadd.f32 %v7000, %v7359
    %v7361 = vpop.f32.mrf.mxu0
    %v7362 = vpop.f32.mrf.mxu0
    %v7363 = vadd.f32 %v7003, %v7362
    %v7364 = vpop.f32.mrf.mxu0
    %7365 = vmatprep.mubr.bf16.mxu0 %v5380
    %7366 = vmatmul.mubr.bf16.gmra.mxu0 %v5379
    %v7367 = vpop.f32.mrf.mxu0
    %v7368 = vadd.f32 %v7008, %v7367
    %v7369 = vpop.f32.mrf.mxu0
    %v7370 = vpop.f32.mrf.mxu0
    %v7371 = vadd.f32 %v7011, %v7370
    %v7372 = vpop.f32.mrf.mxu0
    %7373 = vmatprep.mubr.bf16.mxu0 %v5387
    %7374 = vmatmul.mubr.bf16.gmra.mxu0 %v5386
    %v7375 = vpop.f32.mrf.mxu0
    %v7376 = vadd.f32 %v7016, %v7375
    %v7377 = vpop.f32.mrf.mxu0
    %v7378 = vpop.f32.mrf.mxu0
    %v7379 = vadd.f32 %v7019, %v7378
    %v7380 = vpop.f32.mrf.mxu0
    %7381 = vmatprep.mubr.bf16.mxu0 %v5394
    %7382 = vmatmul.mubr.bf16.gmra.mxu0 %v5393
    %v7383 = vpop.f32.mrf.mxu0
    %v7384 = vadd.f32 %v7024, %v7383
    %v7385 = vpop.f32.mrf.mxu0
    %v7386 = vpop.f32.mrf.mxu0
    %v7387 = vadd.f32 %v7027, %v7386
    %v7388 = vpop.f32.mrf.mxu0
    %7389 = vmatprep.mubr.bf16.mxu0 %v5401
    %7390 = vmatmul.mubr.bf16.gmra.mxu0 %v5400
    %v7391 = vpop.f32.mrf.mxu0
    %v7392 = vadd.f32 %v7032, %v7391
    %v7393 = vpop.f32.mrf.mxu0
    %v7394 = vpop.f32.mrf.mxu0
    %v7395 = vadd.f32 %v7035, %v7394
    %v7396 = vpop.f32.mrf.mxu0
    %7397 = vmatprep.mubr.bf16.mxu0 %v5408
    %7398 = vmatmul.mubr.bf16.gmra.mxu0 %v5407
    %v7399 = vpop.f32.mrf.mxu0
    %v7400 = vadd.f32 %v7040, %v7399
    %v7401 = vpop.f32.mrf.mxu0
    %v7402 = vpop.f32.mrf.mxu0
    %v7403 = vadd.f32 %v7043, %v7402
    %v7404 = vpop.f32.mrf.mxu0
    %7405 = vmatprep.mubr.bf16.mxu0 %v5415
    %7406 = vmatmul.mubr.bf16.gmra.mxu0 %v5414
    %v7407 = vpop.f32.mrf.mxu0
    %v7408 = vadd.f32 %v7048, %v7407
    %v7409 = vpop.f32.mrf.mxu0
    %v7410 = vpop.f32.mrf.mxu0
    %v7411 = vadd.f32 %v7051, %v7410
    %v7412 = vpop.f32.mrf.mxu0
    %7413 = vmatprep.mubr.bf16.mxu0 %v5422
    %7414 = vmatmul.mubr.bf16.gmra.mxu0 %v5421
    %v7415 = vpop.f32.mrf.mxu0
    %v7416 = vadd.f32 %v7056, %v7415
    %v7417 = vpop.f32.mrf.mxu0
    %v7418 = vpop.f32.mrf.mxu0
    %v7419 = vadd.f32 %v7059, %v7418
    %v7420 = vpop.f32.mrf.mxu0
    %7421 = vmatprep.mubr.bf16.mxu0 %v5429
    %7422 = vmatmul.mubr.bf16.gmra.mxu0 %v5428
    %v7423 = vpop.f32.mrf.mxu0
    %v7424 = vadd.f32 %v7064, %v7423
    %v7425 = vpop.f32.mrf.mxu0
    %v7426 = vpop.f32.mrf.mxu0
    %v7427 = vadd.f32 %v7067, %v7426
    %v7428 = vpop.f32.mrf.mxu0
    %7429 = vmatprep.mubr.bf16.mxu0 %v5436
    %7430 = vmatmul.mubr.bf16.gmra.mxu0 %v5435
    %v7431 = vpop.f32.mrf.mxu0
    %v7432 = vadd.f32 %v7072, %v7431
    %v7433 = vpop.f32.mrf.mxu0
    %v7434 = vpop.f32.mrf.mxu0
    %v7435 = vadd.f32 %v7075, %v7434
    %v7436 = vpop.f32.mrf.mxu0
    %7437 = vmatprep.mubr.bf16.mxu0 %v5443
    %7438 = vmatmul.mubr.bf16.gmra.mxu0 %v5442
    %v7439 = vpop.f32.mrf.mxu0
    %v7440 = vadd.f32 %v7080, %v7439
    %v7441 = vpop.f32.mrf.mxu0
    %v7442 = vpop.f32.mrf.mxu0
    %v7443 = vadd.f32 %v7083, %v7442
    %v7444 = vpop.f32.mrf.mxu0
    %7445 = vmatprep.mubr.bf16.mxu0 %v5450
    %7446 = vmatmul.mubr.bf16.gmra.mxu0 %v5449
    %v7447 = vpop.f32.mrf.mxu0
    %v7448 = vadd.f32 %v7088, %v7447
    %v7449 = vpop.f32.mrf.mxu0
    %v7450 = vpop.f32.mrf.mxu0
    %v7451 = vadd.f32 %v7091, %v7450
    %v7452 = vpop.f32.mrf.mxu0
    %7453 = vmatprep.mubr.bf16.mxu0 %v5457
    %7454 = vmatmul.mubr.bf16.gmra.mxu0 %v5456
    %v7455 = vpop.f32.mrf.mxu0
    %v7456 = vadd.f32 %v7096, %v7455
    %v7457 = vpop.f32.mrf.mxu0
    %v7458 = vpop.f32.mrf.mxu0
    %v7459 = vadd.f32 %v7099, %v7458
    %v7460 = vpop.f32.mrf.mxu0
    %7461 = vmatprep.mubr.bf16.mxu0 %v5464
    %7462 = vmatmul.mubr.bf16.gmra.mxu0 %v5463
    %v7463 = vpop.f32.mrf.mxu0
    %v7464 = vadd.f32 %v7104, %v7463
    %v7465 = vpop.f32.mrf.mxu0
    %v7466 = vpop.f32.mrf.mxu0
    %v7467 = vadd.f32 %v7107, %v7466
    %v7468 = vpop.f32.mrf.mxu0
    %7469 = vmatprep.mubr.bf16.mxu0 %v5471
    %7470 = vmatmul.mubr.bf16.gmra.mxu0 %v5470
    %v7471 = vpop.f32.mrf.mxu0
    %v7472 = vadd.f32 %v7112, %v7471
    %v7473 = vpop.f32.mrf.mxu0
    %v7474 = vpop.f32.mrf.mxu0
    %v7475 = vadd.f32 %v7115, %v7474
    %v7476 = vpop.f32.mrf.mxu0
    %7477 = vmatprep.mubr.bf16.mxu0 %v5478
    %7478 = vmatmul.mubr.bf16.gmra.mxu0 %v5477
    %v7479 = vpop.f32.mrf.mxu0
    %v7480 = vadd.f32 %v7120, %v7479
    %v7481 = vpop.f32.mrf.mxu0
    %v7482 = vpop.f32.mrf.mxu0
    %v7483 = vadd.f32 %v7123, %v7482
    %v7484 = vpop.f32.mrf.mxu0
    %7485 = vmatprep.mubr.bf16.mxu0 %v5485
    %7486 = vmatmul.mubr.bf16.gmra.mxu0 %v5484
    %v7487 = vpop.f32.mrf.mxu0
    %v7488 = vadd.f32 %v7128, %v7487
    %v7489 = vpop.f32.mrf.mxu0
    %v7490 = vpop.f32.mrf.mxu0
    %v7491 = vadd.f32 %v7131, %v7490
    %v7492 = vpop.f32.mrf.mxu0
    %7493 = vmatprep.mubr.bf16.mxu0 %v5492
    %7494 = vmatmul.mubr.bf16.gmra.mxu0 %v5491
    %v7495 = vpop.f32.mrf.mxu0
    %v7496 = vadd.f32 %v7136, %v7495
    %v7497 = vpop.f32.mrf.mxu0
    %v7498 = vpop.f32.mrf.mxu0
    %v7499 = vadd.f32 %v7139, %v7498
    %v7500 = vpop.f32.mrf.mxu0
    %7501 = vmatprep.mubr.bf16.mxu0 %v5499
    %7502 = vmatmul.mubr.bf16.gmra.mxu0 %v5498
    %v7503 = vpop.f32.mrf.mxu0
    %v7504 = vadd.f32 %v7144, %v7503
    %v7505 = vpop.f32.mrf.mxu0
    %v7506 = vpop.f32.mrf.mxu0
    %v7507 = vadd.f32 %v7147, %v7506
    %v7508 = vpop.f32.mrf.mxu0
    %7509 = vmatprep.mubr.bf16.mxu0 %v5506
    %7510 = vmatmul.mubr.bf16.gmra.mxu0 %v5505
    %v7511 = vpop.f32.mrf.mxu0
    %v7512 = vadd.f32 %v7152, %v7511
    %v7513 = vpop.f32.mrf.mxu0
    %v7514 = vpop.f32.mrf.mxu0
    %v7515 = vadd.f32 %v7155, %v7514
    %v7516 = vpop.f32.mrf.mxu0
    %7517 = vmatprep.mubr.bf16.mxu0 %v5513
    %7518 = vmatmul.mubr.bf16.gmra.mxu0 %v5512
    %v7519 = vpop.f32.mrf.mxu0
    %v7520 = vadd.f32 %v7160, %v7519
    %v7521 = vpop.f32.mrf.mxu0
    %v7522 = vpop.f32.mrf.mxu0
    %v7523 = vadd.f32 %v7163, %v7522
    %v7524 = vpop.f32.mrf.mxu0
    %7525 = vmatprep.mubr.bf16.mxu0 %v5520
    %7526 = vmatmul.mubr.bf16.gmra.mxu0 %v5519
    %v7527 = vpop.f32.mrf.mxu0
    %v7528 = vadd.f32 %v7168, %v7527
    %v7529 = vpop.f32.mrf.mxu0
    %v7530 = vpop.f32.mrf.mxu0
    %v7531 = vadd.f32 %v7171, %v7530
    %v7532 = vpop.f32.mrf.mxu0
    %7533 = vmatprep.mubr.bf16.mxu0 %v5527
    %7534 = vmatmul.mubr.bf16.gmra.mxu0 %v5526
    %v7535 = vpop.f32.mrf.mxu0
    %v7536 = vadd.f32 %v7176, %v7535
    %v7537 = vpop.f32.mrf.mxu0
    %v7538 = vpop.f32.mrf.mxu0
    %v7539 = vadd.f32 %v7179, %v7538
    %v7540 = vpop.f32.mrf.mxu0
    %7541 = vmatprep.mubr.bf16.mxu0 %v5534
    %7542 = vmatmul.mubr.bf16.gmra.mxu0 %v5533
    %v7543 = vpop.f32.mrf.mxu0
    %v7544 = vadd.f32 %v7184, %v7543
    %v7545 = vpop.f32.mrf.mxu0
    %v7546 = vpop.f32.mrf.mxu0
    %v7547 = vadd.f32 %v7187, %v7546
    %v7548 = vpop.f32.mrf.mxu0
    %7549 = vmatprep.mubr.bf16.mxu0 %v5541
    %7550 = vmatmul.mubr.bf16.gmra.mxu0 %v5540
    %v7551 = vpop.f32.mrf.mxu0
    %v7552 = vadd.f32 %v7192, %v7551
    %v7553 = vpop.f32.mrf.mxu0
    %v7554 = vpop.f32.mrf.mxu0
    %v7555 = vadd.f32 %v7195, %v7554
    %v7556 = vpop.f32.mrf.mxu0
    %7557 = vmatprep.mubr.bf16.mxu0 %v5548
    %7558 = vmatmul.mubr.bf16.gmra.mxu0 %v5547
    %v7559 = vpop.f32.mrf.mxu0
    %v7560 = vadd.f32 %v7200, %v7559
    %v7561 = vpop.f32.mrf.mxu0
    %v7562 = vpop.f32.mrf.mxu0
    %v7563 = vadd.f32 %v7203, %v7562
    %v7564 = vpop.f32.mrf.mxu0
    %7565 = vmatprep.mubr.bf16.mxu0 %v5555
    %7566 = vmatmul.mubr.bf16.gmra.mxu0 %v5554
    %v7567 = vpop.f32.mrf.mxu0
    %v7568 = vadd.f32 %v7208, %v7567
    %v7569 = vpop.f32.mrf.mxu0
    %v7570 = vpop.f32.mrf.mxu0
    %v7571 = vadd.f32 %v7211, %v7570
    %v7572 = vpop.f32.mrf.mxu0
    %7573 = vmatprep.mubr.bf16.mxu0 %v5562
    %7574 = vmatmul.mubr.bf16.gmra.mxu0 %v5561
    %v7575 = vpop.f32.mrf.mxu0
    %v7576 = vadd.f32 %v7216, %v7575
    %v7577 = vpop.f32.mrf.mxu0
    %v7578 = vpop.f32.mrf.mxu0
    %v7579 = vadd.f32 %v7219, %v7578
    %v7580 = vpop.f32.mrf.mxu0
    %7581 = vmatprep.mubr.bf16.mxu0 %v5571
    %7582 = vmatmul.mubr.bf16.gmra.mxu0 %v5570
    %v7583 = vpop.f32.mrf.mxu0
    %v7584 = vadd.f32 %v7224, %v7583
    %v7585 = vpop.f32.mrf.mxu0
    %v7586 = vpop.f32.mrf.mxu0
    %v7587 = vpop.f32.mrf.mxu0
    %7588 = vdwg.mxu0
    %7589 = vmatprep.subr.bf16.mxu0 0
    %7590 = vmatpush1.bf16.msra.mxu0 %v6076
    %7591 = vmatprep.subr.bf16.mxu0 0
    %7592 = vmatpush1.bf16.msra.mxu0 %v6075
    %7593 = vmatprep.subr.bf16.mxu0 0
    %7594 = vmatpush1.bf16.msra.mxu0 %v6074
    %7595 = vmatprep.subr.bf16.mxu0 0
    %7596 = vmatpush1.bf16.msra.mxu0 %v6073
    %7597 = vmatprep.subr.bf16.mxu0 0
    %7598 = vmatpush1.bf16.msra.mxu0 %v6072
    %7599 = vmatprep.subr.bf16.mxu0 0
    %7600 = vmatpush1.bf16.msra.mxu0 %v6071
    %7601 = vmatprep.subr.bf16.mxu0 0
    %7602 = vmatpush1.bf16.msra.mxu0 %v6070
    %7603 = vmatprep.subr.bf16.mxu0 0
    %7604 = vmatpush1.bf16.msra.mxu0 %v6069
    %7605 = vmatprep.subr.bf16.mxu0 0
    %7606 = vmatpush2.bf16.msra.mxu0 0
    %7607 = vmatprep.subr.bf16.mxu0 0
    %7608 = vmatpush2.bf16.msra.mxu0 0
    %7609 = vmatprep.subr.bf16.mxu0 0
    %7610 = vmatpush2.bf16.msra.mxu0 0
    %7611 = vmatprep.subr.bf16.mxu0 0
    %7612 = vmatpush2.bf16.msra.mxu0 0
    %7613 = vmatprep.subr.bf16.mxu0 0
    %7614 = vmatpush2.bf16.msra.mxu0 0
    %7615 = vmatprep.subr.bf16.mxu0 0
    %7616 = vmatpush2.bf16.msra.mxu0 0
    %7617 = vmatprep.subr.bf16.mxu0 0
    %7618 = vmatpush2.bf16.msra.mxu0 0
    %7619 = vmatprep.subr.bf16.mxu0 0
    %7620 = vmatpush2.bf16.msra.mxu0 0
    %7621 = vmatprep.mubr.bf16.mxu0 0
    %7622 = vmatmul.mubr.bf16.gmra.mxu0 %v5290
    %v7623 = vpop.f32.mrf.mxu0
    %v7624 = vadd.f32 %v7264, %v7623
    %v7625 = vpop.f32.mrf.mxu0
    %v7626 = vpop.f32.mrf.mxu0
    %v7627 = vadd.f32 %v7267, %v7626
    %v7628 = vpop.f32.mrf.mxu0
    %7629 = vmatprep.mubr.bf16.mxu0 0
    %7630 = vmatmul.mubr.bf16.gmra.mxu0 %v5297
    %v7631 = vpop.f32.mrf.mxu0
    %v7632 = vadd.f32 %v7272, %v7631
    %v7633 = vpop.f32.mrf.mxu0
    %v7634 = vpop.f32.mrf.mxu0
    %v7635 = vadd.f32 %v7275, %v7634
    %v7636 = vpop.f32.mrf.mxu0
    %7637 = vmatprep.mubr.bf16.mxu0 0
    %7638 = vmatmul.mubr.bf16.gmra.mxu0 %v5304
    %v7639 = vpop.f32.mrf.mxu0
    %v7640 = vadd.f32 %v7280, %v7639
    %v7641 = vpop.f32.mrf.mxu0
    %v7642 = vpop.f32.mrf.mxu0
    %v7643 = vadd.f32 %v7283, %v7642
    %v7644 = vpop.f32.mrf.mxu0
    %7645 = vmatprep.mubr.bf16.mxu0 0
    %7646 = vmatmul.mubr.bf16.gmra.mxu0 %v5311
    %v7647 = vpop.f32.mrf.mxu0
    %v7648 = vadd.f32 %v7288, %v7647
    %v7649 = vpop.f32.mrf.mxu0
    %v7650 = vpop.f32.mrf.mxu0
    %v7651 = vadd.f32 %v7291, %v7650
    %v7652 = vpop.f32.mrf.mxu0
    %7653 = vmatprep.mubr.bf16.mxu0 0
    %7654 = vmatmul.mubr.bf16.gmra.mxu0 %v5318
    %v7655 = vpop.f32.mrf.mxu0
    %v7656 = vadd.f32 %v7296, %v7655
    %v7657 = vpop.f32.mrf.mxu0
    %v7658 = vpop.f32.mrf.mxu0
    %v7659 = vadd.f32 %v7299, %v7658
    %v7660 = vpop.f32.mrf.mxu0
    %7661 = vmatprep.mubr.bf16.mxu0 0
    %7662 = vmatmul.mubr.bf16.gmra.mxu0 %v5325
    %v7663 = vpop.f32.mrf.mxu0
    %v7664 = vadd.f32 %v7304, %v7663
    %v7665 = vpop.f32.mrf.mxu0
    %v7666 = vpop.f32.mrf.mxu0
    %v7667 = vadd.f32 %v7307, %v7666
    %v7668 = vpop.f32.mrf.mxu0
    %7669 = vmatprep.mubr.bf16.mxu0 0
    %7670 = vmatmul.mubr.bf16.gmra.mxu0 %v5332
    %v7671 = vpop.f32.mrf.mxu0
    %v7672 = vadd.f32 %v7312, %v7671
    %v7673 = vpop.f32.mrf.mxu0
    %v7674 = vpop.f32.mrf.mxu0
    %v7675 = vadd.f32 %v7315, %v7674
    %v7676 = vpop.f32.mrf.mxu0
    %7677 = vmatprep.mubr.bf16.mxu0 0
    %7678 = vmatmul.mubr.bf16.gmra.mxu0 %v5339
    %v7679 = vpop.f32.mrf.mxu0
    %v7680 = vadd.f32 %v7320, %v7679
    %v7681 = vpop.f32.mrf.mxu0
    %v7682 = vpop.f32.mrf.mxu0
    %v7683 = vadd.f32 %v7323, %v7682
    %v7684 = vpop.f32.mrf.mxu0
    %7685 = vmatprep.mubr.bf16.mxu0 0
    %7686 = vmatmul.mubr.bf16.gmra.mxu0 %v5346
    %v7687 = vpop.f32.mrf.mxu0
    %v7688 = vadd.f32 %v7328, %v7687
    %v7689 = vpop.f32.mrf.mxu0
    %v7690 = vpop.f32.mrf.mxu0
    %v7691 = vadd.f32 %v7331, %v7690
    %v7692 = vpop.f32.mrf.mxu0
    %7693 = vmatprep.mubr.bf16.mxu0 0
    %7694 = vmatmul.mubr.bf16.gmra.mxu0 %v5353
    %v7695 = vpop.f32.mrf.mxu0
    %v7696 = vadd.f32 %v7336, %v7695
    %v7697 = vpop.f32.mrf.mxu0
    %v7698 = vpop.f32.mrf.mxu0
    %v7699 = vadd.f32 %v7339, %v7698
    %v7700 = vpop.f32.mrf.mxu0
    %7701 = vmatprep.mubr.bf16.mxu0 0
    %7702 = vmatmul.mubr.bf16.gmra.mxu0 %v5360
    %v7703 = vpop.f32.mrf.mxu0
    %v7704 = vadd.f32 %v7344, %v7703
    %v7705 = vpop.f32.mrf.mxu0
    %v7706 = vpop.f32.mrf.mxu0
    %v7707 = vadd.f32 %v7347, %v7706
    %v7708 = vpop.f32.mrf.mxu0
    %7709 = vmatprep.mubr.bf16.mxu0 0
    %7710 = vmatmul.mubr.bf16.gmra.mxu0 %v5367
    %v7711 = vpop.f32.mrf.mxu0
    %v7712 = vadd.f32 %v7352, %v7711
    %v7713 = vpop.f32.mrf.mxu0
    %v7714 = vpop.f32.mrf.mxu0
    %v7715 = vadd.f32 %v7355, %v7714
    %v7716 = vpop.f32.mrf.mxu0
    %7717 = vmatprep.mubr.bf16.mxu0 0
    %7718 = vmatmul.mubr.bf16.gmra.mxu0 %v5374
    %v7719 = vpop.f32.mrf.mxu0
    %v7720 = vadd.f32 %v7360, %v7719
    %v7721 = vpop.f32.mrf.mxu0
    %v7722 = vpop.f32.mrf.mxu0
    %v7723 = vadd.f32 %v7363, %v7722
    %v7724 = vpop.f32.mrf.mxu0
    %7725 = vmatprep.mubr.bf16.mxu0 0
    %7726 = vmatmul.mubr.bf16.gmra.mxu0 %v5381
    %v7727 = vpop.f32.mrf.mxu0
    %v7728 = vadd.f32 %v7368, %v7727
    %v7729 = vpop.f32.mrf.mxu0
    %v7730 = vpop.f32.mrf.mxu0
    %v7731 = vadd.f32 %v7371, %v7730
    %v7732 = vpop.f32.mrf.mxu0
    %7733 = vmatprep.mubr.bf16.mxu0 0
    %7734 = vmatmul.mubr.bf16.gmra.mxu0 %v5388
    %v7735 = vpop.f32.mrf.mxu0
    %v7736 = vadd.f32 %v7376, %v7735
    %v7737 = vpop.f32.mrf.mxu0
    %v7738 = vpop.f32.mrf.mxu0
    %v7739 = vadd.f32 %v7379, %v7738
    %v7740 = vpop.f32.mrf.mxu0
    %7741 = vmatprep.mubr.bf16.mxu0 0
    %7742 = vmatmul.mubr.bf16.gmra.mxu0 %v5395
    %v7743 = vpop.f32.mrf.mxu0
    %v7744 = vadd.f32 %v7384, %v7743
    %v7745 = vpop.f32.mrf.mxu0
    %v7746 = vpop.f32.mrf.mxu0
    %v7747 = vadd.f32 %v7387, %v7746
    %v7748 = vpop.f32.mrf.mxu0
    %7749 = vmatprep.mubr.bf16.mxu0 0
    %7750 = vmatmul.mubr.bf16.gmra.mxu0 %v5402
    %v7751 = vpop.f32.mrf.mxu0
    %v7752 = vadd.f32 %v7392, %v7751
    %v7753 = vpop.f32.mrf.mxu0
    %v7754 = vpop.f32.mrf.mxu0
    %v7755 = vadd.f32 %v7395, %v7754
    %v7756 = vpop.f32.mrf.mxu0
    %7757 = vmatprep.mubr.bf16.mxu0 0
    %7758 = vmatmul.mubr.bf16.gmra.mxu0 %v5409
    %v7759 = vpop.f32.mrf.mxu0
    %v7760 = vadd.f32 %v7400, %v7759
    %v7761 = vpop.f32.mrf.mxu0
    %v7762 = vpop.f32.mrf.mxu0
    %v7763 = vadd.f32 %v7403, %v7762
    %v7764 = vpop.f32.mrf.mxu0
    %7765 = vmatprep.mubr.bf16.mxu0 0
    %7766 = vmatmul.mubr.bf16.gmra.mxu0 %v5416
    %v7767 = vpop.f32.mrf.mxu0
    %v7768 = vadd.f32 %v7408, %v7767
    %v7769 = vpop.f32.mrf.mxu0
    %v7770 = vpop.f32.mrf.mxu0
    %v7771 = vadd.f32 %v7411, %v7770
    %v7772 = vpop.f32.mrf.mxu0
    %7773 = vmatprep.mubr.bf16.mxu0 0
    %7774 = vmatmul.mubr.bf16.gmra.mxu0 %v5423
    %v7775 = vpop.f32.mrf.mxu0
    %v7776 = vadd.f32 %v7416, %v7775
    %v7777 = vpop.f32.mrf.mxu0
    %v7778 = vpop.f32.mrf.mxu0
    %v7779 = vadd.f32 %v7419, %v7778
    %v7780 = vpop.f32.mrf.mxu0
    %7781 = vmatprep.mubr.bf16.mxu0 0
    %7782 = vmatmul.mubr.bf16.gmra.mxu0 %v5430
    %v7783 = vpop.f32.mrf.mxu0
    %v7784 = vadd.f32 %v7424, %v7783
    %v7785 = vpop.f32.mrf.mxu0
    %v7786 = vpop.f32.mrf.mxu0
    %v7787 = vadd.f32 %v7427, %v7786
    %v7788 = vpop.f32.mrf.mxu0
    %7789 = vmatprep.mubr.bf16.mxu0 0
    %7790 = vmatmul.mubr.bf16.gmra.mxu0 %v5437
    %v7791 = vpop.f32.mrf.mxu0
    %v7792 = vadd.f32 %v7432, %v7791
    %v7793 = vpop.f32.mrf.mxu0
    %v7794 = vpop.f32.mrf.mxu0
    %v7795 = vadd.f32 %v7435, %v7794
    %v7796 = vpop.f32.mrf.mxu0
    %7797 = vmatprep.mubr.bf16.mxu0 0
    %7798 = vmatmul.mubr.bf16.gmra.mxu0 %v5444
    %v7799 = vpop.f32.mrf.mxu0
    %v7800 = vadd.f32 %v7440, %v7799
    %v7801 = vpop.f32.mrf.mxu0
    %v7802 = vpop.f32.mrf.mxu0
    %v7803 = vadd.f32 %v7443, %v7802
    %v7804 = vpop.f32.mrf.mxu0
    %7805 = vmatprep.mubr.bf16.mxu0 0
    %7806 = vmatmul.mubr.bf16.gmra.mxu0 %v5451
    %v7807 = vpop.f32.mrf.mxu0
    %v7808 = vadd.f32 %v7448, %v7807
    %v7809 = vpop.f32.mrf.mxu0
    %v7810 = vpop.f32.mrf.mxu0
    %v7811 = vadd.f32 %v7451, %v7810
    %v7812 = vpop.f32.mrf.mxu0
    %7813 = vmatprep.mubr.bf16.mxu0 0
    %7814 = vmatmul.mubr.bf16.gmra.mxu0 %v5458
    %v7815 = vpop.f32.mrf.mxu0
    %v7816 = vadd.f32 %v7456, %v7815
    %v7817 = vpop.f32.mrf.mxu0
    %v7818 = vpop.f32.mrf.mxu0
    %v7819 = vadd.f32 %v7459, %v7818
    %v7820 = vpop.f32.mrf.mxu0
    %7821 = vmatprep.mubr.bf16.mxu0 0
    %7822 = vmatmul.mubr.bf16.gmra.mxu0 %v5465
    %v7823 = vpop.f32.mrf.mxu0
    %v7824 = vadd.f32 %v7464, %v7823
    %v7825 = vpop.f32.mrf.mxu0
    %v7826 = vpop.f32.mrf.mxu0
    %v7827 = vadd.f32 %v7467, %v7826
    %v7828 = vpop.f32.mrf.mxu0
    %7829 = vmatprep.mubr.bf16.mxu0 0
    %7830 = vmatmul.mubr.bf16.gmra.mxu0 %v5472
    %v7831 = vpop.f32.mrf.mxu0
    %v7832 = vadd.f32 %v7472, %v7831
    %v7833 = vpop.f32.mrf.mxu0
    %v7834 = vpop.f32.mrf.mxu0
    %v7835 = vadd.f32 %v7475, %v7834
    %v7836 = vpop.f32.mrf.mxu0
    %7837 = vmatprep.mubr.bf16.mxu0 0
    %7838 = vmatmul.mubr.bf16.gmra.mxu0 %v5479
    %v7839 = vpop.f32.mrf.mxu0
    %v7840 = vadd.f32 %v7480, %v7839
    %v7841 = vpop.f32.mrf.mxu0
    %v7842 = vpop.f32.mrf.mxu0
    %v7843 = vadd.f32 %v7483, %v7842
    %v7844 = vpop.f32.mrf.mxu0
    %7845 = vmatprep.mubr.bf16.mxu0 0
    %7846 = vmatmul.mubr.bf16.gmra.mxu0 %v5486
    %v7847 = vpop.f32.mrf.mxu0
    %v7848 = vadd.f32 %v7488, %v7847
    %v7849 = vpop.f32.mrf.mxu0
    %v7850 = vpop.f32.mrf.mxu0
    %v7851 = vadd.f32 %v7491, %v7850
    %v7852 = vpop.f32.mrf.mxu0
    %7853 = vmatprep.mubr.bf16.mxu0 0
    %7854 = vmatmul.mubr.bf16.gmra.mxu0 %v5493
    %v7855 = vpop.f32.mrf.mxu0
    %v7856 = vadd.f32 %v7496, %v7855
    %v7857 = vpop.f32.mrf.mxu0
    %v7858 = vpop.f32.mrf.mxu0
    %v7859 = vadd.f32 %v7499, %v7858
    %v7860 = vpop.f32.mrf.mxu0
    %7861 = vmatprep.mubr.bf16.mxu0 0
    %7862 = vmatmul.mubr.bf16.gmra.mxu0 %v5500
    %v7863 = vpop.f32.mrf.mxu0
    %v7864 = vadd.f32 %v7504, %v7863
    %v7865 = vpop.f32.mrf.mxu0
    %v7866 = vpop.f32.mrf.mxu0
    %v7867 = vadd.f32 %v7507, %v7866
    %v7868 = vpop.f32.mrf.mxu0
    %7869 = vmatprep.mubr.bf16.mxu0 0
    %7870 = vmatmul.mubr.bf16.gmra.mxu0 %v5507
    %v7871 = vpop.f32.mrf.mxu0
    %v7872 = vadd.f32 %v7512, %v7871
    %v7873 = vpop.f32.mrf.mxu0
    %v7874 = vpop.f32.mrf.mxu0
    %v7875 = vadd.f32 %v7515, %v7874
    %v7876 = vpop.f32.mrf.mxu0
    %7877 = vmatprep.mubr.bf16.mxu0 0
    %7878 = vmatmul.mubr.bf16.gmra.mxu0 %v5514
    %v7879 = vpop.f32.mrf.mxu0
    %v7880 = vadd.f32 %v7520, %v7879
    %v7881 = vpop.f32.mrf.mxu0
    %v7882 = vpop.f32.mrf.mxu0
    %v7883 = vadd.f32 %v7523, %v7882
    %v7884 = vpop.f32.mrf.mxu0
    %7885 = vmatprep.mubr.bf16.mxu0 0
    %7886 = vmatmul.mubr.bf16.gmra.mxu0 %v5521
    %v7887 = vpop.f32.mrf.mxu0
    %v7888 = vadd.f32 %v7528, %v7887
    %v7889 = vpop.f32.mrf.mxu0
    %v7890 = vpop.f32.mrf.mxu0
    %v7891 = vadd.f32 %v7531, %v7890
    %v7892 = vpop.f32.mrf.mxu0
    %7893 = vmatprep.mubr.bf16.mxu0 0
    %7894 = vmatmul.mubr.bf16.gmra.mxu0 %v5528
    %v7895 = vpop.f32.mrf.mxu0
    %v7896 = vadd.f32 %v7536, %v7895
    %v7897 = vpop.f32.mrf.mxu0
    %v7898 = vpop.f32.mrf.mxu0
    %v7899 = vadd.f32 %v7539, %v7898
    %v7900 = vpop.f32.mrf.mxu0
    %7901 = vmatprep.mubr.bf16.mxu0 0
    %7902 = vmatmul.mubr.bf16.gmra.mxu0 %v5535
    %v7903 = vpop.f32.mrf.mxu0
    %v7904 = vadd.f32 %v7544, %v7903
    %v7905 = vpop.f32.mrf.mxu0
    %v7906 = vpop.f32.mrf.mxu0
    %v7907 = vadd.f32 %v7547, %v7906
    %v7908 = vpop.f32.mrf.mxu0
    %7909 = vmatprep.mubr.bf16.mxu0 0
    %7910 = vmatmul.mubr.bf16.gmra.mxu0 %v5542
    %v7911 = vpop.f32.mrf.mxu0
    %v7912 = vadd.f32 %v7552, %v7911
    %v7913 = vpop.f32.mrf.mxu0
    %v7914 = vpop.f32.mrf.mxu0
    %v7915 = vadd.f32 %v7555, %v7914
    %v7916 = vpop.f32.mrf.mxu0
    %7917 = vmatprep.mubr.bf16.mxu0 0
    %7918 = vmatmul.mubr.bf16.gmra.mxu0 %v5549
    %v7919 = vpop.f32.mrf.mxu0
    %v7920 = vadd.f32 %v7560, %v7919
    %v7921 = vpop.f32.mrf.mxu0
    %v7922 = vpop.f32.mrf.mxu0
    %v7923 = vadd.f32 %v7563, %v7922
    %v7924 = vpop.f32.mrf.mxu0
    %7925 = vmatprep.mubr.bf16.mxu0 0
    %7926 = vmatmul.mubr.bf16.gmra.mxu0 %v5556
    %v7927 = vpop.f32.mrf.mxu0
    %v7928 = vadd.f32 %v7568, %v7927
    %v7929 = vpop.f32.mrf.mxu0
    %v7930 = vpop.f32.mrf.mxu0
    %v7931 = vadd.f32 %v7571, %v7930
    %v7932 = vpop.f32.mrf.mxu0
    %7933 = vmatprep.mubr.bf16.mxu0 0
    %7934 = vmatmul.mubr.bf16.gmra.mxu0 %v5563
    %v7935 = vpop.f32.mrf.mxu0
    %v7936 = vadd.f32 %v7576, %v7935
    %v7937 = vpop.f32.mrf.mxu0
    %v7938 = vpop.f32.mrf.mxu0
    %v7939 = vadd.f32 %v7579, %v7938
    %v7940 = vpop.f32.mrf.mxu0
    %7941 = vmatprep.mubr.bf16.mxu0 0
    %7942 = vmatmul.mubr.bf16.gmra.mxu0 %v5572
    %v7943 = vpop.f32.mrf.mxu0
    %v7944 = vadd.f32 %v7584, %v7943
    %v7945 = vpop.f32.mrf.mxu0
    %v7946 = vpop.f32.mrf.mxu0
    %v7947 = vpop.f32.mrf.mxu0
    %7948 = vdwg.mxu0
    %v7949 = vld [vmem:[%s5] sm:$0x1]
    %v7950 = vld [vmem:[%s6] sm:$0x1]
    %v7951 = vmul.f32 %v7624, %v3383
    %v7952 = vmul.f32 %v7627, %v3388
    %v7953 = vmul.f32 %v7632, %v3393
    %v7954 = vmul.f32 %v7635, %v3398
    %v7955 = vmul.f32 %v7640, %v3403
    %v7956 = vmul.f32 %v7643, %v3408
    %v7957 = vmul.f32 %v7648, %v3413
    %v7958 = vmul.f32 %v7651, %v3418
    %v7959 = vmul.f32 %v7656, %v3423
    %v7960 = vmul.f32 %v7659, %v3428
    %v7961 = vmul.f32 %v7664, %v3433
    %v7962 = vmul.f32 %v7667, %v3438
    %v7963 = vmul.f32 %v7672, %v3443
    %v7964 = vmul.f32 %v7675, %v3448
    %v7965 = vmul.f32 %v7680, %v3453
    %v7966 = vmul.f32 %v7683, %v3458
    %v7967 = vmul.f32 %v7688, %v3463
    %v7968 = vmul.f32 %v7691, %v3468
    %v7969 = vmul.f32 %v7696, %v3473
    %v7970 = vmul.f32 %v7699, %v3478
    %v7971 = vmul.f32 %v7704, %v3483
    %v7972 = vmul.f32 %v7707, %v3488
    %v7973 = vmul.f32 %v7712, %v3493
    %v7974 = vmul.f32 %v7715, %v3498
    %v7975 = vmul.f32 %v7720, %v3503
    %v7976 = vmul.f32 %v7723, %v3508
    %v7977 = vmul.f32 %v7728, %v3513
    %v7978 = vmul.f32 %v7731, %v3518
    %v7979 = vmul.f32 %v7736, %v3523
    %v7980 = vmul.f32 %v7739, %v3528
    %v7981 = vmul.f32 %v7744, %v3533
    %v7982 = vmul.f32 %v7747, %v3538
    %v7983 = vmul.f32 %v7752, %v3543
    %v7984 = vmul.f32 %v7755, %v3548
    %v7985 = vmul.f32 %v7760, %v3553
    %v7986 = vmul.f32 %v7763, %v3558
    %v7987 = vmul.f32 %v7768, %v3563
    %v7988 = vmul.f32 %v7771, %v3568
    %v7989 = vmul.f32 %v7776, %v3573
    %v7990 = vmul.f32 %v7779, %v3578
    %v7991 = vmul.f32 %v7784, %v3583
    %v7992 = vmul.f32 %v7787, %v3588
    %v7993 = vmul.f32 %v7792, %v3593
    %v7994 = vmul.f32 %v7795, %v3598
    %v7995 = vmul.f32 %v7800, %v3603
    %v7996 = vmul.f32 %v7803, %v3608
    %v7997 = vmul.f32 %v7808, %v3613
    %v7998 = vmul.f32 %v7811, %v3618
    %v7999 = vmul.f32 %v7816, %v3623
    %v8000 = vmul.f32 %v7819, %v3628
    %v8001 = vmul.f32 %v7824, %v3633
    %v8002 = vmul.f32 %v7827, %v3638
    %v8003 = vmul.f32 %v7832, %v3643
    %v8004 = vmul.f32 %v7835, %v3648
    %v8005 = vmul.f32 %v7840, %v3653
    %v8006 = vmul.f32 %v7843, %v3658
    %v8007 = vmul.f32 %v7848, %v3663
    %v8008 = vmul.f32 %v7851, %v3668
    %v8009 = vmul.f32 %v7856, %v3673
    %v8010 = vmul.f32 %v7859, %v3678
    %v8011 = vmul.f32 %v7864, %v3683
    %v8012 = vmul.f32 %v7867, %v3688
    %v8013 = vmul.f32 %v7872, %v3693
    %v8014 = vmul.f32 %v7875, %v3698
    %v8015 = vmul.f32 %v7880, %v3703
    %v8016 = vmul.f32 %v7883, %v3708
    %v8017 = vmul.f32 %v7888, %v3713
    %v8018 = vmul.f32 %v7891, %v3718
    %v8019 = vmul.f32 %v7896, %v3723
    %v8020 = vmul.f32 %v7899, %v3728
    %v8021 = vmul.f32 %v7904, %v3733
    %v8022 = vmul.f32 %v7907, %v3738
    %v8023 = vmul.f32 %v7912, %v3743
    %v8024 = vmul.f32 %v7915, %v3748
    %v8025 = vmul.f32 %v7920, %v3753
    %v8026 = vmul.f32 %v7923, %v3758
    %v8027 = vmul.f32 %v7928, %v3763
    %v8028 = vmul.f32 %v7931, %v3768
    %v8029 = vmul.f32 %v7936, %v3773
    %v8030 = vmul.f32 %v7939, %v3778
    %v8031 = vmul.f32 %v7944, %v3783
    %v8032 = vadd.f32 %v7951, %v7952
    %v8033 = vadd.f32 %v8032, %v7953
    %v8034 = vadd.f32 %v8033, %v7954
    %v8035 = vadd.f32 %v8034, %v7955
    %v8036 = vadd.f32 %v8035, %v7956
    %v8037 = vadd.f32 %v8036, %v7957
    %v8038 = vadd.f32 %v8037, %v7958
    %v8039 = vadd.f32 %v8038, %v7959
    %v8040 = vadd.f32 %v8039, %v7960
    %v8041 = vadd.f32 %v8040, %v7961
    %v8042 = vadd.f32 %v8041, %v7962
    %v8043 = vadd.f32 %v8042, %v7963
    %v8044 = vadd.f32 %v8043, %v7964
    %v8045 = vadd.f32 %v8044, %v7965
    %v8046 = vadd.f32 %v8045, %v7966
    %v8047 = vadd.f32 %v8046, %v7967
    %v8048 = vadd.f32 %v8047, %v7968
    %v8049 = vadd.f32 %v8048, %v7969
    %v8050 = vadd.f32 %v8049, %v7970
    %v8051 = vadd.f32 %v8050, %v7971
    %v8052 = vadd.f32 %v8051, %v7972
    %v8053 = vadd.f32 %v8052, %v7973
    %v8054 = vadd.f32 %v8053, %v7974
    %v8055 = vadd.f32 %v8054, %v7975
    %v8056 = vadd.f32 %v8055, %v7976
    %v8057 = vadd.f32 %v8056, %v7977
    %v8058 = vadd.f32 %v8057, %v7978
    %v8059 = vadd.f32 %v8058, %v7979
    %v8060 = vadd.f32 %v8059, %v7980
    %v8061 = vadd.f32 %v8060, %v7981
    %v8062 = vadd.f32 %v8061, %v7982
    %v8063 = vadd.f32 %v8062, %v7983
    %v8064 = vadd.f32 %v8063, %v7984
    %v8065 = vadd.f32 %v8064, %v7985
    %v8066 = vadd.f32 %v8065, %v7986
    %v8067 = vadd.f32 %v8066, %v7987
    %v8068 = vadd.f32 %v8067, %v7988
    %v8069 = vadd.f32 %v8068, %v7989
    %v8070 = vadd.f32 %v8069, %v7990
    %v8071 = vadd.f32 %v8070, %v7991
    %v8072 = vadd.f32 %v8071, %v7992
    %v8073 = vadd.f32 %v8072, %v7993
    %v8074 = vadd.f32 %v8073, %v7994
    %v8075 = vadd.f32 %v8074, %v7995
    %v8076 = vadd.f32 %v8075, %v7996
    %v8077 = vadd.f32 %v8076, %v7997
    %v8078 = vadd.f32 %v8077, %v7998
    %v8079 = vadd.f32 %v8078, %v7999
    %v8080 = vadd.f32 %v8079, %v8000
    %v8081 = vadd.f32 %v8080, %v8001
    %v8082 = vadd.f32 %v8081, %v8002
    %v8083 = vadd.f32 %v8082, %v8003
    %v8084 = vadd.f32 %v8083, %v8004
    %v8085 = vadd.f32 %v8084, %v8005
    %v8086 = vadd.f32 %v8085, %v8006
    %v8087 = vadd.f32 %v8086, %v8007
    %v8088 = vadd.f32 %v8087, %v8008
    %v8089 = vadd.f32 %v8088, %v8009
    %v8090 = vadd.f32 %v8089, %v8010
    %v8091 = vadd.f32 %v8090, %v8011
    %v8092 = vadd.f32 %v8091, %v8012
    %v8093 = vadd.f32 %v8092, %v8013
    %v8094 = vadd.f32 %v8093, %v8014
    %v8095 = vadd.f32 %v8094, %v8015
    %v8096 = vadd.f32 %v8095, %v8016
    %v8097 = vadd.f32 %v8096, %v8017
    %v8098 = vadd.f32 %v8097, %v8018
    %v8099 = vadd.f32 %v8098, %v8019
    %v8100 = vadd.f32 %v8099, %v8020
    %v8101 = vadd.f32 %v8100, %v8021
    %v8102 = vadd.f32 %v8101, %v8022
    %v8103 = vadd.f32 %v8102, %v8023
    %v8104 = vadd.f32 %v8103, %v8024
    %v8105 = vadd.f32 %v8104, %v8025
    %v8106 = vadd.f32 %v8105, %v8026
    %v8107 = vadd.f32 %v8106, %v8027
    %v8108 = vadd.f32 %v8107, %v8028
    %v8109 = vadd.f32 %v8108, %v8029
    %v8110 = vadd.f32 %v8109, %v8030
    %v8111 = vadd.f32 %v8110, %v8031
    %v8112 = vrot.slane %v8111, 4
    %v8113 = vadd.f32 %v8111, %v8112
    %v8114 = vrot.slane %v8113, 2
    %v8115 = vadd.f32 %v8113, %v8114
    %v8116 = vrot.slane %v8115, 1
    %v8117 = vadd.f32 %v8115, %v8116
    %v8118 = vmul.f32 %v8117, 0.001953125
    %v8119 = vsub.f32 %v7624, %v8118
    %v8120 = vsub.f32 %v7627, %v8118
    %v8121 = vsub.f32 %v7632, %v8118
    %v8122 = vsub.f32 %v7635, %v8118
    %v8123 = vsub.f32 %v7640, %v8118
    %v8124 = vsub.f32 %v7643, %v8118
    %v8125 = vsub.f32 %v7648, %v8118
    %v8126 = vsub.f32 %v7651, %v8118
    %v8127 = vsub.f32 %v7656, %v8118
    %v8128 = vsub.f32 %v7659, %v8118
    %v8129 = vsub.f32 %v7664, %v8118
    %v8130 = vsub.f32 %v7667, %v8118
    %v8131 = vsub.f32 %v7672, %v8118
    %v8132 = vsub.f32 %v7675, %v8118
    %v8133 = vsub.f32 %v7680, %v8118
    %v8134 = vsub.f32 %v7683, %v8118
    %v8135 = vsub.f32 %v7688, %v8118
    %v8136 = vsub.f32 %v7691, %v8118
    %v8137 = vsub.f32 %v7696, %v8118
    %v8138 = vsub.f32 %v7699, %v8118
    %v8139 = vsub.f32 %v7704, %v8118
    %v8140 = vsub.f32 %v7707, %v8118
    %v8141 = vsub.f32 %v7712, %v8118
    %v8142 = vsub.f32 %v7715, %v8118
    %v8143 = vsub.f32 %v7720, %v8118
    %v8144 = vsub.f32 %v7723, %v8118
    %v8145 = vsub.f32 %v7728, %v8118
    %v8146 = vsub.f32 %v7731, %v8118
    %v8147 = vsub.f32 %v7736, %v8118
    %v8148 = vsub.f32 %v7739, %v8118
    %v8149 = vsub.f32 %v7744, %v8118
    %v8150 = vsub.f32 %v7747, %v8118
    %v8151 = vsub.f32 %v7752, %v8118
    %v8152 = vsub.f32 %v7755, %v8118
    %v8153 = vsub.f32 %v7760, %v8118
    %v8154 = vsub.f32 %v7763, %v8118
    %v8155 = vsub.f32 %v7768, %v8118
    %v8156 = vsub.f32 %v7771, %v8118
    %v8157 = vsub.f32 %v7776, %v8118
    %v8158 = vsub.f32 %v7779, %v8118
    %v8159 = vsub.f32 %v7784, %v8118
    %v8160 = vsub.f32 %v7787, %v8118
    %v8161 = vsub.f32 %v7792, %v8118
    %v8162 = vsub.f32 %v7795, %v8118
    %v8163 = vsub.f32 %v7800, %v8118
    %v8164 = vsub.f32 %v7803, %v8118
    %v8165 = vsub.f32 %v7808, %v8118
    %v8166 = vsub.f32 %v7811, %v8118
    %v8167 = vsub.f32 %v7816, %v8118
    %v8168 = vsub.f32 %v7819, %v8118
    %v8169 = vsub.f32 %v7824, %v8118
    %v8170 = vsub.f32 %v7827, %v8118
    %v8171 = vsub.f32 %v7832, %v8118
    %v8172 = vsub.f32 %v7835, %v8118
    %v8173 = vsub.f32 %v7840, %v8118
    %v8174 = vsub.f32 %v7843, %v8118
    %v8175 = vsub.f32 %v7848, %v8118
    %v8176 = vsub.f32 %v7851, %v8118
    %v8177 = vsub.f32 %v7856, %v8118
    %v8178 = vsub.f32 %v7859, %v8118
    %v8179 = vsub.f32 %v7864, %v8118
    %v8180 = vsub.f32 %v7867, %v8118
    %v8181 = vsub.f32 %v7872, %v8118
    %v8182 = vsub.f32 %v7875, %v8118
    %v8183 = vsub.f32 %v7880, %v8118
    %v8184 = vsub.f32 %v7883, %v8118
    %v8185 = vsub.f32 %v7888, %v8118
    %v8186 = vsub.f32 %v7891, %v8118
    %v8187 = vsub.f32 %v7896, %v8118
    %v8188 = vsub.f32 %v7899, %v8118
    %v8189 = vsub.f32 %v7904, %v8118
    %v8190 = vsub.f32 %v7907, %v8118
    %v8191 = vsub.f32 %v7912, %v8118
    %v8192 = vsub.f32 %v7915, %v8118
    %v8193 = vsub.f32 %v7920, %v8118
    %v8194 = vsub.f32 %v7923, %v8118
    %v8195 = vsub.f32 %v7928, %v8118
    %v8196 = vsub.f32 %v7931, %v8118
    %v8197 = vsub.f32 %v7936, %v8118
    %v8198 = vsub.f32 %v7939, %v8118
    %v8199 = vsub.f32 %v7944, %v8118
    %v8200 = vmul.f32 %v8119, %v3383
    %v8201 = vmul.f32 %v8120, %v3388
    %v8202 = vmul.f32 %v8121, %v3393
    %v8203 = vmul.f32 %v8122, %v3398
    %v8204 = vmul.f32 %v8123, %v3403
    %v8205 = vmul.f32 %v8124, %v3408
    %v8206 = vmul.f32 %v8125, %v3413
    %v8207 = vmul.f32 %v8126, %v3418
    %v8208 = vmul.f32 %v8127, %v3423
    %v8209 = vmul.f32 %v8128, %v3428
    %v8210 = vmul.f32 %v8129, %v3433
    %v8211 = vmul.f32 %v8130, %v3438
    %v8212 = vmul.f32 %v8131, %v3443
    %v8213 = vmul.f32 %v8132, %v3448
    %v8214 = vmul.f32 %v8133, %v3453
    %v8215 = vmul.f32 %v8134, %v3458
    %v8216 = vmul.f32 %v8135, %v3463
    %v8217 = vmul.f32 %v8136, %v3468
    %v8218 = vmul.f32 %v8137, %v3473
    %v8219 = vmul.f32 %v8138, %v3478
    %v8220 = vmul.f32 %v8139, %v3483
    %v8221 = vmul.f32 %v8140, %v3488
    %v8222 = vmul.f32 %v8141, %v3493
    %v8223 = vmul.f32 %v8142, %v3498
    %v8224 = vmul.f32 %v8143, %v3503
    %v8225 = vmul.f32 %v8144, %v3508
    %v8226 = vmul.f32 %v8145, %v3513
    %v8227 = vmul.f32 %v8146, %v3518
    %v8228 = vmul.f32 %v8147, %v3523
    %v8229 = vmul.f32 %v8148, %v3528
    %v8230 = vmul.f32 %v8149, %v3533
    %v8231 = vmul.f32 %v8150, %v3538
    %v8232 = vmul.f32 %v8151, %v3543
    %v8233 = vmul.f32 %v8152, %v3548
    %v8234 = vmul.f32 %v8153, %v3553
    %v8235 = vmul.f32 %v8154, %v3558
    %v8236 = vmul.f32 %v8155, %v3563
    %v8237 = vmul.f32 %v8156, %v3568
    %v8238 = vmul.f32 %v8157, %v3573
    %v8239 = vmul.f32 %v8158, %v3578
    %v8240 = vmul.f32 %v8159, %v3583
    %v8241 = vmul.f32 %v8160, %v3588
    %v8242 = vmul.f32 %v8161, %v3593
    %v8243 = vmul.f32 %v8162, %v3598
    %v8244 = vmul.f32 %v8163, %v3603
    %v8245 = vmul.f32 %v8164, %v3608
    %v8246 = vmul.f32 %v8165, %v3613
    %v8247 = vmul.f32 %v8166, %v3618
    %v8248 = vmul.f32 %v8167, %v3623
    %v8249 = vmul.f32 %v8168, %v3628
    %v8250 = vmul.f32 %v8169, %v3633
    %v8251 = vmul.f32 %v8170, %v3638
    %v8252 = vmul.f32 %v8171, %v3643
    %v8253 = vmul.f32 %v8172, %v3648
    %v8254 = vmul.f32 %v8173, %v3653
    %v8255 = vmul.f32 %v8174, %v3658
    %v8256 = vmul.f32 %v8175, %v3663
    %v8257 = vmul.f32 %v8176, %v3668
    %v8258 = vmul.f32 %v8177, %v3673
    %v8259 = vmul.f32 %v8178, %v3678
    %v8260 = vmul.f32 %v8179, %v3683
    %v8261 = vmul.f32 %v8180, %v3688
    %v8262 = vmul.f32 %v8181, %v3693
    %v8263 = vmul.f32 %v8182, %v3698
    %v8264 = vmul.f32 %v8183, %v3703
    %v8265 = vmul.f32 %v8184, %v3708
    %v8266 = vmul.f32 %v8185, %v3713
    %v8267 = vmul.f32 %v8186, %v3718
    %v8268 = vmul.f32 %v8187, %v3723
    %v8269 = vmul.f32 %v8188, %v3728
    %v8270 = vmul.f32 %v8189, %v3733
    %v8271 = vmul.f32 %v8190, %v3738
    %v8272 = vmul.f32 %v8191, %v3743
    %v8273 = vmul.f32 %v8192, %v3748
    %v8274 = vmul.f32 %v8193, %v3753
    %v8275 = vmul.f32 %v8194, %v3758
    %v8276 = vmul.f32 %v8195, %v3763
    %v8277 = vmul.f32 %v8196, %v3768
    %v8278 = vmul.f32 %v8197, %v3773
    %v8279 = vmul.f32 %v8198, %v3778
    %v8280 = vmul.f32 %v8199, %v3783
    %v8281 = vmul.f32 %v8200, %v8200
    %v8282 = vmul.f32 %v8201, %v8201
    %v8283 = vmul.f32 %v8202, %v8202
    %v8284 = vmul.f32 %v8203, %v8203
    %v8285 = vmul.f32 %v8204, %v8204
    %v8286 = vmul.f32 %v8205, %v8205
    %v8287 = vmul.f32 %v8206, %v8206
    %v8288 = vmul.f32 %v8207, %v8207
    %v8289 = vmul.f32 %v8208, %v8208
    %v8290 = vmul.f32 %v8209, %v8209
    %v8291 = vmul.f32 %v8210, %v8210
    %v8292 = vmul.f32 %v8211, %v8211
    %v8293 = vmul.f32 %v8212, %v8212
    %v8294 = vmul.f32 %v8213, %v8213
    %v8295 = vmul.f32 %v8214, %v8214
    %v8296 = vmul.f32 %v8215, %v8215
    %v8297 = vmul.f32 %v8216, %v8216
    %v8298 = vmul.f32 %v8217, %v8217
    %v8299 = vmul.f32 %v8218, %v8218
    %v8300 = vmul.f32 %v8219, %v8219
    %v8301 = vmul.f32 %v8220, %v8220
    %v8302 = vmul.f32 %v8221, %v8221
    %v8303 = vmul.f32 %v8222, %v8222
    %v8304 = vmul.f32 %v8223, %v8223
    %v8305 = vmul.f32 %v8224, %v8224
    %v8306 = vmul.f32 %v8225, %v8225
    %v8307 = vmul.f32 %v8226, %v8226
    %v8308 = vmul.f32 %v8227, %v8227
    %v8309 = vmul.f32 %v8228, %v8228
    %v8310 = vmul.f32 %v8229, %v8229
    %v8311 = vmul.f32 %v8230, %v8230
    %v8312 = vmul.f32 %v8231, %v8231
    %v8313 = vmul.f32 %v8232, %v8232
    %v8314 = vmul.f32 %v8233, %v8233
    %v8315 = vmul.f32 %v8234, %v8234
    %v8316 = vmul.f32 %v8235, %v8235
    %v8317 = vmul.f32 %v8236, %v8236
    %v8318 = vmul.f32 %v8237, %v8237
    %v8319 = vmul.f32 %v8238, %v8238
    %v8320 = vmul.f32 %v8239, %v8239
    %v8321 = vmul.f32 %v8240, %v8240
    %v8322 = vmul.f32 %v8241, %v8241
    %v8323 = vmul.f32 %v8242, %v8242
    %v8324 = vmul.f32 %v8243, %v8243
    %v8325 = vmul.f32 %v8244, %v8244
    %v8326 = vmul.f32 %v8245, %v8245
    %v8327 = vmul.f32 %v8246, %v8246
    %v8328 = vmul.f32 %v8247, %v8247
    %v8329 = vmul.f32 %v8248, %v8248
    %v8330 = vmul.f32 %v8249, %v8249
    %v8331 = vmul.f32 %v8250, %v8250
    %v8332 = vmul.f32 %v8251, %v8251
    %v8333 = vmul.f32 %v8252, %v8252
    %v8334 = vmul.f32 %v8253, %v8253
    %v8335 = vmul.f32 %v8254, %v8254
    %v8336 = vmul.f32 %v8255, %v8255
    %v8337 = vmul.f32 %v8256, %v8256
    %v8338 = vmul.f32 %v8257, %v8257
    %v8339 = vmul.f32 %v8258, %v8258
    %v8340 = vmul.f32 %v8259, %v8259
    %v8341 = vmul.f32 %v8260, %v8260
    %v8342 = vmul.f32 %v8261, %v8261
    %v8343 = vmul.f32 %v8262, %v8262
    %v8344 = vmul.f32 %v8263, %v8263
    %v8345 = vmul.f32 %v8264, %v8264
    %v8346 = vmul.f32 %v8265, %v8265
    %v8347 = vmul.f32 %v8266, %v8266
    %v8348 = vmul.f32 %v8267, %v8267
    %v8349 = vmul.f32 %v8268, %v8268
    %v8350 = vmul.f32 %v8269, %v8269
    %v8351 = vmul.f32 %v8270, %v8270
    %v8352 = vmul.f32 %v8271, %v8271
    %v8353 = vmul.f32 %v8272, %v8272
    %v8354 = vmul.f32 %v8273, %v8273
    %v8355 = vmul.f32 %v8274, %v8274
    %v8356 = vmul.f32 %v8275, %v8275
    %v8357 = vmul.f32 %v8276, %v8276
    %v8358 = vmul.f32 %v8277, %v8277
    %v8359 = vmul.f32 %v8278, %v8278
    %v8360 = vmul.f32 %v8279, %v8279
    %v8361 = vmul.f32 %v8280, %v8280
    %v8362 = vadd.f32 %v8281, %v8282
    %v8363 = vadd.f32 %v8362, %v8283
    %v8364 = vadd.f32 %v8363, %v8284
    %v8365 = vadd.f32 %v8364, %v8285
    %v8366 = vadd.f32 %v8365, %v8286
    %v8367 = vadd.f32 %v8366, %v8287
    %v8368 = vadd.f32 %v8367, %v8288
    %v8369 = vadd.f32 %v8368, %v8289
    %v8370 = vadd.f32 %v8369, %v8290
    %v8371 = vadd.f32 %v8370, %v8291
    %v8372 = vadd.f32 %v8371, %v8292
    %v8373 = vadd.f32 %v8372, %v8293
    %v8374 = vadd.f32 %v8373, %v8294
    %v8375 = vadd.f32 %v8374, %v8295
    %v8376 = vadd.f32 %v8375, %v8296
    %v8377 = vadd.f32 %v8376, %v8297
    %v8378 = vadd.f32 %v8377, %v8298
    %v8379 = vadd.f32 %v8378, %v8299
    %v8380 = vadd.f32 %v8379, %v8300
    %v8381 = vadd.f32 %v8380, %v8301
    %v8382 = vadd.f32 %v8381, %v8302
    %v8383 = vadd.f32 %v8382, %v8303
    %v8384 = vadd.f32 %v8383, %v8304
    %v8385 = vadd.f32 %v8384, %v8305
    %v8386 = vadd.f32 %v8385, %v8306
    %v8387 = vadd.f32 %v8386, %v8307
    %v8388 = vadd.f32 %v8387, %v8308
    %v8389 = vadd.f32 %v8388, %v8309
    %v8390 = vadd.f32 %v8389, %v8310
    %v8391 = vadd.f32 %v8390, %v8311
    %v8392 = vadd.f32 %v8391, %v8312
    %v8393 = vadd.f32 %v8392, %v8313
    %v8394 = vadd.f32 %v8393, %v8314
    %v8395 = vadd.f32 %v8394, %v8315
    %v8396 = vadd.f32 %v8395, %v8316
    %v8397 = vadd.f32 %v8396, %v8317
    %v8398 = vadd.f32 %v8397, %v8318
    %v8399 = vadd.f32 %v8398, %v8319
    %v8400 = vadd.f32 %v8399, %v8320
    %v8401 = vadd.f32 %v8400, %v8321
    %v8402 = vadd.f32 %v8401, %v8322
    %v8403 = vadd.f32 %v8402, %v8323
    %v8404 = vadd.f32 %v8403, %v8324
    %v8405 = vadd.f32 %v8404, %v8325
    %v8406 = vadd.f32 %v8405, %v8326
    %v8407 = vadd.f32 %v8406, %v8327
    %v8408 = vadd.f32 %v8407, %v8328
    %v8409 = vadd.f32 %v8408, %v8329
    %v8410 = vadd.f32 %v8409, %v8330
    %v8411 = vadd.f32 %v8410, %v8331
    %v8412 = vadd.f32 %v8411, %v8332
    %v8413 = vadd.f32 %v8412, %v8333
    %v8414 = vadd.f32 %v8413, %v8334
    %v8415 = vadd.f32 %v8414, %v8335
    %v8416 = vadd.f32 %v8415, %v8336
    %v8417 = vadd.f32 %v8416, %v8337
    %v8418 = vadd.f32 %v8417, %v8338
    %v8419 = vadd.f32 %v8418, %v8339
    %v8420 = vadd.f32 %v8419, %v8340
    %v8421 = vadd.f32 %v8420, %v8341
    %v8422 = vadd.f32 %v8421, %v8342
    %v8423 = vadd.f32 %v8422, %v8343
    %v8424 = vadd.f32 %v8423, %v8344
    %v8425 = vadd.f32 %v8424, %v8345
    %v8426 = vadd.f32 %v8425, %v8346
    %v8427 = vadd.f32 %v8426, %v8347
    %v8428 = vadd.f32 %v8427, %v8348
    %v8429 = vadd.f32 %v8428, %v8349
    %v8430 = vadd.f32 %v8429, %v8350
    %v8431 = vadd.f32 %v8430, %v8351
    %v8432 = vadd.f32 %v8431, %v8352
    %v8433 = vadd.f32 %v8432, %v8353
    %v8434 = vadd.f32 %v8433, %v8354
    %v8435 = vadd.f32 %v8434, %v8355
    %v8436 = vadd.f32 %v8435, %v8356
    %v8437 = vadd.f32 %v8436, %v8357
    %v8438 = vadd.f32 %v8437, %v8358
    %v8439 = vadd.f32 %v8438, %v8359
    %v8440 = vadd.f32 %v8439, %v8360
    %v8441 = vadd.f32 %v8440, %v8361
    %v8442 = vrot.slane %v8441, 4
    %v8443 = vadd.f32 %v8441, %v8442
    %v8444 = vrot.slane %v8443, 2
    %v8445 = vadd.f32 %v8443, %v8444
    %v8446 = vrot.slane %v8445, 1
    %v8447 = vadd.f32 %v8445, %v8446
    %v8448 = vmul.f32 %v8447, 0.001953125
    %v8449 = vadd.f32 %v8448, 1e-05
    %v8450 = vrsqrt.pop %v8449
    %v8451 = vmul.f32 %v7949, %v8450
    %v8452 = vmul.f32 %v8118, %v8451
    %v8453 = vsub.f32 %v7950, %v8452
    %v8455 = vlaneseq
    %v8456 = vshrl.u32 %v8455, 7
    %v8457 = vsub.s32 0, %v8456
    %v8458 = vrot.slane %v8451, %v8457
    %v8460 = vmul.f32 %v7624, %v8458
    %v8461 = vmul.f32 %v7627, %v8458
    %v8462 = vmul.f32 %v7632, %v8458
    %v8463 = vmul.f32 %v7635, %v8458
    %v8464 = vmul.f32 %v7640, %v8458
    %v8465 = vmul.f32 %v7643, %v8458
    %v8466 = vmul.f32 %v7648, %v8458
    %v8467 = vmul.f32 %v7651, %v8458
    %v8468 = vmul.f32 %v7656, %v8458
    %v8469 = vmul.f32 %v7659, %v8458
    %v8470 = vmul.f32 %v7664, %v8458
    %v8471 = vmul.f32 %v7667, %v8458
    %v8472 = vmul.f32 %v7672, %v8458
    %v8473 = vmul.f32 %v7675, %v8458
    %v8474 = vmul.f32 %v7680, %v8458
    %v8475 = vmul.f32 %v7683, %v8458
    %v8476 = vmul.f32 %v7688, %v8458
    %v8477 = vmul.f32 %v7691, %v8458
    %v8478 = vmul.f32 %v7696, %v8458
    %v8479 = vmul.f32 %v7699, %v8458
    %v8480 = vmul.f32 %v7704, %v8458
    %v8481 = vmul.f32 %v7707, %v8458
    %v8482 = vmul.f32 %v7712, %v8458
    %v8483 = vmul.f32 %v7715, %v8458
    %v8484 = vmul.f32 %v7720, %v8458
    %v8485 = vmul.f32 %v7723, %v8458
    %v8486 = vmul.f32 %v7728, %v8458
    %v8487 = vmul.f32 %v7731, %v8458
    %v8488 = vmul.f32 %v7736, %v8458
    %v8489 = vmul.f32 %v7739, %v8458
    %v8490 = vmul.f32 %v7744, %v8458
    %v8491 = vmul.f32 %v7747, %v8458
    %v8492 = vmul.f32 %v7752, %v8458
    %v8493 = vmul.f32 %v7755, %v8458
    %v8494 = vmul.f32 %v7760, %v8458
    %v8495 = vmul.f32 %v7763, %v8458
    %v8496 = vmul.f32 %v7768, %v8458
    %v8497 = vmul.f32 %v7771, %v8458
    %v8498 = vmul.f32 %v7776, %v8458
    %v8499 = vmul.f32 %v7779, %v8458
    %v8500 = vmul.f32 %v7784, %v8458
    %v8501 = vmul.f32 %v7787, %v8458
    %v8502 = vmul.f32 %v7792, %v8458
    %v8503 = vmul.f32 %v7795, %v8458
    %v8504 = vmul.f32 %v7800, %v8458
    %v8505 = vmul.f32 %v7803, %v8458
    %v8506 = vmul.f32 %v7808, %v8458
    %v8507 = vmul.f32 %v7811, %v8458
    %v8508 = vmul.f32 %v7816, %v8458
    %v8509 = vmul.f32 %v7819, %v8458
    %v8510 = vmul.f32 %v7824, %v8458
    %v8511 = vmul.f32 %v7827, %v8458
    %v8512 = vmul.f32 %v7832, %v8458
    %v8513 = vmul.f32 %v7835, %v8458
    %v8514 = vmul.f32 %v7840, %v8458
    %v8515 = vmul.f32 %v7843, %v8458
    %v8516 = vmul.f32 %v7848, %v8458
    %v8517 = vmul.f32 %v7851, %v8458
    %v8518 = vmul.f32 %v7856, %v8458
    %v8519 = vmul.f32 %v7859, %v8458
    %v8520 = vmul.f32 %v7864, %v8458
    %v8521 = vmul.f32 %v7867, %v8458
    %v8522 = vmul.f32 %v7872, %v8458
    %v8523 = vmul.f32 %v7875, %v8458
    %v8524 = vmul.f32 %v7880, %v8458
    %v8525 = vmul.f32 %v7883, %v8458
    %v8526 = vmul.f32 %v7888, %v8458
    %v8527 = vmul.f32 %v7891, %v8458
    %v8528 = vmul.f32 %v7896, %v8458
    %v8529 = vmul.f32 %v7899, %v8458
    %v8530 = vmul.f32 %v7904, %v8458
    %v8531 = vmul.f32 %v7907, %v8458
    %v8532 = vmul.f32 %v7912, %v8458
    %v8533 = vmul.f32 %v7915, %v8458
    %v8534 = vmul.f32 %v7920, %v8458
    %v8535 = vmul.f32 %v7923, %v8458
    %v8536 = vmul.f32 %v7928, %v8458
    %v8537 = vmul.f32 %v7931, %v8458
    %v8538 = vmul.f32 %v7936, %v8458
    %v8539 = vmul.f32 %v7939, %v8458
    %v8540 = vmul.f32 %v7944, %v8458
    %v8542 = vlaneseq
    %v8543 = vshrl.u32 %v8542, 7
    %v8544 = vsub.s32 0, %v8543
    %v8545 = vrot.slane %v8453, %v8544
    %v8547 = vadd.f32 %v8460, %v8545
    %v8548 = vadd.f32 %v8461, %v8545
    %v8549 = vadd.f32 %v8462, %v8545
    %v8550 = vadd.f32 %v8463, %v8545
    %v8551 = vadd.f32 %v8464, %v8545
    %v8552 = vadd.f32 %v8465, %v8545
    %v8553 = vadd.f32 %v8466, %v8545
    %v8554 = vadd.f32 %v8467, %v8545
    %v8555 = vadd.f32 %v8468, %v8545
    %v8556 = vadd.f32 %v8469, %v8545
    %v8557 = vadd.f32 %v8470, %v8545
    %v8558 = vadd.f32 %v8471, %v8545
    %v8559 = vadd.f32 %v8472, %v8545
    %v8560 = vadd.f32 %v8473, %v8545
    %v8561 = vadd.f32 %v8474, %v8545
    %v8562 = vadd.f32 %v8475, %v8545
    %v8563 = vadd.f32 %v8476, %v8545
    %v8564 = vadd.f32 %v8477, %v8545
    %v8565 = vadd.f32 %v8478, %v8545
    %v8566 = vadd.f32 %v8479, %v8545
    %v8567 = vadd.f32 %v8480, %v8545
    %v8568 = vadd.f32 %v8481, %v8545
    %v8569 = vadd.f32 %v8482, %v8545
    %v8570 = vadd.f32 %v8483, %v8545
    %v8571 = vadd.f32 %v8484, %v8545
    %v8572 = vadd.f32 %v8485, %v8545
    %v8573 = vadd.f32 %v8486, %v8545
    %v8574 = vadd.f32 %v8487, %v8545
    %v8575 = vadd.f32 %v8488, %v8545
    %v8576 = vadd.f32 %v8489, %v8545
    %v8577 = vadd.f32 %v8490, %v8545
    %v8578 = vadd.f32 %v8491, %v8545
    %v8579 = vadd.f32 %v8492, %v8545
    %v8580 = vadd.f32 %v8493, %v8545
    %v8581 = vadd.f32 %v8494, %v8545
    %v8582 = vadd.f32 %v8495, %v8545
    %v8583 = vadd.f32 %v8496, %v8545
    %v8584 = vadd.f32 %v8497, %v8545
    %v8585 = vadd.f32 %v8498, %v8545
    %v8586 = vadd.f32 %v8499, %v8545
    %v8587 = vadd.f32 %v8500, %v8545
    %v8588 = vadd.f32 %v8501, %v8545
    %v8589 = vadd.f32 %v8502, %v8545
    %v8590 = vadd.f32 %v8503, %v8545
    %v8591 = vadd.f32 %v8504, %v8545
    %v8592 = vadd.f32 %v8505, %v8545
    %v8593 = vadd.f32 %v8506, %v8545
    %v8594 = vadd.f32 %v8507, %v8545
    %v8595 = vadd.f32 %v8508, %v8545
    %v8596 = vadd.f32 %v8509, %v8545
    %v8597 = vadd.f32 %v8510, %v8545
    %v8598 = vadd.f32 %v8511, %v8545
    %v8599 = vadd.f32 %v8512, %v8545
    %v8600 = vadd.f32 %v8513, %v8545
    %v8601 = vadd.f32 %v8514, %v8545
    %v8602 = vadd.f32 %v8515, %v8545
    %v8603 = vadd.f32 %v8516, %v8545
    %v8604 = vadd.f32 %v8517, %v8545
    %v8605 = vadd.f32 %v8518, %v8545
    %v8606 = vadd.f32 %v8519, %v8545
    %v8607 = vadd.f32 %v8520, %v8545
    %v8608 = vadd.f32 %v8521, %v8545
    %v8609 = vadd.f32 %v8522, %v8545
    %v8610 = vadd.f32 %v8523, %v8545
    %v8611 = vadd.f32 %v8524, %v8545
    %v8612 = vadd.f32 %v8525, %v8545
    %v8613 = vadd.f32 %v8526, %v8545
    %v8614 = vadd.f32 %v8527, %v8545
    %v8615 = vadd.f32 %v8528, %v8545
    %v8616 = vadd.f32 %v8529, %v8545
    %v8617 = vadd.f32 %v8530, %v8545
    %v8618 = vadd.f32 %v8531, %v8545
    %v8619 = vadd.f32 %v8532, %v8545
    %v8620 = vadd.f32 %v8533, %v8545
    %v8621 = vadd.f32 %v8534, %v8545
    %v8622 = vadd.f32 %v8535, %v8545
    %v8623 = vadd.f32 %v8536, %v8545
    %v8624 = vadd.f32 %v8537, %v8545
    %v8625 = vadd.f32 %v8538, %v8545
    %v8626 = vadd.f32 %v8539, %v8545
    %v8627 = vadd.f32 %v8540, %v8545
    %v8628 = vld [vmem:[#allocation3 + $0x18] sm:$0xff]
    %v8629 = vld [vmem:[#allocation3 + $0x20] sm:$0xff]
    %v8630 = vld [vmem:[#allocation3 + $0x28] sm:$0xff]
    %v8631 = vld [vmem:[#allocation3 + $0x30] sm:$0xff]
    %v8632 = vld [vmem:[#allocation3 + $0x38] sm:$0xff]
    %v8633 = vld [vmem:[#allocation3 + $0x40] sm:$0xff]
    %v8634 = vld [vmem:[#allocation3 + $0x48] sm:$0xff]
    %v8635 = vld [vmem:[#allocation3 + $0x50] sm:$0xff]
    %v8636 = vld [vmem:[#allocation3 + $0x58] sm:$0xff]
    %v8637 = vld [vmem:[#allocation3 + $0x60] sm:$0xff]
    %v8638 = vld [vmem:[#allocation3 + $0x68] sm:$0xff]
    %v8639 = vld [vmem:[#allocation3 + $0x70] sm:$0xff]
    %v8640 = vld [vmem:[#allocation3 + $0x78] sm:$0xff]
    %v8641 = vld [vmem:[#allocation3 + $0x80] sm:$0xff]
    %v8642 = vld [vmem:[#allocation3 + $0x88] sm:$0xff]
    %v8643 = vld [vmem:[#allocation3 + $0x90] sm:$0xff]
    %v8644 = vld [vmem:[#allocation3 + $0x98] sm:$0xff]
    %v8645 = vld [vmem:[#allocation3 + $0xa0] sm:$0xff]
    %v8646 = vld [vmem:[#allocation3 + $0xa8] sm:$0xff]
    %v8647 = vld [vmem:[#allocation3 + $0xb0] sm:$0xff]
    %v8648 = vld [vmem:[#allocation3 + $0xb8] sm:$0xff]
    %v8649 = vld [vmem:[#allocation3 + $0xc0] sm:$0xff]
    %v8650 = vld [vmem:[#allocation3 + $0xc8] sm:$0xff]
    %v8651 = vld [vmem:[#allocation3 + $0xd0] sm:$0xff]
    %v8652 = vld [vmem:[#allocation3 + $0xd8] sm:$0xff]
    %v8653 = vld [vmem:[#allocation3 + $0xe0] sm:$0xff]
    %v8654 = vld [vmem:[#allocation3 + $0xe8] sm:$0xff]
    %v8655 = vld [vmem:[#allocation3 + $0xf0] sm:$0xff]
    %v8656 = vld [vmem:[#allocation3 + $0xf8] sm:$0xff]
    %v8657 = vld [vmem:[#allocation3 + $0x100] sm:$0xff]
    %v8658 = vld [vmem:[#allocation3 + $0x108] sm:$0xff]
    %v8659 = vld [vmem:[#allocation3 + $0x110] sm:$0xff]
    %v8660 = vld [vmem:[#allocation3 + $0x118] sm:$0xff]
    %v8661 = vld [vmem:[#allocation3 + $0x120] sm:$0xff]
    %v8662 = vld [vmem:[#allocation3 + $0x128] sm:$0xff]
    %v8663 = vld [vmem:[#allocation3 + $0x130] sm:$0xff]
    %v8664 = vld [vmem:[#allocation3 + $0x138] sm:$0xff]
    %v8665 = vld [vmem:[#allocation3 + $0x140] sm:$0xff]
    %v8666 = vld [vmem:[#allocation3 + $0x148] sm:$0xff]
    %v8667 = vld [vmem:[#allocation3 + $0x150] sm:$0xff]
    %v8668 = vld [vmem:[#allocation3 + $0x158] sm:$0xff]
    %v8669 = vld [vmem:[#allocation3 + $0x160] sm:$0xff]
    %v8670 = vld [vmem:[#allocation3 + $0x168] sm:$0xff]
    %v8671 = vld [vmem:[#allocation3 + $0x170] sm:$0xff]
    %v8672 = vld [vmem:[#allocation3 + $0x178] sm:$0xff]
    %v8673 = vld [vmem:[#allocation3 + $0x180] sm:$0xff]
    %v8674 = vld [vmem:[#allocation3 + $0x188] sm:$0xff]
    %v8675 = vld [vmem:[#allocation3 + $0x190] sm:$0xff]
    %v8676 = vld [vmem:[#allocation3 + $0x198] sm:$0xff]
    %v8677 = vld [vmem:[#allocation3 + $0x1a0] sm:$0xff]
    %v8678 = vld [vmem:[#allocation3 + $0x1a8] sm:$0xff]
    %v8679 = vld [vmem:[#allocation3 + $0x1b0] sm:$0xff]
    %v8680 = vld [vmem:[#allocation3 + $0x1b8] sm:$0xff]
    %v8681 = vld [vmem:[#allocation3 + $0x1c0] sm:$0xff]
    %v8682 = vld [vmem:[#allocation3 + $0x1c8] sm:$0xff]
    %v8683 = vld [vmem:[#allocation3 + $0x1d0] sm:$0xff]
    %v8684 = vld [vmem:[#allocation3 + $0x1d8] sm:$0xff]
    %v8685 = vld [vmem:[#allocation3 + $0x1e0] sm:$0xff]
    %v8686 = vld [vmem:[#allocation3 + $0x1e8] sm:$0xff]
    %v8687 = vld [vmem:[#allocation3 + $0x1f0] sm:$0xff]
    %v8688 = vld [vmem:[#allocation3 + $0x1f8] sm:$0xff]
    %v8689 = vld [vmem:[#allocation3 + $0x200] sm:$0xff]
    %v8690 = vld [vmem:[#allocation3 + $0x208] sm:$0xff]
    %v8691 = vld [vmem:[#allocation3 + $0x210] sm:$0xff]
    %v8692 = vld [vmem:[#allocation3 + $0x218] sm:$0xff]
    %v8693 = vld [vmem:[#allocation3 + $0x220] sm:$0xff]
    %v8694 = vld [vmem:[#allocation3 + $0x228] sm:$0xff]
    %v8695 = vld [vmem:[#allocation3 + $0x230] sm:$0xff]
    %v8696 = vld [vmem:[#allocation3 + $0x238] sm:$0xff]
    %v8697 = vld [vmem:[#allocation3 + $0x240] sm:$0xff]
    %v8698 = vld [vmem:[#allocation3 + $0x248] sm:$0xff]
    %v8699 = vld [vmem:[#allocation3 + $0x250] sm:$0xff]
    %v8700 = vld [vmem:[#allocation3 + $0x258] sm:$0xff]
    %v8701 = vld [vmem:[#allocation3 + $0x260] sm:$0xff]
    %v8702 = vld [vmem:[#allocation3 + $0x268] sm:$0xff]
    %v8703 = vld [vmem:[#allocation3 + $0x270] sm:$0xff]
    %v8704 = vld [vmem:[#allocation3 + $0x278] sm:$0xff]
    %v8705 = vld [vmem:[#allocation3 + $0x280] sm:$0xff]
    %v8706 = vld [vmem:[#allocation3 + $0x288] sm:$0xff]
    %v8707 = vld [vmem:[#allocation3 + $0x290] sm:$0xff]
    %v8708 = vld [vmem:[#allocation3 + $0x298] sm:$0xff]
    %v8709 = vadd.f32 %v8547, %v8628
    %v8710 = vadd.f32 %v8548, %v8629
    %v8711 = vadd.f32 %v8549, %v8630
    %v8712 = vadd.f32 %v8550, %v8631
    %v8713 = vadd.f32 %v8551, %v8632
    %v8714 = vadd.f32 %v8552, %v8633
    %v8715 = vadd.f32 %v8553, %v8634
    %v8716 = vadd.f32 %v8554, %v8635
    %v8717 = vadd.f32 %v8555, %v8636
    %v8718 = vadd.f32 %v8556, %v8637
    %v8719 = vadd.f32 %v8557, %v8638
    %v8720 = vadd.f32 %v8558, %v8639
    %v8721 = vadd.f32 %v8559, %v8640
    %v8722 = vadd.f32 %v8560, %v8641
    %v8723 = vadd.f32 %v8561, %v8642
    %v8724 = vadd.f32 %v8562, %v8643
    %v8725 = vadd.f32 %v8563, %v8644
    %v8726 = vadd.f32 %v8564, %v8645
    %v8727 = vadd.f32 %v8565, %v8646
    %v8728 = vadd.f32 %v8566, %v8647
    %v8729 = vadd.f32 %v8567, %v8648
    %v8730 = vadd.f32 %v8568, %v8649
    %v8731 = vadd.f32 %v8569, %v8650
    %v8732 = vadd.f32 %v8570, %v8651
    %v8733 = vadd.f32 %v8571, %v8652
    %v8734 = vadd.f32 %v8572, %v8653
    %v8735 = vadd.f32 %v8573, %v8654
    %v8736 = vadd.f32 %v8574, %v8655
    %v8737 = vadd.f32 %v8575, %v8656
    %v8738 = vadd.f32 %v8576, %v8657
    %v8739 = vadd.f32 %v8577, %v8658
    %v8740 = vadd.f32 %v8578, %v8659
    %v8741 = vadd.f32 %v8579, %v8660
    %v8742 = vadd.f32 %v8580, %v8661
    %v8743 = vadd.f32 %v8581, %v8662
    %v8744 = vadd.f32 %v8582, %v8663
    %v8745 = vadd.f32 %v8583, %v8664
    %v8746 = vadd.f32 %v8584, %v8665
    %v8747 = vadd.f32 %v8585, %v8666
    %v8748 = vadd.f32 %v8586, %v8667
    %v8749 = vadd.f32 %v8587, %v8668
    %v8750 = vadd.f32 %v8588, %v8669
    %v8751 = vadd.f32 %v8589, %v8670
    %v8752 = vadd.f32 %v8590, %v8671
    %v8753 = vadd.f32 %v8591, %v8672
    %v8754 = vadd.f32 %v8592, %v8673
    %v8755 = vadd.f32 %v8593, %v8674
    %v8756 = vadd.f32 %v8594, %v8675
    %v8757 = vadd.f32 %v8595, %v8676
    %v8758 = vadd.f32 %v8596, %v8677
    %v8759 = vadd.f32 %v8597, %v8678
    %v8760 = vadd.f32 %v8598, %v8679
    %v8761 = vadd.f32 %v8599, %v8680
    %v8762 = vadd.f32 %v8600, %v8681
    %v8763 = vadd.f32 %v8601, %v8682
    %v8764 = vadd.f32 %v8602, %v8683
    %v8765 = vadd.f32 %v8603, %v8684
    %v8766 = vadd.f32 %v8604, %v8685
    %v8767 = vadd.f32 %v8605, %v8686
    %v8768 = vadd.f32 %v8606, %v8687
    %v8769 = vadd.f32 %v8607, %v8688
    %v8770 = vadd.f32 %v8608, %v8689
    %v8771 = vadd.f32 %v8609, %v8690
    %v8772 = vadd.f32 %v8610, %v8691
    %v8773 = vadd.f32 %v8611, %v8692
    %v8774 = vadd.f32 %v8612, %v8693
    %v8775 = vadd.f32 %v8613, %v8694
    %v8776 = vadd.f32 %v8614, %v8695
    %v8777 = vadd.f32 %v8615, %v8696
    %v8778 = vadd.f32 %v8616, %v8697
    %v8779 = vadd.f32 %v8617, %v8698
    %v8780 = vadd.f32 %v8618, %v8699
    %v8781 = vadd.f32 %v8619, %v8700
    %v8782 = vadd.f32 %v8620, %v8701
    %v8783 = vadd.f32 %v8621, %v8702
    %v8784 = vadd.f32 %v8622, %v8703
    %v8785 = vadd.f32 %v8623, %v8704
    %v8786 = vadd.f32 %v8624, %v8705
    %v8787 = vadd.f32 %v8625, %v8706
    %v8788 = vadd.f32 %v8626, %v8707
    %v8789 = vadd.f32 %v8627, %v8708
    %v8790 = vmax.f32 %v8709, 0.0
    %v8791 = vmax.f32 %v8710, 0.0
    %v8792 = vmax.f32 %v8711, 0.0
    %v8793 = vmax.f32 %v8712, 0.0
    %v8794 = vmax.f32 %v8713, 0.0
    %v8795 = vmax.f32 %v8714, 0.0
    %v8796 = vmax.f32 %v8715, 0.0
    %v8797 = vmax.f32 %v8716, 0.0
    %v8798 = vmax.f32 %v8717, 0.0
    %v8799 = vmax.f32 %v8718, 0.0
    %v8800 = vmax.f32 %v8719, 0.0
    %v8801 = vmax.f32 %v8720, 0.0
    %v8802 = vmax.f32 %v8721, 0.0
    %v8803 = vmax.f32 %v8722, 0.0
    %v8804 = vmax.f32 %v8723, 0.0
    %v8805 = vmax.f32 %v8724, 0.0
    %v8806 = vmax.f32 %v8725, 0.0
    %v8807 = vmax.f32 %v8726, 0.0
    %v8808 = vmax.f32 %v8727, 0.0
    %v8809 = vmax.f32 %v8728, 0.0
    %v8810 = vmax.f32 %v8729, 0.0
    %v8811 = vmax.f32 %v8730, 0.0
    %v8812 = vmax.f32 %v8731, 0.0
    %v8813 = vmax.f32 %v8732, 0.0
    %v8814 = vmax.f32 %v8733, 0.0
    %v8815 = vmax.f32 %v8734, 0.0
    %v8816 = vmax.f32 %v8735, 0.0
    %v8817 = vmax.f32 %v8736, 0.0
    %v8818 = vmax.f32 %v8737, 0.0
    %v8819 = vmax.f32 %v8738, 0.0
    %v8820 = vmax.f32 %v8739, 0.0
    %v8821 = vmax.f32 %v8740, 0.0
    %v8822 = vmax.f32 %v8741, 0.0
    %v8823 = vmax.f32 %v8742, 0.0
    %v8824 = vmax.f32 %v8743, 0.0
    %v8825 = vmax.f32 %v8744, 0.0
    %v8826 = vmax.f32 %v8745, 0.0
    %v8827 = vmax.f32 %v8746, 0.0
    %v8828 = vmax.f32 %v8747, 0.0
    %v8829 = vmax.f32 %v8748, 0.0
    %v8830 = vmax.f32 %v8749, 0.0
    %v8831 = vmax.f32 %v8750, 0.0
    %v8832 = vmax.f32 %v8751, 0.0
    %v8833 = vmax.f32 %v8752, 0.0
    %v8834 = vmax.f32 %v8753, 0.0
    %v8835 = vmax.f32 %v8754, 0.0
    %v8836 = vmax.f32 %v8755, 0.0
    %v8837 = vmax.f32 %v8756, 0.0
    %v8838 = vmax.f32 %v8757, 0.0
    %v8839 = vmax.f32 %v8758, 0.0
    %v8840 = vmax.f32 %v8759, 0.0
    %v8841 = vmax.f32 %v8760, 0.0
    %v8842 = vmax.f32 %v8761, 0.0
    %v8843 = vmax.f32 %v8762, 0.0
    %v8844 = vmax.f32 %v8763, 0.0
    %v8845 = vmax.f32 %v8764, 0.0
    %v8846 = vmax.f32 %v8765, 0.0
    %v8847 = vmax.f32 %v8766, 0.0
    %v8848 = vmax.f32 %v8767, 0.0
    %v8849 = vmax.f32 %v8768, 0.0
    %v8850 = vmax.f32 %v8769, 0.0
    %v8851 = vmax.f32 %v8770, 0.0
    %v8852 = vmax.f32 %v8771, 0.0
    %v8853 = vmax.f32 %v8772, 0.0
    %v8854 = vmax.f32 %v8773, 0.0
    %v8855 = vmax.f32 %v8774, 0.0
    %v8856 = vmax.f32 %v8775, 0.0
    %v8857 = vmax.f32 %v8776, 0.0
    %v8858 = vmax.f32 %v8777, 0.0
    %v8859 = vmax.f32 %v8778, 0.0
    %v8860 = vmax.f32 %v8779, 0.0
    %v8861 = vmax.f32 %v8780, 0.0
    %v8862 = vmax.f32 %v8781, 0.0
    %v8863 = vmax.f32 %v8782, 0.0
    %v8864 = vmax.f32 %v8783, 0.0
    %v8865 = vmax.f32 %v8784, 0.0
    %v8866 = vmax.f32 %v8785, 0.0
    %v8867 = vmax.f32 %v8786, 0.0
    %v8868 = vmax.f32 %v8787, 0.0
    %v8869 = vmax.f32 %v8788, 0.0
    %v8870 = vmax.f32 %v8789, 0.0
    %8871 = vst [vmem:[#allocation8] sm:$0xff] %v8790
    %8872 = vst [vmem:[#allocation8 + $0x8] sm:$0xff] %v8791
    %8873 = vst [vmem:[#allocation8 + $0x10] sm:$0xff] %v8792
    %8874 = vst [vmem:[#allocation8 + $0x18] sm:$0xff] %v8793
    %8875 = vst [vmem:[#allocation8 + $0x20] sm:$0xff] %v8794
    %8876 = vst [vmem:[#allocation8 + $0x28] sm:$0xff] %v8795
    %8877 = vst [vmem:[#allocation8 + $0x30] sm:$0xff] %v8796
    %8878 = vst [vmem:[#allocation8 + $0x38] sm:$0xff] %v8797
    %8879 = vst [vmem:[#allocation8 + $0x40] sm:$0xff] %v8798
    %8880 = vst [vmem:[#allocation8 + $0x48] sm:$0xff] %v8799
    %8881 = vst [vmem:[#allocation8 + $0x50] sm:$0xff] %v8800
    %8882 = vst [vmem:[#allocation8 + $0x58] sm:$0xff] %v8801
    %8883 = vst [vmem:[#allocation8 + $0x60] sm:$0xff] %v8802
    %8884 = vst [vmem:[#allocation8 + $0x68] sm:$0xff] %v8803
    %8885 = vst [vmem:[#allocation8 + $0x70] sm:$0xff] %v8804
    %8886 = vst [vmem:[#allocation8 + $0x78] sm:$0xff] %v8805
    %8887 = vst [vmem:[#allocation8 + $0x80] sm:$0xff] %v8806
    %8888 = vst [vmem:[#allocation8 + $0x88] sm:$0xff] %v8807
    %8889 = vst [vmem:[#allocation8 + $0x90] sm:$0xff] %v8808
    %8890 = vst [vmem:[#allocation8 + $0x98] sm:$0xff] %v8809
    %8891 = vst [vmem:[#allocation8 + $0xa0] sm:$0xff] %v8810
    %8892 = vst [vmem:[#allocation8 + $0xa8] sm:$0xff] %v8811
    %8893 = vst [vmem:[#allocation8 + $0xb0] sm:$0xff] %v8812
    %8894 = vst [vmem:[#allocation8 + $0xb8] sm:$0xff] %v8813
    %8895 = vst [vmem:[#allocation8 + $0xc0] sm:$0xff] %v8814
    %8896 = vst [vmem:[#allocation8 + $0xc8] sm:$0xff] %v8815
    %8897 = vst [vmem:[#allocation8 + $0xd0] sm:$0xff] %v8816
    %8898 = vst [vmem:[#allocation8 + $0xd8] sm:$0xff] %v8817
    %8899 = vst [vmem:[#allocation8 + $0xe0] sm:$0xff] %v8818
    %8900 = vst [vmem:[#allocation8 + $0xe8] sm:$0xff] %v8819
    %8901 = vst [vmem:[#allocation8 + $0xf0] sm:$0xff] %v8820
    %8902 = vst [vmem:[#allocation8 + $0xf8] sm:$0xff] %v8821
    %8903 = vst [vmem:[#allocation8 + $0x100] sm:$0xff] %v8822
    %8904 = vst [vmem:[#allocation8 + $0x108] sm:$0xff] %v8823
    %8905 = vst [vmem:[#allocation8 + $0x110] sm:$0xff] %v8824
    %8906 = vst [vmem:[#allocation8 + $0x118] sm:$0xff] %v8825
    %8907 = vst [vmem:[#allocation8 + $0x120] sm:$0xff] %v8826
    %8908 = vst [vmem:[#allocation8 + $0x128] sm:$0xff] %v8827
    %8909 = vst [vmem:[#allocation8 + $0x130] sm:$0xff] %v8828
    %8910 = vst [vmem:[#allocation8 + $0x138] sm:$0xff] %v8829
    %8911 = vst [vmem:[#allocation8 + $0x140] sm:$0xff] %v8830
    %8912 = vst [vmem:[#allocation8 + $0x148] sm:$0xff] %v8831
    %8913 = vst [vmem:[#allocation8 + $0x150] sm:$0xff] %v8832
    %8914 = vst [vmem:[#allocation8 + $0x158] sm:$0xff] %v8833
    %8915 = vst [vmem:[#allocation8 + $0x160] sm:$0xff] %v8834
    %8916 = vst [vmem:[#allocation8 + $0x168] sm:$0xff] %v8835
    %8917 = vst [vmem:[#allocation8 + $0x170] sm:$0xff] %v8836
    %8918 = vst [vmem:[#allocation8 + $0x178] sm:$0xff] %v8837
    %8919 = vst [vmem:[#allocation8 + $0x180] sm:$0xff] %v8838
    %8920 = vst [vmem:[#allocation8 + $0x188] sm:$0xff] %v8839
    %8921 = vst [vmem:[#allocation8 + $0x190] sm:$0xff] %v8840
    %8922 = vst [vmem:[#allocation8 + $0x198] sm:$0xff] %v8841
    %8923 = vst [vmem:[#allocation8 + $0x1a0] sm:$0xff] %v8842
    %8924 = vst [vmem:[#allocation8 + $0x1a8] sm:$0xff] %v8843
    %8925 = vst [vmem:[#allocation8 + $0x1b0] sm:$0xff] %v8844
    %8926 = vst [vmem:[#allocation8 + $0x1b8] sm:$0xff] %v8845
    %8927 = vst [vmem:[#allocation8 + $0x1c0] sm:$0xff] %v8846
    %8928 = vst [vmem:[#allocation8 + $0x1c8] sm:$0xff] %v8847
    %8929 = vst [vmem:[#allocation8 + $0x1d0] sm:$0xff] %v8848
    %8930 = vst [vmem:[#allocation8 + $0x1d8] sm:$0xff] %v8849
    %8931 = vst [vmem:[#allocation8 + $0x1e0] sm:$0xff] %v8850
    %8932 = vst [vmem:[#allocation8 + $0x1e8] sm:$0xff] %v8851
    %8933 = vst [vmem:[#allocation8 + $0x1f0] sm:$0xff] %v8852
    %8934 = vst [vmem:[#allocation8 + $0x1f8] sm:$0xff] %v8853
    %8935 = vst [vmem:[#allocation8 + $0x200] sm:$0xff] %v8854
    %8936 = vst [vmem:[#allocation8 + $0x208] sm:$0xff] %v8855
    %8937 = vst [vmem:[#allocation8 + $0x210] sm:$0xff] %v8856
    %8938 = vst [vmem:[#allocation8 + $0x218] sm:$0xff] %v8857
    %8939 = vst [vmem:[#allocation8 + $0x220] sm:$0xff] %v8858
    %8940 = vst [vmem:[#allocation8 + $0x228] sm:$0xff] %v8859
    %8941 = vst [vmem:[#allocation8 + $0x230] sm:$0xff] %v8860
    %8942 = vst [vmem:[#allocation8 + $0x238] sm:$0xff] %v8861
    %8943 = vst [vmem:[#allocation8 + $0x240] sm:$0xff] %v8862
    %8944 = vst [vmem:[#allocation8 + $0x248] sm:$0xff] %v8863
    %8945 = vst [vmem:[#allocation8 + $0x250] sm:$0xff] %v8864
    %8946 = vst [vmem:[#allocation8 + $0x258] sm:$0xff] %v8865
    %8947 = vst [vmem:[#allocation8 + $0x260] sm:$0xff] %v8866
    %8948 = vst [vmem:[#allocation8 + $0x268] sm:$0xff] %v8867
    %8949 = vst [vmem:[#allocation8 + $0x270] sm:$0xff] %v8868
    %8950 = vst [vmem:[#allocation8 + $0x278] sm:$0xff] %v8869
    %8951 = vst [vmem:[#allocation8 + $0x280] sm:$0xff] %v8870
    // Predicated region
    $region42: #{tpu_custom_call.1} parent=1 // pred_check
      _
    $region43: #{tpu_custom_call.1} parent=1 // pred_check_branch
      %8953 = sbr.rel (0) target = $region45
    $region44: #{tpu_custom_call.1} parent=1 // pred_region
      %s8955 = ssub.s32 10368, 10368
      %8956 = vsyncadd [#allocation5], %s8955
      %s8957 = sshll.u32 [#allocation8], 4
      %s8958 = int_to_ptr.vmem [resolvable:$true] %s8957
      %8963 = dma.vmem_to_hbm [thread:$0]  %s8958, 10368, %s8, [#allocation5], 128, 128, 8
    $region45: #{tpu_custom_call.1} parent=1 // pred_fallthru
      _
    // Predicated region
    $region46: #{tpu_custom_call.1} parent=1 // pred_check
      _
    $region47: #{tpu_custom_call.1} parent=1 // pred_check_branch
      %8965 = sbr.rel (0) target = $region49
    $region48: #{tpu_custom_call.1} parent=1 // pred_region
      %8966 = dma.done [#allocation5], 10368
    $region49: #{tpu_custom_call.1} parent=1 // pred_fallthru
      _
    %8967 = vsyncpa [#allocation4], 1
    %8968 = vsyncpa [#allocation7], 1
    %8969 = vsyncpa [#allocation5], 1

</llo_original>
